<compile_context>
chip_gen: v7x
topology: tpu7x:2x2x1
jax: 0.10.0
libtpu: 0.0.40
codegen_flags: <defaults>
</compile_context>

<pallas_src>
import functools

import jax
import jax.numpy as jnp
from jax.experimental import pallas as pl
from jax.experimental.pallas import tpu as pltpu


def _default_vmem_limit_bytes():
    """Generation-aware scoped-VMEM cap.

    v5e/v6e (128 MiB physical) -> ~96 MiB, v7x (64 MiB physical) -> 48 MiB,
    with a conservative 48 MiB fallback if the hardware query is unavailable.
    """
    try:
        cap = pltpu.get_tpu_info().vmem_capacity_bytes
        return int(min(100 * 2**20, (cap * 3) // 4))
    except Exception:
        return 48 * 2**20


def _conv3x3_instnorm(x32, w_ref, mask_l, mask_r, *, H, W, C, eps, mm_dtype):
    """Reflect-padded 3x3 conv (bias-free) + InstanceNorm2d(affine=False).

    x32:     (H*W, C) f32 row-flattened NHWC image.
    w_ref:   (9, C, C) weight ref, tap k = 3*kh + kw, layout (cin, cout).
    mask_l:  ((H+2)*W, 1) bool, True where the pixel is in image column 0.
    mask_r:  ((H+2)*W, 1) bool, True where the pixel is in image column W-1.
    Returns  (H*W, C) f32 normalized conv output.
    """
    HW = H * W
    R = (H + 2) * W

    # Reflect-pad along H only.  All three pieces are W-row multiples, so the
    # slices are sublane-aligned when W % 8 == 0 (asserted in the wrapper).
    f32 = jnp.concatenate([x32[W:2 * W], x32, x32[HW - 2 * W:HW - W]], axis=0)  # (R, C)

    # +-1 column taps == +-1 row shifts of the row-flattened image, done on the
    # XLU with pltpu.roll (no sublane-offset concat relayouts).  The cyclic
    # wrap rows (row 0 of `up`, row R-1 of `dn`) land on image columns 0 / W-1
    # and are always replaced by the boundary selects below.
    up32 = pltpu.roll(f32, shift=1, axis=0)        # up[r] = f[r-1]
    dn32 = pltpu.roll(f32, shift=R - 1, axis=0)    # dn[r] = f[r+1]  (cyclic -1)

    # Single cast of the three tap buffers to the MXU feed dtype (bf16 default).
    f = f32.astype(mm_dtype)
    up = up32.astype(mm_dtype)
    dn = dn32.astype(mm_dtype)
    left = jnp.where(mask_l, dn, up)               # column j-1, reflected at j == 0
    right = jnp.where(mask_r, up, dn)              # column j+1, reflected at j == W-1
    shifted = (left, f, right)

    # 3x3 conv as 9 accumulated MXU matmuls (no im2col buffer), f32 accumulation.
    # Conv bias omitted: it is exactly cancelled by the InstanceNorm mean
    # subtraction below.
    acc = jnp.zeros((HW, C), jnp.float32)
    for kh in range(3):
        for kw in range(3):
            tap = shifted[kw][kh * W:kh * W + HW]              # (HW, C) row-aligned slice
            acc = acc + jnp.dot(tap, w_ref[3 * kh + kw],
                                preferred_element_type=jnp.float32)

    # InstanceNorm(affine=False): two-pass (centered) variance, f32 statistics.
    inv_n = 1.0 / float(HW)
    mean = jnp.sum(acc, axis=0, keepdims=True) * inv_n
    yc = acc - mean
    var = jnp.sum(yc * yc, axis=0, keepdims=True) * inv_n
    return yc * jax.lax.rsqrt(var + eps)


def _resnet_block_kernel(x_ref, w1_ref, w2_ref, out_ref, *, H, W, C, eps):
    mm_dtype = w1_ref.dtype             # MXU feed dtype (bf16 by default)
    x = x_ref[0].astype(jnp.float32)    # (H*W, C)

    # Column-boundary masks of the H-padded, row-flattened image: built once,
    # shared by both convs, and kept at lane-width 1 so the `where`s broadcast
    # them along lanes for free (no (rows, C) index tensor).
    col = jax.lax.broadcasted_iota(
        jnp.int32, (H + 2, W, 1), 1).reshape((H + 2) * W, 1)
    mask_l = col == 0
    mask_r = col == W - 1

    # branch 1: reflect pad -> conv3x3 -> instance norm -> relu
    h = _conv3x3_instnorm(x, w1_ref, mask_l, mask_r,
                          H=H, W=W, C=C, eps=eps, mm_dtype=mm_dtype)
    h = jnp.maximum(h, 0.0)

    # branch 2: reflect pad -> conv3x3 -> instance norm
    h = _conv3x3_instnorm(h, w2_ref, mask_l, mask_r,
                          H=H, W=W, C=C, eps=eps, mm_dtype=mm_dtype)

    # residual add (f32), cast back to the output dtype
    out_ref[0] = (x + h).astype(out_ref.dtype)


def resnet_block_nhwc(x, w1, b1, w2, b2, *, matmul_dtype=jnp.bfloat16,
                      vmem_limit_bytes=None):
    """x: (N, H, W, C); w*: (3, 3, C_in, C_out) (HWIO); b*: ignored.

    The conv biases are accepted for interface parity with the PyTorch module
    but are mathematically a no-op under InstanceNorm2d(affine=False).
    matmul_dtype=jnp.bfloat16 (default) feeds the MXU in bf16 with f32
    accumulation and f32 norm statistics; pass jnp.float32 for full precision.
    """
    N, H, W, C = x.shape
    assert H >= 2 and W >= 2, "reflection pad of 1 needs H, W >= 2"
    # Tap-slice starts (kh*W) must be sublane-aligned for free views.
    # TODO(synk): support W % 8 != 0 via a reflect-aware pad/unpad of W.
    assert W % 8 == 0, "W must be a multiple of 8 for aligned tap slices"
    del b1, b2  # exactly cancelled by the InstanceNorm mean subtraction

    # One-time wrapper-side weight relayout to (tap, cin, cout) and the MXU
    # feed dtype.
    w1r = w1.reshape(9, C, C).astype(matmul_dtype)
    w2r = w2.reshape(9, C, C).astype(matmul_dtype)

    x2 = x.reshape(N, H * W, C)  # channels stay on the lane axis

    if vmem_limit_bytes is None:
        vmem_limit_bytes = _default_vmem_limit_bytes()

    flops = 2 * (2 * 9 * C * C * H * W) * N          # two convs, 2 flops / MAC
    bytes_accessed = (2 * x2.size * x2.dtype.itemsize
                      + w1r.size * w1r.dtype.itemsize
                      + w2r.size * w2r.dtype.itemsize)

    # TODO(synk): for production pix2pixHD shapes (C=512-1024, H=W>=64) add a
    # row-block grid axis (1 image-row halo) with a two-phase InstanceNorm
    # (per-channel sum/sumsq accumulated across row blocks, then a normalize +
    # residual pass), single-buffer the constant weight blocks
    # (pipeline_mode=pl.Buffered(1)), and make the row-block axis "parallel"
    # so both v7x TensorCores get work at batch 1; a whole image per grid step
    # does not fit v7x's 64 MiB VMEM at those shapes.
    kernel = functools.partial(_resnet_block_kernel, H=H, W=W, C=C, eps=1e-5)
    out = pl.pallas_call(
        kernel,
        out_shape=jax.ShapeDtypeStruct((N, H * W, C), x.dtype),
        grid_spec=pltpu.PrefetchScalarGridSpec(
            num_scalar_prefetch=0,
            grid=(N,),
            in_specs=[
                pl.BlockSpec((1, H * W, C), lambda n: (n, 0, 0)),
                pl.BlockSpec((9, C, C), lambda n: (0, 0, 0)),
                pl.BlockSpec((9, C, C), lambda n: (0, 0, 0)),
            ],
            out_specs=pl.BlockSpec((1, H * W, C), lambda n: (n, 0, 0)),
        ),
        compiler_params=pltpu.CompilerParams(
            dimension_semantics=("parallel",),
            vmem_limit_bytes=int(vmem_limit_bytes),
        ),
        cost_estimate=pl.CostEstimate(
            flops=int(flops), transcendentals=0,
            bytes_accessed=int(bytes_accessed)),
    )(x2, w1r, w2r)
    return out.reshape(N, H, W, C)


def resnet_block_nchw(x_nchw, w1, b1, w2, b2, *, matmul_dtype=jnp.bfloat16):
    """Matches the PyTorch module's NCHW interface."""
    x = jnp.transpose(x_nchw, (0, 2, 3, 1))              # NCHW -> NHWC
    y = resnet_block_nhwc(x, w1, b1, w2, b2, matmul_dtype=matmul_dtype)
    return jnp.transpose(y, (0, 3, 1, 2))                # NHWC -> NCHW


# ----------------------------- reference (pure JAX) -----------------------------
def _ref_conv_in(x_nhwc, w, b, relu):
    xp = jnp.pad(x_nhwc, ((0, 0), (1, 1), (1, 1), (0, 0)), mode="reflect")
    y = jax.lax.conv_general_dilated(
        xp, w, window_strides=(1, 1), padding="VALID",
        dimension_numbers=("NHWC", "HWIO", "NHWC"))
    y = y + b.reshape(1, 1, 1, -1)
    mean = jnp.mean(y, axis=(1, 2), keepdims=True)
    var = jnp.mean((y - mean) ** 2, axis=(1, 2), keepdims=True)
    y = (y - mean) * jax.lax.rsqrt(var + 1e-5)
    if relu:
        y = jnp.maximum(y, 0.0)
    return y


def _reference(x_nhwc, w1, b1, w2, b2):
    h = _ref_conv_in(x_nhwc, w1, b1, relu=True)
    h = _ref_conv_in(h, w2, b2, relu=False)
    return x_nhwc + h


if __name__ == "__main__":
    key = jax.random.PRNGKey(0)
    N, C, H, W = 2, 4, 16, 16   # dim = 4

    k_x, k_w1, k_b1, k_w2, k_b2 = jax.random.split(key, 5)
    x_nchw = jax.random.normal(k_x, (N, C, H, W), dtype=jnp.float32)

    # Conv2d(dim, dim, 3) parameters. PyTorch weight layout is (out, in, kh, kw);
    # we initialize directly in (kh, kw, in, out) = HWIO.
    fan_in = C * 3 * 3
    bound = 1.0 / (fan_in ** 0.5)
    w1 = jax.random.uniform(k_w1, (3, 3, C, C), jnp.float32, -bound, bound)
    b1 = jax.random.uniform(k_b1, (1, C), jnp.float32, -bound, bound)
    w2 = jax.random.uniform(k_w2, (3, 3, C, C), jnp.float32, -bound, bound)
    b2 = jax.random.uniform(k_b2, (1, C), jnp.float32, -bound, bound)

    # Pure-JAX reference (keeps the conv biases and uses the same two-pass
    # variance; InstanceNorm cancels the bias so results must agree).
    x_nhwc = jnp.transpose(x_nchw, (0, 2, 3, 1))
    ref = jnp.transpose(_reference(x_nhwc, w1, b1, w2, b2), (0, 3, 1, 2))

    # 1) Full-precision MXU path: tight tolerance.
    out_f32 = jax.block_until_ready(
        resnet_block_nchw(x_nchw, w1, b1, w2, b2, matmul_dtype=jnp.float32))
    assert out_f32.shape == (N, C, H, W)
    err_f32 = float(jnp.max(jnp.abs(out_f32 - ref)))
    assert err_f32 < 2e-4, f"f32 path mismatch vs reference: {err_f32}"

    # 2) Default bf16 MXU feed path (f32 accumulation + f32 norm statistics):
    #    loose tolerance (bf16 rounding of conv inputs/weights).
    out_bf16 = jax.block_until_ready(resnet_block_nchw(x_nchw, w1, b1, w2, b2))
    assert out_bf16.shape == (N, C, H, W)
    err_bf16 = float(jnp.max(jnp.abs(out_bf16 - ref)))
    assert err_bf16 < 2e-1, f"bf16 path mismatch vs reference: {err_bf16}"

    print("KERNEL_OK")
</pallas_src>

<mosaic_0001>
module attributes {stable_mosaic.version = 11 : i64} {
  func.func @_resnet_block_kernel(%arg0: i32, %arg1: memref<1x256x4xf32, #tpu.memory_space<vmem>>, %arg2: memref<9x4x4xf32, #tpu.memory_space<vmem>>, %arg3: memref<9x4x4xf32, #tpu.memory_space<vmem>>, %arg4: memref<1x256x4xf32, #tpu.memory_space<vmem>>) attributes {dimension_semantics = [#tpu.dimension_semantics<parallel>], iteration_bounds = array<i64: 2>, scalar_prefetch = 0 : i64, scratch_operands = 0 : i64, tpu.core_type = #tpu.core_type<tc>, window_params = [{transform_indices = @transform_0, window_bounds = array<i64: 1, 256, 4>}, {pipeline_mode = #tpu.pipeline_mode<synchronous>, transform_indices = @transform_1, window_bounds = array<i64: 9, 4, 4>}, {pipeline_mode = #tpu.pipeline_mode<synchronous>, transform_indices = @transform_2, window_bounds = array<i64: 9, 4, 4>}, {transform_indices = @transform_3, window_bounds = array<i64: 1, 256, 4>}]} {
    %c0 = arith.constant 0 : index
    %c0_0 = arith.constant 0 : index
    %c0_1 = arith.constant 0 : index
    %0 = vector.load %arg1[%c0, %c0_0, %c0_1] : memref<1x256x4xf32, #tpu.memory_space<vmem>>, vector<1x256x4xf32>
    %1 = vector.shape_cast %0 : vector<1x256x4xf32> to vector<256x4xf32>
    %2 = tpu.iota {dimensions = array<i32: 1>} : vector<18x16x1xi32>
    %3 = vector.shape_cast %2 : vector<18x16x1xi32> to vector<288x1xi32>
    %c0_i32 = arith.constant 0 : i32
    %4 = vector.broadcast %c0_i32 : i32 to vector<288x1xi32>
    %5 = arith.cmpi eq, %3, %4 : vector<288x1xi32>
    %c15_i32 = arith.constant 15 : i32
    %6 = vector.broadcast %c15_i32 : i32 to vector<288x1xi32>
    %7 = arith.cmpi eq, %3, %6 : vector<288x1xi32>
    %8 = vector.extract_strided_slice %1 {offsets = [16, 0], sizes = [16, 4], strides = [1, 1]} : vector<256x4xf32> to vector<16x4xf32>
    %9 = vector.extract_strided_slice %1 {offsets = [224, 0], sizes = [16, 4], strides = [1, 1]} : vector<256x4xf32> to vector<16x4xf32>
    %10 = tpu.concatenate %8, %1, %9 in 0 : vector<16x4xf32>, vector<256x4xf32>, vector<16x4xf32> -> vector<288x4xf32>
    %c1_i32 = arith.constant 1 : i32
    %11 = tpu.dynamic_rotate %10 by %c1_i32 dim 0 : vector<288x4xf32>, i32 -> vector<288x4xf32>
    %c287_i32 = arith.constant 287 : i32
    %12 = tpu.dynamic_rotate %10 by %c287_i32 dim 0 : vector<288x4xf32>, i32 -> vector<288x4xf32>
    %13 = vector.shape_cast %5 : vector<288x1xi1> to vector<288x1xi1>
    %14 = vector.broadcast %13 : vector<288x1xi1> to vector<288x4xi1>
    %15 = arith.select %14, %12, %11 : vector<288x4xi1>, vector<288x4xf32>
    %16 = vector.shape_cast %7 : vector<288x1xi1> to vector<288x1xi1>
    %17 = vector.broadcast %16 : vector<288x1xi1> to vector<288x4xi1>
    %18 = arith.select %17, %11, %12 : vector<288x4xi1>, vector<288x4xf32>
    %cst = arith.constant 0.000000e+00 : f32
    %19 = vector.broadcast %cst : f32 to vector<256x4xf32>
    %20 = vector.extract_strided_slice %15 {offsets = [0, 0], sizes = [256, 4], strides = [1, 1]} : vector<288x4xf32> to vector<256x4xf32>
    %c0_2 = arith.constant 0 : index
    %c0_3 = arith.constant 0 : index
    %c0_4 = arith.constant 0 : index
    %21 = vector.load %arg2[%c0_2, %c0_3, %c0_4] : memref<9x4x4xf32, #tpu.memory_space<vmem>>, vector<1x4x4xf32>
    %22 = vector.shape_cast %21 : vector<1x4x4xf32> to vector<4x4xf32>
    %cst_5 = arith.constant dense<0.000000e+00> : vector<256x4xf32>
    %23 = tpu.matmul %20, %22, %cst_5 {dimension_numbers = #tpu.dot_dimension_numbers<[1], [0], [0], [1], [0, 0, 1, 1], [], []>} : vector<256x4xf32>, vector<4x4xf32>, vector<256x4xf32> -> vector<256x4xf32>
    %24 = arith.addf %19, %23 : vector<256x4xf32>
    %25 = vector.extract_strided_slice %10 {offsets = [0, 0], sizes = [256, 4], strides = [1, 1]} : vector<288x4xf32> to vector<256x4xf32>
    %c1 = arith.constant 1 : index
    %c0_6 = arith.constant 0 : index
    %c0_7 = arith.constant 0 : index
    %26 = vector.load %arg2[%c1, %c0_6, %c0_7] : memref<9x4x4xf32, #tpu.memory_space<vmem>>, vector<1x4x4xf32>
    %27 = vector.shape_cast %26 : vector<1x4x4xf32> to vector<4x4xf32>
    %cst_8 = arith.constant dense<0.000000e+00> : vector<256x4xf32>
    %28 = tpu.matmul %25, %27, %cst_8 {dimension_numbers = #tpu.dot_dimension_numbers<[1], [0], [0], [1], [0, 0, 1, 1], [], []>} : vector<256x4xf32>, vector<4x4xf32>, vector<256x4xf32> -> vector<256x4xf32>
    %29 = arith.addf %24, %28 : vector<256x4xf32>
    %30 = vector.extract_strided_slice %18 {offsets = [0, 0], sizes = [256, 4], strides = [1, 1]} : vector<288x4xf32> to vector<256x4xf32>
    %c2 = arith.constant 2 : index
    %c0_9 = arith.constant 0 : index
    %c0_10 = arith.constant 0 : index
    %31 = vector.load %arg2[%c2, %c0_9, %c0_10] : memref<9x4x4xf32, #tpu.memory_space<vmem>>, vector<1x4x4xf32>
    %32 = vector.shape_cast %31 : vector<1x4x4xf32> to vector<4x4xf32>
    %cst_11 = arith.constant dense<0.000000e+00> : vector<256x4xf32>
    %33 = tpu.matmul %30, %32, %cst_11 {dimension_numbers = #tpu.dot_dimension_numbers<[1], [0], [0], [1], [0, 0, 1, 1], [], []>} : vector<256x4xf32>, vector<4x4xf32>, vector<256x4xf32> -> vector<256x4xf32>
    %34 = arith.addf %29, %33 : vector<256x4xf32>
    %35 = vector.extract_strided_slice %15 {offsets = [16, 0], sizes = [256, 4], strides = [1, 1]} : vector<288x4xf32> to vector<256x4xf32>
    %c3 = arith.constant 3 : index
    %c0_12 = arith.constant 0 : index
    %c0_13 = arith.constant 0 : index
    %36 = vector.load %arg2[%c3, %c0_12, %c0_13] : memref<9x4x4xf32, #tpu.memory_space<vmem>>, vector<1x4x4xf32>
    %37 = vector.shape_cast %36 : vector<1x4x4xf32> to vector<4x4xf32>
    %cst_14 = arith.constant dense<0.000000e+00> : vector<256x4xf32>
    %38 = tpu.matmul %35, %37, %cst_14 {dimension_numbers = #tpu.dot_dimension_numbers<[1], [0], [0], [1], [0, 0, 1, 1], [], []>} : vector<256x4xf32>, vector<4x4xf32>, vector<256x4xf32> -> vector<256x4xf32>
    %39 = arith.addf %34, %38 : vector<256x4xf32>
    %40 = vector.extract_strided_slice %10 {offsets = [16, 0], sizes = [256, 4], strides = [1, 1]} : vector<288x4xf32> to vector<256x4xf32>
    %c4 = arith.constant 4 : index
    %c0_15 = arith.constant 0 : index
    %c0_16 = arith.constant 0 : index
    %41 = vector.load %arg2[%c4, %c0_15, %c0_16] : memref<9x4x4xf32, #tpu.memory_space<vmem>>, vector<1x4x4xf32>
    %42 = vector.shape_cast %41 : vector<1x4x4xf32> to vector<4x4xf32>
    %cst_17 = arith.constant dense<0.000000e+00> : vector<256x4xf32>
    %43 = tpu.matmul %40, %42, %cst_17 {dimension_numbers = #tpu.dot_dimension_numbers<[1], [0], [0], [1], [0, 0, 1, 1], [], []>} : vector<256x4xf32>, vector<4x4xf32>, vector<256x4xf32> -> vector<256x4xf32>
    %44 = arith.addf %39, %43 : vector<256x4xf32>
    %45 = vector.extract_strided_slice %18 {offsets = [16, 0], sizes = [256, 4], strides = [1, 1]} : vector<288x4xf32> to vector<256x4xf32>
    %c5 = arith.constant 5 : index
    %c0_18 = arith.constant 0 : index
    %c0_19 = arith.constant 0 : index
    %46 = vector.load %arg2[%c5, %c0_18, %c0_19] : memref<9x4x4xf32, #tpu.memory_space<vmem>>, vector<1x4x4xf32>
    %47 = vector.shape_cast %46 : vector<1x4x4xf32> to vector<4x4xf32>
    %cst_20 = arith.constant dense<0.000000e+00> : vector<256x4xf32>
    %48 = tpu.matmul %45, %47, %cst_20 {dimension_numbers = #tpu.dot_dimension_numbers<[1], [0], [0], [1], [0, 0, 1, 1], [], []>} : vector<256x4xf32>, vector<4x4xf32>, vector<256x4xf32> -> vector<256x4xf32>
    %49 = arith.addf %44, %48 : vector<256x4xf32>
    %50 = vector.extract_strided_slice %15 {offsets = [32, 0], sizes = [256, 4], strides = [1, 1]} : vector<288x4xf32> to vector<256x4xf32>
    %c6 = arith.constant 6 : index
    %c0_21 = arith.constant 0 : index
    %c0_22 = arith.constant 0 : index
    %51 = vector.load %arg2[%c6, %c0_21, %c0_22] : memref<9x4x4xf32, #tpu.memory_space<vmem>>, vector<1x4x4xf32>
    %52 = vector.shape_cast %51 : vector<1x4x4xf32> to vector<4x4xf32>
    %cst_23 = arith.constant dense<0.000000e+00> : vector<256x4xf32>
    %53 = tpu.matmul %50, %52, %cst_23 {dimension_numbers = #tpu.dot_dimension_numbers<[1], [0], [0], [1], [0, 0, 1, 1], [], []>} : vector<256x4xf32>, vector<4x4xf32>, vector<256x4xf32> -> vector<256x4xf32>
    %54 = arith.addf %49, %53 : vector<256x4xf32>
    %55 = vector.extract_strided_slice %10 {offsets = [32, 0], sizes = [256, 4], strides = [1, 1]} : vector<288x4xf32> to vector<256x4xf32>
    %c7 = arith.constant 7 : index
    %c0_24 = arith.constant 0 : index
    %c0_25 = arith.constant 0 : index
    %56 = vector.load %arg2[%c7, %c0_24, %c0_25] : memref<9x4x4xf32, #tpu.memory_space<vmem>>, vector<1x4x4xf32>
    %57 = vector.shape_cast %56 : vector<1x4x4xf32> to vector<4x4xf32>
    %cst_26 = arith.constant dense<0.000000e+00> : vector<256x4xf32>
    %58 = tpu.matmul %55, %57, %cst_26 {dimension_numbers = #tpu.dot_dimension_numbers<[1], [0], [0], [1], [0, 0, 1, 1], [], []>} : vector<256x4xf32>, vector<4x4xf32>, vector<256x4xf32> -> vector<256x4xf32>
    %59 = arith.addf %54, %58 : vector<256x4xf32>
    %60 = vector.extract_strided_slice %18 {offsets = [32, 0], sizes = [256, 4], strides = [1, 1]} : vector<288x4xf32> to vector<256x4xf32>
    %c8 = arith.constant 8 : index
    %c0_27 = arith.constant 0 : index
    %c0_28 = arith.constant 0 : index
    %61 = vector.load %arg2[%c8, %c0_27, %c0_28] : memref<9x4x4xf32, #tpu.memory_space<vmem>>, vector<1x4x4xf32>
    %62 = vector.shape_cast %61 : vector<1x4x4xf32> to vector<4x4xf32>
    %cst_29 = arith.constant dense<0.000000e+00> : vector<256x4xf32>
    %63 = tpu.matmul %60, %62, %cst_29 {dimension_numbers = #tpu.dot_dimension_numbers<[1], [0], [0], [1], [0, 0, 1, 1], [], []>} : vector<256x4xf32>, vector<4x4xf32>, vector<256x4xf32> -> vector<256x4xf32>
    %64 = arith.addf %59, %63 : vector<256x4xf32>
    %cst_30 = arith.constant dense<0.000000e+00> : vector<4xf32>
    %65 = vector.multi_reduction <add>, %64, %cst_30 [0] : vector<256x4xf32> to vector<4xf32>
    %66 = vector.shape_cast %65 : vector<4xf32> to vector<1x4xf32>
    %cst_31 = arith.constant 3.906250e-03 : f32
    %67 = vector.broadcast %cst_31 : f32 to vector<1x4xf32>
    %68 = arith.mulf %66, %67 : vector<1x4xf32>
    %69 = vector.broadcast %68 : vector<1x4xf32> to vector<256x4xf32>
    %70 = arith.subf %64, %69 : vector<256x4xf32>
    %71 = arith.mulf %70, %70 : vector<256x4xf32>
    %cst_32 = arith.constant dense<0.000000e+00> : vector<4xf32>
    %72 = vector.multi_reduction <add>, %71, %cst_32 [0] : vector<256x4xf32> to vector<4xf32>
    %73 = vector.shape_cast %72 : vector<4xf32> to vector<1x4xf32>
    %cst_33 = arith.constant 3.906250e-03 : f32
    %74 = vector.broadcast %cst_33 : f32 to vector<1x4xf32>
    %75 = arith.mulf %73, %74 : vector<1x4xf32>
    %cst_34 = arith.constant 9.99999974E-6 : f32
    %76 = vector.broadcast %cst_34 : f32 to vector<1x4xf32>
    %77 = arith.addf %75, %76 : vector<1x4xf32>
    %78 = math.rsqrt %77 : vector<1x4xf32>
    %79 = vector.broadcast %78 : vector<1x4xf32> to vector<256x4xf32>
    %80 = arith.mulf %70, %79 : vector<256x4xf32>
    %cst_35 = arith.constant 0.000000e+00 : f32
    %81 = vector.broadcast %cst_35 : f32 to vector<256x4xf32>
    %82 = arith.maximumf %80, %81 : vector<256x4xf32>
    %83 = vector.extract_strided_slice %82 {offsets = [16, 0], sizes = [16, 4], strides = [1, 1]} : vector<256x4xf32> to vector<16x4xf32>
    %84 = vector.extract_strided_slice %82 {offsets = [224, 0], sizes = [16, 4], strides = [1, 1]} : vector<256x4xf32> to vector<16x4xf32>
    %85 = tpu.concatenate %83, %82, %84 in 0 : vector<16x4xf32>, vector<256x4xf32>, vector<16x4xf32> -> vector<288x4xf32>
    %c1_i32_36 = arith.constant 1 : i32
    %86 = tpu.dynamic_rotate %85 by %c1_i32_36 dim 0 : vector<288x4xf32>, i32 -> vector<288x4xf32>
    %c287_i32_37 = arith.constant 287 : i32
    %87 = tpu.dynamic_rotate %85 by %c287_i32_37 dim 0 : vector<288x4xf32>, i32 -> vector<288x4xf32>
    %88 = vector.shape_cast %5 : vector<288x1xi1> to vector<288x1xi1>
    %89 = vector.broadcast %88 : vector<288x1xi1> to vector<288x4xi1>
    %90 = arith.select %89, %87, %86 : vector<288x4xi1>, vector<288x4xf32>
    %91 = vector.shape_cast %7 : vector<288x1xi1> to vector<288x1xi1>
    %92 = vector.broadcast %91 : vector<288x1xi1> to vector<288x4xi1>
    %93 = arith.select %92, %86, %87 : vector<288x4xi1>, vector<288x4xf32>
    %cst_38 = arith.constant 0.000000e+00 : f32
    %94 = vector.broadcast %cst_38 : f32 to vector<256x4xf32>
    %95 = vector.extract_strided_slice %90 {offsets = [0, 0], sizes = [256, 4], strides = [1, 1]} : vector<288x4xf32> to vector<256x4xf32>
    %c0_39 = arith.constant 0 : index
    %c0_40 = arith.constant 0 : index
    %c0_41 = arith.constant 0 : index
    %96 = vector.load %arg3[%c0_39, %c0_40, %c0_41] : memref<9x4x4xf32, #tpu.memory_space<vmem>>, vector<1x4x4xf32>
    %97 = vector.shape_cast %96 : vector<1x4x4xf32> to vector<4x4xf32>
    %cst_42 = arith.constant dense<0.000000e+00> : vector<256x4xf32>
    %98 = tpu.matmul %95, %97, %cst_42 {dimension_numbers = #tpu.dot_dimension_numbers<[1], [0], [0], [1], [0, 0, 1, 1], [], []>} : vector<256x4xf32>, vector<4x4xf32>, vector<256x4xf32> -> vector<256x4xf32>
    %99 = arith.addf %94, %98 : vector<256x4xf32>
    %100 = vector.extract_strided_slice %85 {offsets = [0, 0], sizes = [256, 4], strides = [1, 1]} : vector<288x4xf32> to vector<256x4xf32>
    %c1_43 = arith.constant 1 : index
    %c0_44 = arith.constant 0 : index
    %c0_45 = arith.constant 0 : index
    %101 = vector.load %arg3[%c1_43, %c0_44, %c0_45] : memref<9x4x4xf32, #tpu.memory_space<vmem>>, vector<1x4x4xf32>
    %102 = vector.shape_cast %101 : vector<1x4x4xf32> to vector<4x4xf32>
    %cst_46 = arith.constant dense<0.000000e+00> : vector<256x4xf32>
    %103 = tpu.matmul %100, %102, %cst_46 {dimension_numbers = #tpu.dot_dimension_numbers<[1], [0], [0], [1], [0, 0, 1, 1], [], []>} : vector<256x4xf32>, vector<4x4xf32>, vector<256x4xf32> -> vector<256x4xf32>
    %104 = arith.addf %99, %103 : vector<256x4xf32>
    %105 = vector.extract_strided_slice %93 {offsets = [0, 0], sizes = [256, 4], strides = [1, 1]} : vector<288x4xf32> to vector<256x4xf32>
    %c2_47 = arith.constant 2 : index
    %c0_48 = arith.constant 0 : index
    %c0_49 = arith.constant 0 : index
    %106 = vector.load %arg3[%c2_47, %c0_48, %c0_49] : memref<9x4x4xf32, #tpu.memory_space<vmem>>, vector<1x4x4xf32>
    %107 = vector.shape_cast %106 : vector<1x4x4xf32> to vector<4x4xf32>
    %cst_50 = arith.constant dense<0.000000e+00> : vector<256x4xf32>
    %108 = tpu.matmul %105, %107, %cst_50 {dimension_numbers = #tpu.dot_dimension_numbers<[1], [0], [0], [1], [0, 0, 1, 1], [], []>} : vector<256x4xf32>, vector<4x4xf32>, vector<256x4xf32> -> vector<256x4xf32>
    %109 = arith.addf %104, %108 : vector<256x4xf32>
    %110 = vector.extract_strided_slice %90 {offsets = [16, 0], sizes = [256, 4], strides = [1, 1]} : vector<288x4xf32> to vector<256x4xf32>
    %c3_51 = arith.constant 3 : index
    %c0_52 = arith.constant 0 : index
    %c0_53 = arith.constant 0 : index
    %111 = vector.load %arg3[%c3_51, %c0_52, %c0_53] : memref<9x4x4xf32, #tpu.memory_space<vmem>>, vector<1x4x4xf32>
    %112 = vector.shape_cast %111 : vector<1x4x4xf32> to vector<4x4xf32>
    %cst_54 = arith.constant dense<0.000000e+00> : vector<256x4xf32>
    %113 = tpu.matmul %110, %112, %cst_54 {dimension_numbers = #tpu.dot_dimension_numbers<[1], [0], [0], [1], [0, 0, 1, 1], [], []>} : vector<256x4xf32>, vector<4x4xf32>, vector<256x4xf32> -> vector<256x4xf32>
    %114 = arith.addf %109, %113 : vector<256x4xf32>
    %115 = vector.extract_strided_slice %85 {offsets = [16, 0], sizes = [256, 4], strides = [1, 1]} : vector<288x4xf32> to vector<256x4xf32>
    %c4_55 = arith.constant 4 : index
    %c0_56 = arith.constant 0 : index
    %c0_57 = arith.constant 0 : index
    %116 = vector.load %arg3[%c4_55, %c0_56, %c0_57] : memref<9x4x4xf32, #tpu.memory_space<vmem>>, vector<1x4x4xf32>
    %117 = vector.shape_cast %116 : vector<1x4x4xf32> to vector<4x4xf32>
    %cst_58 = arith.constant dense<0.000000e+00> : vector<256x4xf32>
    %118 = tpu.matmul %115, %117, %cst_58 {dimension_numbers = #tpu.dot_dimension_numbers<[1], [0], [0], [1], [0, 0, 1, 1], [], []>} : vector<256x4xf32>, vector<4x4xf32>, vector<256x4xf32> -> vector<256x4xf32>
    %119 = arith.addf %114, %118 : vector<256x4xf32>
    %120 = vector.extract_strided_slice %93 {offsets = [16, 0], sizes = [256, 4], strides = [1, 1]} : vector<288x4xf32> to vector<256x4xf32>
    %c5_59 = arith.constant 5 : index
    %c0_60 = arith.constant 0 : index
    %c0_61 = arith.constant 0 : index
    %121 = vector.load %arg3[%c5_59, %c0_60, %c0_61] : memref<9x4x4xf32, #tpu.memory_space<vmem>>, vector<1x4x4xf32>
    %122 = vector.shape_cast %121 : vector<1x4x4xf32> to vector<4x4xf32>
    %cst_62 = arith.constant dense<0.000000e+00> : vector<256x4xf32>
    %123 = tpu.matmul %120, %122, %cst_62 {dimension_numbers = #tpu.dot_dimension_numbers<[1], [0], [0], [1], [0, 0, 1, 1], [], []>} : vector<256x4xf32>, vector<4x4xf32>, vector<256x4xf32> -> vector<256x4xf32>
    %124 = arith.addf %119, %123 : vector<256x4xf32>
    %125 = vector.extract_strided_slice %90 {offsets = [32, 0], sizes = [256, 4], strides = [1, 1]} : vector<288x4xf32> to vector<256x4xf32>
    %c6_63 = arith.constant 6 : index
    %c0_64 = arith.constant 0 : index
    %c0_65 = arith.constant 0 : index
    %126 = vector.load %arg3[%c6_63, %c0_64, %c0_65] : memref<9x4x4xf32, #tpu.memory_space<vmem>>, vector<1x4x4xf32>
    %127 = vector.shape_cast %126 : vector<1x4x4xf32> to vector<4x4xf32>
    %cst_66 = arith.constant dense<0.000000e+00> : vector<256x4xf32>
    %128 = tpu.matmul %125, %127, %cst_66 {dimension_numbers = #tpu.dot_dimension_numbers<[1], [0], [0], [1], [0, 0, 1, 1], [], []>} : vector<256x4xf32>, vector<4x4xf32>, vector<256x4xf32> -> vector<256x4xf32>
    %129 = arith.addf %124, %128 : vector<256x4xf32>
    %130 = vector.extract_strided_slice %85 {offsets = [32, 0], sizes = [256, 4], strides = [1, 1]} : vector<288x4xf32> to vector<256x4xf32>
    %c7_67 = arith.constant 7 : index
    %c0_68 = arith.constant 0 : index
    %c0_69 = arith.constant 0 : index
    %131 = vector.load %arg3[%c7_67, %c0_68, %c0_69] : memref<9x4x4xf32, #tpu.memory_space<vmem>>, vector<1x4x4xf32>
    %132 = vector.shape_cast %131 : vector<1x4x4xf32> to vector<4x4xf32>
    %cst_70 = arith.constant dense<0.000000e+00> : vector<256x4xf32>
    %133 = tpu.matmul %130, %132, %cst_70 {dimension_numbers = #tpu.dot_dimension_numbers<[1], [0], [0], [1], [0, 0, 1, 1], [], []>} : vector<256x4xf32>, vector<4x4xf32>, vector<256x4xf32> -> vector<256x4xf32>
    %134 = arith.addf %129, %133 : vector<256x4xf32>
    %135 = vector.extract_strided_slice %93 {offsets = [32, 0], sizes = [256, 4], strides = [1, 1]} : vector<288x4xf32> to vector<256x4xf32>
    %c8_71 = arith.constant 8 : index
    %c0_72 = arith.constant 0 : index
    %c0_73 = arith.constant 0 : index
    %136 = vector.load %arg3[%c8_71, %c0_72, %c0_73] : memref<9x4x4xf32, #tpu.memory_space<vmem>>, vector<1x4x4xf32>
    %137 = vector.shape_cast %136 : vector<1x4x4xf32> to vector<4x4xf32>
    %cst_74 = arith.constant dense<0.000000e+00> : vector<256x4xf32>
    %138 = tpu.matmul %135, %137, %cst_74 {dimension_numbers = #tpu.dot_dimension_numbers<[1], [0], [0], [1], [0, 0, 1, 1], [], []>} : vector<256x4xf32>, vector<4x4xf32>, vector<256x4xf32> -> vector<256x4xf32>
    %139 = arith.addf %134, %138 : vector<256x4xf32>
    %cst_75 = arith.constant dense<0.000000e+00> : vector<4xf32>
    %140 = vector.multi_reduction <add>, %139, %cst_75 [0] : vector<256x4xf32> to vector<4xf32>
    %141 = vector.shape_cast %140 : vector<4xf32> to vector<1x4xf32>
    %cst_76 = arith.constant 3.906250e-03 : f32
    %142 = vector.broadcast %cst_76 : f32 to vector<1x4xf32>
    %143 = arith.mulf %141, %142 : vector<1x4xf32>
    %144 = vector.broadcast %143 : vector<1x4xf32> to vector<256x4xf32>
    %145 = arith.subf %139, %144 : vector<256x4xf32>
    %146 = arith.mulf %145, %145 : vector<256x4xf32>
    %cst_77 = arith.constant dense<0.000000e+00> : vector<4xf32>
    %147 = vector.multi_reduction <add>, %146, %cst_77 [0] : vector<256x4xf32> to vector<4xf32>
    %148 = vector.shape_cast %147 : vector<4xf32> to vector<1x4xf32>
    %cst_78 = arith.constant 3.906250e-03 : f32
    %149 = vector.broadcast %cst_78 : f32 to vector<1x4xf32>
    %150 = arith.mulf %148, %149 : vector<1x4xf32>
    %cst_79 = arith.constant 9.99999974E-6 : f32
    %151 = vector.broadcast %cst_79 : f32 to vector<1x4xf32>
    %152 = arith.addf %150, %151 : vector<1x4xf32>
    %153 = math.rsqrt %152 : vector<1x4xf32>
    %154 = vector.broadcast %153 : vector<1x4xf32> to vector<256x4xf32>
    %155 = arith.mulf %145, %154 : vector<256x4xf32>
    %156 = arith.addf %1, %155 : vector<256x4xf32>
    %c0_80 = arith.constant 0 : index
    %c0_81 = arith.constant 0 : index
    %c0_82 = arith.constant 0 : index
    %157 = vector.load %arg4[%c0_80, %c0_81, %c0_82] : memref<1x256x4xf32, #tpu.memory_space<vmem>>, vector<1x256x4xf32>
    %158 = vector.shape_cast %157 : vector<1x256x4xf32> to vector<256x4xf32>
    %159 = vector.shape_cast %156 : vector<256x4xf32> to vector<1x256x4xf32>
    tpu.vector_store %arg4[%c0_80, %c0_81, %c0_82], %159 {strides = array<i32>} : memref<1x256x4xf32, #tpu.memory_space<vmem>>, vector<1x256x4xf32>,
    return
  }
  func.func @transform_0(%arg0: i32) -> (i32, i32, i32) {
    %c0_i32 = arith.constant 0 : i32
    %c0_i32_0 = arith.constant 0 : i32
    %c0_i32_1 = arith.constant 0 : i32
    return %arg0, %c0_i32, %c0_i32_0 : i32, i32, i32
  }
  func.func @transform_1(%arg0: i32) -> (i32, i32, i32) {
    %c0_i32 = arith.constant 0 : i32
    %c0_i32_0 = arith.constant 0 : i32
    %c0_i32_1 = arith.constant 0 : i32
    %c0_i32_2 = arith.constant 0 : i32
    return %c0_i32, %c0_i32_0, %c0_i32_1 : i32, i32, i32
  }
  func.func @transform_2(%arg0: i32) -> (i32, i32, i32) {
    %c0_i32 = arith.constant 0 : i32
    %c0_i32_0 = arith.constant 0 : i32
    %c0_i32_1 = arith.constant 0 : i32
    %c0_i32_2 = arith.constant 0 : i32
    return %c0_i32, %c0_i32_0, %c0_i32_1 : i32, i32, i32
  }
  func.func @transform_3(%arg0: i32) -> (i32, i32, i32) {
    %c0_i32 = arith.constant 0 : i32
    %c0_i32_0 = arith.constant 0 : i32
    %c0_i32_1 = arith.constant 0 : i32
    return %arg0, %c0_i32, %c0_i32_0 : i32, i32, i32
  }
}

</mosaic_0001>

<llo_original>
// kernel: tpu_custom_call.1
$region0: #{tpu_custom_call.1}
  #allocation0 [shape = 'u32[]', space=smem, size = 0x4, offset = 0x4, fixed_abs, tag = 'smem constant byte address 0x4 - core index']
  #allocation1 [shape = 'u32[144,128]{1,0:T(1,128)}', space=vmem, size = 0x12000, scoped, tag = 'internal scratch']
  %s0 = inlined_call_operand.vmem [shape: f32[2,256,4], index: 0, kind: input, shape index: {}]
  %s1 = inlined_call_operand.vmem [shape: f32[9,4,4], index: 1, kind: input, shape index: {}]
  %s2 = inlined_call_operand.vmem [shape: f32[9,4,4], index: 2, kind: input, shape index: {}]
  %s3 = inlined_call_operand.vmem [shape: f32[2,256,4], index: 3, kind: output, shape index: {}]
  %s4 = sld [smem:[#allocation0]]
  $region45: #{tpu_custom_call.1} parent=0
    _
  %s6 = ssub.s32 1, %s4
  %s7 = scalar_select 0, %s6, %s4
  loop: start=0, step=1, limit=4
  $region2: #{tpu_custom_call.1} parent=0 // loop_pre_header
    _
  $region3: #{tpu_custom_call.1} parent=0 // loop_header
    %s9 = sphi 0, %s13
    %p10 = scmp.ge.s32.totalorder %s9, 4
    %s19 = sphi 0, %s21
    %s22 = sphi 0, %s19
    %s23 = sphi 0, %s22
    %s39 = sphi 0, %s23
    %s43 = sphi 0, %s43
    %s45 = sphi 0, %s43
    %s46 = sphi 0, %s45
    %s60 = sphi 0, %s46
    %s64 = sphi 0, %s64
    %s66 = sphi 0, %s64
    %s67 = sphi 0, %s66
    %s81 = sphi 0, %s67
    %s87 = sphi 0, %s89
    %s90 = sphi 0, %s87
    %s91 = sphi 0, %s90
    %s107 = sphi 0, %s91
  $region4: #{tpu_custom_call.1} parent=0 // loop_header_branch
    %12 = sbr.rel (%p10) target = $region8
  $region5: #{tpu_custom_call.1} parent=0 // loop_body
    %s14 = ssub.s32 %s9, 1
    %s15 = ssub.s32 %s9, 2
    %s16 = sadd.s32 %s9, 1
    %s17 = ssub.s32 %s9, %s16
    %p18 = scmp.eq.s32.totalorder %s17, 0
    %s20 = sadd.s32 %s19, 1
    %s21 = scalar_select %p18, %s19, %s20
    %p24 = pneg %p18
    %p25 = scmp.eq.s32.totalorder %s9, 1
    %p26 = por %p24, %p25
    %p27 = scmp.ne.s32.totalorder %s19, %s22
    %p28 = scmp.eq.s32.totalorder %s9, 0
    %p29 = por %p27, %p28
    %p30 = scmp.ne.s32.totalorder %s19, %s22
    %p31 = scmp.eq.s32.totalorder %s14, 1
    %p32 = por %p30, %p31
    %p33 = scmp.ne.s32.totalorder %s22, %s23
    %p34 = scmp.eq.s32.totalorder %s14, 0
    %p35 = por %p33, %p34
    %p36 = scmp.ne.s32.totalorder %s22, %s23
    %p37 = scmp.eq.s32.totalorder %s15, 1
    %p38 = por %p36, %p37
    %p40 = scmp.ne.s32.totalorder %s23, %s39
    %p41 = scmp.eq.s32.totalorder %s15, 0
    %p42 = por %p40, %p41
    %s44 = sadd.s32 %s43, 1
    %p47 = scmp.eq.s32.totalorder %s9, 1
    %p48 = scmp.ne.s32.totalorder %s43, %s45
    %p49 = scmp.eq.s32.totalorder %s9, 0
    %p50 = por %p48, %p49
    %p51 = scmp.ne.s32.totalorder %s43, %s45
    %p52 = scmp.eq.s32.totalorder %s14, 1
    %p53 = por %p51, %p52
    %p54 = scmp.ne.s32.totalorder %s45, %s46
    %p55 = scmp.eq.s32.totalorder %s14, 0
    %p56 = por %p54, %p55
    %p57 = scmp.ne.s32.totalorder %s45, %s46
    %p58 = scmp.eq.s32.totalorder %s15, 1
    %p59 = por %p57, %p58
    %p61 = scmp.ne.s32.totalorder %s46, %s60
    %p62 = scmp.eq.s32.totalorder %s15, 0
    %p63 = por %p61, %p62
    %s65 = sadd.s32 %s64, 1
    %p68 = scmp.eq.s32.totalorder %s9, 1
    %p69 = scmp.ne.s32.totalorder %s64, %s66
    %p70 = scmp.eq.s32.totalorder %s9, 0
    %p71 = por %p69, %p70
    %p72 = scmp.ne.s32.totalorder %s64, %s66
    %p73 = scmp.eq.s32.totalorder %s14, 1
    %p74 = por %p72, %p73
    %p75 = scmp.ne.s32.totalorder %s66, %s67
    %p76 = scmp.eq.s32.totalorder %s14, 0
    %p77 = por %p75, %p76
    %p78 = scmp.ne.s32.totalorder %s66, %s67
    %p79 = scmp.eq.s32.totalorder %s15, 1
    %p80 = por %p78, %p79
    %p82 = scmp.ne.s32.totalorder %s67, %s81
    %p83 = scmp.eq.s32.totalorder %s15, 0
    %p84 = por %p82, %p83
    %s85 = ssub.s32 %s9, %s16
    %p86 = scmp.eq.s32.totalorder %s85, 0
    %s88 = sadd.s32 %s87, 1
    %s89 = scalar_select %p86, %s87, %s88
    %p92 = pneg %p86
    %p93 = scmp.eq.s32.totalorder %s9, 1
    %p94 = por %p92, %p93
    %p95 = scmp.ne.s32.totalorder %s87, %s90
    %p96 = scmp.eq.s32.totalorder %s9, 0
    %p97 = por %p95, %p96
    %p98 = scmp.ne.s32.totalorder %s87, %s90
    %p99 = scmp.eq.s32.totalorder %s14, 1
    %p100 = por %p98, %p99
    %p101 = scmp.ne.s32.totalorder %s90, %s91
    %p102 = scmp.eq.s32.totalorder %s14, 0
    %p103 = por %p101, %p102
    %p104 = scmp.ne.s32.totalorder %s90, %s91
    %p105 = scmp.eq.s32.totalorder %s15, 1
    %p106 = por %p104, %p105
    %p108 = scmp.ne.s32.totalorder %s91, %s107
    %p109 = scmp.eq.s32.totalorder %s15, 0
    %p110 = por %p108, %p109
    %p111 = scmp.le.s32.totalorder 1, %s9
    %p112 = scmp.lt.s32.totalorder %s9, 3
    %p113 = pnand %p111, %p112
    %p114 = pneg %p113
    // Predicated region
    $region9: #{tpu_custom_call.1} parent=5 // pred_check
      _
    $region10: #{tpu_custom_call.1} parent=5 // pred_check_branch
      %116 = sbr.rel (%p113) target = $region12
    $region11: #{tpu_custom_call.1} parent=5 // pred_region
      %s117 = ssub.s32 %s9, 1
      // Predicated region
      $region13: #{tpu_custom_call.1} parent=11 // pred_check
        %p118 = pneg %p56
      $region14: #{tpu_custom_call.1} parent=11 // pred_check_branch
        %120 = sbr.rel (%p118) target = $region16
      $region15: #{tpu_custom_call.1} parent=11 // pred_region
        _
      $region16: #{tpu_custom_call.1} parent=11 // pred_fallthru
        _
      // Predicated region
      $region17: #{tpu_custom_call.1} parent=11 // pred_check
        %p121 = pneg %p77
      $region18: #{tpu_custom_call.1} parent=11 // pred_check_branch
        %123 = sbr.rel (%p121) target = $region20
      $region19: #{tpu_custom_call.1} parent=11 // pred_region
        _
      $region20: #{tpu_custom_call.1} parent=11 // pred_fallthru
        _
    $region12: #{tpu_custom_call.1} parent=5 // pred_fallthru
      _
    %p124 = scmp.lt.s32.totalorder %s9, 2
    // Predicated region
    $region21: #{tpu_custom_call.1} parent=5 // pred_check
      %p125 = pneg %p124
    $region22: #{tpu_custom_call.1} parent=5 // pred_check_branch
      %127 = sbr.rel (%p125) target = $region24
    $region23: #{tpu_custom_call.1} parent=5 // pred_region
      // Predicated region
      $region25: #{tpu_custom_call.1} parent=23 // pred_check
        %p128 = pneg %p29
      $region26: #{tpu_custom_call.1} parent=23 // pred_check_branch
        %130 = sbr.rel (%p128) target = $region28
      $region27: #{tpu_custom_call.1} parent=23 // pred_region
        %p131 = scmp.lt.s32.totalorder %s9, 1
        %s132 = scalar_select %p131, %s9, 1
        %s133 = smul.addr %s132, 32
        %s134 = smul.addr %s133, 8
        %s135 = scalar_lea.vmem %s0, %s134
      $region28: #{tpu_custom_call.1} parent=23 // pred_fallthru
        _
    $region24: #{tpu_custom_call.1} parent=5 // pred_fallthru
      _
    %p136 = scmp.le.s32.totalorder 1, %s9
    %p137 = scmp.lt.s32.totalorder %s9, 3
    %p138 = pnand %p136, %p137
    %p139 = pneg %p138
    // Predicated region
    $region29: #{tpu_custom_call.1} parent=5 // pred_check
      _
    $region30: #{tpu_custom_call.1} parent=5 // pred_check_branch
      %141 = sbr.rel (%p138) target = $region32
    $region31: #{tpu_custom_call.1} parent=5 // pred_region
      %s142 = ssub.s32 %s9, 1
      %p143 = scmp.lt.s32.totalorder %s14, 1
      %s144 = scalar_select %p143, %s14, 1
      %s145 = smul.addr %s144, 32
      %s146 = smul.addr %s145, 8
      %s147 = scalar_lea.vmem %s0, %s146
      %p148 = pneg %p35
      %p149 = pneg %p32
      %p150 = pneg %p56
      %p151 = pneg %p53
      %p152 = pneg %p77
      %p153 = pneg %p74
      %p154 = pneg %p103
      %p155 = pneg %p100
      %p156 = scmp.lt.s32.totalorder %s14, 1
      %s157 = scalar_select %p156, %s14, 1
      %s158 = smul.addr %s157, 32
      %s159 = smul.addr %s158, 8
      %s160 = scalar_lea.vmem %s3, %s159
      %p161 = scmp.lt.s32.totalorder %s14, 1
      %s162 = scalar_select %p161, %s14, 1
      %s163 = smul.addr %s162, 32
      %s164 = smul.addr %s163, 8
      %s165 = scalar_lea.vmem %s0, %s164
      %p166 = scmp.lt.s32.totalorder %s14, 1
      %s167 = scalar_select %p166, %s14, 1
      %s168 = smul.addr %s167, 32
      %s169 = smul.addr %s168, 8
      %s170 = scalar_lea.vmem %s3, %s169
      %v171 = vld [vmem:[%s165] sm:$0xff]
      %v172 = vld [vmem:[%s165 + $0x8] sm:$0xff]
      %v173 = vld [vmem:[%s165 + $0x10] sm:$0xff]
      %v174 = vld [vmem:[%s165 + $0x18] sm:$0xff]
      %v175 = vld [vmem:[%s165 + $0x20] sm:$0xff]
      %v176 = vld [vmem:[%s165 + $0x28] sm:$0xff]
      %v177 = vld [vmem:[%s165 + $0x30] sm:$0xff]
      %v178 = vld [vmem:[%s165 + $0x38] sm:$0xff]
      %v179 = vld [vmem:[%s165 + $0x40] sm:$0xff]
      %v180 = vld [vmem:[%s165 + $0x48] sm:$0xff]
      %v181 = vld [vmem:[%s165 + $0x50] sm:$0xff]
      %v182 = vld [vmem:[%s165 + $0x58] sm:$0xff]
      %v183 = vld [vmem:[%s165 + $0x60] sm:$0xff]
      %v184 = vld [vmem:[%s165 + $0x68] sm:$0xff]
      %v185 = vld [vmem:[%s165 + $0x70] sm:$0xff]
      %v186 = vld [vmem:[%s165 + $0x78] sm:$0xff]
      %v187 = vld [vmem:[%s165 + $0x80] sm:$0xff]
      %v188 = vld [vmem:[%s165 + $0x88] sm:$0xff]
      %v189 = vld [vmem:[%s165 + $0x90] sm:$0xff]
      %v190 = vld [vmem:[%s165 + $0x98] sm:$0xff]
      %v191 = vld [vmem:[%s165 + $0xa0] sm:$0xff]
      %v192 = vld [vmem:[%s165 + $0xa8] sm:$0xff]
      %v193 = vld [vmem:[%s165 + $0xb0] sm:$0xff]
      %v194 = vld [vmem:[%s165 + $0xb8] sm:$0xff]
      %v195 = vld [vmem:[%s165 + $0xc0] sm:$0xff]
      %v196 = vld [vmem:[%s165 + $0xc8] sm:$0xff]
      %v197 = vld [vmem:[%s165 + $0xd0] sm:$0xff]
      %v198 = vld [vmem:[%s165 + $0xd8] sm:$0xff]
      %v199 = vld [vmem:[%s165 + $0xe0] sm:$0xff]
      %v200 = vld [vmem:[%s165 + $0xe8] sm:$0xff]
      %v201 = vld [vmem:[%s165 + $0xf0] sm:$0xff]
      %v202 = vld [vmem:[%s165 + $0xf8] sm:$0xff]
      %v203 = vlaneseq
      %v204 = vshrl.u32 %v203, 7
      %v205 = vadd.s32 %v204, 8
      %vm206 = vcmp.eq.s32.totalorder %v204, 0
      %vm207 = vcmp.eq.s32.totalorder %v205, 0
      %vm208 = vcmp.eq.s32.totalorder %v204, 15
      %vm209 = vcmp.eq.s32.totalorder %v205, 15
      %v210 = vrot.slane %v173, 7
      %v211 = vrot.slane %v174, 7
      %v212 = vrot.slane %v171, 7
      %v213 = vrot.slane %v172, 7
      %v214 = vrot.slane %v175, 7
      %v215 = vrot.slane %v176, 7
      %v216 = vrot.slane %v177, 7
      %v217 = vrot.slane %v178, 7
      %v218 = vrot.slane %v179, 7
      %v219 = vrot.slane %v180, 7
      %v220 = vrot.slane %v181, 7
      %v221 = vrot.slane %v182, 7
      %v222 = vrot.slane %v183, 7
      %v223 = vrot.slane %v184, 7
      %v224 = vrot.slane %v185, 7
      %v225 = vrot.slane %v186, 7
      %v226 = vrot.slane %v187, 7
      %v227 = vrot.slane %v188, 7
      %v228 = vrot.slane %v189, 7
      %v229 = vrot.slane %v190, 7
      %v230 = vrot.slane %v191, 7
      %v231 = vrot.slane %v192, 7
      %v232 = vrot.slane %v193, 7
      %v233 = vrot.slane %v194, 7
      %v234 = vrot.slane %v195, 7
      %v235 = vrot.slane %v196, 7
      %v236 = vrot.slane %v197, 7
      %v237 = vrot.slane %v198, 7
      %v238 = vrot.slane %v199, 7
      %v239 = vrot.slane %v200, 7
      %v240 = vrot.slane %v201, 7
      %v241 = vrot.slane %v202, 7
      %vm242 = vcmp.lt.s32.totalorder %v204, 1
      %v243 = vsel %vm242, %v238, %v239
      %v244 = vsel %vm242, %v241, %v238
      %v245 = vsel %vm242, %v240, %v241
      %v246 = vsel %vm242, %v239, %v240
      %v247 = vsel %vm242, %v237, %v238
      %v248 = vsel %vm242, %v236, %v237
      %v249 = vsel %vm242, %v235, %v236
      %v250 = vsel %vm242, %v234, %v235
      %v251 = vsel %vm242, %v233, %v234
      %v252 = vsel %vm242, %v232, %v233
      %v253 = vsel %vm242, %v231, %v232
      %v254 = vsel %vm242, %v230, %v231
      %v255 = vsel %vm242, %v229, %v230
      %v256 = vsel %vm242, %v228, %v229
      %v257 = vsel %vm242, %v227, %v228
      %v258 = vsel %vm242, %v226, %v227
      %v259 = vsel %vm242, %v225, %v226
      %v260 = vsel %vm242, %v224, %v225
      %v261 = vsel %vm242, %v223, %v224
      %v262 = vsel %vm242, %v222, %v223
      %v263 = vsel %vm242, %v221, %v222
      %v264 = vsel %vm242, %v220, %v221
      %v265 = vsel %vm242, %v219, %v220
      %v266 = vsel %vm242, %v218, %v219
      %v267 = vsel %vm242, %v217, %v218
      %v268 = vsel %vm242, %v216, %v217
      %v269 = vsel %vm242, %v215, %v216
      %v270 = vsel %vm242, %v214, %v215
      %v271 = vsel %vm242, %v211, %v214
      %v272 = vsel %vm242, %v210, %v211
      %v273 = vsel %vm242, %v213, %v210
      %v274 = vsel %vm242, %v212, %v213
      %v275 = vsel %vm242, %v211, %v212
      %v276 = vsel %vm242, %v239, %v210
      %v277 = vrot.slane %v173, 1
      %v278 = vrot.slane %v174, 1
      %v279 = vrot.slane %v171, 1
      %v280 = vrot.slane %v172, 1
      %v281 = vrot.slane %v175, 1
      %v282 = vrot.slane %v176, 1
      %v283 = vrot.slane %v177, 1
      %v284 = vrot.slane %v178, 1
      %v285 = vrot.slane %v179, 1
      %v286 = vrot.slane %v180, 1
      %v287 = vrot.slane %v181, 1
      %v288 = vrot.slane %v182, 1
      %v289 = vrot.slane %v183, 1
      %v290 = vrot.slane %v184, 1
      %v291 = vrot.slane %v185, 1
      %v292 = vrot.slane %v186, 1
      %v293 = vrot.slane %v187, 1
      %v294 = vrot.slane %v188, 1
      %v295 = vrot.slane %v189, 1
      %v296 = vrot.slane %v190, 1
      %v297 = vrot.slane %v191, 1
      %v298 = vrot.slane %v192, 1
      %v299 = vrot.slane %v193, 1
      %v300 = vrot.slane %v194, 1
      %v301 = vrot.slane %v195, 1
      %v302 = vrot.slane %v196, 1
      %v303 = vrot.slane %v197, 1
      %v304 = vrot.slane %v198, 1
      %v305 = vrot.slane %v199, 1
      %v306 = vrot.slane %v200, 1
      %v307 = vrot.slane %v201, 1
      %v308 = vrot.slane %v202, 1
      %vm309 = vcmp.lt.s32.totalorder %v204, 7
      %v310 = vsel %vm309, %v305, %v306
      %v311 = vsel %vm309, %v308, %v305
      %v312 = vsel %vm309, %v307, %v308
      %v313 = vsel %vm309, %v306, %v307
      %v314 = vsel %vm309, %v304, %v305
      %v315 = vsel %vm309, %v303, %v304
      %v316 = vsel %vm309, %v302, %v303
      %v317 = vsel %vm309, %v301, %v302
      %v318 = vsel %vm309, %v300, %v301
      %v319 = vsel %vm309, %v299, %v300
      %v320 = vsel %vm309, %v298, %v299
      %v321 = vsel %vm309, %v297, %v298
      %v322 = vsel %vm309, %v296, %v297
      %v323 = vsel %vm309, %v295, %v296
      %v324 = vsel %vm309, %v294, %v295
      %v325 = vsel %vm309, %v293, %v294
      %v326 = vsel %vm309, %v292, %v293
      %v327 = vsel %vm309, %v291, %v292
      %v328 = vsel %vm309, %v290, %v291
      %v329 = vsel %vm309, %v289, %v290
      %v330 = vsel %vm309, %v288, %v289
      %v331 = vsel %vm309, %v287, %v288
      %v332 = vsel %vm309, %v286, %v287
      %v333 = vsel %vm309, %v285, %v286
      %v334 = vsel %vm309, %v284, %v285
      %v335 = vsel %vm309, %v283, %v284
      %v336 = vsel %vm309, %v282, %v283
      %v337 = vsel %vm309, %v281, %v282
      %v338 = vsel %vm309, %v278, %v281
      %v339 = vsel %vm309, %v277, %v278
      %v340 = vsel %vm309, %v280, %v277
      %v341 = vsel %vm309, %v279, %v280
      %v342 = vsel %vm309, %v278, %v279
      %v343 = vsel %vm309, %v306, %v277
      %v344 = vsel %vm206, 1, 0
      %v345 = vsel %vm207, 1, 0
      %vm346 = vcmp.eq.s32.totalorder %v344, 1
      %vm347 = vcmp.eq.s32.totalorder %v345, 1
      %v348 = vsel %vm346, %v339, %v276
      %v349 = vsel %vm347, %v342, %v272
      %v350 = vsel %vm346, %v341, %v275
      %v351 = vsel %vm347, %v340, %v274
      %v352 = vsel %vm346, %v339, %v273
      %v353 = vsel %vm347, %v338, %v272
      %v354 = vsel %vm346, %v337, %v271
      %v355 = vsel %vm347, %v336, %v270
      %v356 = vsel %vm346, %v335, %v269
      %v357 = vsel %vm347, %v334, %v268
      %v358 = vsel %vm346, %v333, %v267
      %v359 = vsel %vm347, %v332, %v266
      %v360 = vsel %vm346, %v331, %v265
      %v361 = vsel %vm347, %v330, %v264
      %v362 = vsel %vm346, %v329, %v263
      %v363 = vsel %vm347, %v328, %v262
      %v364 = vsel %vm346, %v327, %v261
      %v365 = vsel %vm347, %v326, %v260
      %v366 = vsel %vm346, %v325, %v259
      %v367 = vsel %vm347, %v324, %v258
      %v368 = vsel %vm346, %v323, %v257
      %v369 = vsel %vm347, %v322, %v256
      %v370 = vsel %vm346, %v321, %v255
      %v371 = vsel %vm347, %v320, %v254
      %v372 = vsel %vm346, %v319, %v253
      %v373 = vsel %vm347, %v318, %v252
      %v374 = vsel %vm346, %v317, %v251
      %v375 = vsel %vm347, %v316, %v250
      %v376 = vsel %vm346, %v315, %v249
      %v377 = vsel %vm347, %v314, %v248
      %v378 = vsel %vm346, %v310, %v247
      %v379 = vsel %vm347, %v313, %v243
      %v380 = vsel %vm346, %v312, %v246
      %v381 = vsel %vm347, %v311, %v245
      %v382 = vsel %vm346, %v310, %v244
      %v383 = vsel %vm347, %v343, %v243
      %v384 = vsel %vm208, 1, 0
      %v385 = vsel %vm209, 1, 0
      %vm386 = vcmp.eq.s32.totalorder %v384, 1
      %vm387 = vcmp.eq.s32.totalorder %v385, 1
      %v388 = vsel %vm386, %v276, %v339
      %v389 = vsel %vm387, %v272, %v342
      %v390 = vsel %vm386, %v275, %v341
      %v391 = vsel %vm387, %v274, %v340
      %v392 = vsel %vm386, %v273, %v339
      %v393 = vsel %vm387, %v272, %v338
      %v394 = vsel %vm386, %v271, %v337
      %v395 = vsel %vm387, %v270, %v336
      %v396 = vsel %vm386, %v269, %v335
      %v397 = vsel %vm387, %v268, %v334
      %v398 = vsel %vm386, %v267, %v333
      %v399 = vsel %vm387, %v266, %v332
      %v400 = vsel %vm386, %v265, %v331
      %v401 = vsel %vm387, %v264, %v330
      %v402 = vsel %vm386, %v263, %v329
      %v403 = vsel %vm387, %v262, %v328
      %v404 = vsel %vm386, %v261, %v327
      %v405 = vsel %vm387, %v260, %v326
      %v406 = vsel %vm386, %v259, %v325
      %v407 = vsel %vm387, %v258, %v324
      %v408 = vsel %vm386, %v257, %v323
      %v409 = vsel %vm387, %v256, %v322
      %v410 = vsel %vm386, %v255, %v321
      %v411 = vsel %vm387, %v254, %v320
      %v412 = vsel %vm386, %v253, %v319
      %v413 = vsel %vm387, %v252, %v318
      %v414 = vsel %vm386, %v251, %v317
      %v415 = vsel %vm387, %v250, %v316
      %v416 = vsel %vm386, %v249, %v315
      %v417 = vsel %vm387, %v248, %v314
      %v418 = vsel %vm386, %v247, %v310
      %v419 = vsel %vm387, %v243, %v313
      %v420 = vsel %vm386, %v246, %v312
      %v421 = vsel %vm387, %v245, %v311
      %v422 = vsel %vm386, %v244, %v310
      %v423 = vsel %vm387, %v243, %v343
      %v424 = vld [vmem:[%s1] sm:$0xf]
      %s425 = scalar_lea.vmem %s1, 4
      %v426 = vld [vmem:[%s425] sm:$0xf]
      %vm427 = vcmask 31744
      %v429 = vsel %vm427, %v173, 0
      %v432 = vsel %vm427, %v174, 0
      %v435 = vsel %vm427, %v171, 0
      %v438 = vsel %vm427, %v172, 0
      %v441 = vsel %vm427, %v175, 0
      %v444 = vsel %vm427, %v176, 0
      %v447 = vsel %vm427, %v177, 0
      %v450 = vsel %vm427, %v178, 0
      %v453 = vsel %vm427, %v179, 0
      %v456 = vsel %vm427, %v180, 0
      %v459 = vsel %vm427, %v181, 0
      %v462 = vsel %vm427, %v182, 0
      %v465 = vsel %vm427, %v183, 0
      %v468 = vsel %vm427, %v184, 0
      %v471 = vsel %vm427, %v185, 0
      %v474 = vsel %vm427, %v186, 0
      %v477 = vsel %vm427, %v187, 0
      %v480 = vsel %vm427, %v188, 0
      %v483 = vsel %vm427, %v189, 0
      %v486 = vsel %vm427, %v190, 0
      %v489 = vsel %vm427, %v191, 0
      %v492 = vsel %vm427, %v192, 0
      %v495 = vsel %vm427, %v193, 0
      %v498 = vsel %vm427, %v194, 0
      %v501 = vsel %vm427, %v195, 0
      %v504 = vsel %vm427, %v196, 0
      %v507 = vsel %vm427, %v197, 0
      %v510 = vsel %vm427, %v198, 0
      %v513 = vsel %vm427, %v199, 0
      %v516 = vsel %vm427, %v200, 0
      %vm518 = vcmask 1043456
      %v520 = vsel %vm518, %v426, 0
      %522 = vmatprep.subr.mxu0 0.0
      %523 = vmatpush1.msra.mxu0 %v520
      %524 = vmatprep.subr.mxu0 0.0
      %525 = vmatpush1.msra.mxu0 0.0
      %526 = vmatprep.subr.mxu0 0.0
      %527 = vmatpush1.msra.mxu0 0.0
      %528 = vmatprep.subr.mxu0 0.0
      %529 = vmatpush1.msra.mxu0 0.0
      %530 = vmatprep.subr.mxu0 0.0
      %531 = vmatpush1.msra.mxu0 0.0
      %532 = vmatprep.subr.mxu0 0.0
      %533 = vmatpush1.msra.mxu0 0.0
      %534 = vmatprep.subr.mxu0 0.0
      %535 = vmatpush1.msra.mxu0 0.0
      %536 = vmatprep.subr.mxu0 0.0
      %537 = vmatpush1.msra.mxu0 0.0
      %538 = vmatprep.subr.mxu0 0.0
      %539 = vmatpush1.msra.mxu0 0.0
      %540 = vmatprep.subr.mxu0 0.0
      %541 = vmatpush1.msra.mxu0 0.0
      %542 = vmatprep.subr.mxu0 0.0
      %543 = vmatpush1.msra.mxu0 0.0
      %544 = vmatprep.subr.mxu0 0.0
      %545 = vmatpush1.msra.mxu0 0.0
      %546 = vmatprep.subr.mxu0 0.0
      %547 = vmatpush1.msra.mxu0 0.0
      %548 = vmatprep.subr.mxu0 0.0
      %549 = vmatpush1.msra.mxu0 0.0
      %550 = vmatprep.subr.mxu0 0.0
      %551 = vmatpush1.msra.mxu0 0.0
      %552 = vmatprep.subr.mxu0 0.0
      %553 = vmatpush1.msra.mxu0 0.0
      %554 = vmatprep.subr.mxu0 0.0
      %555 = vmatpush1.msra.mxu0 0.0
      %556 = vmatprep.subr.mxu0 0.0
      %557 = vmatpush1.msra.mxu0 0.0
      %558 = vmatprep.subr.mxu0 0.0
      %559 = vmatpush1.msra.mxu0 0.0
      %560 = vmatprep.subr.mxu0 0.0
      %561 = vmatpush1.msra.mxu0 0.0
      %562 = vmatprep.subr.mxu0 0.0
      %563 = vmatpush1.msra.mxu0 0.0
      %564 = vmatprep.subr.mxu0 0.0
      %565 = vmatpush1.msra.mxu0 0.0
      %566 = vmatprep.subr.mxu0 0.0
      %567 = vmatpush1.msra.mxu0 0.0
      %568 = vmatprep.subr.mxu0 0.0
      %569 = vmatpush1.msra.mxu0 0.0
      %570 = vmatprep.subr.mxu0 0.0
      %571 = vmatpush1.msra.mxu0 0.0
      %572 = vmatprep.subr.mxu0 0.0
      %573 = vmatpush1.msra.mxu0 0.0
      %574 = vmatprep.subr.mxu0 0.0
      %575 = vmatpush1.msra.mxu0 0.0
      %576 = vmatprep.subr.mxu0 0.0
      %577 = vmatpush1.msra.mxu0 0.0
      %578 = vmatprep.subr.mxu0 0.0
      %579 = vmatpush1.msra.mxu0 0.0
      %580 = vmatprep.subr.mxu0 0.0
      %581 = vmatpush1.msra.mxu0 0.0
      %582 = vmatprep.subr.mxu0 0.0
      %583 = vmatpush1.msra.mxu0 0.0
      %584 = vmatprep.subr.mxu0 0.0
      %585 = vmatpush1.msra.mxu0 0.0
      %586 = vmatprep.mubr.f32.mxu0 0.0
      %587 = vmatmul.mubr.f32.gmra.mrb[0].mxu0 %v429
      %v588 = vpop.f32.mrb[0].mxu0
      %v589 = vadd.f32 0.0, %v588
      %v590 = vpop.f32.mrb[0].mxu0
      %591 = vmatprep.mubr.f32.mxu0 0.0
      %592 = vmatmul.mubr.f32.gmra.mrb[0].mxu0 %v432
      %v593 = vpop.f32.mrb[0].mxu0
      %v594 = vadd.f32 0.0, %v593
      %v595 = vpop.f32.mrb[0].mxu0
      %596 = vmatprep.mubr.f32.mxu0 0.0
      %597 = vmatmul.mubr.f32.gmra.mrb[0].mxu0 %v435
      %v598 = vpop.f32.mrb[0].mxu0
      %v599 = vadd.f32 0.0, %v598
      %v600 = vpop.f32.mrb[0].mxu0
      %601 = vmatprep.mubr.f32.mxu0 0.0
      %602 = vmatmul.mubr.f32.gmra.mrb[0].mxu0 %v438
      %v603 = vpop.f32.mrb[0].mxu0
      %v604 = vadd.f32 0.0, %v603
      %v605 = vpop.f32.mrb[0].mxu0
      %606 = vmatprep.mubr.f32.mxu0 0.0
      %607 = vmatmul.mubr.f32.gmra.mrb[0].mxu0 %v429
      %v608 = vpop.f32.mrb[0].mxu0
      %v609 = vadd.f32 0.0, %v608
      %v610 = vpop.f32.mrb[0].mxu0
      %611 = vmatprep.mubr.f32.mxu0 0.0
      %612 = vmatmul.mubr.f32.gmra.mrb[0].mxu0 %v432
      %v613 = vpop.f32.mrb[0].mxu0
      %v614 = vadd.f32 0.0, %v613
      %v615 = vpop.f32.mrb[0].mxu0
      %616 = vmatprep.mubr.f32.mxu0 0.0
      %617 = vmatmul.mubr.f32.gmra.mrb[0].mxu0 %v441
      %v618 = vpop.f32.mrb[0].mxu0
      %v619 = vadd.f32 0.0, %v618
      %v620 = vpop.f32.mrb[0].mxu0
      %621 = vmatprep.mubr.f32.mxu0 0.0
      %622 = vmatmul.mubr.f32.gmra.mrb[0].mxu0 %v444
      %v623 = vpop.f32.mrb[0].mxu0
      %v624 = vadd.f32 0.0, %v623
      %v625 = vpop.f32.mrb[0].mxu0
      %626 = vmatprep.mubr.f32.mxu0 0.0
      %627 = vmatmul.mubr.f32.gmra.mrb[0].mxu0 %v447
      %v628 = vpop.f32.mrb[0].mxu0
      %v629 = vadd.f32 0.0, %v628
      %v630 = vpop.f32.mrb[0].mxu0
      %631 = vmatprep.mubr.f32.mxu0 0.0
      %632 = vmatmul.mubr.f32.gmra.mrb[0].mxu0 %v450
      %v633 = vpop.f32.mrb[0].mxu0
      %v634 = vadd.f32 0.0, %v633
      %v635 = vpop.f32.mrb[0].mxu0
      %636 = vmatprep.mubr.f32.mxu0 0.0
      %637 = vmatmul.mubr.f32.gmra.mrb[0].mxu0 %v453
      %v638 = vpop.f32.mrb[0].mxu0
      %v639 = vadd.f32 0.0, %v638
      %v640 = vpop.f32.mrb[0].mxu0
      %641 = vmatprep.mubr.f32.mxu0 0.0
      %642 = vmatmul.mubr.f32.gmra.mrb[0].mxu0 %v456
      %v643 = vpop.f32.mrb[0].mxu0
      %v644 = vadd.f32 0.0, %v643
      %v645 = vpop.f32.mrb[0].mxu0
      %646 = vmatprep.mubr.f32.mxu0 0.0
      %647 = vmatmul.mubr.f32.gmra.mrb[0].mxu0 %v459
      %v648 = vpop.f32.mrb[0].mxu0
      %v649 = vadd.f32 0.0, %v648
      %v650 = vpop.f32.mrb[0].mxu0
      %651 = vmatprep.mubr.f32.mxu0 0.0
      %652 = vmatmul.mubr.f32.gmra.mrb[0].mxu0 %v462
      %v653 = vpop.f32.mrb[0].mxu0
      %v654 = vadd.f32 0.0, %v653
      %v655 = vpop.f32.mrb[0].mxu0
      %656 = vmatprep.mubr.f32.mxu0 0.0
      %657 = vmatmul.mubr.f32.gmra.mrb[0].mxu0 %v465
      %v658 = vpop.f32.mrb[0].mxu0
      %v659 = vadd.f32 0.0, %v658
      %v660 = vpop.f32.mrb[0].mxu0
      %661 = vmatprep.mubr.f32.mxu0 0.0
      %662 = vmatmul.mubr.f32.gmra.mrb[0].mxu0 %v468
      %v663 = vpop.f32.mrb[0].mxu0
      %v664 = vadd.f32 0.0, %v663
      %v665 = vpop.f32.mrb[0].mxu0
      %666 = vmatprep.mubr.f32.mxu0 0.0
      %667 = vmatmul.mubr.f32.gmra.mrb[0].mxu0 %v471
      %v668 = vpop.f32.mrb[0].mxu0
      %v669 = vadd.f32 0.0, %v668
      %v670 = vpop.f32.mrb[0].mxu0
      %671 = vmatprep.mubr.f32.mxu0 0.0
      %672 = vmatmul.mubr.f32.gmra.mrb[0].mxu0 %v474
      %v673 = vpop.f32.mrb[0].mxu0
      %v674 = vadd.f32 0.0, %v673
      %v675 = vpop.f32.mrb[0].mxu0
      %676 = vmatprep.mubr.f32.mxu0 0.0
      %677 = vmatmul.mubr.f32.gmra.mrb[0].mxu0 %v477
      %v678 = vpop.f32.mrb[0].mxu0
      %v679 = vadd.f32 0.0, %v678
      %v680 = vpop.f32.mrb[0].mxu0
      %681 = vmatprep.mubr.f32.mxu0 0.0
      %682 = vmatmul.mubr.f32.gmra.mrb[0].mxu0 %v480
      %v683 = vpop.f32.mrb[0].mxu0
      %v684 = vadd.f32 0.0, %v683
      %v685 = vpop.f32.mrb[0].mxu0
      %686 = vmatprep.mubr.f32.mxu0 0.0
      %687 = vmatmul.mubr.f32.gmra.mrb[0].mxu0 %v483
      %v688 = vpop.f32.mrb[0].mxu0
      %v689 = vadd.f32 0.0, %v688
      %v690 = vpop.f32.mrb[0].mxu0
      %691 = vmatprep.mubr.f32.mxu0 0.0
      %692 = vmatmul.mubr.f32.gmra.mrb[0].mxu0 %v486
      %v693 = vpop.f32.mrb[0].mxu0
      %v694 = vadd.f32 0.0, %v693
      %v695 = vpop.f32.mrb[0].mxu0
      %696 = vmatprep.mubr.f32.mxu0 0.0
      %697 = vmatmul.mubr.f32.gmra.mrb[0].mxu0 %v489
      %v698 = vpop.f32.mrb[0].mxu0
      %v699 = vadd.f32 0.0, %v698
      %v700 = vpop.f32.mrb[0].mxu0
      %701 = vmatprep.mubr.f32.mxu0 0.0
      %702 = vmatmul.mubr.f32.gmra.mrb[0].mxu0 %v492
      %v703 = vpop.f32.mrb[0].mxu0
      %v704 = vadd.f32 0.0, %v703
      %v705 = vpop.f32.mrb[0].mxu0
      %706 = vmatprep.mubr.f32.mxu0 0.0
      %707 = vmatmul.mubr.f32.gmra.mrb[0].mxu0 %v495
      %v708 = vpop.f32.mrb[0].mxu0
      %v709 = vadd.f32 0.0, %v708
      %v710 = vpop.f32.mrb[0].mxu0
      %711 = vmatprep.mubr.f32.mxu0 0.0
      %712 = vmatmul.mubr.f32.gmra.mrb[0].mxu0 %v498
      %v713 = vpop.f32.mrb[0].mxu0
      %v714 = vadd.f32 0.0, %v713
      %v715 = vpop.f32.mrb[0].mxu0
      %716 = vmatprep.mubr.f32.mxu0 0.0
      %717 = vmatmul.mubr.f32.gmra.mrb[0].mxu0 %v501
      %v718 = vpop.f32.mrb[0].mxu0
      %v719 = vadd.f32 0.0, %v718
      %v720 = vpop.f32.mrb[0].mxu0
      %721 = vmatprep.mubr.f32.mxu0 0.0
      %722 = vmatmul.mubr.f32.gmra.mrb[0].mxu0 %v504
      %v723 = vpop.f32.mrb[0].mxu0
      %v724 = vadd.f32 0.0, %v723
      %v725 = vpop.f32.mrb[0].mxu0
      %726 = vmatprep.mubr.f32.mxu0 0.0
      %727 = vmatmul.mubr.f32.gmra.mrb[0].mxu0 %v507
      %v728 = vpop.f32.mrb[0].mxu0
      %v729 = vadd.f32 0.0, %v728
      %v730 = vpop.f32.mrb[0].mxu0
      %731 = vmatprep.mubr.f32.mxu0 0.0
      %732 = vmatmul.mubr.f32.gmra.mrb[0].mxu0 %v510
      %v733 = vpop.f32.mrb[0].mxu0
      %v734 = vadd.f32 0.0, %v733
      %v735 = vpop.f32.mrb[0].mxu0
      %736 = vmatprep.mubr.f32.mxu0 0.0
      %737 = vmatmul.mubr.f32.gmra.mrb[0].mxu0 %v513
      %v738 = vpop.f32.mrb[0].mxu0
      %v739 = vadd.f32 0.0, %v738
      %v740 = vpop.f32.mrb[0].mxu0
      %741 = vmatprep.mubr.f32.mxu0 0.0
      %742 = vmatmul.mubr.f32.gmra.mrb[0].mxu0 %v516
      %v743 = vpop.f32.mrb[0].mxu0
      %v744 = vadd.f32 0.0, %v743
      %v745 = vpop.f32.mrb[0].mxu0
      %746 = vdwg.mxu0
      %v748 = vsel %vm427, %v348, 0
      %v751 = vsel %vm427, %v349, 0
      %v754 = vsel %vm427, %v350, 0
      %v757 = vsel %vm427, %v351, 0
      %v760 = vsel %vm427, %v352, 0
      %v763 = vsel %vm427, %v353, 0
      %v766 = vsel %vm427, %v354, 0
      %v769 = vsel %vm427, %v355, 0
      %v772 = vsel %vm427, %v356, 0
      %v775 = vsel %vm427, %v357, 0
      %v778 = vsel %vm427, %v358, 0
      %v781 = vsel %vm427, %v359, 0
      %v784 = vsel %vm427, %v360, 0
      %v787 = vsel %vm427, %v361, 0
      %v790 = vsel %vm427, %v362, 0
      %v793 = vsel %vm427, %v363, 0
      %v796 = vsel %vm427, %v364, 0
      %v799 = vsel %vm427, %v365, 0
      %v802 = vsel %vm427, %v366, 0
      %v805 = vsel %vm427, %v367, 0
      %v808 = vsel %vm427, %v368, 0
      %v811 = vsel %vm427, %v369, 0
      %v814 = vsel %vm427, %v370, 0
      %v817 = vsel %vm427, %v371, 0
      %v820 = vsel %vm427, %v372, 0
      %v823 = vsel %vm427, %v373, 0
      %v826 = vsel %vm427, %v374, 0
      %v829 = vsel %vm427, %v375, 0
      %v832 = vsel %vm427, %v376, 0
      %v835 = vsel %vm427, %v377, 0
      %v838 = vsel %vm427, %v378, 0
      %v841 = vsel %vm427, %v379, 0
      %v844 = vsel %vm518, %v424, 0
      %846 = vmatprep.subr.mxu0 0.0
      %847 = vmatpush1.msra.mxu0 %v844
      %848 = vmatprep.subr.mxu0 0.0
      %849 = vmatpush1.msra.mxu0 0.0
      %850 = vmatprep.subr.mxu0 0.0
      %851 = vmatpush1.msra.mxu0 0.0
      %852 = vmatprep.subr.mxu0 0.0
      %853 = vmatpush1.msra.mxu0 0.0
      %854 = vmatprep.subr.mxu0 0.0
      %855 = vmatpush1.msra.mxu0 0.0
      %856 = vmatprep.subr.mxu0 0.0
      %857 = vmatpush1.msra.mxu0 0.0
      %858 = vmatprep.subr.mxu0 0.0
      %859 = vmatpush1.msra.mxu0 0.0
      %860 = vmatprep.subr.mxu0 0.0
      %861 = vmatpush1.msra.mxu0 0.0
      %862 = vmatprep.subr.mxu0 0.0
      %863 = vmatpush1.msra.mxu0 0.0
      %864 = vmatprep.subr.mxu0 0.0
      %865 = vmatpush1.msra.mxu0 0.0
      %866 = vmatprep.subr.mxu0 0.0
      %867 = vmatpush1.msra.mxu0 0.0
      %868 = vmatprep.subr.mxu0 0.0
      %869 = vmatpush1.msra.mxu0 0.0
      %870 = vmatprep.subr.mxu0 0.0
      %871 = vmatpush1.msra.mxu0 0.0
      %872 = vmatprep.subr.mxu0 0.0
      %873 = vmatpush1.msra.mxu0 0.0
      %874 = vmatprep.subr.mxu0 0.0
      %875 = vmatpush1.msra.mxu0 0.0
      %876 = vmatprep.subr.mxu0 0.0
      %877 = vmatpush1.msra.mxu0 0.0
      %878 = vmatprep.subr.mxu0 0.0
      %879 = vmatpush1.msra.mxu0 0.0
      %880 = vmatprep.subr.mxu0 0.0
      %881 = vmatpush1.msra.mxu0 0.0
      %882 = vmatprep.subr.mxu0 0.0
      %883 = vmatpush1.msra.mxu0 0.0
      %884 = vmatprep.subr.mxu0 0.0
      %885 = vmatpush1.msra.mxu0 0.0
      %886 = vmatprep.subr.mxu0 0.0
      %887 = vmatpush1.msra.mxu0 0.0
      %888 = vmatprep.subr.mxu0 0.0
      %889 = vmatpush1.msra.mxu0 0.0
      %890 = vmatprep.subr.mxu0 0.0
      %891 = vmatpush1.msra.mxu0 0.0
      %892 = vmatprep.subr.mxu0 0.0
      %893 = vmatpush1.msra.mxu0 0.0
      %894 = vmatprep.subr.mxu0 0.0
      %895 = vmatpush1.msra.mxu0 0.0
      %896 = vmatprep.subr.mxu0 0.0
      %897 = vmatpush1.msra.mxu0 0.0
      %898 = vmatprep.subr.mxu0 0.0
      %899 = vmatpush1.msra.mxu0 0.0
      %900 = vmatprep.subr.mxu0 0.0
      %901 = vmatpush1.msra.mxu0 0.0
      %902 = vmatprep.subr.mxu0 0.0
      %903 = vmatpush1.msra.mxu0 0.0
      %904 = vmatprep.subr.mxu0 0.0
      %905 = vmatpush1.msra.mxu0 0.0
      %906 = vmatprep.subr.mxu0 0.0
      %907 = vmatpush1.msra.mxu0 0.0
      %908 = vmatprep.subr.mxu0 0.0
      %909 = vmatpush1.msra.mxu0 0.0
      %910 = vmatprep.mubr.f32.mxu0 0.0
      %911 = vmatmul.mubr.f32.gmra.mrb[0].mxu0 %v748
      %v912 = vpop.f32.mrb[0].mxu0
      %v913 = vadd.f32 %v589, %v912
      %v914 = vpop.f32.mrb[0].mxu0
      %915 = vmatprep.mubr.f32.mxu0 0.0
      %916 = vmatmul.mubr.f32.gmra.mrb[0].mxu0 %v751
      %v917 = vpop.f32.mrb[0].mxu0
      %v918 = vadd.f32 %v594, %v917
      %v919 = vpop.f32.mrb[0].mxu0
      %920 = vmatprep.mubr.f32.mxu0 0.0
      %921 = vmatmul.mubr.f32.gmra.mrb[0].mxu0 %v754
      %v922 = vpop.f32.mrb[0].mxu0
      %v923 = vadd.f32 %v599, %v922
      %v924 = vpop.f32.mrb[0].mxu0
      %925 = vmatprep.mubr.f32.mxu0 0.0
      %926 = vmatmul.mubr.f32.gmra.mrb[0].mxu0 %v757
      %v927 = vpop.f32.mrb[0].mxu0
      %v928 = vadd.f32 %v604, %v927
      %v929 = vpop.f32.mrb[0].mxu0
      %930 = vmatprep.mubr.f32.mxu0 0.0
      %931 = vmatmul.mubr.f32.gmra.mrb[0].mxu0 %v760
      %v932 = vpop.f32.mrb[0].mxu0
      %v933 = vadd.f32 %v609, %v932
      %v934 = vpop.f32.mrb[0].mxu0
      %935 = vmatprep.mubr.f32.mxu0 0.0
      %936 = vmatmul.mubr.f32.gmra.mrb[0].mxu0 %v763
      %v937 = vpop.f32.mrb[0].mxu0
      %v938 = vadd.f32 %v614, %v937
      %v939 = vpop.f32.mrb[0].mxu0
      %940 = vmatprep.mubr.f32.mxu0 0.0
      %941 = vmatmul.mubr.f32.gmra.mrb[0].mxu0 %v766
      %v942 = vpop.f32.mrb[0].mxu0
      %v943 = vadd.f32 %v619, %v942
      %v944 = vpop.f32.mrb[0].mxu0
      %945 = vmatprep.mubr.f32.mxu0 0.0
      %946 = vmatmul.mubr.f32.gmra.mrb[0].mxu0 %v769
      %v947 = vpop.f32.mrb[0].mxu0
      %v948 = vadd.f32 %v624, %v947
      %v949 = vpop.f32.mrb[0].mxu0
      %950 = vmatprep.mubr.f32.mxu0 0.0
      %951 = vmatmul.mubr.f32.gmra.mrb[0].mxu0 %v772
      %v952 = vpop.f32.mrb[0].mxu0
      %v953 = vadd.f32 %v629, %v952
      %v954 = vpop.f32.mrb[0].mxu0
      %955 = vmatprep.mubr.f32.mxu0 0.0
      %956 = vmatmul.mubr.f32.gmra.mrb[0].mxu0 %v775
      %v957 = vpop.f32.mrb[0].mxu0
      %v958 = vadd.f32 %v634, %v957
      %v959 = vpop.f32.mrb[0].mxu0
      %960 = vmatprep.mubr.f32.mxu0 0.0
      %961 = vmatmul.mubr.f32.gmra.mrb[0].mxu0 %v778
      %v962 = vpop.f32.mrb[0].mxu0
      %v963 = vadd.f32 %v639, %v962
      %v964 = vpop.f32.mrb[0].mxu0
      %965 = vmatprep.mubr.f32.mxu0 0.0
      %966 = vmatmul.mubr.f32.gmra.mrb[0].mxu0 %v781
      %v967 = vpop.f32.mrb[0].mxu0
      %v968 = vadd.f32 %v644, %v967
      %v969 = vpop.f32.mrb[0].mxu0
      %970 = vmatprep.mubr.f32.mxu0 0.0
      %971 = vmatmul.mubr.f32.gmra.mrb[0].mxu0 %v784
      %v972 = vpop.f32.mrb[0].mxu0
      %v973 = vadd.f32 %v649, %v972
      %v974 = vpop.f32.mrb[0].mxu0
      %975 = vmatprep.mubr.f32.mxu0 0.0
      %976 = vmatmul.mubr.f32.gmra.mrb[0].mxu0 %v787
      %v977 = vpop.f32.mrb[0].mxu0
      %v978 = vadd.f32 %v654, %v977
      %v979 = vpop.f32.mrb[0].mxu0
      %980 = vmatprep.mubr.f32.mxu0 0.0
      %981 = vmatmul.mubr.f32.gmra.mrb[0].mxu0 %v790
      %v982 = vpop.f32.mrb[0].mxu0
      %v983 = vadd.f32 %v659, %v982
      %v984 = vpop.f32.mrb[0].mxu0
      %985 = vmatprep.mubr.f32.mxu0 0.0
      %986 = vmatmul.mubr.f32.gmra.mrb[0].mxu0 %v793
      %v987 = vpop.f32.mrb[0].mxu0
      %v988 = vadd.f32 %v664, %v987
      %v989 = vpop.f32.mrb[0].mxu0
      %990 = vmatprep.mubr.f32.mxu0 0.0
      %991 = vmatmul.mubr.f32.gmra.mrb[0].mxu0 %v796
      %v992 = vpop.f32.mrb[0].mxu0
      %v993 = vadd.f32 %v669, %v992
      %v994 = vpop.f32.mrb[0].mxu0
      %995 = vmatprep.mubr.f32.mxu0 0.0
      %996 = vmatmul.mubr.f32.gmra.mrb[0].mxu0 %v799
      %v997 = vpop.f32.mrb[0].mxu0
      %v998 = vadd.f32 %v674, %v997
      %v999 = vpop.f32.mrb[0].mxu0
      %1000 = vmatprep.mubr.f32.mxu0 0.0
      %1001 = vmatmul.mubr.f32.gmra.mrb[0].mxu0 %v802
      %v1002 = vpop.f32.mrb[0].mxu0
      %v1003 = vadd.f32 %v679, %v1002
      %v1004 = vpop.f32.mrb[0].mxu0
      %1005 = vmatprep.mubr.f32.mxu0 0.0
      %1006 = vmatmul.mubr.f32.gmra.mrb[0].mxu0 %v805
      %v1007 = vpop.f32.mrb[0].mxu0
      %v1008 = vadd.f32 %v684, %v1007
      %v1009 = vpop.f32.mrb[0].mxu0
      %1010 = vmatprep.mubr.f32.mxu0 0.0
      %1011 = vmatmul.mubr.f32.gmra.mrb[0].mxu0 %v808
      %v1012 = vpop.f32.mrb[0].mxu0
      %v1013 = vadd.f32 %v689, %v1012
      %v1014 = vpop.f32.mrb[0].mxu0
      %1015 = vmatprep.mubr.f32.mxu0 0.0
      %1016 = vmatmul.mubr.f32.gmra.mrb[0].mxu0 %v811
      %v1017 = vpop.f32.mrb[0].mxu0
      %v1018 = vadd.f32 %v694, %v1017
      %v1019 = vpop.f32.mrb[0].mxu0
      %1020 = vmatprep.mubr.f32.mxu0 0.0
      %1021 = vmatmul.mubr.f32.gmra.mrb[0].mxu0 %v814
      %v1022 = vpop.f32.mrb[0].mxu0
      %v1023 = vadd.f32 %v699, %v1022
      %v1024 = vpop.f32.mrb[0].mxu0
      %1025 = vmatprep.mubr.f32.mxu0 0.0
      %1026 = vmatmul.mubr.f32.gmra.mrb[0].mxu0 %v817
      %v1027 = vpop.f32.mrb[0].mxu0
      %v1028 = vadd.f32 %v704, %v1027
      %v1029 = vpop.f32.mrb[0].mxu0
      %1030 = vmatprep.mubr.f32.mxu0 0.0
      %1031 = vmatmul.mubr.f32.gmra.mrb[0].mxu0 %v820
      %v1032 = vpop.f32.mrb[0].mxu0
      %v1033 = vadd.f32 %v709, %v1032
      %v1034 = vpop.f32.mrb[0].mxu0
      %1035 = vmatprep.mubr.f32.mxu0 0.0
      %1036 = vmatmul.mubr.f32.gmra.mrb[0].mxu0 %v823
      %v1037 = vpop.f32.mrb[0].mxu0
      %v1038 = vadd.f32 %v714, %v1037
      %v1039 = vpop.f32.mrb[0].mxu0
      %1040 = vmatprep.mubr.f32.mxu0 0.0
      %1041 = vmatmul.mubr.f32.gmra.mrb[0].mxu0 %v826
      %v1042 = vpop.f32.mrb[0].mxu0
      %v1043 = vadd.f32 %v719, %v1042
      %v1044 = vpop.f32.mrb[0].mxu0
      %1045 = vmatprep.mubr.f32.mxu0 0.0
      %1046 = vmatmul.mubr.f32.gmra.mrb[0].mxu0 %v829
      %v1047 = vpop.f32.mrb[0].mxu0
      %v1048 = vadd.f32 %v724, %v1047
      %v1049 = vpop.f32.mrb[0].mxu0
      %1050 = vmatprep.mubr.f32.mxu0 0.0
      %1051 = vmatmul.mubr.f32.gmra.mrb[0].mxu0 %v832
      %v1052 = vpop.f32.mrb[0].mxu0
      %v1053 = vadd.f32 %v729, %v1052
      %v1054 = vpop.f32.mrb[0].mxu0
      %1055 = vmatprep.mubr.f32.mxu0 0.0
      %1056 = vmatmul.mubr.f32.gmra.mrb[0].mxu0 %v835
      %v1057 = vpop.f32.mrb[0].mxu0
      %v1058 = vadd.f32 %v734, %v1057
      %v1059 = vpop.f32.mrb[0].mxu0
      %1060 = vmatprep.mubr.f32.mxu0 0.0
      %1061 = vmatmul.mubr.f32.gmra.mrb[0].mxu0 %v838
      %v1062 = vpop.f32.mrb[0].mxu0
      %v1063 = vadd.f32 %v739, %v1062
      %v1064 = vpop.f32.mrb[0].mxu0
      %1065 = vmatprep.mubr.f32.mxu0 0.0
      %1066 = vmatmul.mubr.f32.gmra.mrb[0].mxu0 %v841
      %v1067 = vpop.f32.mrb[0].mxu0
      %v1068 = vadd.f32 %v744, %v1067
      %v1069 = vpop.f32.mrb[0].mxu0
      %1070 = vdwg.mxu0
      %s1071 = scalar_lea.vmem %s1, 8
      %v1072 = vld [vmem:[%s1071] sm:$0xf]
      %v1074 = vsel %vm427, %v388, 0
      %v1077 = vsel %vm427, %v389, 0
      %v1080 = vsel %vm427, %v390, 0
      %v1083 = vsel %vm427, %v391, 0
      %v1086 = vsel %vm427, %v392, 0
      %v1089 = vsel %vm427, %v393, 0
      %v1092 = vsel %vm427, %v394, 0
      %v1095 = vsel %vm427, %v395, 0
      %v1098 = vsel %vm427, %v396, 0
      %v1101 = vsel %vm427, %v397, 0
      %v1104 = vsel %vm427, %v398, 0
      %v1107 = vsel %vm427, %v399, 0
      %v1110 = vsel %vm427, %v400, 0
      %v1113 = vsel %vm427, %v401, 0
      %v1116 = vsel %vm427, %v402, 0
      %v1119 = vsel %vm427, %v403, 0
      %v1122 = vsel %vm427, %v404, 0
      %v1125 = vsel %vm427, %v405, 0
      %v1128 = vsel %vm427, %v406, 0
      %v1131 = vsel %vm427, %v407, 0
      %v1134 = vsel %vm427, %v408, 0
      %v1137 = vsel %vm427, %v409, 0
      %v1140 = vsel %vm427, %v410, 0
      %v1143 = vsel %vm427, %v411, 0
      %v1146 = vsel %vm427, %v412, 0
      %v1149 = vsel %vm427, %v413, 0
      %v1152 = vsel %vm427, %v414, 0
      %v1155 = vsel %vm427, %v415, 0
      %v1158 = vsel %vm427, %v416, 0
      %v1161 = vsel %vm427, %v417, 0
      %v1164 = vsel %vm427, %v418, 0
      %v1167 = vsel %vm427, %v419, 0
      %v1170 = vsel %vm518, %v1072, 0
      %1172 = vmatprep.subr.mxu0 0.0
      %1173 = vmatpush1.msra.mxu0 %v1170
      %1174 = vmatprep.subr.mxu0 0.0
      %1175 = vmatpush1.msra.mxu0 0.0
      %1176 = vmatprep.subr.mxu0 0.0
      %1177 = vmatpush1.msra.mxu0 0.0
      %1178 = vmatprep.subr.mxu0 0.0
      %1179 = vmatpush1.msra.mxu0 0.0
      %1180 = vmatprep.subr.mxu0 0.0
      %1181 = vmatpush1.msra.mxu0 0.0
      %1182 = vmatprep.subr.mxu0 0.0
      %1183 = vmatpush1.msra.mxu0 0.0
      %1184 = vmatprep.subr.mxu0 0.0
      %1185 = vmatpush1.msra.mxu0 0.0
      %1186 = vmatprep.subr.mxu0 0.0
      %1187 = vmatpush1.msra.mxu0 0.0
      %1188 = vmatprep.subr.mxu0 0.0
      %1189 = vmatpush1.msra.mxu0 0.0
      %1190 = vmatprep.subr.mxu0 0.0
      %1191 = vmatpush1.msra.mxu0 0.0
      %1192 = vmatprep.subr.mxu0 0.0
      %1193 = vmatpush1.msra.mxu0 0.0
      %1194 = vmatprep.subr.mxu0 0.0
      %1195 = vmatpush1.msra.mxu0 0.0
      %1196 = vmatprep.subr.mxu0 0.0
      %1197 = vmatpush1.msra.mxu0 0.0
      %1198 = vmatprep.subr.mxu0 0.0
      %1199 = vmatpush1.msra.mxu0 0.0
      %1200 = vmatprep.subr.mxu0 0.0
      %1201 = vmatpush1.msra.mxu0 0.0
      %1202 = vmatprep.subr.mxu0 0.0
      %1203 = vmatpush1.msra.mxu0 0.0
      %1204 = vmatprep.subr.mxu0 0.0
      %1205 = vmatpush1.msra.mxu0 0.0
      %1206 = vmatprep.subr.mxu0 0.0
      %1207 = vmatpush1.msra.mxu0 0.0
      %1208 = vmatprep.subr.mxu0 0.0
      %1209 = vmatpush1.msra.mxu0 0.0
      %1210 = vmatprep.subr.mxu0 0.0
      %1211 = vmatpush1.msra.mxu0 0.0
      %1212 = vmatprep.subr.mxu0 0.0
      %1213 = vmatpush1.msra.mxu0 0.0
      %1214 = vmatprep.subr.mxu0 0.0
      %1215 = vmatpush1.msra.mxu0 0.0
      %1216 = vmatprep.subr.mxu0 0.0
      %1217 = vmatpush1.msra.mxu0 0.0
      %1218 = vmatprep.subr.mxu0 0.0
      %1219 = vmatpush1.msra.mxu0 0.0
      %1220 = vmatprep.subr.mxu0 0.0
      %1221 = vmatpush1.msra.mxu0 0.0
      %1222 = vmatprep.subr.mxu0 0.0
      %1223 = vmatpush1.msra.mxu0 0.0
      %1224 = vmatprep.subr.mxu0 0.0
      %1225 = vmatpush1.msra.mxu0 0.0
      %1226 = vmatprep.subr.mxu0 0.0
      %1227 = vmatpush1.msra.mxu0 0.0
      %1228 = vmatprep.subr.mxu0 0.0
      %1229 = vmatpush1.msra.mxu0 0.0
      %1230 = vmatprep.subr.mxu0 0.0
      %1231 = vmatpush1.msra.mxu0 0.0
      %1232 = vmatprep.subr.mxu0 0.0
      %1233 = vmatpush1.msra.mxu0 0.0
      %1234 = vmatprep.subr.mxu0 0.0
      %1235 = vmatpush1.msra.mxu0 0.0
      %1236 = vmatprep.mubr.f32.mxu0 0.0
      %1237 = vmatmul.mubr.f32.gmra.mrb[0].mxu0 %v1074
      %v1238 = vpop.f32.mrb[0].mxu0
      %v1239 = vadd.f32 0.0, %v1238
      %v1240 = vpop.f32.mrb[0].mxu0
      %1241 = vmatprep.mubr.f32.mxu0 0.0
      %1242 = vmatmul.mubr.f32.gmra.mrb[0].mxu0 %v1077
      %v1243 = vpop.f32.mrb[0].mxu0
      %v1244 = vadd.f32 0.0, %v1243
      %v1245 = vpop.f32.mrb[0].mxu0
      %1246 = vmatprep.mubr.f32.mxu0 0.0
      %1247 = vmatmul.mubr.f32.gmra.mrb[0].mxu0 %v1080
      %v1248 = vpop.f32.mrb[0].mxu0
      %v1249 = vadd.f32 0.0, %v1248
      %v1250 = vpop.f32.mrb[0].mxu0
      %1251 = vmatprep.mubr.f32.mxu0 0.0
      %1252 = vmatmul.mubr.f32.gmra.mrb[0].mxu0 %v1083
      %v1253 = vpop.f32.mrb[0].mxu0
      %v1254 = vadd.f32 0.0, %v1253
      %v1255 = vpop.f32.mrb[0].mxu0
      %1256 = vmatprep.mubr.f32.mxu0 0.0
      %1257 = vmatmul.mubr.f32.gmra.mrb[0].mxu0 %v1086
      %v1258 = vpop.f32.mrb[0].mxu0
      %v1259 = vadd.f32 0.0, %v1258
      %v1260 = vpop.f32.mrb[0].mxu0
      %1261 = vmatprep.mubr.f32.mxu0 0.0
      %1262 = vmatmul.mubr.f32.gmra.mrb[0].mxu0 %v1089
      %v1263 = vpop.f32.mrb[0].mxu0
      %v1264 = vadd.f32 0.0, %v1263
      %v1265 = vpop.f32.mrb[0].mxu0
      %1266 = vmatprep.mubr.f32.mxu0 0.0
      %1267 = vmatmul.mubr.f32.gmra.mrb[0].mxu0 %v1092
      %v1268 = vpop.f32.mrb[0].mxu0
      %v1269 = vadd.f32 0.0, %v1268
      %v1270 = vpop.f32.mrb[0].mxu0
      %1271 = vmatprep.mubr.f32.mxu0 0.0
      %1272 = vmatmul.mubr.f32.gmra.mrb[0].mxu0 %v1095
      %v1273 = vpop.f32.mrb[0].mxu0
      %v1274 = vadd.f32 0.0, %v1273
      %v1275 = vpop.f32.mrb[0].mxu0
      %1276 = vmatprep.mubr.f32.mxu0 0.0
      %1277 = vmatmul.mubr.f32.gmra.mrb[0].mxu0 %v1098
      %v1278 = vpop.f32.mrb[0].mxu0
      %v1279 = vadd.f32 0.0, %v1278
      %v1280 = vpop.f32.mrb[0].mxu0
      %1281 = vmatprep.mubr.f32.mxu0 0.0
      %1282 = vmatmul.mubr.f32.gmra.mrb[0].mxu0 %v1101
      %v1283 = vpop.f32.mrb[0].mxu0
      %v1284 = vadd.f32 0.0, %v1283
      %v1285 = vpop.f32.mrb[0].mxu0
      %1286 = vmatprep.mubr.f32.mxu0 0.0
      %1287 = vmatmul.mubr.f32.gmra.mrb[0].mxu0 %v1104
      %v1288 = vpop.f32.mrb[0].mxu0
      %v1289 = vadd.f32 0.0, %v1288
      %v1290 = vpop.f32.mrb[0].mxu0
      %1291 = vmatprep.mubr.f32.mxu0 0.0
      %1292 = vmatmul.mubr.f32.gmra.mrb[0].mxu0 %v1107
      %v1293 = vpop.f32.mrb[0].mxu0
      %v1294 = vadd.f32 0.0, %v1293
      %v1295 = vpop.f32.mrb[0].mxu0
      %1296 = vmatprep.mubr.f32.mxu0 0.0
      %1297 = vmatmul.mubr.f32.gmra.mrb[0].mxu0 %v1110
      %v1298 = vpop.f32.mrb[0].mxu0
      %v1299 = vadd.f32 0.0, %v1298
      %v1300 = vpop.f32.mrb[0].mxu0
      %1301 = vmatprep.mubr.f32.mxu0 0.0
      %1302 = vmatmul.mubr.f32.gmra.mrb[0].mxu0 %v1113
      %v1303 = vpop.f32.mrb[0].mxu0
      %v1304 = vadd.f32 0.0, %v1303
      %v1305 = vpop.f32.mrb[0].mxu0
      %1306 = vmatprep.mubr.f32.mxu0 0.0
      %1307 = vmatmul.mubr.f32.gmra.mrb[0].mxu0 %v1116
      %v1308 = vpop.f32.mrb[0].mxu0
      %v1309 = vadd.f32 0.0, %v1308
      %v1310 = vpop.f32.mrb[0].mxu0
      %1311 = vmatprep.mubr.f32.mxu0 0.0
      %1312 = vmatmul.mubr.f32.gmra.mrb[0].mxu0 %v1119
      %v1313 = vpop.f32.mrb[0].mxu0
      %v1314 = vadd.f32 0.0, %v1313
      %v1315 = vpop.f32.mrb[0].mxu0
      %1316 = vmatprep.mubr.f32.mxu0 0.0
      %1317 = vmatmul.mubr.f32.gmra.mrb[0].mxu0 %v1122
      %v1318 = vpop.f32.mrb[0].mxu0
      %v1319 = vadd.f32 0.0, %v1318
      %v1320 = vpop.f32.mrb[0].mxu0
      %1321 = vmatprep.mubr.f32.mxu0 0.0
      %1322 = vmatmul.mubr.f32.gmra.mrb[0].mxu0 %v1125
      %v1323 = vpop.f32.mrb[0].mxu0
      %v1324 = vadd.f32 0.0, %v1323
      %v1325 = vpop.f32.mrb[0].mxu0
      %1326 = vmatprep.mubr.f32.mxu0 0.0
      %1327 = vmatmul.mubr.f32.gmra.mrb[0].mxu0 %v1128
      %v1328 = vpop.f32.mrb[0].mxu0
      %v1329 = vadd.f32 0.0, %v1328
      %v1330 = vpop.f32.mrb[0].mxu0
      %1331 = vmatprep.mubr.f32.mxu0 0.0
      %1332 = vmatmul.mubr.f32.gmra.mrb[0].mxu0 %v1131
      %v1333 = vpop.f32.mrb[0].mxu0
      %v1334 = vadd.f32 0.0, %v1333
      %v1335 = vpop.f32.mrb[0].mxu0
      %1336 = vmatprep.mubr.f32.mxu0 0.0
      %1337 = vmatmul.mubr.f32.gmra.mrb[0].mxu0 %v1134
      %v1338 = vpop.f32.mrb[0].mxu0
      %v1339 = vadd.f32 0.0, %v1338
      %v1340 = vpop.f32.mrb[0].mxu0
      %1341 = vmatprep.mubr.f32.mxu0 0.0
      %1342 = vmatmul.mubr.f32.gmra.mrb[0].mxu0 %v1137
      %v1343 = vpop.f32.mrb[0].mxu0
      %v1344 = vadd.f32 0.0, %v1343
      %v1345 = vpop.f32.mrb[0].mxu0
      %1346 = vmatprep.mubr.f32.mxu0 0.0
      %1347 = vmatmul.mubr.f32.gmra.mrb[0].mxu0 %v1140
      %v1348 = vpop.f32.mrb[0].mxu0
      %v1349 = vadd.f32 0.0, %v1348
      %v1350 = vpop.f32.mrb[0].mxu0
      %1351 = vmatprep.mubr.f32.mxu0 0.0
      %1352 = vmatmul.mubr.f32.gmra.mrb[0].mxu0 %v1143
      %v1353 = vpop.f32.mrb[0].mxu0
      %v1354 = vadd.f32 0.0, %v1353
      %v1355 = vpop.f32.mrb[0].mxu0
      %1356 = vmatprep.mubr.f32.mxu0 0.0
      %1357 = vmatmul.mubr.f32.gmra.mrb[0].mxu0 %v1146
      %v1358 = vpop.f32.mrb[0].mxu0
      %v1359 = vadd.f32 0.0, %v1358
      %v1360 = vpop.f32.mrb[0].mxu0
      %1361 = vmatprep.mubr.f32.mxu0 0.0
      %1362 = vmatmul.mubr.f32.gmra.mrb[0].mxu0 %v1149
      %v1363 = vpop.f32.mrb[0].mxu0
      %v1364 = vadd.f32 0.0, %v1363
      %v1365 = vpop.f32.mrb[0].mxu0
      %1366 = vmatprep.mubr.f32.mxu0 0.0
      %1367 = vmatmul.mubr.f32.gmra.mrb[0].mxu0 %v1152
      %v1368 = vpop.f32.mrb[0].mxu0
      %v1369 = vadd.f32 0.0, %v1368
      %v1370 = vpop.f32.mrb[0].mxu0
      %1371 = vmatprep.mubr.f32.mxu0 0.0
      %1372 = vmatmul.mubr.f32.gmra.mrb[0].mxu0 %v1155
      %v1373 = vpop.f32.mrb[0].mxu0
      %v1374 = vadd.f32 0.0, %v1373
      %v1375 = vpop.f32.mrb[0].mxu0
      %1376 = vmatprep.mubr.f32.mxu0 0.0
      %1377 = vmatmul.mubr.f32.gmra.mrb[0].mxu0 %v1158
      %v1378 = vpop.f32.mrb[0].mxu0
      %v1379 = vadd.f32 0.0, %v1378
      %v1380 = vpop.f32.mrb[0].mxu0
      %1381 = vmatprep.mubr.f32.mxu0 0.0
      %1382 = vmatmul.mubr.f32.gmra.mrb[0].mxu0 %v1161
      %v1383 = vpop.f32.mrb[0].mxu0
      %v1384 = vadd.f32 0.0, %v1383
      %v1385 = vpop.f32.mrb[0].mxu0
      %1386 = vmatprep.mubr.f32.mxu0 0.0
      %1387 = vmatmul.mubr.f32.gmra.mrb[0].mxu0 %v1164
      %v1388 = vpop.f32.mrb[0].mxu0
      %v1389 = vadd.f32 0.0, %v1388
      %v1390 = vpop.f32.mrb[0].mxu0
      %1391 = vmatprep.mubr.f32.mxu0 0.0
      %1392 = vmatmul.mubr.f32.gmra.mrb[0].mxu0 %v1167
      %v1393 = vpop.f32.mrb[0].mxu0
      %v1394 = vadd.f32 0.0, %v1393
      %v1395 = vpop.f32.mrb[0].mxu0
      %1396 = vdwg.mxu0
      %v1397 = vadd.f32 %v913, %v1239
      %v1398 = vadd.f32 %v918, %v1244
      %v1399 = vadd.f32 %v923, %v1249
      %v1400 = vadd.f32 %v928, %v1254
      %v1401 = vadd.f32 %v933, %v1259
      %v1402 = vadd.f32 %v938, %v1264
      %v1403 = vadd.f32 %v943, %v1269
      %v1404 = vadd.f32 %v948, %v1274
      %v1405 = vadd.f32 %v953, %v1279
      %v1406 = vadd.f32 %v958, %v1284
      %v1407 = vadd.f32 %v963, %v1289
      %v1408 = vadd.f32 %v968, %v1294
      %v1409 = vadd.f32 %v973, %v1299
      %v1410 = vadd.f32 %v978, %v1304
      %v1411 = vadd.f32 %v983, %v1309
      %v1412 = vadd.f32 %v988, %v1314
      %v1413 = vadd.f32 %v993, %v1319
      %v1414 = vadd.f32 %v998, %v1324
      %v1415 = vadd.f32 %v1003, %v1329
      %v1416 = vadd.f32 %v1008, %v1334
      %v1417 = vadd.f32 %v1013, %v1339
      %v1418 = vadd.f32 %v1018, %v1344
      %v1419 = vadd.f32 %v1023, %v1349
      %v1420 = vadd.f32 %v1028, %v1354
      %v1421 = vadd.f32 %v1033, %v1359
      %v1422 = vadd.f32 %v1038, %v1364
      %v1423 = vadd.f32 %v1043, %v1369
      %v1424 = vadd.f32 %v1048, %v1374
      %v1425 = vadd.f32 %v1053, %v1379
      %v1426 = vadd.f32 %v1058, %v1384
      %v1427 = vadd.f32 %v1063, %v1389
      %v1428 = vadd.f32 %v1068, %v1394
      %s1429 = scalar_lea.vmem %s1, 12
      %v1430 = vld [vmem:[%s1429] sm:$0xf]
      %v1432 = vsel %vm427, %v380, 0
      %v1435 = vsel %vm427, %v381, 0
      %v1438 = vsel %vm518, %v1430, 0
      %1440 = vmatprep.subr.mxu0 0.0
      %1441 = vmatpush1.msra.mxu0 %v1438
      %1442 = vmatprep.subr.mxu0 0.0
      %1443 = vmatpush1.msra.mxu0 0.0
      %1444 = vmatprep.subr.mxu0 0.0
      %1445 = vmatpush1.msra.mxu0 0.0
      %1446 = vmatprep.subr.mxu0 0.0
      %1447 = vmatpush1.msra.mxu0 0.0
      %1448 = vmatprep.subr.mxu0 0.0
      %1449 = vmatpush1.msra.mxu0 0.0
      %1450 = vmatprep.subr.mxu0 0.0
      %1451 = vmatpush1.msra.mxu0 0.0
      %1452 = vmatprep.subr.mxu0 0.0
      %1453 = vmatpush1.msra.mxu0 0.0
      %1454 = vmatprep.subr.mxu0 0.0
      %1455 = vmatpush1.msra.mxu0 0.0
      %1456 = vmatprep.subr.mxu0 0.0
      %1457 = vmatpush1.msra.mxu0 0.0
      %1458 = vmatprep.subr.mxu0 0.0
      %1459 = vmatpush1.msra.mxu0 0.0
      %1460 = vmatprep.subr.mxu0 0.0
      %1461 = vmatpush1.msra.mxu0 0.0
      %1462 = vmatprep.subr.mxu0 0.0
      %1463 = vmatpush1.msra.mxu0 0.0
      %1464 = vmatprep.subr.mxu0 0.0
      %1465 = vmatpush1.msra.mxu0 0.0
      %1466 = vmatprep.subr.mxu0 0.0
      %1467 = vmatpush1.msra.mxu0 0.0
      %1468 = vmatprep.subr.mxu0 0.0
      %1469 = vmatpush1.msra.mxu0 0.0
      %1470 = vmatprep.subr.mxu0 0.0
      %1471 = vmatpush1.msra.mxu0 0.0
      %1472 = vmatprep.subr.mxu0 0.0
      %1473 = vmatpush1.msra.mxu0 0.0
      %1474 = vmatprep.subr.mxu0 0.0
      %1475 = vmatpush1.msra.mxu0 0.0
      %1476 = vmatprep.subr.mxu0 0.0
      %1477 = vmatpush1.msra.mxu0 0.0
      %1478 = vmatprep.subr.mxu0 0.0
      %1479 = vmatpush1.msra.mxu0 0.0
      %1480 = vmatprep.subr.mxu0 0.0
      %1481 = vmatpush1.msra.mxu0 0.0
      %1482 = vmatprep.subr.mxu0 0.0
      %1483 = vmatpush1.msra.mxu0 0.0
      %1484 = vmatprep.subr.mxu0 0.0
      %1485 = vmatpush1.msra.mxu0 0.0
      %1486 = vmatprep.subr.mxu0 0.0
      %1487 = vmatpush1.msra.mxu0 0.0
      %1488 = vmatprep.subr.mxu0 0.0
      %1489 = vmatpush1.msra.mxu0 0.0
      %1490 = vmatprep.subr.mxu0 0.0
      %1491 = vmatpush1.msra.mxu0 0.0
      %1492 = vmatprep.subr.mxu0 0.0
      %1493 = vmatpush1.msra.mxu0 0.0
      %1494 = vmatprep.subr.mxu0 0.0
      %1495 = vmatpush1.msra.mxu0 0.0
      %1496 = vmatprep.subr.mxu0 0.0
      %1497 = vmatpush1.msra.mxu0 0.0
      %1498 = vmatprep.subr.mxu0 0.0
      %1499 = vmatpush1.msra.mxu0 0.0
      %1500 = vmatprep.subr.mxu0 0.0
      %1501 = vmatpush1.msra.mxu0 0.0
      %1502 = vmatprep.subr.mxu0 0.0
      %1503 = vmatpush1.msra.mxu0 0.0
      %1504 = vmatprep.mubr.f32.mxu0 0.0
      %1505 = vmatmul.mubr.f32.gmra.mrb[0].mxu0 %v754
      %v1506 = vpop.f32.mrb[0].mxu0
      %v1507 = vadd.f32 0.0, %v1506
      %v1508 = vpop.f32.mrb[0].mxu0
      %1509 = vmatprep.mubr.f32.mxu0 0.0
      %1510 = vmatmul.mubr.f32.gmra.mrb[0].mxu0 %v757
      %v1511 = vpop.f32.mrb[0].mxu0
      %v1512 = vadd.f32 0.0, %v1511
      %v1513 = vpop.f32.mrb[0].mxu0
      %1514 = vmatprep.mubr.f32.mxu0 0.0
      %1515 = vmatmul.mubr.f32.gmra.mrb[0].mxu0 %v760
      %v1516 = vpop.f32.mrb[0].mxu0
      %v1517 = vadd.f32 0.0, %v1516
      %v1518 = vpop.f32.mrb[0].mxu0
      %1519 = vmatprep.mubr.f32.mxu0 0.0
      %1520 = vmatmul.mubr.f32.gmra.mrb[0].mxu0 %v763
      %v1521 = vpop.f32.mrb[0].mxu0
      %v1522 = vadd.f32 0.0, %v1521
      %v1523 = vpop.f32.mrb[0].mxu0
      %1524 = vmatprep.mubr.f32.mxu0 0.0
      %1525 = vmatmul.mubr.f32.gmra.mrb[0].mxu0 %v766
      %v1526 = vpop.f32.mrb[0].mxu0
      %v1527 = vadd.f32 0.0, %v1526
      %v1528 = vpop.f32.mrb[0].mxu0
      %1529 = vmatprep.mubr.f32.mxu0 0.0
      %1530 = vmatmul.mubr.f32.gmra.mrb[0].mxu0 %v769
      %v1531 = vpop.f32.mrb[0].mxu0
      %v1532 = vadd.f32 0.0, %v1531
      %v1533 = vpop.f32.mrb[0].mxu0
      %1534 = vmatprep.mubr.f32.mxu0 0.0
      %1535 = vmatmul.mubr.f32.gmra.mrb[0].mxu0 %v772
      %v1536 = vpop.f32.mrb[0].mxu0
      %v1537 = vadd.f32 0.0, %v1536
      %v1538 = vpop.f32.mrb[0].mxu0
      %1539 = vmatprep.mubr.f32.mxu0 0.0
      %1540 = vmatmul.mubr.f32.gmra.mrb[0].mxu0 %v775
      %v1541 = vpop.f32.mrb[0].mxu0
      %v1542 = vadd.f32 0.0, %v1541
      %v1543 = vpop.f32.mrb[0].mxu0
      %1544 = vmatprep.mubr.f32.mxu0 0.0
      %1545 = vmatmul.mubr.f32.gmra.mrb[0].mxu0 %v778
      %v1546 = vpop.f32.mrb[0].mxu0
      %v1547 = vadd.f32 0.0, %v1546
      %v1548 = vpop.f32.mrb[0].mxu0
      %1549 = vmatprep.mubr.f32.mxu0 0.0
      %1550 = vmatmul.mubr.f32.gmra.mrb[0].mxu0 %v781
      %v1551 = vpop.f32.mrb[0].mxu0
      %v1552 = vadd.f32 0.0, %v1551
      %v1553 = vpop.f32.mrb[0].mxu0
      %1554 = vmatprep.mubr.f32.mxu0 0.0
      %1555 = vmatmul.mubr.f32.gmra.mrb[0].mxu0 %v784
      %v1556 = vpop.f32.mrb[0].mxu0
      %v1557 = vadd.f32 0.0, %v1556
      %v1558 = vpop.f32.mrb[0].mxu0
      %1559 = vmatprep.mubr.f32.mxu0 0.0
      %1560 = vmatmul.mubr.f32.gmra.mrb[0].mxu0 %v787
      %v1561 = vpop.f32.mrb[0].mxu0
      %v1562 = vadd.f32 0.0, %v1561
      %v1563 = vpop.f32.mrb[0].mxu0
      %1564 = vmatprep.mubr.f32.mxu0 0.0
      %1565 = vmatmul.mubr.f32.gmra.mrb[0].mxu0 %v790
      %v1566 = vpop.f32.mrb[0].mxu0
      %v1567 = vadd.f32 0.0, %v1566
      %v1568 = vpop.f32.mrb[0].mxu0
      %1569 = vmatprep.mubr.f32.mxu0 0.0
      %1570 = vmatmul.mubr.f32.gmra.mrb[0].mxu0 %v793
      %v1571 = vpop.f32.mrb[0].mxu0
      %v1572 = vadd.f32 0.0, %v1571
      %v1573 = vpop.f32.mrb[0].mxu0
      %1574 = vmatprep.mubr.f32.mxu0 0.0
      %1575 = vmatmul.mubr.f32.gmra.mrb[0].mxu0 %v796
      %v1576 = vpop.f32.mrb[0].mxu0
      %v1577 = vadd.f32 0.0, %v1576
      %v1578 = vpop.f32.mrb[0].mxu0
      %1579 = vmatprep.mubr.f32.mxu0 0.0
      %1580 = vmatmul.mubr.f32.gmra.mrb[0].mxu0 %v799
      %v1581 = vpop.f32.mrb[0].mxu0
      %v1582 = vadd.f32 0.0, %v1581
      %v1583 = vpop.f32.mrb[0].mxu0
      %1584 = vmatprep.mubr.f32.mxu0 0.0
      %1585 = vmatmul.mubr.f32.gmra.mrb[0].mxu0 %v802
      %v1586 = vpop.f32.mrb[0].mxu0
      %v1587 = vadd.f32 0.0, %v1586
      %v1588 = vpop.f32.mrb[0].mxu0
      %1589 = vmatprep.mubr.f32.mxu0 0.0
      %1590 = vmatmul.mubr.f32.gmra.mrb[0].mxu0 %v805
      %v1591 = vpop.f32.mrb[0].mxu0
      %v1592 = vadd.f32 0.0, %v1591
      %v1593 = vpop.f32.mrb[0].mxu0
      %1594 = vmatprep.mubr.f32.mxu0 0.0
      %1595 = vmatmul.mubr.f32.gmra.mrb[0].mxu0 %v808
      %v1596 = vpop.f32.mrb[0].mxu0
      %v1597 = vadd.f32 0.0, %v1596
      %v1598 = vpop.f32.mrb[0].mxu0
      %1599 = vmatprep.mubr.f32.mxu0 0.0
      %1600 = vmatmul.mubr.f32.gmra.mrb[0].mxu0 %v811
      %v1601 = vpop.f32.mrb[0].mxu0
      %v1602 = vadd.f32 0.0, %v1601
      %v1603 = vpop.f32.mrb[0].mxu0
      %1604 = vmatprep.mubr.f32.mxu0 0.0
      %1605 = vmatmul.mubr.f32.gmra.mrb[0].mxu0 %v814
      %v1606 = vpop.f32.mrb[0].mxu0
      %v1607 = vadd.f32 0.0, %v1606
      %v1608 = vpop.f32.mrb[0].mxu0
      %1609 = vmatprep.mubr.f32.mxu0 0.0
      %1610 = vmatmul.mubr.f32.gmra.mrb[0].mxu0 %v817
      %v1611 = vpop.f32.mrb[0].mxu0
      %v1612 = vadd.f32 0.0, %v1611
      %v1613 = vpop.f32.mrb[0].mxu0
      %1614 = vmatprep.mubr.f32.mxu0 0.0
      %1615 = vmatmul.mubr.f32.gmra.mrb[0].mxu0 %v820
      %v1616 = vpop.f32.mrb[0].mxu0
      %v1617 = vadd.f32 0.0, %v1616
      %v1618 = vpop.f32.mrb[0].mxu0
      %1619 = vmatprep.mubr.f32.mxu0 0.0
      %1620 = vmatmul.mubr.f32.gmra.mrb[0].mxu0 %v823
      %v1621 = vpop.f32.mrb[0].mxu0
      %v1622 = vadd.f32 0.0, %v1621
      %v1623 = vpop.f32.mrb[0].mxu0
      %1624 = vmatprep.mubr.f32.mxu0 0.0
      %1625 = vmatmul.mubr.f32.gmra.mrb[0].mxu0 %v826
      %v1626 = vpop.f32.mrb[0].mxu0
      %v1627 = vadd.f32 0.0, %v1626
      %v1628 = vpop.f32.mrb[0].mxu0
      %1629 = vmatprep.mubr.f32.mxu0 0.0
      %1630 = vmatmul.mubr.f32.gmra.mrb[0].mxu0 %v829
      %v1631 = vpop.f32.mrb[0].mxu0
      %v1632 = vadd.f32 0.0, %v1631
      %v1633 = vpop.f32.mrb[0].mxu0
      %1634 = vmatprep.mubr.f32.mxu0 0.0
      %1635 = vmatmul.mubr.f32.gmra.mrb[0].mxu0 %v832
      %v1636 = vpop.f32.mrb[0].mxu0
      %v1637 = vadd.f32 0.0, %v1636
      %v1638 = vpop.f32.mrb[0].mxu0
      %1639 = vmatprep.mubr.f32.mxu0 0.0
      %1640 = vmatmul.mubr.f32.gmra.mrb[0].mxu0 %v835
      %v1641 = vpop.f32.mrb[0].mxu0
      %v1642 = vadd.f32 0.0, %v1641
      %v1643 = vpop.f32.mrb[0].mxu0
      %1644 = vmatprep.mubr.f32.mxu0 0.0
      %1645 = vmatmul.mubr.f32.gmra.mrb[0].mxu0 %v838
      %v1646 = vpop.f32.mrb[0].mxu0
      %v1647 = vadd.f32 0.0, %v1646
      %v1648 = vpop.f32.mrb[0].mxu0
      %1649 = vmatprep.mubr.f32.mxu0 0.0
      %1650 = vmatmul.mubr.f32.gmra.mrb[0].mxu0 %v841
      %v1651 = vpop.f32.mrb[0].mxu0
      %v1652 = vadd.f32 0.0, %v1651
      %v1653 = vpop.f32.mrb[0].mxu0
      %1654 = vmatprep.mubr.f32.mxu0 0.0
      %1655 = vmatmul.mubr.f32.gmra.mrb[0].mxu0 %v1432
      %v1656 = vpop.f32.mrb[0].mxu0
      %v1657 = vadd.f32 0.0, %v1656
      %v1658 = vpop.f32.mrb[0].mxu0
      %1659 = vmatprep.mubr.f32.mxu0 0.0
      %1660 = vmatmul.mubr.f32.gmra.mrb[0].mxu0 %v1435
      %v1661 = vpop.f32.mrb[0].mxu0
      %v1662 = vadd.f32 0.0, %v1661
      %v1663 = vpop.f32.mrb[0].mxu0
      %1664 = vdwg.mxu0
      %v1665 = vadd.f32 %v1397, %v1507
      %v1666 = vadd.f32 %v1398, %v1512
      %v1667 = vadd.f32 %v1399, %v1517
      %v1668 = vadd.f32 %v1400, %v1522
      %v1669 = vadd.f32 %v1401, %v1527
      %v1670 = vadd.f32 %v1402, %v1532
      %v1671 = vadd.f32 %v1403, %v1537
      %v1672 = vadd.f32 %v1404, %v1542
      %v1673 = vadd.f32 %v1405, %v1547
      %v1674 = vadd.f32 %v1406, %v1552
      %v1675 = vadd.f32 %v1407, %v1557
      %v1676 = vadd.f32 %v1408, %v1562
      %v1677 = vadd.f32 %v1409, %v1567
      %v1678 = vadd.f32 %v1410, %v1572
      %v1679 = vadd.f32 %v1411, %v1577
      %v1680 = vadd.f32 %v1412, %v1582
      %v1681 = vadd.f32 %v1413, %v1587
      %v1682 = vadd.f32 %v1414, %v1592
      %v1683 = vadd.f32 %v1415, %v1597
      %v1684 = vadd.f32 %v1416, %v1602
      %v1685 = vadd.f32 %v1417, %v1607
      %v1686 = vadd.f32 %v1418, %v1612
      %v1687 = vadd.f32 %v1419, %v1617
      %v1688 = vadd.f32 %v1420, %v1622
      %v1689 = vadd.f32 %v1421, %v1627
      %v1690 = vadd.f32 %v1422, %v1632
      %v1691 = vadd.f32 %v1423, %v1637
      %v1692 = vadd.f32 %v1424, %v1642
      %v1693 = vadd.f32 %v1425, %v1647
      %v1694 = vadd.f32 %v1426, %v1652
      %v1695 = vadd.f32 %v1427, %v1657
      %v1696 = vadd.f32 %v1428, %v1662
      %s1697 = scalar_lea.vmem %s1, 16
      %v1698 = vld [vmem:[%s1697] sm:$0xf]
      %v1700 = vsel %vm427, %v201, 0
      %v1703 = vsel %vm427, %v202, 0
      %v1706 = vsel %vm518, %v1698, 0
      %1708 = vmatprep.subr.mxu0 0.0
      %1709 = vmatpush1.msra.mxu0 %v1706
      %1710 = vmatprep.subr.mxu0 0.0
      %1711 = vmatpush1.msra.mxu0 0.0
      %1712 = vmatprep.subr.mxu0 0.0
      %1713 = vmatpush1.msra.mxu0 0.0
      %1714 = vmatprep.subr.mxu0 0.0
      %1715 = vmatpush1.msra.mxu0 0.0
      %1716 = vmatprep.subr.mxu0 0.0
      %1717 = vmatpush1.msra.mxu0 0.0
      %1718 = vmatprep.subr.mxu0 0.0
      %1719 = vmatpush1.msra.mxu0 0.0
      %1720 = vmatprep.subr.mxu0 0.0
      %1721 = vmatpush1.msra.mxu0 0.0
      %1722 = vmatprep.subr.mxu0 0.0
      %1723 = vmatpush1.msra.mxu0 0.0
      %1724 = vmatprep.subr.mxu0 0.0
      %1725 = vmatpush1.msra.mxu0 0.0
      %1726 = vmatprep.subr.mxu0 0.0
      %1727 = vmatpush1.msra.mxu0 0.0
      %1728 = vmatprep.subr.mxu0 0.0
      %1729 = vmatpush1.msra.mxu0 0.0
      %1730 = vmatprep.subr.mxu0 0.0
      %1731 = vmatpush1.msra.mxu0 0.0
      %1732 = vmatprep.subr.mxu0 0.0
      %1733 = vmatpush1.msra.mxu0 0.0
      %1734 = vmatprep.subr.mxu0 0.0
      %1735 = vmatpush1.msra.mxu0 0.0
      %1736 = vmatprep.subr.mxu0 0.0
      %1737 = vmatpush1.msra.mxu0 0.0
      %1738 = vmatprep.subr.mxu0 0.0
      %1739 = vmatpush1.msra.mxu0 0.0
      %1740 = vmatprep.subr.mxu0 0.0
      %1741 = vmatpush1.msra.mxu0 0.0
      %1742 = vmatprep.subr.mxu0 0.0
      %1743 = vmatpush1.msra.mxu0 0.0
      %1744 = vmatprep.subr.mxu0 0.0
      %1745 = vmatpush1.msra.mxu0 0.0
      %1746 = vmatprep.subr.mxu0 0.0
      %1747 = vmatpush1.msra.mxu0 0.0
      %1748 = vmatprep.subr.mxu0 0.0
      %1749 = vmatpush1.msra.mxu0 0.0
      %1750 = vmatprep.subr.mxu0 0.0
      %1751 = vmatpush1.msra.mxu0 0.0
      %1752 = vmatprep.subr.mxu0 0.0
      %1753 = vmatpush1.msra.mxu0 0.0
      %1754 = vmatprep.subr.mxu0 0.0
      %1755 = vmatpush1.msra.mxu0 0.0
      %1756 = vmatprep.subr.mxu0 0.0
      %1757 = vmatpush1.msra.mxu0 0.0
      %1758 = vmatprep.subr.mxu0 0.0
      %1759 = vmatpush1.msra.mxu0 0.0
      %1760 = vmatprep.subr.mxu0 0.0
      %1761 = vmatpush1.msra.mxu0 0.0
      %1762 = vmatprep.subr.mxu0 0.0
      %1763 = vmatpush1.msra.mxu0 0.0
      %1764 = vmatprep.subr.mxu0 0.0
      %1765 = vmatpush1.msra.mxu0 0.0
      %1766 = vmatprep.subr.mxu0 0.0
      %1767 = vmatpush1.msra.mxu0 0.0
      %1768 = vmatprep.subr.mxu0 0.0
      %1769 = vmatpush1.msra.mxu0 0.0
      %1770 = vmatprep.subr.mxu0 0.0
      %1771 = vmatpush1.msra.mxu0 0.0
      %1772 = vmatprep.mubr.f32.mxu0 0.0
      %1773 = vmatmul.mubr.f32.gmra.mrb[0].mxu0 %v435
      %v1774 = vpop.f32.mrb[0].mxu0
      %v1775 = vadd.f32 0.0, %v1774
      %v1776 = vpop.f32.mrb[0].mxu0
      %1777 = vmatprep.mubr.f32.mxu0 0.0
      %1778 = vmatmul.mubr.f32.gmra.mrb[0].mxu0 %v438
      %v1779 = vpop.f32.mrb[0].mxu0
      %v1780 = vadd.f32 0.0, %v1779
      %v1781 = vpop.f32.mrb[0].mxu0
      %1782 = vmatprep.mubr.f32.mxu0 0.0
      %1783 = vmatmul.mubr.f32.gmra.mrb[0].mxu0 %v429
      %v1784 = vpop.f32.mrb[0].mxu0
      %v1785 = vadd.f32 0.0, %v1784
      %v1786 = vpop.f32.mrb[0].mxu0
      %1787 = vmatprep.mubr.f32.mxu0 0.0
      %1788 = vmatmul.mubr.f32.gmra.mrb[0].mxu0 %v432
      %v1789 = vpop.f32.mrb[0].mxu0
      %v1790 = vadd.f32 0.0, %v1789
      %v1791 = vpop.f32.mrb[0].mxu0
      %1792 = vmatprep.mubr.f32.mxu0 0.0
      %1793 = vmatmul.mubr.f32.gmra.mrb[0].mxu0 %v441
      %v1794 = vpop.f32.mrb[0].mxu0
      %v1795 = vadd.f32 0.0, %v1794
      %v1796 = vpop.f32.mrb[0].mxu0
      %1797 = vmatprep.mubr.f32.mxu0 0.0
      %1798 = vmatmul.mubr.f32.gmra.mrb[0].mxu0 %v444
      %v1799 = vpop.f32.mrb[0].mxu0
      %v1800 = vadd.f32 0.0, %v1799
      %v1801 = vpop.f32.mrb[0].mxu0
      %1802 = vmatprep.mubr.f32.mxu0 0.0
      %1803 = vmatmul.mubr.f32.gmra.mrb[0].mxu0 %v447
      %v1804 = vpop.f32.mrb[0].mxu0
      %v1805 = vadd.f32 0.0, %v1804
      %v1806 = vpop.f32.mrb[0].mxu0
      %1807 = vmatprep.mubr.f32.mxu0 0.0
      %1808 = vmatmul.mubr.f32.gmra.mrb[0].mxu0 %v450
      %v1809 = vpop.f32.mrb[0].mxu0
      %v1810 = vadd.f32 0.0, %v1809
      %v1811 = vpop.f32.mrb[0].mxu0
      %1812 = vmatprep.mubr.f32.mxu0 0.0
      %1813 = vmatmul.mubr.f32.gmra.mrb[0].mxu0 %v453
      %v1814 = vpop.f32.mrb[0].mxu0
      %v1815 = vadd.f32 0.0, %v1814
      %v1816 = vpop.f32.mrb[0].mxu0
      %1817 = vmatprep.mubr.f32.mxu0 0.0
      %1818 = vmatmul.mubr.f32.gmra.mrb[0].mxu0 %v456
      %v1819 = vpop.f32.mrb[0].mxu0
      %v1820 = vadd.f32 0.0, %v1819
      %v1821 = vpop.f32.mrb[0].mxu0
      %1822 = vmatprep.mubr.f32.mxu0 0.0
      %1823 = vmatmul.mubr.f32.gmra.mrb[0].mxu0 %v459
      %v1824 = vpop.f32.mrb[0].mxu0
      %v1825 = vadd.f32 0.0, %v1824
      %v1826 = vpop.f32.mrb[0].mxu0
      %1827 = vmatprep.mubr.f32.mxu0 0.0
      %1828 = vmatmul.mubr.f32.gmra.mrb[0].mxu0 %v462
      %v1829 = vpop.f32.mrb[0].mxu0
      %v1830 = vadd.f32 0.0, %v1829
      %v1831 = vpop.f32.mrb[0].mxu0
      %1832 = vmatprep.mubr.f32.mxu0 0.0
      %1833 = vmatmul.mubr.f32.gmra.mrb[0].mxu0 %v465
      %v1834 = vpop.f32.mrb[0].mxu0
      %v1835 = vadd.f32 0.0, %v1834
      %v1836 = vpop.f32.mrb[0].mxu0
      %1837 = vmatprep.mubr.f32.mxu0 0.0
      %1838 = vmatmul.mubr.f32.gmra.mrb[0].mxu0 %v468
      %v1839 = vpop.f32.mrb[0].mxu0
      %v1840 = vadd.f32 0.0, %v1839
      %v1841 = vpop.f32.mrb[0].mxu0
      %1842 = vmatprep.mubr.f32.mxu0 0.0
      %1843 = vmatmul.mubr.f32.gmra.mrb[0].mxu0 %v471
      %v1844 = vpop.f32.mrb[0].mxu0
      %v1845 = vadd.f32 0.0, %v1844
      %v1846 = vpop.f32.mrb[0].mxu0
      %1847 = vmatprep.mubr.f32.mxu0 0.0
      %1848 = vmatmul.mubr.f32.gmra.mrb[0].mxu0 %v474
      %v1849 = vpop.f32.mrb[0].mxu0
      %v1850 = vadd.f32 0.0, %v1849
      %v1851 = vpop.f32.mrb[0].mxu0
      %1852 = vmatprep.mubr.f32.mxu0 0.0
      %1853 = vmatmul.mubr.f32.gmra.mrb[0].mxu0 %v477
      %v1854 = vpop.f32.mrb[0].mxu0
      %v1855 = vadd.f32 0.0, %v1854
      %v1856 = vpop.f32.mrb[0].mxu0
      %1857 = vmatprep.mubr.f32.mxu0 0.0
      %1858 = vmatmul.mubr.f32.gmra.mrb[0].mxu0 %v480
      %v1859 = vpop.f32.mrb[0].mxu0
      %v1860 = vadd.f32 0.0, %v1859
      %v1861 = vpop.f32.mrb[0].mxu0
      %1862 = vmatprep.mubr.f32.mxu0 0.0
      %1863 = vmatmul.mubr.f32.gmra.mrb[0].mxu0 %v483
      %v1864 = vpop.f32.mrb[0].mxu0
      %v1865 = vadd.f32 0.0, %v1864
      %v1866 = vpop.f32.mrb[0].mxu0
      %1867 = vmatprep.mubr.f32.mxu0 0.0
      %1868 = vmatmul.mubr.f32.gmra.mrb[0].mxu0 %v486
      %v1869 = vpop.f32.mrb[0].mxu0
      %v1870 = vadd.f32 0.0, %v1869
      %v1871 = vpop.f32.mrb[0].mxu0
      %1872 = vmatprep.mubr.f32.mxu0 0.0
      %1873 = vmatmul.mubr.f32.gmra.mrb[0].mxu0 %v489
      %v1874 = vpop.f32.mrb[0].mxu0
      %v1875 = vadd.f32 0.0, %v1874
      %v1876 = vpop.f32.mrb[0].mxu0
      %1877 = vmatprep.mubr.f32.mxu0 0.0
      %1878 = vmatmul.mubr.f32.gmra.mrb[0].mxu0 %v492
      %v1879 = vpop.f32.mrb[0].mxu0
      %v1880 = vadd.f32 0.0, %v1879
      %v1881 = vpop.f32.mrb[0].mxu0
      %1882 = vmatprep.mubr.f32.mxu0 0.0
      %1883 = vmatmul.mubr.f32.gmra.mrb[0].mxu0 %v495
      %v1884 = vpop.f32.mrb[0].mxu0
      %v1885 = vadd.f32 0.0, %v1884
      %v1886 = vpop.f32.mrb[0].mxu0
      %1887 = vmatprep.mubr.f32.mxu0 0.0
      %1888 = vmatmul.mubr.f32.gmra.mrb[0].mxu0 %v498
      %v1889 = vpop.f32.mrb[0].mxu0
      %v1890 = vadd.f32 0.0, %v1889
      %v1891 = vpop.f32.mrb[0].mxu0
      %1892 = vmatprep.mubr.f32.mxu0 0.0
      %1893 = vmatmul.mubr.f32.gmra.mrb[0].mxu0 %v501
      %v1894 = vpop.f32.mrb[0].mxu0
      %v1895 = vadd.f32 0.0, %v1894
      %v1896 = vpop.f32.mrb[0].mxu0
      %1897 = vmatprep.mubr.f32.mxu0 0.0
      %1898 = vmatmul.mubr.f32.gmra.mrb[0].mxu0 %v504
      %v1899 = vpop.f32.mrb[0].mxu0
      %v1900 = vadd.f32 0.0, %v1899
      %v1901 = vpop.f32.mrb[0].mxu0
      %1902 = vmatprep.mubr.f32.mxu0 0.0
      %1903 = vmatmul.mubr.f32.gmra.mrb[0].mxu0 %v507
      %v1904 = vpop.f32.mrb[0].mxu0
      %v1905 = vadd.f32 0.0, %v1904
      %v1906 = vpop.f32.mrb[0].mxu0
      %1907 = vmatprep.mubr.f32.mxu0 0.0
      %1908 = vmatmul.mubr.f32.gmra.mrb[0].mxu0 %v510
      %v1909 = vpop.f32.mrb[0].mxu0
      %v1910 = vadd.f32 0.0, %v1909
      %v1911 = vpop.f32.mrb[0].mxu0
      %1912 = vmatprep.mubr.f32.mxu0 0.0
      %1913 = vmatmul.mubr.f32.gmra.mrb[0].mxu0 %v513
      %v1914 = vpop.f32.mrb[0].mxu0
      %v1915 = vadd.f32 0.0, %v1914
      %v1916 = vpop.f32.mrb[0].mxu0
      %1917 = vmatprep.mubr.f32.mxu0 0.0
      %1918 = vmatmul.mubr.f32.gmra.mrb[0].mxu0 %v516
      %v1919 = vpop.f32.mrb[0].mxu0
      %v1920 = vadd.f32 0.0, %v1919
      %v1921 = vpop.f32.mrb[0].mxu0
      %1922 = vmatprep.mubr.f32.mxu0 0.0
      %1923 = vmatmul.mubr.f32.gmra.mrb[0].mxu0 %v1700
      %v1924 = vpop.f32.mrb[0].mxu0
      %v1925 = vadd.f32 0.0, %v1924
      %v1926 = vpop.f32.mrb[0].mxu0
      %1927 = vmatprep.mubr.f32.mxu0 0.0
      %1928 = vmatmul.mubr.f32.gmra.mrb[0].mxu0 %v1703
      %v1929 = vpop.f32.mrb[0].mxu0
      %v1930 = vadd.f32 0.0, %v1929
      %v1931 = vpop.f32.mrb[0].mxu0
      %1932 = vdwg.mxu0
      %v1933 = vadd.f32 %v1665, %v1775
      %v1934 = vadd.f32 %v1666, %v1780
      %v1935 = vadd.f32 %v1667, %v1785
      %v1936 = vadd.f32 %v1668, %v1790
      %v1937 = vadd.f32 %v1669, %v1795
      %v1938 = vadd.f32 %v1670, %v1800
      %v1939 = vadd.f32 %v1671, %v1805
      %v1940 = vadd.f32 %v1672, %v1810
      %v1941 = vadd.f32 %v1673, %v1815
      %v1942 = vadd.f32 %v1674, %v1820
      %v1943 = vadd.f32 %v1675, %v1825
      %v1944 = vadd.f32 %v1676, %v1830
      %v1945 = vadd.f32 %v1677, %v1835
      %v1946 = vadd.f32 %v1678, %v1840
      %v1947 = vadd.f32 %v1679, %v1845
      %v1948 = vadd.f32 %v1680, %v1850
      %v1949 = vadd.f32 %v1681, %v1855
      %v1950 = vadd.f32 %v1682, %v1860
      %v1951 = vadd.f32 %v1683, %v1865
      %v1952 = vadd.f32 %v1684, %v1870
      %v1953 = vadd.f32 %v1685, %v1875
      %v1954 = vadd.f32 %v1686, %v1880
      %v1955 = vadd.f32 %v1687, %v1885
      %v1956 = vadd.f32 %v1688, %v1890
      %v1957 = vadd.f32 %v1689, %v1895
      %v1958 = vadd.f32 %v1690, %v1900
      %v1959 = vadd.f32 %v1691, %v1905
      %v1960 = vadd.f32 %v1692, %v1910
      %v1961 = vadd.f32 %v1693, %v1915
      %v1962 = vadd.f32 %v1694, %v1920
      %v1963 = vadd.f32 %v1695, %v1925
      %v1964 = vadd.f32 %v1696, %v1930
      %s1965 = scalar_lea.vmem %s1, 20
      %v1966 = vld [vmem:[%s1965] sm:$0xf]
      %v1968 = vsel %vm427, %v420, 0
      %v1971 = vsel %vm427, %v421, 0
      %v1974 = vsel %vm518, %v1966, 0
      %1976 = vmatprep.subr.mxu0 0.0
      %1977 = vmatpush1.msra.mxu0 %v1974
      %1978 = vmatprep.subr.mxu0 0.0
      %1979 = vmatpush1.msra.mxu0 0.0
      %1980 = vmatprep.subr.mxu0 0.0
      %1981 = vmatpush1.msra.mxu0 0.0
      %1982 = vmatprep.subr.mxu0 0.0
      %1983 = vmatpush1.msra.mxu0 0.0
      %1984 = vmatprep.subr.mxu0 0.0
      %1985 = vmatpush1.msra.mxu0 0.0
      %1986 = vmatprep.subr.mxu0 0.0
      %1987 = vmatpush1.msra.mxu0 0.0
      %1988 = vmatprep.subr.mxu0 0.0
      %1989 = vmatpush1.msra.mxu0 0.0
      %1990 = vmatprep.subr.mxu0 0.0
      %1991 = vmatpush1.msra.mxu0 0.0
      %1992 = vmatprep.subr.mxu0 0.0
      %1993 = vmatpush1.msra.mxu0 0.0
      %1994 = vmatprep.subr.mxu0 0.0
      %1995 = vmatpush1.msra.mxu0 0.0
      %1996 = vmatprep.subr.mxu0 0.0
      %1997 = vmatpush1.msra.mxu0 0.0
      %1998 = vmatprep.subr.mxu0 0.0
      %1999 = vmatpush1.msra.mxu0 0.0
      %2000 = vmatprep.subr.mxu0 0.0
      %2001 = vmatpush1.msra.mxu0 0.0
      %2002 = vmatprep.subr.mxu0 0.0
      %2003 = vmatpush1.msra.mxu0 0.0
      %2004 = vmatprep.subr.mxu0 0.0
      %2005 = vmatpush1.msra.mxu0 0.0
      %2006 = vmatprep.subr.mxu0 0.0
      %2007 = vmatpush1.msra.mxu0 0.0
      %2008 = vmatprep.subr.mxu0 0.0
      %2009 = vmatpush1.msra.mxu0 0.0
      %2010 = vmatprep.subr.mxu0 0.0
      %2011 = vmatpush1.msra.mxu0 0.0
      %2012 = vmatprep.subr.mxu0 0.0
      %2013 = vmatpush1.msra.mxu0 0.0
      %2014 = vmatprep.subr.mxu0 0.0
      %2015 = vmatpush1.msra.mxu0 0.0
      %2016 = vmatprep.subr.mxu0 0.0
      %2017 = vmatpush1.msra.mxu0 0.0
      %2018 = vmatprep.subr.mxu0 0.0
      %2019 = vmatpush1.msra.mxu0 0.0
      %2020 = vmatprep.subr.mxu0 0.0
      %2021 = vmatpush1.msra.mxu0 0.0
      %2022 = vmatprep.subr.mxu0 0.0
      %2023 = vmatpush1.msra.mxu0 0.0
      %2024 = vmatprep.subr.mxu0 0.0
      %2025 = vmatpush1.msra.mxu0 0.0
      %2026 = vmatprep.subr.mxu0 0.0
      %2027 = vmatpush1.msra.mxu0 0.0
      %2028 = vmatprep.subr.mxu0 0.0
      %2029 = vmatpush1.msra.mxu0 0.0
      %2030 = vmatprep.subr.mxu0 0.0
      %2031 = vmatpush1.msra.mxu0 0.0
      %2032 = vmatprep.subr.mxu0 0.0
      %2033 = vmatpush1.msra.mxu0 0.0
      %2034 = vmatprep.subr.mxu0 0.0
      %2035 = vmatpush1.msra.mxu0 0.0
      %2036 = vmatprep.subr.mxu0 0.0
      %2037 = vmatpush1.msra.mxu0 0.0
      %2038 = vmatprep.subr.mxu0 0.0
      %2039 = vmatpush1.msra.mxu0 0.0
      %2040 = vmatprep.mubr.f32.mxu0 0.0
      %2041 = vmatmul.mubr.f32.gmra.mrb[0].mxu0 %v1080
      %v2042 = vpop.f32.mrb[0].mxu0
      %v2043 = vadd.f32 0.0, %v2042
      %v2044 = vpop.f32.mrb[0].mxu0
      %2045 = vmatprep.mubr.f32.mxu0 0.0
      %2046 = vmatmul.mubr.f32.gmra.mrb[0].mxu0 %v1083
      %v2047 = vpop.f32.mrb[0].mxu0
      %v2048 = vadd.f32 0.0, %v2047
      %v2049 = vpop.f32.mrb[0].mxu0
      %2050 = vmatprep.mubr.f32.mxu0 0.0
      %2051 = vmatmul.mubr.f32.gmra.mrb[0].mxu0 %v1086
      %v2052 = vpop.f32.mrb[0].mxu0
      %v2053 = vadd.f32 0.0, %v2052
      %v2054 = vpop.f32.mrb[0].mxu0
      %2055 = vmatprep.mubr.f32.mxu0 0.0
      %2056 = vmatmul.mubr.f32.gmra.mrb[0].mxu0 %v1089
      %v2057 = vpop.f32.mrb[0].mxu0
      %v2058 = vadd.f32 0.0, %v2057
      %v2059 = vpop.f32.mrb[0].mxu0
      %2060 = vmatprep.mubr.f32.mxu0 0.0
      %2061 = vmatmul.mubr.f32.gmra.mrb[0].mxu0 %v1092
      %v2062 = vpop.f32.mrb[0].mxu0
      %v2063 = vadd.f32 0.0, %v2062
      %v2064 = vpop.f32.mrb[0].mxu0
      %2065 = vmatprep.mubr.f32.mxu0 0.0
      %2066 = vmatmul.mubr.f32.gmra.mrb[0].mxu0 %v1095
      %v2067 = vpop.f32.mrb[0].mxu0
      %v2068 = vadd.f32 0.0, %v2067
      %v2069 = vpop.f32.mrb[0].mxu0
      %2070 = vmatprep.mubr.f32.mxu0 0.0
      %2071 = vmatmul.mubr.f32.gmra.mrb[0].mxu0 %v1098
      %v2072 = vpop.f32.mrb[0].mxu0
      %v2073 = vadd.f32 0.0, %v2072
      %v2074 = vpop.f32.mrb[0].mxu0
      %2075 = vmatprep.mubr.f32.mxu0 0.0
      %2076 = vmatmul.mubr.f32.gmra.mrb[0].mxu0 %v1101
      %v2077 = vpop.f32.mrb[0].mxu0
      %v2078 = vadd.f32 0.0, %v2077
      %v2079 = vpop.f32.mrb[0].mxu0
      %2080 = vmatprep.mubr.f32.mxu0 0.0
      %2081 = vmatmul.mubr.f32.gmra.mrb[0].mxu0 %v1104
      %v2082 = vpop.f32.mrb[0].mxu0
      %v2083 = vadd.f32 0.0, %v2082
      %v2084 = vpop.f32.mrb[0].mxu0
      %2085 = vmatprep.mubr.f32.mxu0 0.0
      %2086 = vmatmul.mubr.f32.gmra.mrb[0].mxu0 %v1107
      %v2087 = vpop.f32.mrb[0].mxu0
      %v2088 = vadd.f32 0.0, %v2087
      %v2089 = vpop.f32.mrb[0].mxu0
      %2090 = vmatprep.mubr.f32.mxu0 0.0
      %2091 = vmatmul.mubr.f32.gmra.mrb[0].mxu0 %v1110
      %v2092 = vpop.f32.mrb[0].mxu0
      %v2093 = vadd.f32 0.0, %v2092
      %v2094 = vpop.f32.mrb[0].mxu0
      %2095 = vmatprep.mubr.f32.mxu0 0.0
      %2096 = vmatmul.mubr.f32.gmra.mrb[0].mxu0 %v1113
      %v2097 = vpop.f32.mrb[0].mxu0
      %v2098 = vadd.f32 0.0, %v2097
      %v2099 = vpop.f32.mrb[0].mxu0
      %2100 = vmatprep.mubr.f32.mxu0 0.0
      %2101 = vmatmul.mubr.f32.gmra.mrb[0].mxu0 %v1116
      %v2102 = vpop.f32.mrb[0].mxu0
      %v2103 = vadd.f32 0.0, %v2102
      %v2104 = vpop.f32.mrb[0].mxu0
      %2105 = vmatprep.mubr.f32.mxu0 0.0
      %2106 = vmatmul.mubr.f32.gmra.mrb[0].mxu0 %v1119
      %v2107 = vpop.f32.mrb[0].mxu0
      %v2108 = vadd.f32 0.0, %v2107
      %v2109 = vpop.f32.mrb[0].mxu0
      %2110 = vmatprep.mubr.f32.mxu0 0.0
      %2111 = vmatmul.mubr.f32.gmra.mrb[0].mxu0 %v1122
      %v2112 = vpop.f32.mrb[0].mxu0
      %v2113 = vadd.f32 0.0, %v2112
      %v2114 = vpop.f32.mrb[0].mxu0
      %2115 = vmatprep.mubr.f32.mxu0 0.0
      %2116 = vmatmul.mubr.f32.gmra.mrb[0].mxu0 %v1125
      %v2117 = vpop.f32.mrb[0].mxu0
      %v2118 = vadd.f32 0.0, %v2117
      %v2119 = vpop.f32.mrb[0].mxu0
      %2120 = vmatprep.mubr.f32.mxu0 0.0
      %2121 = vmatmul.mubr.f32.gmra.mrb[0].mxu0 %v1128
      %v2122 = vpop.f32.mrb[0].mxu0
      %v2123 = vadd.f32 0.0, %v2122
      %v2124 = vpop.f32.mrb[0].mxu0
      %2125 = vmatprep.mubr.f32.mxu0 0.0
      %2126 = vmatmul.mubr.f32.gmra.mrb[0].mxu0 %v1131
      %v2127 = vpop.f32.mrb[0].mxu0
      %v2128 = vadd.f32 0.0, %v2127
      %v2129 = vpop.f32.mrb[0].mxu0
      %2130 = vmatprep.mubr.f32.mxu0 0.0
      %2131 = vmatmul.mubr.f32.gmra.mrb[0].mxu0 %v1134
      %v2132 = vpop.f32.mrb[0].mxu0
      %v2133 = vadd.f32 0.0, %v2132
      %v2134 = vpop.f32.mrb[0].mxu0
      %2135 = vmatprep.mubr.f32.mxu0 0.0
      %2136 = vmatmul.mubr.f32.gmra.mrb[0].mxu0 %v1137
      %v2137 = vpop.f32.mrb[0].mxu0
      %v2138 = vadd.f32 0.0, %v2137
      %v2139 = vpop.f32.mrb[0].mxu0
      %2140 = vmatprep.mubr.f32.mxu0 0.0
      %2141 = vmatmul.mubr.f32.gmra.mrb[0].mxu0 %v1140
      %v2142 = vpop.f32.mrb[0].mxu0
      %v2143 = vadd.f32 0.0, %v2142
      %v2144 = vpop.f32.mrb[0].mxu0
      %2145 = vmatprep.mubr.f32.mxu0 0.0
      %2146 = vmatmul.mubr.f32.gmra.mrb[0].mxu0 %v1143
      %v2147 = vpop.f32.mrb[0].mxu0
      %v2148 = vadd.f32 0.0, %v2147
      %v2149 = vpop.f32.mrb[0].mxu0
      %2150 = vmatprep.mubr.f32.mxu0 0.0
      %2151 = vmatmul.mubr.f32.gmra.mrb[0].mxu0 %v1146
      %v2152 = vpop.f32.mrb[0].mxu0
      %v2153 = vadd.f32 0.0, %v2152
      %v2154 = vpop.f32.mrb[0].mxu0
      %2155 = vmatprep.mubr.f32.mxu0 0.0
      %2156 = vmatmul.mubr.f32.gmra.mrb[0].mxu0 %v1149
      %v2157 = vpop.f32.mrb[0].mxu0
      %v2158 = vadd.f32 0.0, %v2157
      %v2159 = vpop.f32.mrb[0].mxu0
      %2160 = vmatprep.mubr.f32.mxu0 0.0
      %2161 = vmatmul.mubr.f32.gmra.mrb[0].mxu0 %v1152
      %v2162 = vpop.f32.mrb[0].mxu0
      %v2163 = vadd.f32 0.0, %v2162
      %v2164 = vpop.f32.mrb[0].mxu0
      %2165 = vmatprep.mubr.f32.mxu0 0.0
      %2166 = vmatmul.mubr.f32.gmra.mrb[0].mxu0 %v1155
      %v2167 = vpop.f32.mrb[0].mxu0
      %v2168 = vadd.f32 0.0, %v2167
      %v2169 = vpop.f32.mrb[0].mxu0
      %2170 = vmatprep.mubr.f32.mxu0 0.0
      %2171 = vmatmul.mubr.f32.gmra.mrb[0].mxu0 %v1158
      %v2172 = vpop.f32.mrb[0].mxu0
      %v2173 = vadd.f32 0.0, %v2172
      %v2174 = vpop.f32.mrb[0].mxu0
      %2175 = vmatprep.mubr.f32.mxu0 0.0
      %2176 = vmatmul.mubr.f32.gmra.mrb[0].mxu0 %v1161
      %v2177 = vpop.f32.mrb[0].mxu0
      %v2178 = vadd.f32 0.0, %v2177
      %v2179 = vpop.f32.mrb[0].mxu0
      %2180 = vmatprep.mubr.f32.mxu0 0.0
      %2181 = vmatmul.mubr.f32.gmra.mrb[0].mxu0 %v1164
      %v2182 = vpop.f32.mrb[0].mxu0
      %v2183 = vadd.f32 0.0, %v2182
      %v2184 = vpop.f32.mrb[0].mxu0
      %2185 = vmatprep.mubr.f32.mxu0 0.0
      %2186 = vmatmul.mubr.f32.gmra.mrb[0].mxu0 %v1167
      %v2187 = vpop.f32.mrb[0].mxu0
      %v2188 = vadd.f32 0.0, %v2187
      %v2189 = vpop.f32.mrb[0].mxu0
      %2190 = vmatprep.mubr.f32.mxu0 0.0
      %2191 = vmatmul.mubr.f32.gmra.mrb[0].mxu0 %v1968
      %v2192 = vpop.f32.mrb[0].mxu0
      %v2193 = vadd.f32 0.0, %v2192
      %v2194 = vpop.f32.mrb[0].mxu0
      %2195 = vmatprep.mubr.f32.mxu0 0.0
      %2196 = vmatmul.mubr.f32.gmra.mrb[0].mxu0 %v1971
      %v2197 = vpop.f32.mrb[0].mxu0
      %v2198 = vadd.f32 0.0, %v2197
      %v2199 = vpop.f32.mrb[0].mxu0
      %2200 = vdwg.mxu0
      %v2201 = vadd.f32 %v1933, %v2043
      %v2202 = vadd.f32 %v1934, %v2048
      %v2203 = vadd.f32 %v1935, %v2053
      %v2204 = vadd.f32 %v1936, %v2058
      %v2205 = vadd.f32 %v1937, %v2063
      %v2206 = vadd.f32 %v1938, %v2068
      %v2207 = vadd.f32 %v1939, %v2073
      %v2208 = vadd.f32 %v1940, %v2078
      %v2209 = vadd.f32 %v1941, %v2083
      %v2210 = vadd.f32 %v1942, %v2088
      %v2211 = vadd.f32 %v1943, %v2093
      %v2212 = vadd.f32 %v1944, %v2098
      %v2213 = vadd.f32 %v1945, %v2103
      %v2214 = vadd.f32 %v1946, %v2108
      %v2215 = vadd.f32 %v1947, %v2113
      %v2216 = vadd.f32 %v1948, %v2118
      %v2217 = vadd.f32 %v1949, %v2123
      %v2218 = vadd.f32 %v1950, %v2128
      %v2219 = vadd.f32 %v1951, %v2133
      %v2220 = vadd.f32 %v1952, %v2138
      %v2221 = vadd.f32 %v1953, %v2143
      %v2222 = vadd.f32 %v1954, %v2148
      %v2223 = vadd.f32 %v1955, %v2153
      %v2224 = vadd.f32 %v1956, %v2158
      %v2225 = vadd.f32 %v1957, %v2163
      %v2226 = vadd.f32 %v1958, %v2168
      %v2227 = vadd.f32 %v1959, %v2173
      %v2228 = vadd.f32 %v1960, %v2178
      %v2229 = vadd.f32 %v1961, %v2183
      %v2230 = vadd.f32 %v1962, %v2188
      %v2231 = vadd.f32 %v1963, %v2193
      %v2232 = vadd.f32 %v1964, %v2198
      %s2233 = scalar_lea.vmem %s1, 24
      %v2234 = vld [vmem:[%s2233] sm:$0xf]
      %v2236 = vsel %vm427, %v382, 0
      %v2239 = vsel %vm427, %v383, 0
      %v2242 = vsel %vm518, %v2234, 0
      %2244 = vmatprep.subr.mxu0 0.0
      %2245 = vmatpush1.msra.mxu0 %v2242
      %2246 = vmatprep.subr.mxu0 0.0
      %2247 = vmatpush1.msra.mxu0 0.0
      %2248 = vmatprep.subr.mxu0 0.0
      %2249 = vmatpush1.msra.mxu0 0.0
      %2250 = vmatprep.subr.mxu0 0.0
      %2251 = vmatpush1.msra.mxu0 0.0
      %2252 = vmatprep.subr.mxu0 0.0
      %2253 = vmatpush1.msra.mxu0 0.0
      %2254 = vmatprep.subr.mxu0 0.0
      %2255 = vmatpush1.msra.mxu0 0.0
      %2256 = vmatprep.subr.mxu0 0.0
      %2257 = vmatpush1.msra.mxu0 0.0
      %2258 = vmatprep.subr.mxu0 0.0
      %2259 = vmatpush1.msra.mxu0 0.0
      %2260 = vmatprep.subr.mxu0 0.0
      %2261 = vmatpush1.msra.mxu0 0.0
      %2262 = vmatprep.subr.mxu0 0.0
      %2263 = vmatpush1.msra.mxu0 0.0
      %2264 = vmatprep.subr.mxu0 0.0
      %2265 = vmatpush1.msra.mxu0 0.0
      %2266 = vmatprep.subr.mxu0 0.0
      %2267 = vmatpush1.msra.mxu0 0.0
      %2268 = vmatprep.subr.mxu0 0.0
      %2269 = vmatpush1.msra.mxu0 0.0
      %2270 = vmatprep.subr.mxu0 0.0
      %2271 = vmatpush1.msra.mxu0 0.0
      %2272 = vmatprep.subr.mxu0 0.0
      %2273 = vmatpush1.msra.mxu0 0.0
      %2274 = vmatprep.subr.mxu0 0.0
      %2275 = vmatpush1.msra.mxu0 0.0
      %2276 = vmatprep.subr.mxu0 0.0
      %2277 = vmatpush1.msra.mxu0 0.0
      %2278 = vmatprep.subr.mxu0 0.0
      %2279 = vmatpush1.msra.mxu0 0.0
      %2280 = vmatprep.subr.mxu0 0.0
      %2281 = vmatpush1.msra.mxu0 0.0
      %2282 = vmatprep.subr.mxu0 0.0
      %2283 = vmatpush1.msra.mxu0 0.0
      %2284 = vmatprep.subr.mxu0 0.0
      %2285 = vmatpush1.msra.mxu0 0.0
      %2286 = vmatprep.subr.mxu0 0.0
      %2287 = vmatpush1.msra.mxu0 0.0
      %2288 = vmatprep.subr.mxu0 0.0
      %2289 = vmatpush1.msra.mxu0 0.0
      %2290 = vmatprep.subr.mxu0 0.0
      %2291 = vmatpush1.msra.mxu0 0.0
      %2292 = vmatprep.subr.mxu0 0.0
      %2293 = vmatpush1.msra.mxu0 0.0
      %2294 = vmatprep.subr.mxu0 0.0
      %2295 = vmatpush1.msra.mxu0 0.0
      %2296 = vmatprep.subr.mxu0 0.0
      %2297 = vmatpush1.msra.mxu0 0.0
      %2298 = vmatprep.subr.mxu0 0.0
      %2299 = vmatpush1.msra.mxu0 0.0
      %2300 = vmatprep.subr.mxu0 0.0
      %2301 = vmatpush1.msra.mxu0 0.0
      %2302 = vmatprep.subr.mxu0 0.0
      %2303 = vmatpush1.msra.mxu0 0.0
      %2304 = vmatprep.subr.mxu0 0.0
      %2305 = vmatpush1.msra.mxu0 0.0
      %2306 = vmatprep.subr.mxu0 0.0
      %2307 = vmatpush1.msra.mxu0 0.0
      %2308 = vmatprep.mubr.f32.mxu0 0.0
      %2309 = vmatmul.mubr.f32.gmra.mrb[0].mxu0 %v760
      %v2310 = vpop.f32.mrb[0].mxu0
      %v2311 = vadd.f32 0.0, %v2310
      %v2312 = vpop.f32.mrb[0].mxu0
      %2313 = vmatprep.mubr.f32.mxu0 0.0
      %2314 = vmatmul.mubr.f32.gmra.mrb[0].mxu0 %v763
      %v2315 = vpop.f32.mrb[0].mxu0
      %v2316 = vadd.f32 0.0, %v2315
      %v2317 = vpop.f32.mrb[0].mxu0
      %2318 = vmatprep.mubr.f32.mxu0 0.0
      %2319 = vmatmul.mubr.f32.gmra.mrb[0].mxu0 %v766
      %v2320 = vpop.f32.mrb[0].mxu0
      %v2321 = vadd.f32 0.0, %v2320
      %v2322 = vpop.f32.mrb[0].mxu0
      %2323 = vmatprep.mubr.f32.mxu0 0.0
      %2324 = vmatmul.mubr.f32.gmra.mrb[0].mxu0 %v769
      %v2325 = vpop.f32.mrb[0].mxu0
      %v2326 = vadd.f32 0.0, %v2325
      %v2327 = vpop.f32.mrb[0].mxu0
      %2328 = vmatprep.mubr.f32.mxu0 0.0
      %2329 = vmatmul.mubr.f32.gmra.mrb[0].mxu0 %v772
      %v2330 = vpop.f32.mrb[0].mxu0
      %v2331 = vadd.f32 0.0, %v2330
      %v2332 = vpop.f32.mrb[0].mxu0
      %2333 = vmatprep.mubr.f32.mxu0 0.0
      %2334 = vmatmul.mubr.f32.gmra.mrb[0].mxu0 %v775
      %v2335 = vpop.f32.mrb[0].mxu0
      %v2336 = vadd.f32 0.0, %v2335
      %v2337 = vpop.f32.mrb[0].mxu0
      %2338 = vmatprep.mubr.f32.mxu0 0.0
      %2339 = vmatmul.mubr.f32.gmra.mrb[0].mxu0 %v778
      %v2340 = vpop.f32.mrb[0].mxu0
      %v2341 = vadd.f32 0.0, %v2340
      %v2342 = vpop.f32.mrb[0].mxu0
      %2343 = vmatprep.mubr.f32.mxu0 0.0
      %2344 = vmatmul.mubr.f32.gmra.mrb[0].mxu0 %v781
      %v2345 = vpop.f32.mrb[0].mxu0
      %v2346 = vadd.f32 0.0, %v2345
      %v2347 = vpop.f32.mrb[0].mxu0
      %2348 = vmatprep.mubr.f32.mxu0 0.0
      %2349 = vmatmul.mubr.f32.gmra.mrb[0].mxu0 %v784
      %v2350 = vpop.f32.mrb[0].mxu0
      %v2351 = vadd.f32 0.0, %v2350
      %v2352 = vpop.f32.mrb[0].mxu0
      %2353 = vmatprep.mubr.f32.mxu0 0.0
      %2354 = vmatmul.mubr.f32.gmra.mrb[0].mxu0 %v787
      %v2355 = vpop.f32.mrb[0].mxu0
      %v2356 = vadd.f32 0.0, %v2355
      %v2357 = vpop.f32.mrb[0].mxu0
      %2358 = vmatprep.mubr.f32.mxu0 0.0
      %2359 = vmatmul.mubr.f32.gmra.mrb[0].mxu0 %v790
      %v2360 = vpop.f32.mrb[0].mxu0
      %v2361 = vadd.f32 0.0, %v2360
      %v2362 = vpop.f32.mrb[0].mxu0
      %2363 = vmatprep.mubr.f32.mxu0 0.0
      %2364 = vmatmul.mubr.f32.gmra.mrb[0].mxu0 %v793
      %v2365 = vpop.f32.mrb[0].mxu0
      %v2366 = vadd.f32 0.0, %v2365
      %v2367 = vpop.f32.mrb[0].mxu0
      %2368 = vmatprep.mubr.f32.mxu0 0.0
      %2369 = vmatmul.mubr.f32.gmra.mrb[0].mxu0 %v796
      %v2370 = vpop.f32.mrb[0].mxu0
      %v2371 = vadd.f32 0.0, %v2370
      %v2372 = vpop.f32.mrb[0].mxu0
      %2373 = vmatprep.mubr.f32.mxu0 0.0
      %2374 = vmatmul.mubr.f32.gmra.mrb[0].mxu0 %v799
      %v2375 = vpop.f32.mrb[0].mxu0
      %v2376 = vadd.f32 0.0, %v2375
      %v2377 = vpop.f32.mrb[0].mxu0
      %2378 = vmatprep.mubr.f32.mxu0 0.0
      %2379 = vmatmul.mubr.f32.gmra.mrb[0].mxu0 %v802
      %v2380 = vpop.f32.mrb[0].mxu0
      %v2381 = vadd.f32 0.0, %v2380
      %v2382 = vpop.f32.mrb[0].mxu0
      %2383 = vmatprep.mubr.f32.mxu0 0.0
      %2384 = vmatmul.mubr.f32.gmra.mrb[0].mxu0 %v805
      %v2385 = vpop.f32.mrb[0].mxu0
      %v2386 = vadd.f32 0.0, %v2385
      %v2387 = vpop.f32.mrb[0].mxu0
      %2388 = vmatprep.mubr.f32.mxu0 0.0
      %2389 = vmatmul.mubr.f32.gmra.mrb[0].mxu0 %v808
      %v2390 = vpop.f32.mrb[0].mxu0
      %v2391 = vadd.f32 0.0, %v2390
      %v2392 = vpop.f32.mrb[0].mxu0
      %2393 = vmatprep.mubr.f32.mxu0 0.0
      %2394 = vmatmul.mubr.f32.gmra.mrb[0].mxu0 %v811
      %v2395 = vpop.f32.mrb[0].mxu0
      %v2396 = vadd.f32 0.0, %v2395
      %v2397 = vpop.f32.mrb[0].mxu0
      %2398 = vmatprep.mubr.f32.mxu0 0.0
      %2399 = vmatmul.mubr.f32.gmra.mrb[0].mxu0 %v814
      %v2400 = vpop.f32.mrb[0].mxu0
      %v2401 = vadd.f32 0.0, %v2400
      %v2402 = vpop.f32.mrb[0].mxu0
      %2403 = vmatprep.mubr.f32.mxu0 0.0
      %2404 = vmatmul.mubr.f32.gmra.mrb[0].mxu0 %v817
      %v2405 = vpop.f32.mrb[0].mxu0
      %v2406 = vadd.f32 0.0, %v2405
      %v2407 = vpop.f32.mrb[0].mxu0
      %2408 = vmatprep.mubr.f32.mxu0 0.0
      %2409 = vmatmul.mubr.f32.gmra.mrb[0].mxu0 %v820
      %v2410 = vpop.f32.mrb[0].mxu0
      %v2411 = vadd.f32 0.0, %v2410
      %v2412 = vpop.f32.mrb[0].mxu0
      %2413 = vmatprep.mubr.f32.mxu0 0.0
      %2414 = vmatmul.mubr.f32.gmra.mrb[0].mxu0 %v823
      %v2415 = vpop.f32.mrb[0].mxu0
      %v2416 = vadd.f32 0.0, %v2415
      %v2417 = vpop.f32.mrb[0].mxu0
      %2418 = vmatprep.mubr.f32.mxu0 0.0
      %2419 = vmatmul.mubr.f32.gmra.mrb[0].mxu0 %v826
      %v2420 = vpop.f32.mrb[0].mxu0
      %v2421 = vadd.f32 0.0, %v2420
      %v2422 = vpop.f32.mrb[0].mxu0
      %2423 = vmatprep.mubr.f32.mxu0 0.0
      %2424 = vmatmul.mubr.f32.gmra.mrb[0].mxu0 %v829
      %v2425 = vpop.f32.mrb[0].mxu0
      %v2426 = vadd.f32 0.0, %v2425
      %v2427 = vpop.f32.mrb[0].mxu0
      %2428 = vmatprep.mubr.f32.mxu0 0.0
      %2429 = vmatmul.mubr.f32.gmra.mrb[0].mxu0 %v832
      %v2430 = vpop.f32.mrb[0].mxu0
      %v2431 = vadd.f32 0.0, %v2430
      %v2432 = vpop.f32.mrb[0].mxu0
      %2433 = vmatprep.mubr.f32.mxu0 0.0
      %2434 = vmatmul.mubr.f32.gmra.mrb[0].mxu0 %v835
      %v2435 = vpop.f32.mrb[0].mxu0
      %v2436 = vadd.f32 0.0, %v2435
      %v2437 = vpop.f32.mrb[0].mxu0
      %2438 = vmatprep.mubr.f32.mxu0 0.0
      %2439 = vmatmul.mubr.f32.gmra.mrb[0].mxu0 %v838
      %v2440 = vpop.f32.mrb[0].mxu0
      %v2441 = vadd.f32 0.0, %v2440
      %v2442 = vpop.f32.mrb[0].mxu0
      %2443 = vmatprep.mubr.f32.mxu0 0.0
      %2444 = vmatmul.mubr.f32.gmra.mrb[0].mxu0 %v841
      %v2445 = vpop.f32.mrb[0].mxu0
      %v2446 = vadd.f32 0.0, %v2445
      %v2447 = vpop.f32.mrb[0].mxu0
      %2448 = vmatprep.mubr.f32.mxu0 0.0
      %2449 = vmatmul.mubr.f32.gmra.mrb[0].mxu0 %v1432
      %v2450 = vpop.f32.mrb[0].mxu0
      %v2451 = vadd.f32 0.0, %v2450
      %v2452 = vpop.f32.mrb[0].mxu0
      %2453 = vmatprep.mubr.f32.mxu0 0.0
      %2454 = vmatmul.mubr.f32.gmra.mrb[0].mxu0 %v1435
      %v2455 = vpop.f32.mrb[0].mxu0
      %v2456 = vadd.f32 0.0, %v2455
      %v2457 = vpop.f32.mrb[0].mxu0
      %2458 = vmatprep.mubr.f32.mxu0 0.0
      %2459 = vmatmul.mubr.f32.gmra.mrb[0].mxu0 %v2236
      %v2460 = vpop.f32.mrb[0].mxu0
      %v2461 = vadd.f32 0.0, %v2460
      %v2462 = vpop.f32.mrb[0].mxu0
      %2463 = vmatprep.mubr.f32.mxu0 0.0
      %2464 = vmatmul.mubr.f32.gmra.mrb[0].mxu0 %v2239
      %v2465 = vpop.f32.mrb[0].mxu0
      %v2466 = vadd.f32 0.0, %v2465
      %v2467 = vpop.f32.mrb[0].mxu0
      %2468 = vdwg.mxu0
      %v2469 = vadd.f32 %v2201, %v2311
      %v2470 = vadd.f32 %v2202, %v2316
      %v2471 = vadd.f32 %v2203, %v2321
      %v2472 = vadd.f32 %v2204, %v2326
      %v2473 = vadd.f32 %v2205, %v2331
      %v2474 = vadd.f32 %v2206, %v2336
      %v2475 = vadd.f32 %v2207, %v2341
      %v2476 = vadd.f32 %v2208, %v2346
      %v2477 = vadd.f32 %v2209, %v2351
      %v2478 = vadd.f32 %v2210, %v2356
      %v2479 = vadd.f32 %v2211, %v2361
      %v2480 = vadd.f32 %v2212, %v2366
      %v2481 = vadd.f32 %v2213, %v2371
      %v2482 = vadd.f32 %v2214, %v2376
      %v2483 = vadd.f32 %v2215, %v2381
      %v2484 = vadd.f32 %v2216, %v2386
      %v2485 = vadd.f32 %v2217, %v2391
      %v2486 = vadd.f32 %v2218, %v2396
      %v2487 = vadd.f32 %v2219, %v2401
      %v2488 = vadd.f32 %v2220, %v2406
      %v2489 = vadd.f32 %v2221, %v2411
      %v2490 = vadd.f32 %v2222, %v2416
      %v2491 = vadd.f32 %v2223, %v2421
      %v2492 = vadd.f32 %v2224, %v2426
      %v2493 = vadd.f32 %v2225, %v2431
      %v2494 = vadd.f32 %v2226, %v2436
      %v2495 = vadd.f32 %v2227, %v2441
      %v2496 = vadd.f32 %v2228, %v2446
      %v2497 = vadd.f32 %v2229, %v2451
      %v2498 = vadd.f32 %v2230, %v2456
      %v2499 = vadd.f32 %v2231, %v2461
      %v2500 = vadd.f32 %v2232, %v2466
      %s2501 = scalar_lea.vmem %s1, 28
      %v2502 = vld [vmem:[%s2501] sm:$0xf]
      %v2504 = vsel %vm518, %v2502, 0
      %2506 = vmatprep.subr.mxu0 0.0
      %2507 = vmatpush1.msra.mxu0 %v2504
      %2508 = vmatprep.subr.mxu0 0.0
      %2509 = vmatpush1.msra.mxu0 0.0
      %2510 = vmatprep.subr.mxu0 0.0
      %2511 = vmatpush1.msra.mxu0 0.0
      %2512 = vmatprep.subr.mxu0 0.0
      %2513 = vmatpush1.msra.mxu0 0.0
      %2514 = vmatprep.subr.mxu0 0.0
      %2515 = vmatpush1.msra.mxu0 0.0
      %2516 = vmatprep.subr.mxu0 0.0
      %2517 = vmatpush1.msra.mxu0 0.0
      %2518 = vmatprep.subr.mxu0 0.0
      %2519 = vmatpush1.msra.mxu0 0.0
      %2520 = vmatprep.subr.mxu0 0.0
      %2521 = vmatpush1.msra.mxu0 0.0
      %2522 = vmatprep.subr.mxu0 0.0
      %2523 = vmatpush1.msra.mxu0 0.0
      %2524 = vmatprep.subr.mxu0 0.0
      %2525 = vmatpush1.msra.mxu0 0.0
      %2526 = vmatprep.subr.mxu0 0.0
      %2527 = vmatpush1.msra.mxu0 0.0
      %2528 = vmatprep.subr.mxu0 0.0
      %2529 = vmatpush1.msra.mxu0 0.0
      %2530 = vmatprep.subr.mxu0 0.0
      %2531 = vmatpush1.msra.mxu0 0.0
      %2532 = vmatprep.subr.mxu0 0.0
      %2533 = vmatpush1.msra.mxu0 0.0
      %2534 = vmatprep.subr.mxu0 0.0
      %2535 = vmatpush1.msra.mxu0 0.0
      %2536 = vmatprep.subr.mxu0 0.0
      %2537 = vmatpush1.msra.mxu0 0.0
      %2538 = vmatprep.subr.mxu0 0.0
      %2539 = vmatpush1.msra.mxu0 0.0
      %2540 = vmatprep.subr.mxu0 0.0
      %2541 = vmatpush1.msra.mxu0 0.0
      %2542 = vmatprep.subr.mxu0 0.0
      %2543 = vmatpush1.msra.mxu0 0.0
      %2544 = vmatprep.subr.mxu0 0.0
      %2545 = vmatpush1.msra.mxu0 0.0
      %2546 = vmatprep.subr.mxu0 0.0
      %2547 = vmatpush1.msra.mxu0 0.0
      %2548 = vmatprep.subr.mxu0 0.0
      %2549 = vmatpush1.msra.mxu0 0.0
      %2550 = vmatprep.subr.mxu0 0.0
      %2551 = vmatpush1.msra.mxu0 0.0
      %2552 = vmatprep.subr.mxu0 0.0
      %2553 = vmatpush1.msra.mxu0 0.0
      %2554 = vmatprep.subr.mxu0 0.0
      %2555 = vmatpush1.msra.mxu0 0.0
      %2556 = vmatprep.subr.mxu0 0.0
      %2557 = vmatpush1.msra.mxu0 0.0
      %2558 = vmatprep.subr.mxu0 0.0
      %2559 = vmatpush1.msra.mxu0 0.0
      %2560 = vmatprep.subr.mxu0 0.0
      %2561 = vmatpush1.msra.mxu0 0.0
      %2562 = vmatprep.subr.mxu0 0.0
      %2563 = vmatpush1.msra.mxu0 0.0
      %2564 = vmatprep.subr.mxu0 0.0
      %2565 = vmatpush1.msra.mxu0 0.0
      %2566 = vmatprep.subr.mxu0 0.0
      %2567 = vmatpush1.msra.mxu0 0.0
      %2568 = vmatprep.subr.mxu0 0.0
      %2569 = vmatpush1.msra.mxu0 0.0
      %2570 = vmatprep.mubr.f32.mxu0 0.0
      %2571 = vmatmul.mubr.f32.gmra.mrb[0].mxu0 %v429
      %v2572 = vpop.f32.mrb[0].mxu0
      %v2573 = vadd.f32 0.0, %v2572
      %v2574 = vpop.f32.mrb[0].mxu0
      %2575 = vmatprep.mubr.f32.mxu0 0.0
      %2576 = vmatmul.mubr.f32.gmra.mrb[0].mxu0 %v432
      %v2577 = vpop.f32.mrb[0].mxu0
      %v2578 = vadd.f32 0.0, %v2577
      %v2579 = vpop.f32.mrb[0].mxu0
      %2580 = vmatprep.mubr.f32.mxu0 0.0
      %2581 = vmatmul.mubr.f32.gmra.mrb[0].mxu0 %v441
      %v2582 = vpop.f32.mrb[0].mxu0
      %v2583 = vadd.f32 0.0, %v2582
      %v2584 = vpop.f32.mrb[0].mxu0
      %2585 = vmatprep.mubr.f32.mxu0 0.0
      %2586 = vmatmul.mubr.f32.gmra.mrb[0].mxu0 %v444
      %v2587 = vpop.f32.mrb[0].mxu0
      %v2588 = vadd.f32 0.0, %v2587
      %v2589 = vpop.f32.mrb[0].mxu0
      %2590 = vmatprep.mubr.f32.mxu0 0.0
      %2591 = vmatmul.mubr.f32.gmra.mrb[0].mxu0 %v447
      %v2592 = vpop.f32.mrb[0].mxu0
      %v2593 = vadd.f32 0.0, %v2592
      %v2594 = vpop.f32.mrb[0].mxu0
      %2595 = vmatprep.mubr.f32.mxu0 0.0
      %2596 = vmatmul.mubr.f32.gmra.mrb[0].mxu0 %v450
      %v2597 = vpop.f32.mrb[0].mxu0
      %v2598 = vadd.f32 0.0, %v2597
      %v2599 = vpop.f32.mrb[0].mxu0
      %2600 = vmatprep.mubr.f32.mxu0 0.0
      %2601 = vmatmul.mubr.f32.gmra.mrb[0].mxu0 %v453
      %v2602 = vpop.f32.mrb[0].mxu0
      %v2603 = vadd.f32 0.0, %v2602
      %v2604 = vpop.f32.mrb[0].mxu0
      %2605 = vmatprep.mubr.f32.mxu0 0.0
      %2606 = vmatmul.mubr.f32.gmra.mrb[0].mxu0 %v456
      %v2607 = vpop.f32.mrb[0].mxu0
      %v2608 = vadd.f32 0.0, %v2607
      %v2609 = vpop.f32.mrb[0].mxu0
      %2610 = vmatprep.mubr.f32.mxu0 0.0
      %2611 = vmatmul.mubr.f32.gmra.mrb[0].mxu0 %v459
      %v2612 = vpop.f32.mrb[0].mxu0
      %v2613 = vadd.f32 0.0, %v2612
      %v2614 = vpop.f32.mrb[0].mxu0
      %2615 = vmatprep.mubr.f32.mxu0 0.0
      %2616 = vmatmul.mubr.f32.gmra.mrb[0].mxu0 %v462
      %v2617 = vpop.f32.mrb[0].mxu0
      %v2618 = vadd.f32 0.0, %v2617
      %v2619 = vpop.f32.mrb[0].mxu0
      %2620 = vmatprep.mubr.f32.mxu0 0.0
      %2621 = vmatmul.mubr.f32.gmra.mrb[0].mxu0 %v465
      %v2622 = vpop.f32.mrb[0].mxu0
      %v2623 = vadd.f32 0.0, %v2622
      %v2624 = vpop.f32.mrb[0].mxu0
      %2625 = vmatprep.mubr.f32.mxu0 0.0
      %2626 = vmatmul.mubr.f32.gmra.mrb[0].mxu0 %v468
      %v2627 = vpop.f32.mrb[0].mxu0
      %v2628 = vadd.f32 0.0, %v2627
      %v2629 = vpop.f32.mrb[0].mxu0
      %2630 = vmatprep.mubr.f32.mxu0 0.0
      %2631 = vmatmul.mubr.f32.gmra.mrb[0].mxu0 %v471
      %v2632 = vpop.f32.mrb[0].mxu0
      %v2633 = vadd.f32 0.0, %v2632
      %v2634 = vpop.f32.mrb[0].mxu0
      %2635 = vmatprep.mubr.f32.mxu0 0.0
      %2636 = vmatmul.mubr.f32.gmra.mrb[0].mxu0 %v474
      %v2637 = vpop.f32.mrb[0].mxu0
      %v2638 = vadd.f32 0.0, %v2637
      %v2639 = vpop.f32.mrb[0].mxu0
      %2640 = vmatprep.mubr.f32.mxu0 0.0
      %2641 = vmatmul.mubr.f32.gmra.mrb[0].mxu0 %v477
      %v2642 = vpop.f32.mrb[0].mxu0
      %v2643 = vadd.f32 0.0, %v2642
      %v2644 = vpop.f32.mrb[0].mxu0
      %2645 = vmatprep.mubr.f32.mxu0 0.0
      %2646 = vmatmul.mubr.f32.gmra.mrb[0].mxu0 %v480
      %v2647 = vpop.f32.mrb[0].mxu0
      %v2648 = vadd.f32 0.0, %v2647
      %v2649 = vpop.f32.mrb[0].mxu0
      %2650 = vmatprep.mubr.f32.mxu0 0.0
      %2651 = vmatmul.mubr.f32.gmra.mrb[0].mxu0 %v483
      %v2652 = vpop.f32.mrb[0].mxu0
      %v2653 = vadd.f32 0.0, %v2652
      %v2654 = vpop.f32.mrb[0].mxu0
      %2655 = vmatprep.mubr.f32.mxu0 0.0
      %2656 = vmatmul.mubr.f32.gmra.mrb[0].mxu0 %v486
      %v2657 = vpop.f32.mrb[0].mxu0
      %v2658 = vadd.f32 0.0, %v2657
      %v2659 = vpop.f32.mrb[0].mxu0
      %2660 = vmatprep.mubr.f32.mxu0 0.0
      %2661 = vmatmul.mubr.f32.gmra.mrb[0].mxu0 %v489
      %v2662 = vpop.f32.mrb[0].mxu0
      %v2663 = vadd.f32 0.0, %v2662
      %v2664 = vpop.f32.mrb[0].mxu0
      %2665 = vmatprep.mubr.f32.mxu0 0.0
      %2666 = vmatmul.mubr.f32.gmra.mrb[0].mxu0 %v492
      %v2667 = vpop.f32.mrb[0].mxu0
      %v2668 = vadd.f32 0.0, %v2667
      %v2669 = vpop.f32.mrb[0].mxu0
      %2670 = vmatprep.mubr.f32.mxu0 0.0
      %2671 = vmatmul.mubr.f32.gmra.mrb[0].mxu0 %v495
      %v2672 = vpop.f32.mrb[0].mxu0
      %v2673 = vadd.f32 0.0, %v2672
      %v2674 = vpop.f32.mrb[0].mxu0
      %2675 = vmatprep.mubr.f32.mxu0 0.0
      %2676 = vmatmul.mubr.f32.gmra.mrb[0].mxu0 %v498
      %v2677 = vpop.f32.mrb[0].mxu0
      %v2678 = vadd.f32 0.0, %v2677
      %v2679 = vpop.f32.mrb[0].mxu0
      %2680 = vmatprep.mubr.f32.mxu0 0.0
      %2681 = vmatmul.mubr.f32.gmra.mrb[0].mxu0 %v501
      %v2682 = vpop.f32.mrb[0].mxu0
      %v2683 = vadd.f32 0.0, %v2682
      %v2684 = vpop.f32.mrb[0].mxu0
      %2685 = vmatprep.mubr.f32.mxu0 0.0
      %2686 = vmatmul.mubr.f32.gmra.mrb[0].mxu0 %v504
      %v2687 = vpop.f32.mrb[0].mxu0
      %v2688 = vadd.f32 0.0, %v2687
      %v2689 = vpop.f32.mrb[0].mxu0
      %2690 = vmatprep.mubr.f32.mxu0 0.0
      %2691 = vmatmul.mubr.f32.gmra.mrb[0].mxu0 %v507
      %v2692 = vpop.f32.mrb[0].mxu0
      %v2693 = vadd.f32 0.0, %v2692
      %v2694 = vpop.f32.mrb[0].mxu0
      %2695 = vmatprep.mubr.f32.mxu0 0.0
      %2696 = vmatmul.mubr.f32.gmra.mrb[0].mxu0 %v510
      %v2697 = vpop.f32.mrb[0].mxu0
      %v2698 = vadd.f32 0.0, %v2697
      %v2699 = vpop.f32.mrb[0].mxu0
      %2700 = vmatprep.mubr.f32.mxu0 0.0
      %2701 = vmatmul.mubr.f32.gmra.mrb[0].mxu0 %v513
      %v2702 = vpop.f32.mrb[0].mxu0
      %v2703 = vadd.f32 0.0, %v2702
      %v2704 = vpop.f32.mrb[0].mxu0
      %2705 = vmatprep.mubr.f32.mxu0 0.0
      %2706 = vmatmul.mubr.f32.gmra.mrb[0].mxu0 %v516
      %v2707 = vpop.f32.mrb[0].mxu0
      %v2708 = vadd.f32 0.0, %v2707
      %v2709 = vpop.f32.mrb[0].mxu0
      %2710 = vmatprep.mubr.f32.mxu0 0.0
      %2711 = vmatmul.mubr.f32.gmra.mrb[0].mxu0 %v1700
      %v2712 = vpop.f32.mrb[0].mxu0
      %v2713 = vadd.f32 0.0, %v2712
      %v2714 = vpop.f32.mrb[0].mxu0
      %2715 = vmatprep.mubr.f32.mxu0 0.0
      %2716 = vmatmul.mubr.f32.gmra.mrb[0].mxu0 %v1703
      %v2717 = vpop.f32.mrb[0].mxu0
      %v2718 = vadd.f32 0.0, %v2717
      %v2719 = vpop.f32.mrb[0].mxu0
      %2720 = vmatprep.mubr.f32.mxu0 0.0
      %2721 = vmatmul.mubr.f32.gmra.mrb[0].mxu0 %v513
      %v2722 = vpop.f32.mrb[0].mxu0
      %v2723 = vadd.f32 0.0, %v2722
      %v2724 = vpop.f32.mrb[0].mxu0
      %2725 = vmatprep.mubr.f32.mxu0 0.0
      %2726 = vmatmul.mubr.f32.gmra.mrb[0].mxu0 %v516
      %v2727 = vpop.f32.mrb[0].mxu0
      %v2728 = vadd.f32 0.0, %v2727
      %v2729 = vpop.f32.mrb[0].mxu0
      %2730 = vdwg.mxu0
      %v2731 = vadd.f32 %v2469, %v2573
      %v2732 = vadd.f32 %v2470, %v2578
      %v2733 = vadd.f32 %v2471, %v2583
      %v2734 = vadd.f32 %v2472, %v2588
      %v2735 = vadd.f32 %v2473, %v2593
      %v2736 = vadd.f32 %v2474, %v2598
      %v2737 = vadd.f32 %v2475, %v2603
      %v2738 = vadd.f32 %v2476, %v2608
      %v2739 = vadd.f32 %v2477, %v2613
      %v2740 = vadd.f32 %v2478, %v2618
      %v2741 = vadd.f32 %v2479, %v2623
      %v2742 = vadd.f32 %v2480, %v2628
      %v2743 = vadd.f32 %v2481, %v2633
      %v2744 = vadd.f32 %v2482, %v2638
      %v2745 = vadd.f32 %v2483, %v2643
      %v2746 = vadd.f32 %v2484, %v2648
      %v2747 = vadd.f32 %v2485, %v2653
      %v2748 = vadd.f32 %v2486, %v2658
      %v2749 = vadd.f32 %v2487, %v2663
      %v2750 = vadd.f32 %v2488, %v2668
      %v2751 = vadd.f32 %v2489, %v2673
      %v2752 = vadd.f32 %v2490, %v2678
      %v2753 = vadd.f32 %v2491, %v2683
      %v2754 = vadd.f32 %v2492, %v2688
      %v2755 = vadd.f32 %v2493, %v2693
      %v2756 = vadd.f32 %v2494, %v2698
      %v2757 = vadd.f32 %v2495, %v2703
      %v2758 = vadd.f32 %v2496, %v2708
      %v2759 = vadd.f32 %v2497, %v2713
      %v2760 = vadd.f32 %v2498, %v2718
      %v2761 = vadd.f32 %v2499, %v2723
      %v2762 = vadd.f32 %v2500, %v2728
      %s2763 = scalar_lea.vmem %s1, 32
      %v2764 = vld [vmem:[%s2763] sm:$0xf]
      %v2766 = vsel %vm427, %v422, 0
      %v2769 = vsel %vm427, %v423, 0
      %v2772 = vsel %vm518, %v2764, 0
      %2774 = vmatprep.subr.mxu0 0.0
      %2775 = vmatpush1.msra.mxu0 %v2772
      %2776 = vmatprep.subr.mxu0 0.0
      %2777 = vmatpush1.msra.mxu0 0.0
      %2778 = vmatprep.subr.mxu0 0.0
      %2779 = vmatpush1.msra.mxu0 0.0
      %2780 = vmatprep.subr.mxu0 0.0
      %2781 = vmatpush1.msra.mxu0 0.0
      %2782 = vmatprep.subr.mxu0 0.0
      %2783 = vmatpush1.msra.mxu0 0.0
      %2784 = vmatprep.subr.mxu0 0.0
      %2785 = vmatpush1.msra.mxu0 0.0
      %2786 = vmatprep.subr.mxu0 0.0
      %2787 = vmatpush1.msra.mxu0 0.0
      %2788 = vmatprep.subr.mxu0 0.0
      %2789 = vmatpush1.msra.mxu0 0.0
      %2790 = vmatprep.subr.mxu0 0.0
      %2791 = vmatpush1.msra.mxu0 0.0
      %2792 = vmatprep.subr.mxu0 0.0
      %2793 = vmatpush1.msra.mxu0 0.0
      %2794 = vmatprep.subr.mxu0 0.0
      %2795 = vmatpush1.msra.mxu0 0.0
      %2796 = vmatprep.subr.mxu0 0.0
      %2797 = vmatpush1.msra.mxu0 0.0
      %2798 = vmatprep.subr.mxu0 0.0
      %2799 = vmatpush1.msra.mxu0 0.0
      %2800 = vmatprep.subr.mxu0 0.0
      %2801 = vmatpush1.msra.mxu0 0.0
      %2802 = vmatprep.subr.mxu0 0.0
      %2803 = vmatpush1.msra.mxu0 0.0
      %2804 = vmatprep.subr.mxu0 0.0
      %2805 = vmatpush1.msra.mxu0 0.0
      %2806 = vmatprep.subr.mxu0 0.0
      %2807 = vmatpush1.msra.mxu0 0.0
      %2808 = vmatprep.subr.mxu0 0.0
      %2809 = vmatpush1.msra.mxu0 0.0
      %2810 = vmatprep.subr.mxu0 0.0
      %2811 = vmatpush1.msra.mxu0 0.0
      %2812 = vmatprep.subr.mxu0 0.0
      %2813 = vmatpush1.msra.mxu0 0.0
      %2814 = vmatprep.subr.mxu0 0.0
      %2815 = vmatpush1.msra.mxu0 0.0
      %2816 = vmatprep.subr.mxu0 0.0
      %2817 = vmatpush1.msra.mxu0 0.0
      %2818 = vmatprep.subr.mxu0 0.0
      %2819 = vmatpush1.msra.mxu0 0.0
      %2820 = vmatprep.subr.mxu0 0.0
      %2821 = vmatpush1.msra.mxu0 0.0
      %2822 = vmatprep.subr.mxu0 0.0
      %2823 = vmatpush1.msra.mxu0 0.0
      %2824 = vmatprep.subr.mxu0 0.0
      %2825 = vmatpush1.msra.mxu0 0.0
      %2826 = vmatprep.subr.mxu0 0.0
      %2827 = vmatpush1.msra.mxu0 0.0
      %2828 = vmatprep.subr.mxu0 0.0
      %2829 = vmatpush1.msra.mxu0 0.0
      %2830 = vmatprep.subr.mxu0 0.0
      %2831 = vmatpush1.msra.mxu0 0.0
      %2832 = vmatprep.subr.mxu0 0.0
      %2833 = vmatpush1.msra.mxu0 0.0
      %2834 = vmatprep.subr.mxu0 0.0
      %2835 = vmatpush1.msra.mxu0 0.0
      %2836 = vmatprep.subr.mxu0 0.0
      %2837 = vmatpush1.msra.mxu0 0.0
      %2838 = vmatprep.mubr.f32.mxu0 0.0
      %2839 = vmatmul.mubr.f32.gmra.mrb[0].mxu0 %v1086
      %v2840 = vpop.f32.mrb[0].mxu0
      %v2841 = vadd.f32 0.0, %v2840
      %v2842 = vpop.f32.mrb[0].mxu0
      %2843 = vmatprep.mubr.f32.mxu0 0.0
      %2844 = vmatmul.mubr.f32.gmra.mrb[0].mxu0 %v1089
      %v2845 = vpop.f32.mrb[0].mxu0
      %v2846 = vadd.f32 0.0, %v2845
      %v2847 = vpop.f32.mrb[0].mxu0
      %2848 = vmatprep.mubr.f32.mxu0 0.0
      %2849 = vmatmul.mubr.f32.gmra.mrb[0].mxu0 %v1092
      %v2850 = vpop.f32.mrb[0].mxu0
      %v2851 = vadd.f32 0.0, %v2850
      %v2852 = vpop.f32.mrb[0].mxu0
      %2853 = vmatprep.mubr.f32.mxu0 0.0
      %2854 = vmatmul.mubr.f32.gmra.mrb[0].mxu0 %v1095
      %v2855 = vpop.f32.mrb[0].mxu0
      %v2856 = vadd.f32 0.0, %v2855
      %v2857 = vpop.f32.mrb[0].mxu0
      %2858 = vmatprep.mubr.f32.mxu0 0.0
      %2859 = vmatmul.mubr.f32.gmra.mrb[0].mxu0 %v1098
      %v2860 = vpop.f32.mrb[0].mxu0
      %v2861 = vadd.f32 0.0, %v2860
      %v2862 = vpop.f32.mrb[0].mxu0
      %2863 = vmatprep.mubr.f32.mxu0 0.0
      %2864 = vmatmul.mubr.f32.gmra.mrb[0].mxu0 %v1101
      %v2865 = vpop.f32.mrb[0].mxu0
      %v2866 = vadd.f32 0.0, %v2865
      %v2867 = vpop.f32.mrb[0].mxu0
      %2868 = vmatprep.mubr.f32.mxu0 0.0
      %2869 = vmatmul.mubr.f32.gmra.mrb[0].mxu0 %v1104
      %v2870 = vpop.f32.mrb[0].mxu0
      %v2871 = vadd.f32 0.0, %v2870
      %v2872 = vpop.f32.mrb[0].mxu0
      %2873 = vmatprep.mubr.f32.mxu0 0.0
      %2874 = vmatmul.mubr.f32.gmra.mrb[0].mxu0 %v1107
      %v2875 = vpop.f32.mrb[0].mxu0
      %v2876 = vadd.f32 0.0, %v2875
      %v2877 = vpop.f32.mrb[0].mxu0
      %2878 = vmatprep.mubr.f32.mxu0 0.0
      %2879 = vmatmul.mubr.f32.gmra.mrb[0].mxu0 %v1110
      %v2880 = vpop.f32.mrb[0].mxu0
      %v2881 = vadd.f32 0.0, %v2880
      %v2882 = vpop.f32.mrb[0].mxu0
      %2883 = vmatprep.mubr.f32.mxu0 0.0
      %2884 = vmatmul.mubr.f32.gmra.mrb[0].mxu0 %v1113
      %v2885 = vpop.f32.mrb[0].mxu0
      %v2886 = vadd.f32 0.0, %v2885
      %v2887 = vpop.f32.mrb[0].mxu0
      %2888 = vmatprep.mubr.f32.mxu0 0.0
      %2889 = vmatmul.mubr.f32.gmra.mrb[0].mxu0 %v1116
      %v2890 = vpop.f32.mrb[0].mxu0
      %v2891 = vadd.f32 0.0, %v2890
      %v2892 = vpop.f32.mrb[0].mxu0
      %2893 = vmatprep.mubr.f32.mxu0 0.0
      %2894 = vmatmul.mubr.f32.gmra.mrb[0].mxu0 %v1119
      %v2895 = vpop.f32.mrb[0].mxu0
      %v2896 = vadd.f32 0.0, %v2895
      %v2897 = vpop.f32.mrb[0].mxu0
      %2898 = vmatprep.mubr.f32.mxu0 0.0
      %2899 = vmatmul.mubr.f32.gmra.mrb[0].mxu0 %v1122
      %v2900 = vpop.f32.mrb[0].mxu0
      %v2901 = vadd.f32 0.0, %v2900
      %v2902 = vpop.f32.mrb[0].mxu0
      %2903 = vmatprep.mubr.f32.mxu0 0.0
      %2904 = vmatmul.mubr.f32.gmra.mrb[0].mxu0 %v1125
      %v2905 = vpop.f32.mrb[0].mxu0
      %v2906 = vadd.f32 0.0, %v2905
      %v2907 = vpop.f32.mrb[0].mxu0
      %2908 = vmatprep.mubr.f32.mxu0 0.0
      %2909 = vmatmul.mubr.f32.gmra.mrb[0].mxu0 %v1128
      %v2910 = vpop.f32.mrb[0].mxu0
      %v2911 = vadd.f32 0.0, %v2910
      %v2912 = vpop.f32.mrb[0].mxu0
      %2913 = vmatprep.mubr.f32.mxu0 0.0
      %2914 = vmatmul.mubr.f32.gmra.mrb[0].mxu0 %v1131
      %v2915 = vpop.f32.mrb[0].mxu0
      %v2916 = vadd.f32 0.0, %v2915
      %v2917 = vpop.f32.mrb[0].mxu0
      %2918 = vmatprep.mubr.f32.mxu0 0.0
      %2919 = vmatmul.mubr.f32.gmra.mrb[0].mxu0 %v1134
      %v2920 = vpop.f32.mrb[0].mxu0
      %v2921 = vadd.f32 0.0, %v2920
      %v2922 = vpop.f32.mrb[0].mxu0
      %2923 = vmatprep.mubr.f32.mxu0 0.0
      %2924 = vmatmul.mubr.f32.gmra.mrb[0].mxu0 %v1137
      %v2925 = vpop.f32.mrb[0].mxu0
      %v2926 = vadd.f32 0.0, %v2925
      %v2927 = vpop.f32.mrb[0].mxu0
      %2928 = vmatprep.mubr.f32.mxu0 0.0
      %2929 = vmatmul.mubr.f32.gmra.mrb[0].mxu0 %v1140
      %v2930 = vpop.f32.mrb[0].mxu0
      %v2931 = vadd.f32 0.0, %v2930
      %v2932 = vpop.f32.mrb[0].mxu0
      %2933 = vmatprep.mubr.f32.mxu0 0.0
      %2934 = vmatmul.mubr.f32.gmra.mrb[0].mxu0 %v1143
      %v2935 = vpop.f32.mrb[0].mxu0
      %v2936 = vadd.f32 0.0, %v2935
      %v2937 = vpop.f32.mrb[0].mxu0
      %2938 = vmatprep.mubr.f32.mxu0 0.0
      %2939 = vmatmul.mubr.f32.gmra.mrb[0].mxu0 %v1146
      %v2940 = vpop.f32.mrb[0].mxu0
      %v2941 = vadd.f32 0.0, %v2940
      %v2942 = vpop.f32.mrb[0].mxu0
      %2943 = vmatprep.mubr.f32.mxu0 0.0
      %2944 = vmatmul.mubr.f32.gmra.mrb[0].mxu0 %v1149
      %v2945 = vpop.f32.mrb[0].mxu0
      %v2946 = vadd.f32 0.0, %v2945
      %v2947 = vpop.f32.mrb[0].mxu0
      %2948 = vmatprep.mubr.f32.mxu0 0.0
      %2949 = vmatmul.mubr.f32.gmra.mrb[0].mxu0 %v1152
      %v2950 = vpop.f32.mrb[0].mxu0
      %v2951 = vadd.f32 0.0, %v2950
      %v2952 = vpop.f32.mrb[0].mxu0
      %2953 = vmatprep.mubr.f32.mxu0 0.0
      %2954 = vmatmul.mubr.f32.gmra.mrb[0].mxu0 %v1155
      %v2955 = vpop.f32.mrb[0].mxu0
      %v2956 = vadd.f32 0.0, %v2955
      %v2957 = vpop.f32.mrb[0].mxu0
      %2958 = vmatprep.mubr.f32.mxu0 0.0
      %2959 = vmatmul.mubr.f32.gmra.mrb[0].mxu0 %v1158
      %v2960 = vpop.f32.mrb[0].mxu0
      %v2961 = vadd.f32 0.0, %v2960
      %v2962 = vpop.f32.mrb[0].mxu0
      %2963 = vmatprep.mubr.f32.mxu0 0.0
      %2964 = vmatmul.mubr.f32.gmra.mrb[0].mxu0 %v1161
      %v2965 = vpop.f32.mrb[0].mxu0
      %v2966 = vadd.f32 0.0, %v2965
      %v2967 = vpop.f32.mrb[0].mxu0
      %2968 = vmatprep.mubr.f32.mxu0 0.0
      %2969 = vmatmul.mubr.f32.gmra.mrb[0].mxu0 %v1164
      %v2970 = vpop.f32.mrb[0].mxu0
      %v2971 = vadd.f32 0.0, %v2970
      %v2972 = vpop.f32.mrb[0].mxu0
      %2973 = vmatprep.mubr.f32.mxu0 0.0
      %2974 = vmatmul.mubr.f32.gmra.mrb[0].mxu0 %v1167
      %v2975 = vpop.f32.mrb[0].mxu0
      %v2976 = vadd.f32 0.0, %v2975
      %v2977 = vpop.f32.mrb[0].mxu0
      %2978 = vmatprep.mubr.f32.mxu0 0.0
      %2979 = vmatmul.mubr.f32.gmra.mrb[0].mxu0 %v1968
      %v2980 = vpop.f32.mrb[0].mxu0
      %v2981 = vadd.f32 0.0, %v2980
      %v2982 = vpop.f32.mrb[0].mxu0
      %2983 = vmatprep.mubr.f32.mxu0 0.0
      %2984 = vmatmul.mubr.f32.gmra.mrb[0].mxu0 %v1971
      %v2985 = vpop.f32.mrb[0].mxu0
      %v2986 = vadd.f32 0.0, %v2985
      %v2987 = vpop.f32.mrb[0].mxu0
      %2988 = vmatprep.mubr.f32.mxu0 0.0
      %2989 = vmatmul.mubr.f32.gmra.mrb[0].mxu0 %v2766
      %v2990 = vpop.f32.mrb[0].mxu0
      %v2991 = vadd.f32 0.0, %v2990
      %v2992 = vpop.f32.mrb[0].mxu0
      %2993 = vmatprep.mubr.f32.mxu0 0.0
      %2994 = vmatmul.mubr.f32.gmra.mrb[0].mxu0 %v2769
      %v2995 = vpop.f32.mrb[0].mxu0
      %v2996 = vadd.f32 0.0, %v2995
      %v2997 = vpop.f32.mrb[0].mxu0
      %2998 = vdwg.mxu0
      %v2999 = vadd.f32 %v2731, %v2841
      %v3000 = vadd.f32 %v2732, %v2846
      %v3001 = vadd.f32 %v2733, %v2851
      %v3002 = vadd.f32 %v2734, %v2856
      %v3003 = vadd.f32 %v2735, %v2861
      %v3004 = vadd.f32 %v2736, %v2866
      %v3005 = vadd.f32 %v2737, %v2871
      %v3006 = vadd.f32 %v2738, %v2876
      %v3007 = vadd.f32 %v2739, %v2881
      %v3008 = vadd.f32 %v2740, %v2886
      %v3009 = vadd.f32 %v2741, %v2891
      %v3010 = vadd.f32 %v2742, %v2896
      %v3011 = vadd.f32 %v2743, %v2901
      %v3012 = vadd.f32 %v2744, %v2906
      %v3013 = vadd.f32 %v2745, %v2911
      %v3014 = vadd.f32 %v2746, %v2916
      %v3015 = vadd.f32 %v2747, %v2921
      %v3016 = vadd.f32 %v2748, %v2926
      %v3017 = vadd.f32 %v2749, %v2931
      %v3018 = vadd.f32 %v2750, %v2936
      %v3019 = vadd.f32 %v2751, %v2941
      %v3020 = vadd.f32 %v2752, %v2946
      %v3021 = vadd.f32 %v2753, %v2951
      %v3022 = vadd.f32 %v2754, %v2956
      %v3023 = vadd.f32 %v2755, %v2961
      %v3024 = vadd.f32 %v2756, %v2966
      %v3025 = vadd.f32 %v2757, %v2971
      %v3026 = vadd.f32 %v2758, %v2976
      %v3027 = vadd.f32 %v2759, %v2981
      %v3028 = vadd.f32 %v2760, %v2986
      %v3029 = vadd.f32 %v2761, %v2991
      %v3030 = vadd.f32 %v2762, %v2996
      %v3031 = vsel %vm427, %v2999, 0.0
      %v3032 = vsel %vm427, %v3000, 0.0
      %v3033 = vadd.f32 %v3031, %v3032
      %v3034 = vsel %vm427, %v3001, 0.0
      %v3035 = vadd.f32 %v3033, %v3034
      %v3036 = vsel %vm427, %v3002, 0.0
      %v3037 = vadd.f32 %v3035, %v3036
      %v3038 = vsel %vm427, %v3003, 0.0
      %v3039 = vadd.f32 %v3037, %v3038
      %v3040 = vsel %vm427, %v3004, 0.0
      %v3041 = vadd.f32 %v3039, %v3040
      %v3042 = vsel %vm427, %v3005, 0.0
      %v3043 = vadd.f32 %v3041, %v3042
      %v3044 = vsel %vm427, %v3006, 0.0
      %v3045 = vadd.f32 %v3043, %v3044
      %v3046 = vsel %vm427, %v3007, 0.0
      %v3047 = vadd.f32 %v3045, %v3046
      %v3048 = vsel %vm427, %v3008, 0.0
      %v3049 = vadd.f32 %v3047, %v3048
      %v3050 = vsel %vm427, %v3009, 0.0
      %v3051 = vadd.f32 %v3049, %v3050
      %v3052 = vsel %vm427, %v3010, 0.0
      %v3053 = vadd.f32 %v3051, %v3052
      %v3054 = vsel %vm427, %v3011, 0.0
      %v3055 = vadd.f32 %v3053, %v3054
      %v3056 = vsel %vm427, %v3012, 0.0
      %v3057 = vadd.f32 %v3055, %v3056
      %v3058 = vsel %vm427, %v3013, 0.0
      %v3059 = vadd.f32 %v3057, %v3058
      %v3060 = vsel %vm427, %v3014, 0.0
      %v3061 = vadd.f32 %v3059, %v3060
      %v3062 = vsel %vm427, %v3015, 0.0
      %v3063 = vadd.f32 %v3061, %v3062
      %v3064 = vsel %vm427, %v3016, 0.0
      %v3065 = vadd.f32 %v3063, %v3064
      %v3066 = vsel %vm427, %v3017, 0.0
      %v3067 = vadd.f32 %v3065, %v3066
      %v3068 = vsel %vm427, %v3018, 0.0
      %v3069 = vadd.f32 %v3067, %v3068
      %v3070 = vsel %vm427, %v3019, 0.0
      %v3071 = vadd.f32 %v3069, %v3070
      %v3072 = vsel %vm427, %v3020, 0.0
      %v3073 = vadd.f32 %v3071, %v3072
      %v3074 = vsel %vm427, %v3021, 0.0
      %v3075 = vadd.f32 %v3073, %v3074
      %v3076 = vsel %vm427, %v3022, 0.0
      %v3077 = vadd.f32 %v3075, %v3076
      %v3078 = vsel %vm427, %v3023, 0.0
      %v3079 = vadd.f32 %v3077, %v3078
      %v3080 = vsel %vm427, %v3024, 0.0
      %v3081 = vadd.f32 %v3079, %v3080
      %v3082 = vsel %vm427, %v3025, 0.0
      %v3083 = vadd.f32 %v3081, %v3082
      %v3084 = vsel %vm427, %v3026, 0.0
      %v3085 = vadd.f32 %v3083, %v3084
      %v3086 = vsel %vm427, %v3027, 0.0
      %v3087 = vadd.f32 %v3085, %v3086
      %v3088 = vsel %vm427, %v3028, 0.0
      %v3089 = vadd.f32 %v3087, %v3088
      %v3090 = vsel %vm427, %v3029, 0.0
      %v3091 = vadd.f32 %v3089, %v3090
      %v3092 = vsel %vm427, %v3030, 0.0
      %v3093 = vadd.f32 %v3091, %v3092
      %v3094 = vrot.slane %v3093, 4
      %v3095 = vadd.f32 %v3093, %v3094
      %v3096 = vrot.slane %v3095, 2
      %v3097 = vadd.f32 %v3095, %v3096
      %v3098 = vrot.slane %v3097, 1
      %v3099 = vadd.f32 %v3097, %v3098
      %v3100 = vmul.f32 %v3099, 0.00390625
      %v3101 = vsub.f32 %v2999, %v3100
      %v3102 = vsub.f32 %v3000, %v3100
      %v3103 = vsub.f32 %v3001, %v3100
      %v3104 = vsub.f32 %v3002, %v3100
      %v3105 = vsub.f32 %v3003, %v3100
      %v3106 = vsub.f32 %v3004, %v3100
      %v3107 = vsub.f32 %v3005, %v3100
      %v3108 = vsub.f32 %v3006, %v3100
      %v3109 = vsub.f32 %v3007, %v3100
      %v3110 = vsub.f32 %v3008, %v3100
      %v3111 = vsub.f32 %v3009, %v3100
      %v3112 = vsub.f32 %v3010, %v3100
      %v3113 = vsub.f32 %v3011, %v3100
      %v3114 = vsub.f32 %v3012, %v3100
      %v3115 = vsub.f32 %v3013, %v3100
      %v3116 = vsub.f32 %v3014, %v3100
      %v3117 = vsub.f32 %v3015, %v3100
      %v3118 = vsub.f32 %v3016, %v3100
      %v3119 = vsub.f32 %v3017, %v3100
      %v3120 = vsub.f32 %v3018, %v3100
      %v3121 = vsub.f32 %v3019, %v3100
      %v3122 = vsub.f32 %v3020, %v3100
      %v3123 = vsub.f32 %v3021, %v3100
      %v3124 = vsub.f32 %v3022, %v3100
      %v3125 = vsub.f32 %v3023, %v3100
      %v3126 = vsub.f32 %v3024, %v3100
      %v3127 = vsub.f32 %v3025, %v3100
      %v3128 = vsub.f32 %v3026, %v3100
      %v3129 = vsub.f32 %v3027, %v3100
      %v3130 = vsub.f32 %v3028, %v3100
      %v3131 = vsub.f32 %v3029, %v3100
      %v3132 = vsub.f32 %v3030, %v3100
      %v3133 = vmul.f32 %v3101, %v3101
      %v3134 = vmul.f32 %v3102, %v3102
      %v3135 = vmul.f32 %v3103, %v3103
      %v3136 = vmul.f32 %v3104, %v3104
      %v3137 = vmul.f32 %v3105, %v3105
      %v3138 = vmul.f32 %v3106, %v3106
      %v3139 = vmul.f32 %v3107, %v3107
      %v3140 = vmul.f32 %v3108, %v3108
      %v3141 = vmul.f32 %v3109, %v3109
      %v3142 = vmul.f32 %v3110, %v3110
      %v3143 = vmul.f32 %v3111, %v3111
      %v3144 = vmul.f32 %v3112, %v3112
      %v3145 = vmul.f32 %v3113, %v3113
      %v3146 = vmul.f32 %v3114, %v3114
      %v3147 = vmul.f32 %v3115, %v3115
      %v3148 = vmul.f32 %v3116, %v3116
      %v3149 = vmul.f32 %v3117, %v3117
      %v3150 = vmul.f32 %v3118, %v3118
      %v3151 = vmul.f32 %v3119, %v3119
      %v3152 = vmul.f32 %v3120, %v3120
      %v3153 = vmul.f32 %v3121, %v3121
      %v3154 = vmul.f32 %v3122, %v3122
      %v3155 = vmul.f32 %v3123, %v3123
      %v3156 = vmul.f32 %v3124, %v3124
      %v3157 = vmul.f32 %v3125, %v3125
      %v3158 = vmul.f32 %v3126, %v3126
      %v3159 = vmul.f32 %v3127, %v3127
      %v3160 = vmul.f32 %v3128, %v3128
      %v3161 = vmul.f32 %v3129, %v3129
      %v3162 = vmul.f32 %v3130, %v3130
      %v3163 = vmul.f32 %v3131, %v3131
      %v3164 = vmul.f32 %v3132, %v3132
      %v3165 = vsel %vm427, %v3133, 0.0
      %v3166 = vsel %vm427, %v3134, 0.0
      %v3167 = vadd.f32 %v3165, %v3166
      %v3168 = vsel %vm427, %v3135, 0.0
      %v3169 = vadd.f32 %v3167, %v3168
      %v3170 = vsel %vm427, %v3136, 0.0
      %v3171 = vadd.f32 %v3169, %v3170
      %v3172 = vsel %vm427, %v3137, 0.0
      %v3173 = vadd.f32 %v3171, %v3172
      %v3174 = vsel %vm427, %v3138, 0.0
      %v3175 = vadd.f32 %v3173, %v3174
      %v3176 = vsel %vm427, %v3139, 0.0
      %v3177 = vadd.f32 %v3175, %v3176
      %v3178 = vsel %vm427, %v3140, 0.0
      %v3179 = vadd.f32 %v3177, %v3178
      %v3180 = vsel %vm427, %v3141, 0.0
      %v3181 = vadd.f32 %v3179, %v3180
      %v3182 = vsel %vm427, %v3142, 0.0
      %v3183 = vadd.f32 %v3181, %v3182
      %v3184 = vsel %vm427, %v3143, 0.0
      %v3185 = vadd.f32 %v3183, %v3184
      %v3186 = vsel %vm427, %v3144, 0.0
      %v3187 = vadd.f32 %v3185, %v3186
      %v3188 = vsel %vm427, %v3145, 0.0
      %v3189 = vadd.f32 %v3187, %v3188
      %v3190 = vsel %vm427, %v3146, 0.0
      %v3191 = vadd.f32 %v3189, %v3190
      %v3192 = vsel %vm427, %v3147, 0.0
      %v3193 = vadd.f32 %v3191, %v3192
      %v3194 = vsel %vm427, %v3148, 0.0
      %v3195 = vadd.f32 %v3193, %v3194
      %v3196 = vsel %vm427, %v3149, 0.0
      %v3197 = vadd.f32 %v3195, %v3196
      %v3198 = vsel %vm427, %v3150, 0.0
      %v3199 = vadd.f32 %v3197, %v3198
      %v3200 = vsel %vm427, %v3151, 0.0
      %v3201 = vadd.f32 %v3199, %v3200
      %v3202 = vsel %vm427, %v3152, 0.0
      %v3203 = vadd.f32 %v3201, %v3202
      %v3204 = vsel %vm427, %v3153, 0.0
      %v3205 = vadd.f32 %v3203, %v3204
      %v3206 = vsel %vm427, %v3154, 0.0
      %v3207 = vadd.f32 %v3205, %v3206
      %v3208 = vsel %vm427, %v3155, 0.0
      %v3209 = vadd.f32 %v3207, %v3208
      %v3210 = vsel %vm427, %v3156, 0.0
      %v3211 = vadd.f32 %v3209, %v3210
      %v3212 = vsel %vm427, %v3157, 0.0
      %v3213 = vadd.f32 %v3211, %v3212
      %v3214 = vsel %vm427, %v3158, 0.0
      %v3215 = vadd.f32 %v3213, %v3214
      %v3216 = vsel %vm427, %v3159, 0.0
      %v3217 = vadd.f32 %v3215, %v3216
      %v3218 = vsel %vm427, %v3160, 0.0
      %v3219 = vadd.f32 %v3217, %v3218
      %v3220 = vsel %vm427, %v3161, 0.0
      %v3221 = vadd.f32 %v3219, %v3220
      %v3222 = vsel %vm427, %v3162, 0.0
      %v3223 = vadd.f32 %v3221, %v3222
      %v3224 = vsel %vm427, %v3163, 0.0
      %v3225 = vadd.f32 %v3223, %v3224
      %v3226 = vsel %vm427, %v3164, 0.0
      %v3227 = vadd.f32 %v3225, %v3226
      %v3228 = vrot.slane %v3227, 4
      %v3229 = vadd.f32 %v3227, %v3228
      %v3230 = vrot.slane %v3229, 2
      %v3231 = vadd.f32 %v3229, %v3230
      %v3232 = vrot.slane %v3231, 1
      %v3233 = vadd.f32 %v3231, %v3232
      %v3234 = vmul.f32 %v3233, 0.00390625
      %v3235 = vadd.f32 %v3234, 1e-05
      %v3236 = vrsqrt.pop %v3235
      %v3237 = vmul.f32 %v3101, %v3236
      %v3238 = vmul.f32 %v3102, %v3236
      %v3239 = vmul.f32 %v3103, %v3236
      %v3240 = vmul.f32 %v3104, %v3236
      %v3241 = vmul.f32 %v3105, %v3236
      %v3242 = vmul.f32 %v3106, %v3236
      %v3243 = vmul.f32 %v3107, %v3236
      %v3244 = vmul.f32 %v3108, %v3236
      %v3245 = vmul.f32 %v3109, %v3236
      %v3246 = vmul.f32 %v3110, %v3236
      %v3247 = vmul.f32 %v3111, %v3236
      %v3248 = vmul.f32 %v3112, %v3236
      %v3249 = vmul.f32 %v3113, %v3236
      %v3250 = vmul.f32 %v3114, %v3236
      %v3251 = vmul.f32 %v3115, %v3236
      %v3252 = vmul.f32 %v3116, %v3236
      %v3253 = vmul.f32 %v3117, %v3236
      %v3254 = vmul.f32 %v3118, %v3236
      %v3255 = vmul.f32 %v3119, %v3236
      %v3256 = vmul.f32 %v3120, %v3236
      %v3257 = vmul.f32 %v3121, %v3236
      %v3258 = vmul.f32 %v3122, %v3236
      %v3259 = vmul.f32 %v3123, %v3236
      %v3260 = vmul.f32 %v3124, %v3236
      %v3261 = vmul.f32 %v3125, %v3236
      %v3262 = vmul.f32 %v3126, %v3236
      %v3263 = vmul.f32 %v3127, %v3236
      %v3264 = vmul.f32 %v3128, %v3236
      %v3265 = vmul.f32 %v3129, %v3236
      %v3266 = vmul.f32 %v3130, %v3236
      %v3267 = vmul.f32 %v3131, %v3236
      %v3268 = vmul.f32 %v3132, %v3236
      %v3269 = vmax.f32 %v3237, 0.0
      %v3270 = vmax.f32 %v3238, 0.0
      %v3271 = vmax.f32 %v3239, 0.0
      %v3272 = vmax.f32 %v3240, 0.0
      %v3273 = vmax.f32 %v3241, 0.0
      %v3274 = vmax.f32 %v3242, 0.0
      %v3275 = vmax.f32 %v3243, 0.0
      %v3276 = vmax.f32 %v3244, 0.0
      %v3277 = vmax.f32 %v3245, 0.0
      %v3278 = vmax.f32 %v3246, 0.0
      %v3279 = vmax.f32 %v3247, 0.0
      %v3280 = vmax.f32 %v3248, 0.0
      %v3281 = vmax.f32 %v3249, 0.0
      %v3282 = vmax.f32 %v3250, 0.0
      %v3283 = vmax.f32 %v3251, 0.0
      %v3284 = vmax.f32 %v3252, 0.0
      %v3285 = vmax.f32 %v3253, 0.0
      %v3286 = vmax.f32 %v3254, 0.0
      %v3287 = vmax.f32 %v3255, 0.0
      %v3288 = vmax.f32 %v3256, 0.0
      %v3289 = vmax.f32 %v3257, 0.0
      %v3290 = vmax.f32 %v3258, 0.0
      %v3291 = vmax.f32 %v3259, 0.0
      %v3292 = vmax.f32 %v3260, 0.0
      %v3293 = vmax.f32 %v3261, 0.0
      %v3294 = vmax.f32 %v3262, 0.0
      %v3295 = vmax.f32 %v3263, 0.0
      %v3296 = vmax.f32 %v3264, 0.0
      %v3297 = vmax.f32 %v3265, 0.0
      %v3298 = vmax.f32 %v3266, 0.0
      %v3299 = vmax.f32 %v3267, 0.0
      %v3300 = vmax.f32 %v3268, 0.0
      %v3301 = vrot.slane %v3271, 7
      %v3302 = vrot.slane %v3272, 7
      %v3303 = vrot.slane %v3269, 7
      %v3304 = vrot.slane %v3270, 7
      %v3305 = vrot.slane %v3273, 7
      %v3306 = vrot.slane %v3274, 7
      %v3307 = vrot.slane %v3275, 7
      %v3308 = vrot.slane %v3276, 7
      %v3309 = vrot.slane %v3277, 7
      %v3310 = vrot.slane %v3278, 7
      %v3311 = vrot.slane %v3279, 7
      %v3312 = vrot.slane %v3280, 7
      %v3313 = vrot.slane %v3281, 7
      %v3314 = vrot.slane %v3282, 7
      %v3315 = vrot.slane %v3283, 7
      %v3316 = vrot.slane %v3284, 7
      %v3317 = vrot.slane %v3285, 7
      %v3318 = vrot.slane %v3286, 7
      %v3319 = vrot.slane %v3287, 7
      %v3320 = vrot.slane %v3288, 7
      %v3321 = vrot.slane %v3289, 7
      %v3322 = vrot.slane %v3290, 7
      %v3323 = vrot.slane %v3291, 7
      %v3324 = vrot.slane %v3292, 7
      %v3325 = vrot.slane %v3293, 7
      %v3326 = vrot.slane %v3294, 7
      %v3327 = vrot.slane %v3295, 7
      %v3328 = vrot.slane %v3296, 7
      %v3329 = vrot.slane %v3297, 7
      %v3330 = vrot.slane %v3298, 7
      %v3331 = vrot.slane %v3299, 7
      %v3332 = vrot.slane %v3300, 7
      %v3333 = vsel %vm242, %v3329, %v3330
      %v3334 = vsel %vm242, %v3332, %v3329
      %v3335 = vsel %vm242, %v3331, %v3332
      %v3336 = vsel %vm242, %v3330, %v3331
      %v3337 = vsel %vm242, %v3328, %v3329
      %v3338 = vsel %vm242, %v3327, %v3328
      %v3339 = vsel %vm242, %v3326, %v3327
      %v3340 = vsel %vm242, %v3325, %v3326
      %v3341 = vsel %vm242, %v3324, %v3325
      %v3342 = vsel %vm242, %v3323, %v3324
      %v3343 = vsel %vm242, %v3322, %v3323
      %v3344 = vsel %vm242, %v3321, %v3322
      %v3345 = vsel %vm242, %v3320, %v3321
      %v3346 = vsel %vm242, %v3319, %v3320
      %v3347 = vsel %vm242, %v3318, %v3319
      %v3348 = vsel %vm242, %v3317, %v3318
      %v3349 = vsel %vm242, %v3316, %v3317
      %v3350 = vsel %vm242, %v3315, %v3316
      %v3351 = vsel %vm242, %v3314, %v3315
      %v3352 = vsel %vm242, %v3313, %v3314
      %v3353 = vsel %vm242, %v3312, %v3313
      %v3354 = vsel %vm242, %v3311, %v3312
      %v3355 = vsel %vm242, %v3310, %v3311
      %v3356 = vsel %vm242, %v3309, %v3310
      %v3357 = vsel %vm242, %v3308, %v3309
      %v3358 = vsel %vm242, %v3307, %v3308
      %v3359 = vsel %vm242, %v3306, %v3307
      %v3360 = vsel %vm242, %v3305, %v3306
      %v3361 = vsel %vm242, %v3302, %v3305
      %v3362 = vsel %vm242, %v3301, %v3302
      %v3363 = vsel %vm242, %v3304, %v3301
      %v3364 = vsel %vm242, %v3303, %v3304
      %v3365 = vsel %vm242, %v3302, %v3303
      %v3366 = vsel %vm242, %v3330, %v3301
      %v3367 = vrot.slane %v3271, 1
      %v3368 = vrot.slane %v3272, 1
      %v3369 = vrot.slane %v3269, 1
      %v3370 = vrot.slane %v3270, 1
      %v3371 = vrot.slane %v3273, 1
      %v3372 = vrot.slane %v3274, 1
      %v3373 = vrot.slane %v3275, 1
      %v3374 = vrot.slane %v3276, 1
      %v3375 = vrot.slane %v3277, 1
      %v3376 = vrot.slane %v3278, 1
      %v3377 = vrot.slane %v3279, 1
      %v3378 = vrot.slane %v3280, 1
      %v3379 = vrot.slane %v3281, 1
      %v3380 = vrot.slane %v3282, 1
      %v3381 = vrot.slane %v3283, 1
      %v3382 = vrot.slane %v3284, 1
      %v3383 = vrot.slane %v3285, 1
      %v3384 = vrot.slane %v3286, 1
      %v3385 = vrot.slane %v3287, 1
      %v3386 = vrot.slane %v3288, 1
      %v3387 = vrot.slane %v3289, 1
      %v3388 = vrot.slane %v3290, 1
      %v3389 = vrot.slane %v3291, 1
      %v3390 = vrot.slane %v3292, 1
      %v3391 = vrot.slane %v3293, 1
      %v3392 = vrot.slane %v3294, 1
      %v3393 = vrot.slane %v3295, 1
      %v3394 = vrot.slane %v3296, 1
      %v3395 = vrot.slane %v3297, 1
      %v3396 = vrot.slane %v3298, 1
      %v3397 = vrot.slane %v3299, 1
      %v3398 = vrot.slane %v3300, 1
      %v3399 = vsel %vm309, %v3395, %v3396
      %v3400 = vsel %vm309, %v3398, %v3395
      %v3401 = vsel %vm309, %v3397, %v3398
      %v3402 = vsel %vm309, %v3396, %v3397
      %v3403 = vsel %vm309, %v3394, %v3395
      %v3404 = vsel %vm309, %v3393, %v3394
      %v3405 = vsel %vm309, %v3392, %v3393
      %v3406 = vsel %vm309, %v3391, %v3392
      %v3407 = vsel %vm309, %v3390, %v3391
      %v3408 = vsel %vm309, %v3389, %v3390
      %v3409 = vsel %vm309, %v3388, %v3389
      %v3410 = vsel %vm309, %v3387, %v3388
      %v3411 = vsel %vm309, %v3386, %v3387
      %v3412 = vsel %vm309, %v3385, %v3386
      %v3413 = vsel %vm309, %v3384, %v3385
      %v3414 = vsel %vm309, %v3383, %v3384
      %v3415 = vsel %vm309, %v3382, %v3383
      %v3416 = vsel %vm309, %v3381, %v3382
      %v3417 = vsel %vm309, %v3380, %v3381
      %v3418 = vsel %vm309, %v3379, %v3380
      %v3419 = vsel %vm309, %v3378, %v3379
      %v3420 = vsel %vm309, %v3377, %v3378
      %v3421 = vsel %vm309, %v3376, %v3377
      %v3422 = vsel %vm309, %v3375, %v3376
      %v3423 = vsel %vm309, %v3374, %v3375
      %v3424 = vsel %vm309, %v3373, %v3374
      %v3425 = vsel %vm309, %v3372, %v3373
      %v3426 = vsel %vm309, %v3371, %v3372
      %v3427 = vsel %vm309, %v3368, %v3371
      %v3428 = vsel %vm309, %v3367, %v3368
      %v3429 = vsel %vm309, %v3370, %v3367
      %v3430 = vsel %vm309, %v3369, %v3370
      %v3431 = vsel %vm309, %v3368, %v3369
      %v3432 = vsel %vm309, %v3396, %v3367
      %v3433 = vsel %vm346, %v3428, %v3366
      %v3434 = vsel %vm347, %v3431, %v3362
      %v3435 = vsel %vm346, %v3430, %v3365
      %v3436 = vsel %vm347, %v3429, %v3364
      %v3437 = vsel %vm346, %v3428, %v3363
      %v3438 = vsel %vm347, %v3427, %v3362
      %v3439 = vsel %vm346, %v3426, %v3361
      %v3440 = vsel %vm347, %v3425, %v3360
      %v3441 = vsel %vm346, %v3424, %v3359
      %v3442 = vsel %vm347, %v3423, %v3358
      %v3443 = vsel %vm346, %v3422, %v3357
      %v3444 = vsel %vm347, %v3421, %v3356
      %v3445 = vsel %vm346, %v3420, %v3355
      %v3446 = vsel %vm347, %v3419, %v3354
      %v3447 = vsel %vm346, %v3418, %v3353
      %v3448 = vsel %vm347, %v3417, %v3352
      %v3449 = vsel %vm346, %v3416, %v3351
      %v3450 = vsel %vm347, %v3415, %v3350
      %v3451 = vsel %vm346, %v3414, %v3349
      %v3452 = vsel %vm347, %v3413, %v3348
      %v3453 = vsel %vm346, %v3412, %v3347
      %v3454 = vsel %vm347, %v3411, %v3346
      %v3455 = vsel %vm346, %v3410, %v3345
      %v3456 = vsel %vm347, %v3409, %v3344
      %v3457 = vsel %vm346, %v3408, %v3343
      %v3458 = vsel %vm347, %v3407, %v3342
      %v3459 = vsel %vm346, %v3406, %v3341
      %v3460 = vsel %vm347, %v3405, %v3340
      %v3461 = vsel %vm346, %v3404, %v3339
      %v3462 = vsel %vm347, %v3403, %v3338
      %v3463 = vsel %vm346, %v3399, %v3337
      %v3464 = vsel %vm347, %v3402, %v3333
      %v3465 = vsel %vm346, %v3401, %v3336
      %v3466 = vsel %vm347, %v3400, %v3335
      %v3467 = vsel %vm346, %v3399, %v3334
      %v3468 = vsel %vm347, %v3432, %v3333
      %v3469 = vsel %vm386, %v3366, %v3428
      %v3470 = vsel %vm387, %v3362, %v3431
      %v3471 = vsel %vm386, %v3365, %v3430
      %v3472 = vsel %vm387, %v3364, %v3429
      %v3473 = vsel %vm386, %v3363, %v3428
      %v3474 = vsel %vm387, %v3362, %v3427
      %v3475 = vsel %vm386, %v3361, %v3426
      %v3476 = vsel %vm387, %v3360, %v3425
      %v3477 = vsel %vm386, %v3359, %v3424
      %v3478 = vsel %vm387, %v3358, %v3423
      %v3479 = vsel %vm386, %v3357, %v3422
      %v3480 = vsel %vm387, %v3356, %v3421
      %v3481 = vsel %vm386, %v3355, %v3420
      %v3482 = vsel %vm387, %v3354, %v3419
      %v3483 = vsel %vm386, %v3353, %v3418
      %v3484 = vsel %vm387, %v3352, %v3417
      %v3485 = vsel %vm386, %v3351, %v3416
      %v3486 = vsel %vm387, %v3350, %v3415
      %v3487 = vsel %vm386, %v3349, %v3414
      %v3488 = vsel %vm387, %v3348, %v3413
      %v3489 = vsel %vm386, %v3347, %v3412
      %v3490 = vsel %vm387, %v3346, %v3411
      %v3491 = vsel %vm386, %v3345, %v3410
      %v3492 = vsel %vm387, %v3344, %v3409
      %v3493 = vsel %vm386, %v3343, %v3408
      %v3494 = vsel %vm387, %v3342, %v3407
      %v3495 = vsel %vm386, %v3341, %v3406
      %v3496 = vsel %vm387, %v3340, %v3405
      %v3497 = vsel %vm386, %v3339, %v3404
      %v3498 = vsel %vm387, %v3338, %v3403
      %v3499 = vsel %vm386, %v3337, %v3399
      %v3500 = vsel %vm387, %v3333, %v3402
      %v3501 = vsel %vm386, %v3336, %v3401
      %v3502 = vsel %vm387, %v3335, %v3400
      %v3503 = vsel %vm386, %v3334, %v3399
      %v3504 = vsel %vm387, %v3333, %v3432
      %v3505 = vld [vmem:[%s2] sm:$0xf]
      %s3506 = scalar_lea.vmem %s2, 4
      %v3507 = vld [vmem:[%s3506] sm:$0xf]
      %v3509 = vsel %vm427, %v3271, 0
      %v3512 = vsel %vm427, %v3272, 0
      %v3515 = vsel %vm427, %v3269, 0
      %v3518 = vsel %vm427, %v3270, 0
      %v3521 = vsel %vm427, %v3273, 0
      %v3524 = vsel %vm427, %v3274, 0
      %v3527 = vsel %vm427, %v3275, 0
      %v3530 = vsel %vm427, %v3276, 0
      %v3533 = vsel %vm427, %v3277, 0
      %v3536 = vsel %vm427, %v3278, 0
      %v3539 = vsel %vm427, %v3279, 0
      %v3542 = vsel %vm427, %v3280, 0
      %v3545 = vsel %vm427, %v3281, 0
      %v3548 = vsel %vm427, %v3282, 0
      %v3551 = vsel %vm427, %v3283, 0
      %v3554 = vsel %vm427, %v3284, 0
      %v3557 = vsel %vm427, %v3285, 0
      %v3560 = vsel %vm427, %v3286, 0
      %v3563 = vsel %vm427, %v3287, 0
      %v3566 = vsel %vm427, %v3288, 0
      %v3569 = vsel %vm427, %v3289, 0
      %v3572 = vsel %vm427, %v3290, 0
      %v3575 = vsel %vm427, %v3291, 0
      %v3578 = vsel %vm427, %v3292, 0
      %v3581 = vsel %vm427, %v3293, 0
      %v3584 = vsel %vm427, %v3294, 0
      %v3587 = vsel %vm427, %v3295, 0
      %v3590 = vsel %vm427, %v3296, 0
      %v3593 = vsel %vm427, %v3297, 0
      %v3596 = vsel %vm427, %v3298, 0
      %v3599 = vsel %vm518, %v3507, 0
      %3601 = vmatprep.subr.mxu0 0.0
      %3602 = vmatpush1.msra.mxu0 %v3599
      %3603 = vmatprep.subr.mxu0 0.0
      %3604 = vmatpush1.msra.mxu0 0.0
      %3605 = vmatprep.subr.mxu0 0.0
      %3606 = vmatpush1.msra.mxu0 0.0
      %3607 = vmatprep.subr.mxu0 0.0
      %3608 = vmatpush1.msra.mxu0 0.0
      %3609 = vmatprep.subr.mxu0 0.0
      %3610 = vmatpush1.msra.mxu0 0.0
      %3611 = vmatprep.subr.mxu0 0.0
      %3612 = vmatpush1.msra.mxu0 0.0
      %3613 = vmatprep.subr.mxu0 0.0
      %3614 = vmatpush1.msra.mxu0 0.0
      %3615 = vmatprep.subr.mxu0 0.0
      %3616 = vmatpush1.msra.mxu0 0.0
      %3617 = vmatprep.subr.mxu0 0.0
      %3618 = vmatpush1.msra.mxu0 0.0
      %3619 = vmatprep.subr.mxu0 0.0
      %3620 = vmatpush1.msra.mxu0 0.0
      %3621 = vmatprep.subr.mxu0 0.0
      %3622 = vmatpush1.msra.mxu0 0.0
      %3623 = vmatprep.subr.mxu0 0.0
      %3624 = vmatpush1.msra.mxu0 0.0
      %3625 = vmatprep.subr.mxu0 0.0
      %3626 = vmatpush1.msra.mxu0 0.0
      %3627 = vmatprep.subr.mxu0 0.0
      %3628 = vmatpush1.msra.mxu0 0.0
      %3629 = vmatprep.subr.mxu0 0.0
      %3630 = vmatpush1.msra.mxu0 0.0
      %3631 = vmatprep.subr.mxu0 0.0
      %3632 = vmatpush1.msra.mxu0 0.0
      %3633 = vmatprep.subr.mxu0 0.0
      %3634 = vmatpush1.msra.mxu0 0.0
      %3635 = vmatprep.subr.mxu0 0.0
      %3636 = vmatpush1.msra.mxu0 0.0
      %3637 = vmatprep.subr.mxu0 0.0
      %3638 = vmatpush1.msra.mxu0 0.0
      %3639 = vmatprep.subr.mxu0 0.0
      %3640 = vmatpush1.msra.mxu0 0.0
      %3641 = vmatprep.subr.mxu0 0.0
      %3642 = vmatpush1.msra.mxu0 0.0
      %3643 = vmatprep.subr.mxu0 0.0
      %3644 = vmatpush1.msra.mxu0 0.0
      %3645 = vmatprep.subr.mxu0 0.0
      %3646 = vmatpush1.msra.mxu0 0.0
      %3647 = vmatprep.subr.mxu0 0.0
      %3648 = vmatpush1.msra.mxu0 0.0
      %3649 = vmatprep.subr.mxu0 0.0
      %3650 = vmatpush1.msra.mxu0 0.0
      %3651 = vmatprep.subr.mxu0 0.0
      %3652 = vmatpush1.msra.mxu0 0.0
      %3653 = vmatprep.subr.mxu0 0.0
      %3654 = vmatpush1.msra.mxu0 0.0
      %3655 = vmatprep.subr.mxu0 0.0
      %3656 = vmatpush1.msra.mxu0 0.0
      %3657 = vmatprep.subr.mxu0 0.0
      %3658 = vmatpush1.msra.mxu0 0.0
      %3659 = vmatprep.subr.mxu0 0.0
      %3660 = vmatpush1.msra.mxu0 0.0
      %3661 = vmatprep.subr.mxu0 0.0
      %3662 = vmatpush1.msra.mxu0 0.0
      %3663 = vmatprep.subr.mxu0 0.0
      %3664 = vmatpush1.msra.mxu0 0.0
      %3665 = vmatprep.mubr.f32.mxu0 0.0
      %3666 = vmatmul.mubr.f32.gmra.mrb[0].mxu0 %v3509
      %v3667 = vpop.f32.mrb[0].mxu0
      %v3668 = vadd.f32 0.0, %v3667
      %v3669 = vpop.f32.mrb[0].mxu0
      %3670 = vmatprep.mubr.f32.mxu0 0.0
      %3671 = vmatmul.mubr.f32.gmra.mrb[0].mxu0 %v3512
      %v3672 = vpop.f32.mrb[0].mxu0
      %v3673 = vadd.f32 0.0, %v3672
      %v3674 = vpop.f32.mrb[0].mxu0
      %3675 = vmatprep.mubr.f32.mxu0 0.0
      %3676 = vmatmul.mubr.f32.gmra.mrb[0].mxu0 %v3515
      %v3677 = vpop.f32.mrb[0].mxu0
      %v3678 = vadd.f32 0.0, %v3677
      %v3679 = vpop.f32.mrb[0].mxu0
      %3680 = vmatprep.mubr.f32.mxu0 0.0
      %3681 = vmatmul.mubr.f32.gmra.mrb[0].mxu0 %v3518
      %v3682 = vpop.f32.mrb[0].mxu0
      %v3683 = vadd.f32 0.0, %v3682
      %v3684 = vpop.f32.mrb[0].mxu0
      %3685 = vmatprep.mubr.f32.mxu0 0.0
      %3686 = vmatmul.mubr.f32.gmra.mrb[0].mxu0 %v3509
      %v3687 = vpop.f32.mrb[0].mxu0
      %v3688 = vadd.f32 0.0, %v3687
      %v3689 = vpop.f32.mrb[0].mxu0
      %3690 = vmatprep.mubr.f32.mxu0 0.0
      %3691 = vmatmul.mubr.f32.gmra.mrb[0].mxu0 %v3512
      %v3692 = vpop.f32.mrb[0].mxu0
      %v3693 = vadd.f32 0.0, %v3692
      %v3694 = vpop.f32.mrb[0].mxu0
      %3695 = vmatprep.mubr.f32.mxu0 0.0
      %3696 = vmatmul.mubr.f32.gmra.mrb[0].mxu0 %v3521
      %v3697 = vpop.f32.mrb[0].mxu0
      %v3698 = vadd.f32 0.0, %v3697
      %v3699 = vpop.f32.mrb[0].mxu0
      %3700 = vmatprep.mubr.f32.mxu0 0.0
      %3701 = vmatmul.mubr.f32.gmra.mrb[0].mxu0 %v3524
      %v3702 = vpop.f32.mrb[0].mxu0
      %v3703 = vadd.f32 0.0, %v3702
      %v3704 = vpop.f32.mrb[0].mxu0
      %3705 = vmatprep.mubr.f32.mxu0 0.0
      %3706 = vmatmul.mubr.f32.gmra.mrb[0].mxu0 %v3527
      %v3707 = vpop.f32.mrb[0].mxu0
      %v3708 = vadd.f32 0.0, %v3707
      %v3709 = vpop.f32.mrb[0].mxu0
      %3710 = vmatprep.mubr.f32.mxu0 0.0
      %3711 = vmatmul.mubr.f32.gmra.mrb[0].mxu0 %v3530
      %v3712 = vpop.f32.mrb[0].mxu0
      %v3713 = vadd.f32 0.0, %v3712
      %v3714 = vpop.f32.mrb[0].mxu0
      %3715 = vmatprep.mubr.f32.mxu0 0.0
      %3716 = vmatmul.mubr.f32.gmra.mrb[0].mxu0 %v3533
      %v3717 = vpop.f32.mrb[0].mxu0
      %v3718 = vadd.f32 0.0, %v3717
      %v3719 = vpop.f32.mrb[0].mxu0
      %3720 = vmatprep.mubr.f32.mxu0 0.0
      %3721 = vmatmul.mubr.f32.gmra.mrb[0].mxu0 %v3536
      %v3722 = vpop.f32.mrb[0].mxu0
      %v3723 = vadd.f32 0.0, %v3722
      %v3724 = vpop.f32.mrb[0].mxu0
      %3725 = vmatprep.mubr.f32.mxu0 0.0
      %3726 = vmatmul.mubr.f32.gmra.mrb[0].mxu0 %v3539
      %v3727 = vpop.f32.mrb[0].mxu0
      %v3728 = vadd.f32 0.0, %v3727
      %v3729 = vpop.f32.mrb[0].mxu0
      %3730 = vmatprep.mubr.f32.mxu0 0.0
      %3731 = vmatmul.mubr.f32.gmra.mrb[0].mxu0 %v3542
      %v3732 = vpop.f32.mrb[0].mxu0
      %v3733 = vadd.f32 0.0, %v3732
      %v3734 = vpop.f32.mrb[0].mxu0
      %3735 = vmatprep.mubr.f32.mxu0 0.0
      %3736 = vmatmul.mubr.f32.gmra.mrb[0].mxu0 %v3545
      %v3737 = vpop.f32.mrb[0].mxu0
      %v3738 = vadd.f32 0.0, %v3737
      %v3739 = vpop.f32.mrb[0].mxu0
      %3740 = vmatprep.mubr.f32.mxu0 0.0
      %3741 = vmatmul.mubr.f32.gmra.mrb[0].mxu0 %v3548
      %v3742 = vpop.f32.mrb[0].mxu0
      %v3743 = vadd.f32 0.0, %v3742
      %v3744 = vpop.f32.mrb[0].mxu0
      %3745 = vmatprep.mubr.f32.mxu0 0.0
      %3746 = vmatmul.mubr.f32.gmra.mrb[0].mxu0 %v3551
      %v3747 = vpop.f32.mrb[0].mxu0
      %v3748 = vadd.f32 0.0, %v3747
      %v3749 = vpop.f32.mrb[0].mxu0
      %3750 = vmatprep.mubr.f32.mxu0 0.0
      %3751 = vmatmul.mubr.f32.gmra.mrb[0].mxu0 %v3554
      %v3752 = vpop.f32.mrb[0].mxu0
      %v3753 = vadd.f32 0.0, %v3752
      %v3754 = vpop.f32.mrb[0].mxu0
      %3755 = vmatprep.mubr.f32.mxu0 0.0
      %3756 = vmatmul.mubr.f32.gmra.mrb[0].mxu0 %v3557
      %v3757 = vpop.f32.mrb[0].mxu0
      %v3758 = vadd.f32 0.0, %v3757
      %v3759 = vpop.f32.mrb[0].mxu0
      %3760 = vmatprep.mubr.f32.mxu0 0.0
      %3761 = vmatmul.mubr.f32.gmra.mrb[0].mxu0 %v3560
      %v3762 = vpop.f32.mrb[0].mxu0
      %v3763 = vadd.f32 0.0, %v3762
      %v3764 = vpop.f32.mrb[0].mxu0
      %3765 = vmatprep.mubr.f32.mxu0 0.0
      %3766 = vmatmul.mubr.f32.gmra.mrb[0].mxu0 %v3563
      %v3767 = vpop.f32.mrb[0].mxu0
      %v3768 = vadd.f32 0.0, %v3767
      %v3769 = vpop.f32.mrb[0].mxu0
      %3770 = vmatprep.mubr.f32.mxu0 0.0
      %3771 = vmatmul.mubr.f32.gmra.mrb[0].mxu0 %v3566
      %v3772 = vpop.f32.mrb[0].mxu0
      %v3773 = vadd.f32 0.0, %v3772
      %v3774 = vpop.f32.mrb[0].mxu0
      %3775 = vmatprep.mubr.f32.mxu0 0.0
      %3776 = vmatmul.mubr.f32.gmra.mrb[0].mxu0 %v3569
      %v3777 = vpop.f32.mrb[0].mxu0
      %v3778 = vadd.f32 0.0, %v3777
      %v3779 = vpop.f32.mrb[0].mxu0
      %3780 = vmatprep.mubr.f32.mxu0 0.0
      %3781 = vmatmul.mubr.f32.gmra.mrb[0].mxu0 %v3572
      %v3782 = vpop.f32.mrb[0].mxu0
      %v3783 = vadd.f32 0.0, %v3782
      %v3784 = vpop.f32.mrb[0].mxu0
      %3785 = vmatprep.mubr.f32.mxu0 0.0
      %3786 = vmatmul.mubr.f32.gmra.mrb[0].mxu0 %v3575
      %v3787 = vpop.f32.mrb[0].mxu0
      %v3788 = vadd.f32 0.0, %v3787
      %v3789 = vpop.f32.mrb[0].mxu0
      %3790 = vmatprep.mubr.f32.mxu0 0.0
      %3791 = vmatmul.mubr.f32.gmra.mrb[0].mxu0 %v3578
      %v3792 = vpop.f32.mrb[0].mxu0
      %v3793 = vadd.f32 0.0, %v3792
      %v3794 = vpop.f32.mrb[0].mxu0
      %3795 = vmatprep.mubr.f32.mxu0 0.0
      %3796 = vmatmul.mubr.f32.gmra.mrb[0].mxu0 %v3581
      %v3797 = vpop.f32.mrb[0].mxu0
      %v3798 = vadd.f32 0.0, %v3797
      %v3799 = vpop.f32.mrb[0].mxu0
      %3800 = vmatprep.mubr.f32.mxu0 0.0
      %3801 = vmatmul.mubr.f32.gmra.mrb[0].mxu0 %v3584
      %v3802 = vpop.f32.mrb[0].mxu0
      %v3803 = vadd.f32 0.0, %v3802
      %v3804 = vpop.f32.mrb[0].mxu0
      %3805 = vmatprep.mubr.f32.mxu0 0.0
      %3806 = vmatmul.mubr.f32.gmra.mrb[0].mxu0 %v3587
      %v3807 = vpop.f32.mrb[0].mxu0
      %v3808 = vadd.f32 0.0, %v3807
      %v3809 = vpop.f32.mrb[0].mxu0
      %3810 = vmatprep.mubr.f32.mxu0 0.0
      %3811 = vmatmul.mubr.f32.gmra.mrb[0].mxu0 %v3590
      %v3812 = vpop.f32.mrb[0].mxu0
      %v3813 = vadd.f32 0.0, %v3812
      %v3814 = vpop.f32.mrb[0].mxu0
      %3815 = vmatprep.mubr.f32.mxu0 0.0
      %3816 = vmatmul.mubr.f32.gmra.mrb[0].mxu0 %v3593
      %v3817 = vpop.f32.mrb[0].mxu0
      %v3818 = vadd.f32 0.0, %v3817
      %v3819 = vpop.f32.mrb[0].mxu0
      %3820 = vmatprep.mubr.f32.mxu0 0.0
      %3821 = vmatmul.mubr.f32.gmra.mrb[0].mxu0 %v3596
      %v3822 = vpop.f32.mrb[0].mxu0
      %v3823 = vadd.f32 0.0, %v3822
      %v3824 = vpop.f32.mrb[0].mxu0
      %3825 = vdwg.mxu0
      %v3827 = vsel %vm427, %v3433, 0
      %v3830 = vsel %vm427, %v3434, 0
      %v3833 = vsel %vm427, %v3435, 0
      %v3836 = vsel %vm427, %v3436, 0
      %v3839 = vsel %vm427, %v3437, 0
      %v3842 = vsel %vm427, %v3438, 0
      %v3845 = vsel %vm427, %v3439, 0
      %v3848 = vsel %vm427, %v3440, 0
      %v3851 = vsel %vm427, %v3441, 0
      %v3854 = vsel %vm427, %v3442, 0
      %v3857 = vsel %vm427, %v3443, 0
      %v3860 = vsel %vm427, %v3444, 0
      %v3863 = vsel %vm427, %v3445, 0
      %v3866 = vsel %vm427, %v3446, 0
      %v3869 = vsel %vm427, %v3447, 0
      %v3872 = vsel %vm427, %v3448, 0
      %v3875 = vsel %vm427, %v3449, 0
      %v3878 = vsel %vm427, %v3450, 0
      %v3881 = vsel %vm427, %v3451, 0
      %v3884 = vsel %vm427, %v3452, 0
      %v3887 = vsel %vm427, %v3453, 0
      %v3890 = vsel %vm427, %v3454, 0
      %v3893 = vsel %vm427, %v3455, 0
      %v3896 = vsel %vm427, %v3456, 0
      %v3899 = vsel %vm427, %v3457, 0
      %v3902 = vsel %vm427, %v3458, 0
      %v3905 = vsel %vm427, %v3459, 0
      %v3908 = vsel %vm427, %v3460, 0
      %v3911 = vsel %vm427, %v3461, 0
      %v3914 = vsel %vm427, %v3462, 0
      %v3917 = vsel %vm427, %v3463, 0
      %v3920 = vsel %vm427, %v3464, 0
      %v3923 = vsel %vm518, %v3505, 0
      %3925 = vmatprep.subr.mxu0 0.0
      %3926 = vmatpush1.msra.mxu0 %v3923
      %3927 = vmatprep.subr.mxu0 0.0
      %3928 = vmatpush1.msra.mxu0 0.0
      %3929 = vmatprep.subr.mxu0 0.0
      %3930 = vmatpush1.msra.mxu0 0.0
      %3931 = vmatprep.subr.mxu0 0.0
      %3932 = vmatpush1.msra.mxu0 0.0
      %3933 = vmatprep.subr.mxu0 0.0
      %3934 = vmatpush1.msra.mxu0 0.0
      %3935 = vmatprep.subr.mxu0 0.0
      %3936 = vmatpush1.msra.mxu0 0.0
      %3937 = vmatprep.subr.mxu0 0.0
      %3938 = vmatpush1.msra.mxu0 0.0
      %3939 = vmatprep.subr.mxu0 0.0
      %3940 = vmatpush1.msra.mxu0 0.0
      %3941 = vmatprep.subr.mxu0 0.0
      %3942 = vmatpush1.msra.mxu0 0.0
      %3943 = vmatprep.subr.mxu0 0.0
      %3944 = vmatpush1.msra.mxu0 0.0
      %3945 = vmatprep.subr.mxu0 0.0
      %3946 = vmatpush1.msra.mxu0 0.0
      %3947 = vmatprep.subr.mxu0 0.0
      %3948 = vmatpush1.msra.mxu0 0.0
      %3949 = vmatprep.subr.mxu0 0.0
      %3950 = vmatpush1.msra.mxu0 0.0
      %3951 = vmatprep.subr.mxu0 0.0
      %3952 = vmatpush1.msra.mxu0 0.0
      %3953 = vmatprep.subr.mxu0 0.0
      %3954 = vmatpush1.msra.mxu0 0.0
      %3955 = vmatprep.subr.mxu0 0.0
      %3956 = vmatpush1.msra.mxu0 0.0
      %3957 = vmatprep.subr.mxu0 0.0
      %3958 = vmatpush1.msra.mxu0 0.0
      %3959 = vmatprep.subr.mxu0 0.0
      %3960 = vmatpush1.msra.mxu0 0.0
      %3961 = vmatprep.subr.mxu0 0.0
      %3962 = vmatpush1.msra.mxu0 0.0
      %3963 = vmatprep.subr.mxu0 0.0
      %3964 = vmatpush1.msra.mxu0 0.0
      %3965 = vmatprep.subr.mxu0 0.0
      %3966 = vmatpush1.msra.mxu0 0.0
      %3967 = vmatprep.subr.mxu0 0.0
      %3968 = vmatpush1.msra.mxu0 0.0
      %3969 = vmatprep.subr.mxu0 0.0
      %3970 = vmatpush1.msra.mxu0 0.0
      %3971 = vmatprep.subr.mxu0 0.0
      %3972 = vmatpush1.msra.mxu0 0.0
      %3973 = vmatprep.subr.mxu0 0.0
      %3974 = vmatpush1.msra.mxu0 0.0
      %3975 = vmatprep.subr.mxu0 0.0
      %3976 = vmatpush1.msra.mxu0 0.0
      %3977 = vmatprep.subr.mxu0 0.0
      %3978 = vmatpush1.msra.mxu0 0.0
      %3979 = vmatprep.subr.mxu0 0.0
      %3980 = vmatpush1.msra.mxu0 0.0
      %3981 = vmatprep.subr.mxu0 0.0
      %3982 = vmatpush1.msra.mxu0 0.0
      %3983 = vmatprep.subr.mxu0 0.0
      %3984 = vmatpush1.msra.mxu0 0.0
      %3985 = vmatprep.subr.mxu0 0.0
      %3986 = vmatpush1.msra.mxu0 0.0
      %3987 = vmatprep.subr.mxu0 0.0
      %3988 = vmatpush1.msra.mxu0 0.0
      %3989 = vmatprep.mubr.f32.mxu0 0.0
      %3990 = vmatmul.mubr.f32.gmra.mrb[0].mxu0 %v3827
      %v3991 = vpop.f32.mrb[0].mxu0
      %v3992 = vadd.f32 %v3668, %v3991
      %v3993 = vpop.f32.mrb[0].mxu0
      %3994 = vmatprep.mubr.f32.mxu0 0.0
      %3995 = vmatmul.mubr.f32.gmra.mrb[0].mxu0 %v3830
      %v3996 = vpop.f32.mrb[0].mxu0
      %v3997 = vadd.f32 %v3673, %v3996
      %v3998 = vpop.f32.mrb[0].mxu0
      %3999 = vmatprep.mubr.f32.mxu0 0.0
      %4000 = vmatmul.mubr.f32.gmra.mrb[0].mxu0 %v3833
      %v4001 = vpop.f32.mrb[0].mxu0
      %v4002 = vadd.f32 %v3678, %v4001
      %v4003 = vpop.f32.mrb[0].mxu0
      %4004 = vmatprep.mubr.f32.mxu0 0.0
      %4005 = vmatmul.mubr.f32.gmra.mrb[0].mxu0 %v3836
      %v4006 = vpop.f32.mrb[0].mxu0
      %v4007 = vadd.f32 %v3683, %v4006
      %v4008 = vpop.f32.mrb[0].mxu0
      %4009 = vmatprep.mubr.f32.mxu0 0.0
      %4010 = vmatmul.mubr.f32.gmra.mrb[0].mxu0 %v3839
      %v4011 = vpop.f32.mrb[0].mxu0
      %v4012 = vadd.f32 %v3688, %v4011
      %v4013 = vpop.f32.mrb[0].mxu0
      %4014 = vmatprep.mubr.f32.mxu0 0.0
      %4015 = vmatmul.mubr.f32.gmra.mrb[0].mxu0 %v3842
      %v4016 = vpop.f32.mrb[0].mxu0
      %v4017 = vadd.f32 %v3693, %v4016
      %v4018 = vpop.f32.mrb[0].mxu0
      %4019 = vmatprep.mubr.f32.mxu0 0.0
      %4020 = vmatmul.mubr.f32.gmra.mrb[0].mxu0 %v3845
      %v4021 = vpop.f32.mrb[0].mxu0
      %v4022 = vadd.f32 %v3698, %v4021
      %v4023 = vpop.f32.mrb[0].mxu0
      %4024 = vmatprep.mubr.f32.mxu0 0.0
      %4025 = vmatmul.mubr.f32.gmra.mrb[0].mxu0 %v3848
      %v4026 = vpop.f32.mrb[0].mxu0
      %v4027 = vadd.f32 %v3703, %v4026
      %v4028 = vpop.f32.mrb[0].mxu0
      %4029 = vmatprep.mubr.f32.mxu0 0.0
      %4030 = vmatmul.mubr.f32.gmra.mrb[0].mxu0 %v3851
      %v4031 = vpop.f32.mrb[0].mxu0
      %v4032 = vadd.f32 %v3708, %v4031
      %v4033 = vpop.f32.mrb[0].mxu0
      %4034 = vmatprep.mubr.f32.mxu0 0.0
      %4035 = vmatmul.mubr.f32.gmra.mrb[0].mxu0 %v3854
      %v4036 = vpop.f32.mrb[0].mxu0
      %v4037 = vadd.f32 %v3713, %v4036
      %v4038 = vpop.f32.mrb[0].mxu0
      %4039 = vmatprep.mubr.f32.mxu0 0.0
      %4040 = vmatmul.mubr.f32.gmra.mrb[0].mxu0 %v3857
      %v4041 = vpop.f32.mrb[0].mxu0
      %v4042 = vadd.f32 %v3718, %v4041
      %v4043 = vpop.f32.mrb[0].mxu0
      %4044 = vmatprep.mubr.f32.mxu0 0.0
      %4045 = vmatmul.mubr.f32.gmra.mrb[0].mxu0 %v3860
      %v4046 = vpop.f32.mrb[0].mxu0
      %v4047 = vadd.f32 %v3723, %v4046
      %v4048 = vpop.f32.mrb[0].mxu0
      %4049 = vmatprep.mubr.f32.mxu0 0.0
      %4050 = vmatmul.mubr.f32.gmra.mrb[0].mxu0 %v3863
      %v4051 = vpop.f32.mrb[0].mxu0
      %v4052 = vadd.f32 %v3728, %v4051
      %v4053 = vpop.f32.mrb[0].mxu0
      %4054 = vmatprep.mubr.f32.mxu0 0.0
      %4055 = vmatmul.mubr.f32.gmra.mrb[0].mxu0 %v3866
      %v4056 = vpop.f32.mrb[0].mxu0
      %v4057 = vadd.f32 %v3733, %v4056
      %v4058 = vpop.f32.mrb[0].mxu0
      %4059 = vmatprep.mubr.f32.mxu0 0.0
      %4060 = vmatmul.mubr.f32.gmra.mrb[0].mxu0 %v3869
      %v4061 = vpop.f32.mrb[0].mxu0
      %v4062 = vadd.f32 %v3738, %v4061
      %v4063 = vpop.f32.mrb[0].mxu0
      %4064 = vmatprep.mubr.f32.mxu0 0.0
      %4065 = vmatmul.mubr.f32.gmra.mrb[0].mxu0 %v3872
      %v4066 = vpop.f32.mrb[0].mxu0
      %v4067 = vadd.f32 %v3743, %v4066
      %v4068 = vpop.f32.mrb[0].mxu0
      %4069 = vmatprep.mubr.f32.mxu0 0.0
      %4070 = vmatmul.mubr.f32.gmra.mrb[0].mxu0 %v3875
      %v4071 = vpop.f32.mrb[0].mxu0
      %v4072 = vadd.f32 %v3748, %v4071
      %v4073 = vpop.f32.mrb[0].mxu0
      %4074 = vmatprep.mubr.f32.mxu0 0.0
      %4075 = vmatmul.mubr.f32.gmra.mrb[0].mxu0 %v3878
      %v4076 = vpop.f32.mrb[0].mxu0
      %v4077 = vadd.f32 %v3753, %v4076
      %v4078 = vpop.f32.mrb[0].mxu0
      %4079 = vmatprep.mubr.f32.mxu0 0.0
      %4080 = vmatmul.mubr.f32.gmra.mrb[0].mxu0 %v3881
      %v4081 = vpop.f32.mrb[0].mxu0
      %v4082 = vadd.f32 %v3758, %v4081
      %v4083 = vpop.f32.mrb[0].mxu0
      %4084 = vmatprep.mubr.f32.mxu0 0.0
      %4085 = vmatmul.mubr.f32.gmra.mrb[0].mxu0 %v3884
      %v4086 = vpop.f32.mrb[0].mxu0
      %v4087 = vadd.f32 %v3763, %v4086
      %v4088 = vpop.f32.mrb[0].mxu0
      %4089 = vmatprep.mubr.f32.mxu0 0.0
      %4090 = vmatmul.mubr.f32.gmra.mrb[0].mxu0 %v3887
      %v4091 = vpop.f32.mrb[0].mxu0
      %v4092 = vadd.f32 %v3768, %v4091
      %v4093 = vpop.f32.mrb[0].mxu0
      %4094 = vmatprep.mubr.f32.mxu0 0.0
      %4095 = vmatmul.mubr.f32.gmra.mrb[0].mxu0 %v3890
      %v4096 = vpop.f32.mrb[0].mxu0
      %v4097 = vadd.f32 %v3773, %v4096
      %v4098 = vpop.f32.mrb[0].mxu0
      %4099 = vmatprep.mubr.f32.mxu0 0.0
      %4100 = vmatmul.mubr.f32.gmra.mrb[0].mxu0 %v3893
      %v4101 = vpop.f32.mrb[0].mxu0
      %v4102 = vadd.f32 %v3778, %v4101
      %v4103 = vpop.f32.mrb[0].mxu0
      %4104 = vmatprep.mubr.f32.mxu0 0.0
      %4105 = vmatmul.mubr.f32.gmra.mrb[0].mxu0 %v3896
      %v4106 = vpop.f32.mrb[0].mxu0
      %v4107 = vadd.f32 %v3783, %v4106
      %v4108 = vpop.f32.mrb[0].mxu0
      %4109 = vmatprep.mubr.f32.mxu0 0.0
      %4110 = vmatmul.mubr.f32.gmra.mrb[0].mxu0 %v3899
      %v4111 = vpop.f32.mrb[0].mxu0
      %v4112 = vadd.f32 %v3788, %v4111
      %v4113 = vpop.f32.mrb[0].mxu0
      %4114 = vmatprep.mubr.f32.mxu0 0.0
      %4115 = vmatmul.mubr.f32.gmra.mrb[0].mxu0 %v3902
      %v4116 = vpop.f32.mrb[0].mxu0
      %v4117 = vadd.f32 %v3793, %v4116
      %v4118 = vpop.f32.mrb[0].mxu0
      %4119 = vmatprep.mubr.f32.mxu0 0.0
      %4120 = vmatmul.mubr.f32.gmra.mrb[0].mxu0 %v3905
      %v4121 = vpop.f32.mrb[0].mxu0
      %v4122 = vadd.f32 %v3798, %v4121
      %v4123 = vpop.f32.mrb[0].mxu0
      %4124 = vmatprep.mubr.f32.mxu0 0.0
      %4125 = vmatmul.mubr.f32.gmra.mrb[0].mxu0 %v3908
      %v4126 = vpop.f32.mrb[0].mxu0
      %v4127 = vadd.f32 %v3803, %v4126
      %v4128 = vpop.f32.mrb[0].mxu0
      %4129 = vmatprep.mubr.f32.mxu0 0.0
      %4130 = vmatmul.mubr.f32.gmra.mrb[0].mxu0 %v3911
      %v4131 = vpop.f32.mrb[0].mxu0
      %v4132 = vadd.f32 %v3808, %v4131
      %v4133 = vpop.f32.mrb[0].mxu0
      %4134 = vmatprep.mubr.f32.mxu0 0.0
      %4135 = vmatmul.mubr.f32.gmra.mrb[0].mxu0 %v3914
      %v4136 = vpop.f32.mrb[0].mxu0
      %v4137 = vadd.f32 %v3813, %v4136
      %v4138 = vpop.f32.mrb[0].mxu0
      %4139 = vmatprep.mubr.f32.mxu0 0.0
      %4140 = vmatmul.mubr.f32.gmra.mrb[0].mxu0 %v3917
      %v4141 = vpop.f32.mrb[0].mxu0
      %v4142 = vadd.f32 %v3818, %v4141
      %v4143 = vpop.f32.mrb[0].mxu0
      %4144 = vmatprep.mubr.f32.mxu0 0.0
      %4145 = vmatmul.mubr.f32.gmra.mrb[0].mxu0 %v3920
      %v4146 = vpop.f32.mrb[0].mxu0
      %v4147 = vadd.f32 %v3823, %v4146
      %v4148 = vpop.f32.mrb[0].mxu0
      %4149 = vdwg.mxu0
      %s4150 = scalar_lea.vmem %s2, 8
      %v4151 = vld [vmem:[%s4150] sm:$0xf]
      %v4153 = vsel %vm427, %v3469, 0
      %v4156 = vsel %vm427, %v3470, 0
      %v4159 = vsel %vm427, %v3471, 0
      %v4162 = vsel %vm427, %v3472, 0
      %v4165 = vsel %vm427, %v3473, 0
      %v4168 = vsel %vm427, %v3474, 0
      %v4171 = vsel %vm427, %v3475, 0
      %v4174 = vsel %vm427, %v3476, 0
      %v4177 = vsel %vm427, %v3477, 0
      %v4180 = vsel %vm427, %v3478, 0
      %v4183 = vsel %vm427, %v3479, 0
      %v4186 = vsel %vm427, %v3480, 0
      %v4189 = vsel %vm427, %v3481, 0
      %v4192 = vsel %vm427, %v3482, 0
      %v4195 = vsel %vm427, %v3483, 0
      %v4198 = vsel %vm427, %v3484, 0
      %v4201 = vsel %vm427, %v3485, 0
      %v4204 = vsel %vm427, %v3486, 0
      %v4207 = vsel %vm427, %v3487, 0
      %v4210 = vsel %vm427, %v3488, 0
      %v4213 = vsel %vm427, %v3489, 0
      %v4216 = vsel %vm427, %v3490, 0
      %v4219 = vsel %vm427, %v3491, 0
      %v4222 = vsel %vm427, %v3492, 0
      %v4225 = vsel %vm427, %v3493, 0
      %v4228 = vsel %vm427, %v3494, 0
      %v4231 = vsel %vm427, %v3495, 0
      %v4234 = vsel %vm427, %v3496, 0
      %v4237 = vsel %vm427, %v3497, 0
      %v4240 = vsel %vm427, %v3498, 0
      %v4243 = vsel %vm427, %v3499, 0
      %v4246 = vsel %vm427, %v3500, 0
      %v4249 = vsel %vm518, %v4151, 0
      %4251 = vmatprep.subr.mxu0 0.0
      %4252 = vmatpush1.msra.mxu0 %v4249
      %4253 = vmatprep.subr.mxu0 0.0
      %4254 = vmatpush1.msra.mxu0 0.0
      %4255 = vmatprep.subr.mxu0 0.0
      %4256 = vmatpush1.msra.mxu0 0.0
      %4257 = vmatprep.subr.mxu0 0.0
      %4258 = vmatpush1.msra.mxu0 0.0
      %4259 = vmatprep.subr.mxu0 0.0
      %4260 = vmatpush1.msra.mxu0 0.0
      %4261 = vmatprep.subr.mxu0 0.0
      %4262 = vmatpush1.msra.mxu0 0.0
      %4263 = vmatprep.subr.mxu0 0.0
      %4264 = vmatpush1.msra.mxu0 0.0
      %4265 = vmatprep.subr.mxu0 0.0
      %4266 = vmatpush1.msra.mxu0 0.0
      %4267 = vmatprep.subr.mxu0 0.0
      %4268 = vmatpush1.msra.mxu0 0.0
      %4269 = vmatprep.subr.mxu0 0.0
      %4270 = vmatpush1.msra.mxu0 0.0
      %4271 = vmatprep.subr.mxu0 0.0
      %4272 = vmatpush1.msra.mxu0 0.0
      %4273 = vmatprep.subr.mxu0 0.0
      %4274 = vmatpush1.msra.mxu0 0.0
      %4275 = vmatprep.subr.mxu0 0.0
      %4276 = vmatpush1.msra.mxu0 0.0
      %4277 = vmatprep.subr.mxu0 0.0
      %4278 = vmatpush1.msra.mxu0 0.0
      %4279 = vmatprep.subr.mxu0 0.0
      %4280 = vmatpush1.msra.mxu0 0.0
      %4281 = vmatprep.subr.mxu0 0.0
      %4282 = vmatpush1.msra.mxu0 0.0
      %4283 = vmatprep.subr.mxu0 0.0
      %4284 = vmatpush1.msra.mxu0 0.0
      %4285 = vmatprep.subr.mxu0 0.0
      %4286 = vmatpush1.msra.mxu0 0.0
      %4287 = vmatprep.subr.mxu0 0.0
      %4288 = vmatpush1.msra.mxu0 0.0
      %4289 = vmatprep.subr.mxu0 0.0
      %4290 = vmatpush1.msra.mxu0 0.0
      %4291 = vmatprep.subr.mxu0 0.0
      %4292 = vmatpush1.msra.mxu0 0.0
      %4293 = vmatprep.subr.mxu0 0.0
      %4294 = vmatpush1.msra.mxu0 0.0
      %4295 = vmatprep.subr.mxu0 0.0
      %4296 = vmatpush1.msra.mxu0 0.0
      %4297 = vmatprep.subr.mxu0 0.0
      %4298 = vmatpush1.msra.mxu0 0.0
      %4299 = vmatprep.subr.mxu0 0.0
      %4300 = vmatpush1.msra.mxu0 0.0
      %4301 = vmatprep.subr.mxu0 0.0
      %4302 = vmatpush1.msra.mxu0 0.0
      %4303 = vmatprep.subr.mxu0 0.0
      %4304 = vmatpush1.msra.mxu0 0.0
      %4305 = vmatprep.subr.mxu0 0.0
      %4306 = vmatpush1.msra.mxu0 0.0
      %4307 = vmatprep.subr.mxu0 0.0
      %4308 = vmatpush1.msra.mxu0 0.0
      %4309 = vmatprep.subr.mxu0 0.0
      %4310 = vmatpush1.msra.mxu0 0.0
      %4311 = vmatprep.subr.mxu0 0.0
      %4312 = vmatpush1.msra.mxu0 0.0
      %4313 = vmatprep.subr.mxu0 0.0
      %4314 = vmatpush1.msra.mxu0 0.0
      %4315 = vmatprep.mubr.f32.mxu0 0.0
      %4316 = vmatmul.mubr.f32.gmra.mrb[0].mxu0 %v4153
      %v4317 = vpop.f32.mrb[0].mxu0
      %v4318 = vadd.f32 0.0, %v4317
      %v4319 = vpop.f32.mrb[0].mxu0
      %4320 = vmatprep.mubr.f32.mxu0 0.0
      %4321 = vmatmul.mubr.f32.gmra.mrb[0].mxu0 %v4156
      %v4322 = vpop.f32.mrb[0].mxu0
      %v4323 = vadd.f32 0.0, %v4322
      %v4324 = vpop.f32.mrb[0].mxu0
      %4325 = vmatprep.mubr.f32.mxu0 0.0
      %4326 = vmatmul.mubr.f32.gmra.mrb[0].mxu0 %v4159
      %v4327 = vpop.f32.mrb[0].mxu0
      %v4328 = vadd.f32 0.0, %v4327
      %v4329 = vpop.f32.mrb[0].mxu0
      %4330 = vmatprep.mubr.f32.mxu0 0.0
      %4331 = vmatmul.mubr.f32.gmra.mrb[0].mxu0 %v4162
      %v4332 = vpop.f32.mrb[0].mxu0
      %v4333 = vadd.f32 0.0, %v4332
      %v4334 = vpop.f32.mrb[0].mxu0
      %4335 = vmatprep.mubr.f32.mxu0 0.0
      %4336 = vmatmul.mubr.f32.gmra.mrb[0].mxu0 %v4165
      %v4337 = vpop.f32.mrb[0].mxu0
      %v4338 = vadd.f32 0.0, %v4337
      %v4339 = vpop.f32.mrb[0].mxu0
      %4340 = vmatprep.mubr.f32.mxu0 0.0
      %4341 = vmatmul.mubr.f32.gmra.mrb[0].mxu0 %v4168
      %v4342 = vpop.f32.mrb[0].mxu0
      %v4343 = vadd.f32 0.0, %v4342
      %v4344 = vpop.f32.mrb[0].mxu0
      %4345 = vmatprep.mubr.f32.mxu0 0.0
      %4346 = vmatmul.mubr.f32.gmra.mrb[0].mxu0 %v4171
      %v4347 = vpop.f32.mrb[0].mxu0
      %v4348 = vadd.f32 0.0, %v4347
      %v4349 = vpop.f32.mrb[0].mxu0
      %4350 = vmatprep.mubr.f32.mxu0 0.0
      %4351 = vmatmul.mubr.f32.gmra.mrb[0].mxu0 %v4174
      %v4352 = vpop.f32.mrb[0].mxu0
      %v4353 = vadd.f32 0.0, %v4352
      %v4354 = vpop.f32.mrb[0].mxu0
      %4355 = vmatprep.mubr.f32.mxu0 0.0
      %4356 = vmatmul.mubr.f32.gmra.mrb[0].mxu0 %v4177
      %v4357 = vpop.f32.mrb[0].mxu0
      %v4358 = vadd.f32 0.0, %v4357
      %v4359 = vpop.f32.mrb[0].mxu0
      %4360 = vmatprep.mubr.f32.mxu0 0.0
      %4361 = vmatmul.mubr.f32.gmra.mrb[0].mxu0 %v4180
      %v4362 = vpop.f32.mrb[0].mxu0
      %v4363 = vadd.f32 0.0, %v4362
      %v4364 = vpop.f32.mrb[0].mxu0
      %4365 = vmatprep.mubr.f32.mxu0 0.0
      %4366 = vmatmul.mubr.f32.gmra.mrb[0].mxu0 %v4183
      %v4367 = vpop.f32.mrb[0].mxu0
      %v4368 = vadd.f32 0.0, %v4367
      %v4369 = vpop.f32.mrb[0].mxu0
      %4370 = vmatprep.mubr.f32.mxu0 0.0
      %4371 = vmatmul.mubr.f32.gmra.mrb[0].mxu0 %v4186
      %v4372 = vpop.f32.mrb[0].mxu0
      %v4373 = vadd.f32 0.0, %v4372
      %v4374 = vpop.f32.mrb[0].mxu0
      %4375 = vmatprep.mubr.f32.mxu0 0.0
      %4376 = vmatmul.mubr.f32.gmra.mrb[0].mxu0 %v4189
      %v4377 = vpop.f32.mrb[0].mxu0
      %v4378 = vadd.f32 0.0, %v4377
      %v4379 = vpop.f32.mrb[0].mxu0
      %4380 = vmatprep.mubr.f32.mxu0 0.0
      %4381 = vmatmul.mubr.f32.gmra.mrb[0].mxu0 %v4192
      %v4382 = vpop.f32.mrb[0].mxu0
      %v4383 = vadd.f32 0.0, %v4382
      %v4384 = vpop.f32.mrb[0].mxu0
      %4385 = vmatprep.mubr.f32.mxu0 0.0
      %4386 = vmatmul.mubr.f32.gmra.mrb[0].mxu0 %v4195
      %v4387 = vpop.f32.mrb[0].mxu0
      %v4388 = vadd.f32 0.0, %v4387
      %v4389 = vpop.f32.mrb[0].mxu0
      %4390 = vmatprep.mubr.f32.mxu0 0.0
      %4391 = vmatmul.mubr.f32.gmra.mrb[0].mxu0 %v4198
      %v4392 = vpop.f32.mrb[0].mxu0
      %v4393 = vadd.f32 0.0, %v4392
      %v4394 = vpop.f32.mrb[0].mxu0
      %4395 = vmatprep.mubr.f32.mxu0 0.0
      %4396 = vmatmul.mubr.f32.gmra.mrb[0].mxu0 %v4201
      %v4397 = vpop.f32.mrb[0].mxu0
      %v4398 = vadd.f32 0.0, %v4397
      %v4399 = vpop.f32.mrb[0].mxu0
      %4400 = vmatprep.mubr.f32.mxu0 0.0
      %4401 = vmatmul.mubr.f32.gmra.mrb[0].mxu0 %v4204
      %v4402 = vpop.f32.mrb[0].mxu0
      %v4403 = vadd.f32 0.0, %v4402
      %v4404 = vpop.f32.mrb[0].mxu0
      %4405 = vmatprep.mubr.f32.mxu0 0.0
      %4406 = vmatmul.mubr.f32.gmra.mrb[0].mxu0 %v4207
      %v4407 = vpop.f32.mrb[0].mxu0
      %v4408 = vadd.f32 0.0, %v4407
      %v4409 = vpop.f32.mrb[0].mxu0
      %4410 = vmatprep.mubr.f32.mxu0 0.0
      %4411 = vmatmul.mubr.f32.gmra.mrb[0].mxu0 %v4210
      %v4412 = vpop.f32.mrb[0].mxu0
      %v4413 = vadd.f32 0.0, %v4412
      %v4414 = vpop.f32.mrb[0].mxu0
      %4415 = vmatprep.mubr.f32.mxu0 0.0
      %4416 = vmatmul.mubr.f32.gmra.mrb[0].mxu0 %v4213
      %v4417 = vpop.f32.mrb[0].mxu0
      %v4418 = vadd.f32 0.0, %v4417
      %v4419 = vpop.f32.mrb[0].mxu0
      %4420 = vmatprep.mubr.f32.mxu0 0.0
      %4421 = vmatmul.mubr.f32.gmra.mrb[0].mxu0 %v4216
      %v4422 = vpop.f32.mrb[0].mxu0
      %v4423 = vadd.f32 0.0, %v4422
      %v4424 = vpop.f32.mrb[0].mxu0
      %4425 = vmatprep.mubr.f32.mxu0 0.0
      %4426 = vmatmul.mubr.f32.gmra.mrb[0].mxu0 %v4219
      %v4427 = vpop.f32.mrb[0].mxu0
      %v4428 = vadd.f32 0.0, %v4427
      %v4429 = vpop.f32.mrb[0].mxu0
      %4430 = vmatprep.mubr.f32.mxu0 0.0
      %4431 = vmatmul.mubr.f32.gmra.mrb[0].mxu0 %v4222
      %v4432 = vpop.f32.mrb[0].mxu0
      %v4433 = vadd.f32 0.0, %v4432
      %v4434 = vpop.f32.mrb[0].mxu0
      %4435 = vmatprep.mubr.f32.mxu0 0.0
      %4436 = vmatmul.mubr.f32.gmra.mrb[0].mxu0 %v4225
      %v4437 = vpop.f32.mrb[0].mxu0
      %v4438 = vadd.f32 0.0, %v4437
      %v4439 = vpop.f32.mrb[0].mxu0
      %4440 = vmatprep.mubr.f32.mxu0 0.0
      %4441 = vmatmul.mubr.f32.gmra.mrb[0].mxu0 %v4228
      %v4442 = vpop.f32.mrb[0].mxu0
      %v4443 = vadd.f32 0.0, %v4442
      %v4444 = vpop.f32.mrb[0].mxu0
      %4445 = vmatprep.mubr.f32.mxu0 0.0
      %4446 = vmatmul.mubr.f32.gmra.mrb[0].mxu0 %v4231
      %v4447 = vpop.f32.mrb[0].mxu0
      %v4448 = vadd.f32 0.0, %v4447
      %v4449 = vpop.f32.mrb[0].mxu0
      %4450 = vmatprep.mubr.f32.mxu0 0.0
      %4451 = vmatmul.mubr.f32.gmra.mrb[0].mxu0 %v4234
      %v4452 = vpop.f32.mrb[0].mxu0
      %v4453 = vadd.f32 0.0, %v4452
      %v4454 = vpop.f32.mrb[0].mxu0
      %4455 = vmatprep.mubr.f32.mxu0 0.0
      %4456 = vmatmul.mubr.f32.gmra.mrb[0].mxu0 %v4237
      %v4457 = vpop.f32.mrb[0].mxu0
      %v4458 = vadd.f32 0.0, %v4457
      %v4459 = vpop.f32.mrb[0].mxu0
      %4460 = vmatprep.mubr.f32.mxu0 0.0
      %4461 = vmatmul.mubr.f32.gmra.mrb[0].mxu0 %v4240
      %v4462 = vpop.f32.mrb[0].mxu0
      %v4463 = vadd.f32 0.0, %v4462
      %v4464 = vpop.f32.mrb[0].mxu0
      %4465 = vmatprep.mubr.f32.mxu0 0.0
      %4466 = vmatmul.mubr.f32.gmra.mrb[0].mxu0 %v4243
      %v4467 = vpop.f32.mrb[0].mxu0
      %v4468 = vadd.f32 0.0, %v4467
      %v4469 = vpop.f32.mrb[0].mxu0
      %4470 = vmatprep.mubr.f32.mxu0 0.0
      %4471 = vmatmul.mubr.f32.gmra.mrb[0].mxu0 %v4246
      %v4472 = vpop.f32.mrb[0].mxu0
      %v4473 = vadd.f32 0.0, %v4472
      %v4474 = vpop.f32.mrb[0].mxu0
      %4475 = vdwg.mxu0
      %v4476 = vadd.f32 %v3992, %v4318
      %v4477 = vadd.f32 %v3997, %v4323
      %v4478 = vadd.f32 %v4002, %v4328
      %v4479 = vadd.f32 %v4007, %v4333
      %v4480 = vadd.f32 %v4012, %v4338
      %v4481 = vadd.f32 %v4017, %v4343
      %v4482 = vadd.f32 %v4022, %v4348
      %v4483 = vadd.f32 %v4027, %v4353
      %v4484 = vadd.f32 %v4032, %v4358
      %v4485 = vadd.f32 %v4037, %v4363
      %v4486 = vadd.f32 %v4042, %v4368
      %v4487 = vadd.f32 %v4047, %v4373
      %v4488 = vadd.f32 %v4052, %v4378
      %v4489 = vadd.f32 %v4057, %v4383
      %v4490 = vadd.f32 %v4062, %v4388
      %v4491 = vadd.f32 %v4067, %v4393
      %v4492 = vadd.f32 %v4072, %v4398
      %v4493 = vadd.f32 %v4077, %v4403
      %v4494 = vadd.f32 %v4082, %v4408
      %v4495 = vadd.f32 %v4087, %v4413
      %v4496 = vadd.f32 %v4092, %v4418
      %v4497 = vadd.f32 %v4097, %v4423
      %v4498 = vadd.f32 %v4102, %v4428
      %v4499 = vadd.f32 %v4107, %v4433
      %v4500 = vadd.f32 %v4112, %v4438
      %v4501 = vadd.f32 %v4117, %v4443
      %v4502 = vadd.f32 %v4122, %v4448
      %v4503 = vadd.f32 %v4127, %v4453
      %v4504 = vadd.f32 %v4132, %v4458
      %v4505 = vadd.f32 %v4137, %v4463
      %v4506 = vadd.f32 %v4142, %v4468
      %v4507 = vadd.f32 %v4147, %v4473
      %s4508 = scalar_lea.vmem %s2, 12
      %v4509 = vld [vmem:[%s4508] sm:$0xf]
      %v4511 = vsel %vm427, %v3465, 0
      %v4514 = vsel %vm427, %v3466, 0
      %v4517 = vsel %vm518, %v4509, 0
      %4519 = vmatprep.subr.mxu0 0.0
      %4520 = vmatpush1.msra.mxu0 %v4517
      %4521 = vmatprep.subr.mxu0 0.0
      %4522 = vmatpush1.msra.mxu0 0.0
      %4523 = vmatprep.subr.mxu0 0.0
      %4524 = vmatpush1.msra.mxu0 0.0
      %4525 = vmatprep.subr.mxu0 0.0
      %4526 = vmatpush1.msra.mxu0 0.0
      %4527 = vmatprep.subr.mxu0 0.0
      %4528 = vmatpush1.msra.mxu0 0.0
      %4529 = vmatprep.subr.mxu0 0.0
      %4530 = vmatpush1.msra.mxu0 0.0
      %4531 = vmatprep.subr.mxu0 0.0
      %4532 = vmatpush1.msra.mxu0 0.0
      %4533 = vmatprep.subr.mxu0 0.0
      %4534 = vmatpush1.msra.mxu0 0.0
      %4535 = vmatprep.subr.mxu0 0.0
      %4536 = vmatpush1.msra.mxu0 0.0
      %4537 = vmatprep.subr.mxu0 0.0
      %4538 = vmatpush1.msra.mxu0 0.0
      %4539 = vmatprep.subr.mxu0 0.0
      %4540 = vmatpush1.msra.mxu0 0.0
      %4541 = vmatprep.subr.mxu0 0.0
      %4542 = vmatpush1.msra.mxu0 0.0
      %4543 = vmatprep.subr.mxu0 0.0
      %4544 = vmatpush1.msra.mxu0 0.0
      %4545 = vmatprep.subr.mxu0 0.0
      %4546 = vmatpush1.msra.mxu0 0.0
      %4547 = vmatprep.subr.mxu0 0.0
      %4548 = vmatpush1.msra.mxu0 0.0
      %4549 = vmatprep.subr.mxu0 0.0
      %4550 = vmatpush1.msra.mxu0 0.0
      %4551 = vmatprep.subr.mxu0 0.0
      %4552 = vmatpush1.msra.mxu0 0.0
      %4553 = vmatprep.subr.mxu0 0.0
      %4554 = vmatpush1.msra.mxu0 0.0
      %4555 = vmatprep.subr.mxu0 0.0
      %4556 = vmatpush1.msra.mxu0 0.0
      %4557 = vmatprep.subr.mxu0 0.0
      %4558 = vmatpush1.msra.mxu0 0.0
      %4559 = vmatprep.subr.mxu0 0.0
      %4560 = vmatpush1.msra.mxu0 0.0
      %4561 = vmatprep.subr.mxu0 0.0
      %4562 = vmatpush1.msra.mxu0 0.0
      %4563 = vmatprep.subr.mxu0 0.0
      %4564 = vmatpush1.msra.mxu0 0.0
      %4565 = vmatprep.subr.mxu0 0.0
      %4566 = vmatpush1.msra.mxu0 0.0
      %4567 = vmatprep.subr.mxu0 0.0
      %4568 = vmatpush1.msra.mxu0 0.0
      %4569 = vmatprep.subr.mxu0 0.0
      %4570 = vmatpush1.msra.mxu0 0.0
      %4571 = vmatprep.subr.mxu0 0.0
      %4572 = vmatpush1.msra.mxu0 0.0
      %4573 = vmatprep.subr.mxu0 0.0
      %4574 = vmatpush1.msra.mxu0 0.0
      %4575 = vmatprep.subr.mxu0 0.0
      %4576 = vmatpush1.msra.mxu0 0.0
      %4577 = vmatprep.subr.mxu0 0.0
      %4578 = vmatpush1.msra.mxu0 0.0
      %4579 = vmatprep.subr.mxu0 0.0
      %4580 = vmatpush1.msra.mxu0 0.0
      %4581 = vmatprep.subr.mxu0 0.0
      %4582 = vmatpush1.msra.mxu0 0.0
      %4583 = vmatprep.mubr.f32.mxu0 0.0
      %4584 = vmatmul.mubr.f32.gmra.mrb[0].mxu0 %v3833
      %v4585 = vpop.f32.mrb[0].mxu0
      %v4586 = vadd.f32 0.0, %v4585
      %v4587 = vpop.f32.mrb[0].mxu0
      %4588 = vmatprep.mubr.f32.mxu0 0.0
      %4589 = vmatmul.mubr.f32.gmra.mrb[0].mxu0 %v3836
      %v4590 = vpop.f32.mrb[0].mxu0
      %v4591 = vadd.f32 0.0, %v4590
      %v4592 = vpop.f32.mrb[0].mxu0
      %4593 = vmatprep.mubr.f32.mxu0 0.0
      %4594 = vmatmul.mubr.f32.gmra.mrb[0].mxu0 %v3839
      %v4595 = vpop.f32.mrb[0].mxu0
      %v4596 = vadd.f32 0.0, %v4595
      %v4597 = vpop.f32.mrb[0].mxu0
      %4598 = vmatprep.mubr.f32.mxu0 0.0
      %4599 = vmatmul.mubr.f32.gmra.mrb[0].mxu0 %v3842
      %v4600 = vpop.f32.mrb[0].mxu0
      %v4601 = vadd.f32 0.0, %v4600
      %v4602 = vpop.f32.mrb[0].mxu0
      %4603 = vmatprep.mubr.f32.mxu0 0.0
      %4604 = vmatmul.mubr.f32.gmra.mrb[0].mxu0 %v3845
      %v4605 = vpop.f32.mrb[0].mxu0
      %v4606 = vadd.f32 0.0, %v4605
      %v4607 = vpop.f32.mrb[0].mxu0
      %4608 = vmatprep.mubr.f32.mxu0 0.0
      %4609 = vmatmul.mubr.f32.gmra.mrb[0].mxu0 %v3848
      %v4610 = vpop.f32.mrb[0].mxu0
      %v4611 = vadd.f32 0.0, %v4610
      %v4612 = vpop.f32.mrb[0].mxu0
      %4613 = vmatprep.mubr.f32.mxu0 0.0
      %4614 = vmatmul.mubr.f32.gmra.mrb[0].mxu0 %v3851
      %v4615 = vpop.f32.mrb[0].mxu0
      %v4616 = vadd.f32 0.0, %v4615
      %v4617 = vpop.f32.mrb[0].mxu0
      %4618 = vmatprep.mubr.f32.mxu0 0.0
      %4619 = vmatmul.mubr.f32.gmra.mrb[0].mxu0 %v3854
      %v4620 = vpop.f32.mrb[0].mxu0
      %v4621 = vadd.f32 0.0, %v4620
      %v4622 = vpop.f32.mrb[0].mxu0
      %4623 = vmatprep.mubr.f32.mxu0 0.0
      %4624 = vmatmul.mubr.f32.gmra.mrb[0].mxu0 %v3857
      %v4625 = vpop.f32.mrb[0].mxu0
      %v4626 = vadd.f32 0.0, %v4625
      %v4627 = vpop.f32.mrb[0].mxu0
      %4628 = vmatprep.mubr.f32.mxu0 0.0
      %4629 = vmatmul.mubr.f32.gmra.mrb[0].mxu0 %v3860
      %v4630 = vpop.f32.mrb[0].mxu0
      %v4631 = vadd.f32 0.0, %v4630
      %v4632 = vpop.f32.mrb[0].mxu0
      %4633 = vmatprep.mubr.f32.mxu0 0.0
      %4634 = vmatmul.mubr.f32.gmra.mrb[0].mxu0 %v3863
      %v4635 = vpop.f32.mrb[0].mxu0
      %v4636 = vadd.f32 0.0, %v4635
      %v4637 = vpop.f32.mrb[0].mxu0
      %4638 = vmatprep.mubr.f32.mxu0 0.0
      %4639 = vmatmul.mubr.f32.gmra.mrb[0].mxu0 %v3866
      %v4640 = vpop.f32.mrb[0].mxu0
      %v4641 = vadd.f32 0.0, %v4640
      %v4642 = vpop.f32.mrb[0].mxu0
      %4643 = vmatprep.mubr.f32.mxu0 0.0
      %4644 = vmatmul.mubr.f32.gmra.mrb[0].mxu0 %v3869
      %v4645 = vpop.f32.mrb[0].mxu0
      %v4646 = vadd.f32 0.0, %v4645
      %v4647 = vpop.f32.mrb[0].mxu0
      %4648 = vmatprep.mubr.f32.mxu0 0.0
      %4649 = vmatmul.mubr.f32.gmra.mrb[0].mxu0 %v3872
      %v4650 = vpop.f32.mrb[0].mxu0
      %v4651 = vadd.f32 0.0, %v4650
      %v4652 = vpop.f32.mrb[0].mxu0
      %4653 = vmatprep.mubr.f32.mxu0 0.0
      %4654 = vmatmul.mubr.f32.gmra.mrb[0].mxu0 %v3875
      %v4655 = vpop.f32.mrb[0].mxu0
      %v4656 = vadd.f32 0.0, %v4655
      %v4657 = vpop.f32.mrb[0].mxu0
      %4658 = vmatprep.mubr.f32.mxu0 0.0
      %4659 = vmatmul.mubr.f32.gmra.mrb[0].mxu0 %v3878
      %v4660 = vpop.f32.mrb[0].mxu0
      %v4661 = vadd.f32 0.0, %v4660
      %v4662 = vpop.f32.mrb[0].mxu0
      %4663 = vmatprep.mubr.f32.mxu0 0.0
      %4664 = vmatmul.mubr.f32.gmra.mrb[0].mxu0 %v3881
      %v4665 = vpop.f32.mrb[0].mxu0
      %v4666 = vadd.f32 0.0, %v4665
      %v4667 = vpop.f32.mrb[0].mxu0
      %4668 = vmatprep.mubr.f32.mxu0 0.0
      %4669 = vmatmul.mubr.f32.gmra.mrb[0].mxu0 %v3884
      %v4670 = vpop.f32.mrb[0].mxu0
      %v4671 = vadd.f32 0.0, %v4670
      %v4672 = vpop.f32.mrb[0].mxu0
      %4673 = vmatprep.mubr.f32.mxu0 0.0
      %4674 = vmatmul.mubr.f32.gmra.mrb[0].mxu0 %v3887
      %v4675 = vpop.f32.mrb[0].mxu0
      %v4676 = vadd.f32 0.0, %v4675
      %v4677 = vpop.f32.mrb[0].mxu0
      %4678 = vmatprep.mubr.f32.mxu0 0.0
      %4679 = vmatmul.mubr.f32.gmra.mrb[0].mxu0 %v3890
      %v4680 = vpop.f32.mrb[0].mxu0
      %v4681 = vadd.f32 0.0, %v4680
      %v4682 = vpop.f32.mrb[0].mxu0
      %4683 = vmatprep.mubr.f32.mxu0 0.0
      %4684 = vmatmul.mubr.f32.gmra.mrb[0].mxu0 %v3893
      %v4685 = vpop.f32.mrb[0].mxu0
      %v4686 = vadd.f32 0.0, %v4685
      %v4687 = vpop.f32.mrb[0].mxu0
      %4688 = vmatprep.mubr.f32.mxu0 0.0
      %4689 = vmatmul.mubr.f32.gmra.mrb[0].mxu0 %v3896
      %v4690 = vpop.f32.mrb[0].mxu0
      %v4691 = vadd.f32 0.0, %v4690
      %v4692 = vpop.f32.mrb[0].mxu0
      %4693 = vmatprep.mubr.f32.mxu0 0.0
      %4694 = vmatmul.mubr.f32.gmra.mrb[0].mxu0 %v3899
      %v4695 = vpop.f32.mrb[0].mxu0
      %v4696 = vadd.f32 0.0, %v4695
      %v4697 = vpop.f32.mrb[0].mxu0
      %4698 = vmatprep.mubr.f32.mxu0 0.0
      %4699 = vmatmul.mubr.f32.gmra.mrb[0].mxu0 %v3902
      %v4700 = vpop.f32.mrb[0].mxu0
      %v4701 = vadd.f32 0.0, %v4700
      %v4702 = vpop.f32.mrb[0].mxu0
      %4703 = vmatprep.mubr.f32.mxu0 0.0
      %4704 = vmatmul.mubr.f32.gmra.mrb[0].mxu0 %v3905
      %v4705 = vpop.f32.mrb[0].mxu0
      %v4706 = vadd.f32 0.0, %v4705
      %v4707 = vpop.f32.mrb[0].mxu0
      %4708 = vmatprep.mubr.f32.mxu0 0.0
      %4709 = vmatmul.mubr.f32.gmra.mrb[0].mxu0 %v3908
      %v4710 = vpop.f32.mrb[0].mxu0
      %v4711 = vadd.f32 0.0, %v4710
      %v4712 = vpop.f32.mrb[0].mxu0
      %4713 = vmatprep.mubr.f32.mxu0 0.0
      %4714 = vmatmul.mubr.f32.gmra.mrb[0].mxu0 %v3911
      %v4715 = vpop.f32.mrb[0].mxu0
      %v4716 = vadd.f32 0.0, %v4715
      %v4717 = vpop.f32.mrb[0].mxu0
      %4718 = vmatprep.mubr.f32.mxu0 0.0
      %4719 = vmatmul.mubr.f32.gmra.mrb[0].mxu0 %v3914
      %v4720 = vpop.f32.mrb[0].mxu0
      %v4721 = vadd.f32 0.0, %v4720
      %v4722 = vpop.f32.mrb[0].mxu0
      %4723 = vmatprep.mubr.f32.mxu0 0.0
      %4724 = vmatmul.mubr.f32.gmra.mrb[0].mxu0 %v3917
      %v4725 = vpop.f32.mrb[0].mxu0
      %v4726 = vadd.f32 0.0, %v4725
      %v4727 = vpop.f32.mrb[0].mxu0
      %4728 = vmatprep.mubr.f32.mxu0 0.0
      %4729 = vmatmul.mubr.f32.gmra.mrb[0].mxu0 %v3920
      %v4730 = vpop.f32.mrb[0].mxu0
      %v4731 = vadd.f32 0.0, %v4730
      %v4732 = vpop.f32.mrb[0].mxu0
      %4733 = vmatprep.mubr.f32.mxu0 0.0
      %4734 = vmatmul.mubr.f32.gmra.mrb[0].mxu0 %v4511
      %v4735 = vpop.f32.mrb[0].mxu0
      %v4736 = vadd.f32 0.0, %v4735
      %v4737 = vpop.f32.mrb[0].mxu0
      %4738 = vmatprep.mubr.f32.mxu0 0.0
      %4739 = vmatmul.mubr.f32.gmra.mrb[0].mxu0 %v4514
      %v4740 = vpop.f32.mrb[0].mxu0
      %v4741 = vadd.f32 0.0, %v4740
      %v4742 = vpop.f32.mrb[0].mxu0
      %4743 = vdwg.mxu0
      %v4744 = vadd.f32 %v4476, %v4586
      %v4745 = vadd.f32 %v4477, %v4591
      %v4746 = vadd.f32 %v4478, %v4596
      %v4747 = vadd.f32 %v4479, %v4601
      %v4748 = vadd.f32 %v4480, %v4606
      %v4749 = vadd.f32 %v4481, %v4611
      %v4750 = vadd.f32 %v4482, %v4616
      %v4751 = vadd.f32 %v4483, %v4621
      %v4752 = vadd.f32 %v4484, %v4626
      %v4753 = vadd.f32 %v4485, %v4631
      %v4754 = vadd.f32 %v4486, %v4636
      %v4755 = vadd.f32 %v4487, %v4641
      %v4756 = vadd.f32 %v4488, %v4646
      %v4757 = vadd.f32 %v4489, %v4651
      %v4758 = vadd.f32 %v4490, %v4656
      %v4759 = vadd.f32 %v4491, %v4661
      %v4760 = vadd.f32 %v4492, %v4666
      %v4761 = vadd.f32 %v4493, %v4671
      %v4762 = vadd.f32 %v4494, %v4676
      %v4763 = vadd.f32 %v4495, %v4681
      %v4764 = vadd.f32 %v4496, %v4686
      %v4765 = vadd.f32 %v4497, %v4691
      %v4766 = vadd.f32 %v4498, %v4696
      %v4767 = vadd.f32 %v4499, %v4701
      %v4768 = vadd.f32 %v4500, %v4706
      %v4769 = vadd.f32 %v4501, %v4711
      %v4770 = vadd.f32 %v4502, %v4716
      %v4771 = vadd.f32 %v4503, %v4721
      %v4772 = vadd.f32 %v4504, %v4726
      %v4773 = vadd.f32 %v4505, %v4731
      %v4774 = vadd.f32 %v4506, %v4736
      %v4775 = vadd.f32 %v4507, %v4741
      %s4776 = scalar_lea.vmem %s2, 16
      %v4777 = vld [vmem:[%s4776] sm:$0xf]
      %v4779 = vsel %vm427, %v3299, 0
      %v4782 = vsel %vm427, %v3300, 0
      %v4785 = vsel %vm518, %v4777, 0
      %4787 = vmatprep.subr.mxu0 0.0
      %4788 = vmatpush1.msra.mxu0 %v4785
      %4789 = vmatprep.subr.mxu0 0.0
      %4790 = vmatpush1.msra.mxu0 0.0
      %4791 = vmatprep.subr.mxu0 0.0
      %4792 = vmatpush1.msra.mxu0 0.0
      %4793 = vmatprep.subr.mxu0 0.0
      %4794 = vmatpush1.msra.mxu0 0.0
      %4795 = vmatprep.subr.mxu0 0.0
      %4796 = vmatpush1.msra.mxu0 0.0
      %4797 = vmatprep.subr.mxu0 0.0
      %4798 = vmatpush1.msra.mxu0 0.0
      %4799 = vmatprep.subr.mxu0 0.0
      %4800 = vmatpush1.msra.mxu0 0.0
      %4801 = vmatprep.subr.mxu0 0.0
      %4802 = vmatpush1.msra.mxu0 0.0
      %4803 = vmatprep.subr.mxu0 0.0
      %4804 = vmatpush1.msra.mxu0 0.0
      %4805 = vmatprep.subr.mxu0 0.0
      %4806 = vmatpush1.msra.mxu0 0.0
      %4807 = vmatprep.subr.mxu0 0.0
      %4808 = vmatpush1.msra.mxu0 0.0
      %4809 = vmatprep.subr.mxu0 0.0
      %4810 = vmatpush1.msra.mxu0 0.0
      %4811 = vmatprep.subr.mxu0 0.0
      %4812 = vmatpush1.msra.mxu0 0.0
      %4813 = vmatprep.subr.mxu0 0.0
      %4814 = vmatpush1.msra.mxu0 0.0
      %4815 = vmatprep.subr.mxu0 0.0
      %4816 = vmatpush1.msra.mxu0 0.0
      %4817 = vmatprep.subr.mxu0 0.0
      %4818 = vmatpush1.msra.mxu0 0.0
      %4819 = vmatprep.subr.mxu0 0.0
      %4820 = vmatpush1.msra.mxu0 0.0
      %4821 = vmatprep.subr.mxu0 0.0
      %4822 = vmatpush1.msra.mxu0 0.0
      %4823 = vmatprep.subr.mxu0 0.0
      %4824 = vmatpush1.msra.mxu0 0.0
      %4825 = vmatprep.subr.mxu0 0.0
      %4826 = vmatpush1.msra.mxu0 0.0
      %4827 = vmatprep.subr.mxu0 0.0
      %4828 = vmatpush1.msra.mxu0 0.0
      %4829 = vmatprep.subr.mxu0 0.0
      %4830 = vmatpush1.msra.mxu0 0.0
      %4831 = vmatprep.subr.mxu0 0.0
      %4832 = vmatpush1.msra.mxu0 0.0
      %4833 = vmatprep.subr.mxu0 0.0
      %4834 = vmatpush1.msra.mxu0 0.0
      %4835 = vmatprep.subr.mxu0 0.0
      %4836 = vmatpush1.msra.mxu0 0.0
      %4837 = vmatprep.subr.mxu0 0.0
      %4838 = vmatpush1.msra.mxu0 0.0
      %4839 = vmatprep.subr.mxu0 0.0
      %4840 = vmatpush1.msra.mxu0 0.0
      %4841 = vmatprep.subr.mxu0 0.0
      %4842 = vmatpush1.msra.mxu0 0.0
      %4843 = vmatprep.subr.mxu0 0.0
      %4844 = vmatpush1.msra.mxu0 0.0
      %4845 = vmatprep.subr.mxu0 0.0
      %4846 = vmatpush1.msra.mxu0 0.0
      %4847 = vmatprep.subr.mxu0 0.0
      %4848 = vmatpush1.msra.mxu0 0.0
      %4849 = vmatprep.subr.mxu0 0.0
      %4850 = vmatpush1.msra.mxu0 0.0
      %4851 = vmatprep.mubr.f32.mxu0 0.0
      %4852 = vmatmul.mubr.f32.gmra.mrb[0].mxu0 %v3515
      %v4853 = vpop.f32.mrb[0].mxu0
      %v4854 = vadd.f32 0.0, %v4853
      %v4855 = vpop.f32.mrb[0].mxu0
      %4856 = vmatprep.mubr.f32.mxu0 0.0
      %4857 = vmatmul.mubr.f32.gmra.mrb[0].mxu0 %v3518
      %v4858 = vpop.f32.mrb[0].mxu0
      %v4859 = vadd.f32 0.0, %v4858
      %v4860 = vpop.f32.mrb[0].mxu0
      %4861 = vmatprep.mubr.f32.mxu0 0.0
      %4862 = vmatmul.mubr.f32.gmra.mrb[0].mxu0 %v3509
      %v4863 = vpop.f32.mrb[0].mxu0
      %v4864 = vadd.f32 0.0, %v4863
      %v4865 = vpop.f32.mrb[0].mxu0
      %4866 = vmatprep.mubr.f32.mxu0 0.0
      %4867 = vmatmul.mubr.f32.gmra.mrb[0].mxu0 %v3512
      %v4868 = vpop.f32.mrb[0].mxu0
      %v4869 = vadd.f32 0.0, %v4868
      %v4870 = vpop.f32.mrb[0].mxu0
      %4871 = vmatprep.mubr.f32.mxu0 0.0
      %4872 = vmatmul.mubr.f32.gmra.mrb[0].mxu0 %v3521
      %v4873 = vpop.f32.mrb[0].mxu0
      %v4874 = vadd.f32 0.0, %v4873
      %v4875 = vpop.f32.mrb[0].mxu0
      %4876 = vmatprep.mubr.f32.mxu0 0.0
      %4877 = vmatmul.mubr.f32.gmra.mrb[0].mxu0 %v3524
      %v4878 = vpop.f32.mrb[0].mxu0
      %v4879 = vadd.f32 0.0, %v4878
      %v4880 = vpop.f32.mrb[0].mxu0
      %4881 = vmatprep.mubr.f32.mxu0 0.0
      %4882 = vmatmul.mubr.f32.gmra.mrb[0].mxu0 %v3527
      %v4883 = vpop.f32.mrb[0].mxu0
      %v4884 = vadd.f32 0.0, %v4883
      %v4885 = vpop.f32.mrb[0].mxu0
      %4886 = vmatprep.mubr.f32.mxu0 0.0
      %4887 = vmatmul.mubr.f32.gmra.mrb[0].mxu0 %v3530
      %v4888 = vpop.f32.mrb[0].mxu0
      %v4889 = vadd.f32 0.0, %v4888
      %v4890 = vpop.f32.mrb[0].mxu0
      %4891 = vmatprep.mubr.f32.mxu0 0.0
      %4892 = vmatmul.mubr.f32.gmra.mrb[0].mxu0 %v3533
      %v4893 = vpop.f32.mrb[0].mxu0
      %v4894 = vadd.f32 0.0, %v4893
      %v4895 = vpop.f32.mrb[0].mxu0
      %4896 = vmatprep.mubr.f32.mxu0 0.0
      %4897 = vmatmul.mubr.f32.gmra.mrb[0].mxu0 %v3536
      %v4898 = vpop.f32.mrb[0].mxu0
      %v4899 = vadd.f32 0.0, %v4898
      %v4900 = vpop.f32.mrb[0].mxu0
      %4901 = vmatprep.mubr.f32.mxu0 0.0
      %4902 = vmatmul.mubr.f32.gmra.mrb[0].mxu0 %v3539
      %v4903 = vpop.f32.mrb[0].mxu0
      %v4904 = vadd.f32 0.0, %v4903
      %v4905 = vpop.f32.mrb[0].mxu0
      %4906 = vmatprep.mubr.f32.mxu0 0.0
      %4907 = vmatmul.mubr.f32.gmra.mrb[0].mxu0 %v3542
      %v4908 = vpop.f32.mrb[0].mxu0
      %v4909 = vadd.f32 0.0, %v4908
      %v4910 = vpop.f32.mrb[0].mxu0
      %4911 = vmatprep.mubr.f32.mxu0 0.0
      %4912 = vmatmul.mubr.f32.gmra.mrb[0].mxu0 %v3545
      %v4913 = vpop.f32.mrb[0].mxu0
      %v4914 = vadd.f32 0.0, %v4913
      %v4915 = vpop.f32.mrb[0].mxu0
      %4916 = vmatprep.mubr.f32.mxu0 0.0
      %4917 = vmatmul.mubr.f32.gmra.mrb[0].mxu0 %v3548
      %v4918 = vpop.f32.mrb[0].mxu0
      %v4919 = vadd.f32 0.0, %v4918
      %v4920 = vpop.f32.mrb[0].mxu0
      %4921 = vmatprep.mubr.f32.mxu0 0.0
      %4922 = vmatmul.mubr.f32.gmra.mrb[0].mxu0 %v3551
      %v4923 = vpop.f32.mrb[0].mxu0
      %v4924 = vadd.f32 0.0, %v4923
      %v4925 = vpop.f32.mrb[0].mxu0
      %4926 = vmatprep.mubr.f32.mxu0 0.0
      %4927 = vmatmul.mubr.f32.gmra.mrb[0].mxu0 %v3554
      %v4928 = vpop.f32.mrb[0].mxu0
      %v4929 = vadd.f32 0.0, %v4928
      %v4930 = vpop.f32.mrb[0].mxu0
      %4931 = vmatprep.mubr.f32.mxu0 0.0
      %4932 = vmatmul.mubr.f32.gmra.mrb[0].mxu0 %v3557
      %v4933 = vpop.f32.mrb[0].mxu0
      %v4934 = vadd.f32 0.0, %v4933
      %v4935 = vpop.f32.mrb[0].mxu0
      %4936 = vmatprep.mubr.f32.mxu0 0.0
      %4937 = vmatmul.mubr.f32.gmra.mrb[0].mxu0 %v3560
      %v4938 = vpop.f32.mrb[0].mxu0
      %v4939 = vadd.f32 0.0, %v4938
      %v4940 = vpop.f32.mrb[0].mxu0
      %4941 = vmatprep.mubr.f32.mxu0 0.0
      %4942 = vmatmul.mubr.f32.gmra.mrb[0].mxu0 %v3563
      %v4943 = vpop.f32.mrb[0].mxu0
      %v4944 = vadd.f32 0.0, %v4943
      %v4945 = vpop.f32.mrb[0].mxu0
      %4946 = vmatprep.mubr.f32.mxu0 0.0
      %4947 = vmatmul.mubr.f32.gmra.mrb[0].mxu0 %v3566
      %v4948 = vpop.f32.mrb[0].mxu0
      %v4949 = vadd.f32 0.0, %v4948
      %v4950 = vpop.f32.mrb[0].mxu0
      %4951 = vmatprep.mubr.f32.mxu0 0.0
      %4952 = vmatmul.mubr.f32.gmra.mrb[0].mxu0 %v3569
      %v4953 = vpop.f32.mrb[0].mxu0
      %v4954 = vadd.f32 0.0, %v4953
      %v4955 = vpop.f32.mrb[0].mxu0
      %4956 = vmatprep.mubr.f32.mxu0 0.0
      %4957 = vmatmul.mubr.f32.gmra.mrb[0].mxu0 %v3572
      %v4958 = vpop.f32.mrb[0].mxu0
      %v4959 = vadd.f32 0.0, %v4958
      %v4960 = vpop.f32.mrb[0].mxu0
      %4961 = vmatprep.mubr.f32.mxu0 0.0
      %4962 = vmatmul.mubr.f32.gmra.mrb[0].mxu0 %v3575
      %v4963 = vpop.f32.mrb[0].mxu0
      %v4964 = vadd.f32 0.0, %v4963
      %v4965 = vpop.f32.mrb[0].mxu0
      %4966 = vmatprep.mubr.f32.mxu0 0.0
      %4967 = vmatmul.mubr.f32.gmra.mrb[0].mxu0 %v3578
      %v4968 = vpop.f32.mrb[0].mxu0
      %v4969 = vadd.f32 0.0, %v4968
      %v4970 = vpop.f32.mrb[0].mxu0
      %4971 = vmatprep.mubr.f32.mxu0 0.0
      %4972 = vmatmul.mubr.f32.gmra.mrb[0].mxu0 %v3581
      %v4973 = vpop.f32.mrb[0].mxu0
      %v4974 = vadd.f32 0.0, %v4973
      %v4975 = vpop.f32.mrb[0].mxu0
      %4976 = vmatprep.mubr.f32.mxu0 0.0
      %4977 = vmatmul.mubr.f32.gmra.mrb[0].mxu0 %v3584
      %v4978 = vpop.f32.mrb[0].mxu0
      %v4979 = vadd.f32 0.0, %v4978
      %v4980 = vpop.f32.mrb[0].mxu0
      %4981 = vmatprep.mubr.f32.mxu0 0.0
      %4982 = vmatmul.mubr.f32.gmra.mrb[0].mxu0 %v3587
      %v4983 = vpop.f32.mrb[0].mxu0
      %v4984 = vadd.f32 0.0, %v4983
      %v4985 = vpop.f32.mrb[0].mxu0
      %4986 = vmatprep.mubr.f32.mxu0 0.0
      %4987 = vmatmul.mubr.f32.gmra.mrb[0].mxu0 %v3590
      %v4988 = vpop.f32.mrb[0].mxu0
      %v4989 = vadd.f32 0.0, %v4988
      %v4990 = vpop.f32.mrb[0].mxu0
      %4991 = vmatprep.mubr.f32.mxu0 0.0
      %4992 = vmatmul.mubr.f32.gmra.mrb[0].mxu0 %v3593
      %v4993 = vpop.f32.mrb[0].mxu0
      %v4994 = vadd.f32 0.0, %v4993
      %v4995 = vpop.f32.mrb[0].mxu0
      %4996 = vmatprep.mubr.f32.mxu0 0.0
      %4997 = vmatmul.mubr.f32.gmra.mrb[0].mxu0 %v3596
      %v4998 = vpop.f32.mrb[0].mxu0
      %v4999 = vadd.f32 0.0, %v4998
      %v5000 = vpop.f32.mrb[0].mxu0
      %5001 = vmatprep.mubr.f32.mxu0 0.0
      %5002 = vmatmul.mubr.f32.gmra.mrb[0].mxu0 %v4779
      %v5003 = vpop.f32.mrb[0].mxu0
      %v5004 = vadd.f32 0.0, %v5003
      %v5005 = vpop.f32.mrb[0].mxu0
      %5006 = vmatprep.mubr.f32.mxu0 0.0
      %5007 = vmatmul.mubr.f32.gmra.mrb[0].mxu0 %v4782
      %v5008 = vpop.f32.mrb[0].mxu0
      %v5009 = vadd.f32 0.0, %v5008
      %v5010 = vpop.f32.mrb[0].mxu0
      %5011 = vdwg.mxu0
      %v5012 = vadd.f32 %v4744, %v4854
      %v5013 = vadd.f32 %v4745, %v4859
      %v5014 = vadd.f32 %v4746, %v4864
      %v5015 = vadd.f32 %v4747, %v4869
      %v5016 = vadd.f32 %v4748, %v4874
      %v5017 = vadd.f32 %v4749, %v4879
      %v5018 = vadd.f32 %v4750, %v4884
      %v5019 = vadd.f32 %v4751, %v4889
      %v5020 = vadd.f32 %v4752, %v4894
      %v5021 = vadd.f32 %v4753, %v4899
      %v5022 = vadd.f32 %v4754, %v4904
      %v5023 = vadd.f32 %v4755, %v4909
      %v5024 = vadd.f32 %v4756, %v4914
      %v5025 = vadd.f32 %v4757, %v4919
      %v5026 = vadd.f32 %v4758, %v4924
      %v5027 = vadd.f32 %v4759, %v4929
      %v5028 = vadd.f32 %v4760, %v4934
      %v5029 = vadd.f32 %v4761, %v4939
      %v5030 = vadd.f32 %v4762, %v4944
      %v5031 = vadd.f32 %v4763, %v4949
      %v5032 = vadd.f32 %v4764, %v4954
      %v5033 = vadd.f32 %v4765, %v4959
      %v5034 = vadd.f32 %v4766, %v4964
      %v5035 = vadd.f32 %v4767, %v4969
      %v5036 = vadd.f32 %v4768, %v4974
      %v5037 = vadd.f32 %v4769, %v4979
      %v5038 = vadd.f32 %v4770, %v4984
      %v5039 = vadd.f32 %v4771, %v4989
      %v5040 = vadd.f32 %v4772, %v4994
      %v5041 = vadd.f32 %v4773, %v4999
      %v5042 = vadd.f32 %v4774, %v5004
      %v5043 = vadd.f32 %v4775, %v5009
      %s5044 = scalar_lea.vmem %s2, 20
      %v5045 = vld [vmem:[%s5044] sm:$0xf]
      %v5047 = vsel %vm427, %v3501, 0
      %v5050 = vsel %vm427, %v3502, 0
      %v5053 = vsel %vm518, %v5045, 0
      %5055 = vmatprep.subr.mxu0 0.0
      %5056 = vmatpush1.msra.mxu0 %v5053
      %5057 = vmatprep.subr.mxu0 0.0
      %5058 = vmatpush1.msra.mxu0 0.0
      %5059 = vmatprep.subr.mxu0 0.0
      %5060 = vmatpush1.msra.mxu0 0.0
      %5061 = vmatprep.subr.mxu0 0.0
      %5062 = vmatpush1.msra.mxu0 0.0
      %5063 = vmatprep.subr.mxu0 0.0
      %5064 = vmatpush1.msra.mxu0 0.0
      %5065 = vmatprep.subr.mxu0 0.0
      %5066 = vmatpush1.msra.mxu0 0.0
      %5067 = vmatprep.subr.mxu0 0.0
      %5068 = vmatpush1.msra.mxu0 0.0
      %5069 = vmatprep.subr.mxu0 0.0
      %5070 = vmatpush1.msra.mxu0 0.0
      %5071 = vmatprep.subr.mxu0 0.0
      %5072 = vmatpush1.msra.mxu0 0.0
      %5073 = vmatprep.subr.mxu0 0.0
      %5074 = vmatpush1.msra.mxu0 0.0
      %5075 = vmatprep.subr.mxu0 0.0
      %5076 = vmatpush1.msra.mxu0 0.0
      %5077 = vmatprep.subr.mxu0 0.0
      %5078 = vmatpush1.msra.mxu0 0.0
      %5079 = vmatprep.subr.mxu0 0.0
      %5080 = vmatpush1.msra.mxu0 0.0
      %5081 = vmatprep.subr.mxu0 0.0
      %5082 = vmatpush1.msra.mxu0 0.0
      %5083 = vmatprep.subr.mxu0 0.0
      %5084 = vmatpush1.msra.mxu0 0.0
      %5085 = vmatprep.subr.mxu0 0.0
      %5086 = vmatpush1.msra.mxu0 0.0
      %5087 = vmatprep.subr.mxu0 0.0
      %5088 = vmatpush1.msra.mxu0 0.0
      %5089 = vmatprep.subr.mxu0 0.0
      %5090 = vmatpush1.msra.mxu0 0.0
      %5091 = vmatprep.subr.mxu0 0.0
      %5092 = vmatpush1.msra.mxu0 0.0
      %5093 = vmatprep.subr.mxu0 0.0
      %5094 = vmatpush1.msra.mxu0 0.0
      %5095 = vmatprep.subr.mxu0 0.0
      %5096 = vmatpush1.msra.mxu0 0.0
      %5097 = vmatprep.subr.mxu0 0.0
      %5098 = vmatpush1.msra.mxu0 0.0
      %5099 = vmatprep.subr.mxu0 0.0
      %5100 = vmatpush1.msra.mxu0 0.0
      %5101 = vmatprep.subr.mxu0 0.0
      %5102 = vmatpush1.msra.mxu0 0.0
      %5103 = vmatprep.subr.mxu0 0.0
      %5104 = vmatpush1.msra.mxu0 0.0
      %5105 = vmatprep.subr.mxu0 0.0
      %5106 = vmatpush1.msra.mxu0 0.0
      %5107 = vmatprep.subr.mxu0 0.0
      %5108 = vmatpush1.msra.mxu0 0.0
      %5109 = vmatprep.subr.mxu0 0.0
      %5110 = vmatpush1.msra.mxu0 0.0
      %5111 = vmatprep.subr.mxu0 0.0
      %5112 = vmatpush1.msra.mxu0 0.0
      %5113 = vmatprep.subr.mxu0 0.0
      %5114 = vmatpush1.msra.mxu0 0.0
      %5115 = vmatprep.subr.mxu0 0.0
      %5116 = vmatpush1.msra.mxu0 0.0
      %5117 = vmatprep.subr.mxu0 0.0
      %5118 = vmatpush1.msra.mxu0 0.0
      %5119 = vmatprep.mubr.f32.mxu0 0.0
      %5120 = vmatmul.mubr.f32.gmra.mrb[0].mxu0 %v4159
      %v5121 = vpop.f32.mrb[0].mxu0
      %v5122 = vadd.f32 0.0, %v5121
      %v5123 = vpop.f32.mrb[0].mxu0
      %5124 = vmatprep.mubr.f32.mxu0 0.0
      %5125 = vmatmul.mubr.f32.gmra.mrb[0].mxu0 %v4162
      %v5126 = vpop.f32.mrb[0].mxu0
      %v5127 = vadd.f32 0.0, %v5126
      %v5128 = vpop.f32.mrb[0].mxu0
      %5129 = vmatprep.mubr.f32.mxu0 0.0
      %5130 = vmatmul.mubr.f32.gmra.mrb[0].mxu0 %v4165
      %v5131 = vpop.f32.mrb[0].mxu0
      %v5132 = vadd.f32 0.0, %v5131
      %v5133 = vpop.f32.mrb[0].mxu0
      %5134 = vmatprep.mubr.f32.mxu0 0.0
      %5135 = vmatmul.mubr.f32.gmra.mrb[0].mxu0 %v4168
      %v5136 = vpop.f32.mrb[0].mxu0
      %v5137 = vadd.f32 0.0, %v5136
      %v5138 = vpop.f32.mrb[0].mxu0
      %5139 = vmatprep.mubr.f32.mxu0 0.0
      %5140 = vmatmul.mubr.f32.gmra.mrb[0].mxu0 %v4171
      %v5141 = vpop.f32.mrb[0].mxu0
      %v5142 = vadd.f32 0.0, %v5141
      %v5143 = vpop.f32.mrb[0].mxu0
      %5144 = vmatprep.mubr.f32.mxu0 0.0
      %5145 = vmatmul.mubr.f32.gmra.mrb[0].mxu0 %v4174
      %v5146 = vpop.f32.mrb[0].mxu0
      %v5147 = vadd.f32 0.0, %v5146
      %v5148 = vpop.f32.mrb[0].mxu0
      %5149 = vmatprep.mubr.f32.mxu0 0.0
      %5150 = vmatmul.mubr.f32.gmra.mrb[0].mxu0 %v4177
      %v5151 = vpop.f32.mrb[0].mxu0
      %v5152 = vadd.f32 0.0, %v5151
      %v5153 = vpop.f32.mrb[0].mxu0
      %5154 = vmatprep.mubr.f32.mxu0 0.0
      %5155 = vmatmul.mubr.f32.gmra.mrb[0].mxu0 %v4180
      %v5156 = vpop.f32.mrb[0].mxu0
      %v5157 = vadd.f32 0.0, %v5156
      %v5158 = vpop.f32.mrb[0].mxu0
      %5159 = vmatprep.mubr.f32.mxu0 0.0
      %5160 = vmatmul.mubr.f32.gmra.mrb[0].mxu0 %v4183
      %v5161 = vpop.f32.mrb[0].mxu0
      %v5162 = vadd.f32 0.0, %v5161
      %v5163 = vpop.f32.mrb[0].mxu0
      %5164 = vmatprep.mubr.f32.mxu0 0.0
      %5165 = vmatmul.mubr.f32.gmra.mrb[0].mxu0 %v4186
      %v5166 = vpop.f32.mrb[0].mxu0
      %v5167 = vadd.f32 0.0, %v5166
      %v5168 = vpop.f32.mrb[0].mxu0
      %5169 = vmatprep.mubr.f32.mxu0 0.0
      %5170 = vmatmul.mubr.f32.gmra.mrb[0].mxu0 %v4189
      %v5171 = vpop.f32.mrb[0].mxu0
      %v5172 = vadd.f32 0.0, %v5171
      %v5173 = vpop.f32.mrb[0].mxu0
      %5174 = vmatprep.mubr.f32.mxu0 0.0
      %5175 = vmatmul.mubr.f32.gmra.mrb[0].mxu0 %v4192
      %v5176 = vpop.f32.mrb[0].mxu0
      %v5177 = vadd.f32 0.0, %v5176
      %v5178 = vpop.f32.mrb[0].mxu0
      %5179 = vmatprep.mubr.f32.mxu0 0.0
      %5180 = vmatmul.mubr.f32.gmra.mrb[0].mxu0 %v4195
      %v5181 = vpop.f32.mrb[0].mxu0
      %v5182 = vadd.f32 0.0, %v5181
      %v5183 = vpop.f32.mrb[0].mxu0
      %5184 = vmatprep.mubr.f32.mxu0 0.0
      %5185 = vmatmul.mubr.f32.gmra.mrb[0].mxu0 %v4198
      %v5186 = vpop.f32.mrb[0].mxu0
      %v5187 = vadd.f32 0.0, %v5186
      %v5188 = vpop.f32.mrb[0].mxu0
      %5189 = vmatprep.mubr.f32.mxu0 0.0
      %5190 = vmatmul.mubr.f32.gmra.mrb[0].mxu0 %v4201
      %v5191 = vpop.f32.mrb[0].mxu0
      %v5192 = vadd.f32 0.0, %v5191
      %v5193 = vpop.f32.mrb[0].mxu0
      %5194 = vmatprep.mubr.f32.mxu0 0.0
      %5195 = vmatmul.mubr.f32.gmra.mrb[0].mxu0 %v4204
      %v5196 = vpop.f32.mrb[0].mxu0
      %v5197 = vadd.f32 0.0, %v5196
      %v5198 = vpop.f32.mrb[0].mxu0
      %5199 = vmatprep.mubr.f32.mxu0 0.0
      %5200 = vmatmul.mubr.f32.gmra.mrb[0].mxu0 %v4207
      %v5201 = vpop.f32.mrb[0].mxu0
      %v5202 = vadd.f32 0.0, %v5201
      %v5203 = vpop.f32.mrb[0].mxu0
      %5204 = vmatprep.mubr.f32.mxu0 0.0
      %5205 = vmatmul.mubr.f32.gmra.mrb[0].mxu0 %v4210
      %v5206 = vpop.f32.mrb[0].mxu0
      %v5207 = vadd.f32 0.0, %v5206
      %v5208 = vpop.f32.mrb[0].mxu0
      %5209 = vmatprep.mubr.f32.mxu0 0.0
      %5210 = vmatmul.mubr.f32.gmra.mrb[0].mxu0 %v4213
      %v5211 = vpop.f32.mrb[0].mxu0
      %v5212 = vadd.f32 0.0, %v5211
      %v5213 = vpop.f32.mrb[0].mxu0
      %5214 = vmatprep.mubr.f32.mxu0 0.0
      %5215 = vmatmul.mubr.f32.gmra.mrb[0].mxu0 %v4216
      %v5216 = vpop.f32.mrb[0].mxu0
      %v5217 = vadd.f32 0.0, %v5216
      %v5218 = vpop.f32.mrb[0].mxu0
      %5219 = vmatprep.mubr.f32.mxu0 0.0
      %5220 = vmatmul.mubr.f32.gmra.mrb[0].mxu0 %v4219
      %v5221 = vpop.f32.mrb[0].mxu0
      %v5222 = vadd.f32 0.0, %v5221
      %v5223 = vpop.f32.mrb[0].mxu0
      %5224 = vmatprep.mubr.f32.mxu0 0.0
      %5225 = vmatmul.mubr.f32.gmra.mrb[0].mxu0 %v4222
      %v5226 = vpop.f32.mrb[0].mxu0
      %v5227 = vadd.f32 0.0, %v5226
      %v5228 = vpop.f32.mrb[0].mxu0
      %5229 = vmatprep.mubr.f32.mxu0 0.0
      %5230 = vmatmul.mubr.f32.gmra.mrb[0].mxu0 %v4225
      %v5231 = vpop.f32.mrb[0].mxu0
      %v5232 = vadd.f32 0.0, %v5231
      %v5233 = vpop.f32.mrb[0].mxu0
      %5234 = vmatprep.mubr.f32.mxu0 0.0
      %5235 = vmatmul.mubr.f32.gmra.mrb[0].mxu0 %v4228
      %v5236 = vpop.f32.mrb[0].mxu0
      %v5237 = vadd.f32 0.0, %v5236
      %v5238 = vpop.f32.mrb[0].mxu0
      %5239 = vmatprep.mubr.f32.mxu0 0.0
      %5240 = vmatmul.mubr.f32.gmra.mrb[0].mxu0 %v4231
      %v5241 = vpop.f32.mrb[0].mxu0
      %v5242 = vadd.f32 0.0, %v5241
      %v5243 = vpop.f32.mrb[0].mxu0
      %5244 = vmatprep.mubr.f32.mxu0 0.0
      %5245 = vmatmul.mubr.f32.gmra.mrb[0].mxu0 %v4234
      %v5246 = vpop.f32.mrb[0].mxu0
      %v5247 = vadd.f32 0.0, %v5246
      %v5248 = vpop.f32.mrb[0].mxu0
      %5249 = vmatprep.mubr.f32.mxu0 0.0
      %5250 = vmatmul.mubr.f32.gmra.mrb[0].mxu0 %v4237
      %v5251 = vpop.f32.mrb[0].mxu0
      %v5252 = vadd.f32 0.0, %v5251
      %v5253 = vpop.f32.mrb[0].mxu0
      %5254 = vmatprep.mubr.f32.mxu0 0.0
      %5255 = vmatmul.mubr.f32.gmra.mrb[0].mxu0 %v4240
      %v5256 = vpop.f32.mrb[0].mxu0
      %v5257 = vadd.f32 0.0, %v5256
      %v5258 = vpop.f32.mrb[0].mxu0
      %5259 = vmatprep.mubr.f32.mxu0 0.0
      %5260 = vmatmul.mubr.f32.gmra.mrb[0].mxu0 %v4243
      %v5261 = vpop.f32.mrb[0].mxu0
      %v5262 = vadd.f32 0.0, %v5261
      %v5263 = vpop.f32.mrb[0].mxu0
      %5264 = vmatprep.mubr.f32.mxu0 0.0
      %5265 = vmatmul.mubr.f32.gmra.mrb[0].mxu0 %v4246
      %v5266 = vpop.f32.mrb[0].mxu0
      %v5267 = vadd.f32 0.0, %v5266
      %v5268 = vpop.f32.mrb[0].mxu0
      %5269 = vmatprep.mubr.f32.mxu0 0.0
      %5270 = vmatmul.mubr.f32.gmra.mrb[0].mxu0 %v5047
      %v5271 = vpop.f32.mrb[0].mxu0
      %v5272 = vadd.f32 0.0, %v5271
      %v5273 = vpop.f32.mrb[0].mxu0
      %5274 = vmatprep.mubr.f32.mxu0 0.0
      %5275 = vmatmul.mubr.f32.gmra.mrb[0].mxu0 %v5050
      %v5276 = vpop.f32.mrb[0].mxu0
      %v5277 = vadd.f32 0.0, %v5276
      %v5278 = vpop.f32.mrb[0].mxu0
      %5279 = vdwg.mxu0
      %v5280 = vadd.f32 %v5012, %v5122
      %v5281 = vadd.f32 %v5013, %v5127
      %v5282 = vadd.f32 %v5014, %v5132
      %v5283 = vadd.f32 %v5015, %v5137
      %v5284 = vadd.f32 %v5016, %v5142
      %v5285 = vadd.f32 %v5017, %v5147
      %v5286 = vadd.f32 %v5018, %v5152
      %v5287 = vadd.f32 %v5019, %v5157
      %v5288 = vadd.f32 %v5020, %v5162
      %v5289 = vadd.f32 %v5021, %v5167
      %v5290 = vadd.f32 %v5022, %v5172
      %v5291 = vadd.f32 %v5023, %v5177
      %v5292 = vadd.f32 %v5024, %v5182
      %v5293 = vadd.f32 %v5025, %v5187
      %v5294 = vadd.f32 %v5026, %v5192
      %v5295 = vadd.f32 %v5027, %v5197
      %v5296 = vadd.f32 %v5028, %v5202
      %v5297 = vadd.f32 %v5029, %v5207
      %v5298 = vadd.f32 %v5030, %v5212
      %v5299 = vadd.f32 %v5031, %v5217
      %v5300 = vadd.f32 %v5032, %v5222
      %v5301 = vadd.f32 %v5033, %v5227
      %v5302 = vadd.f32 %v5034, %v5232
      %v5303 = vadd.f32 %v5035, %v5237
      %v5304 = vadd.f32 %v5036, %v5242
      %v5305 = vadd.f32 %v5037, %v5247
      %v5306 = vadd.f32 %v5038, %v5252
      %v5307 = vadd.f32 %v5039, %v5257
      %v5308 = vadd.f32 %v5040, %v5262
      %v5309 = vadd.f32 %v5041, %v5267
      %v5310 = vadd.f32 %v5042, %v5272
      %v5311 = vadd.f32 %v5043, %v5277
      %s5312 = scalar_lea.vmem %s2, 24
      %v5313 = vld [vmem:[%s5312] sm:$0xf]
      %v5315 = vsel %vm427, %v3467, 0
      %v5318 = vsel %vm427, %v3468, 0
      %v5321 = vsel %vm518, %v5313, 0
      %5323 = vmatprep.subr.mxu0 0.0
      %5324 = vmatpush1.msra.mxu0 %v5321
      %5325 = vmatprep.subr.mxu0 0.0
      %5326 = vmatpush1.msra.mxu0 0.0
      %5327 = vmatprep.subr.mxu0 0.0
      %5328 = vmatpush1.msra.mxu0 0.0
      %5329 = vmatprep.subr.mxu0 0.0
      %5330 = vmatpush1.msra.mxu0 0.0
      %5331 = vmatprep.subr.mxu0 0.0
      %5332 = vmatpush1.msra.mxu0 0.0
      %5333 = vmatprep.subr.mxu0 0.0
      %5334 = vmatpush1.msra.mxu0 0.0
      %5335 = vmatprep.subr.mxu0 0.0
      %5336 = vmatpush1.msra.mxu0 0.0
      %5337 = vmatprep.subr.mxu0 0.0
      %5338 = vmatpush1.msra.mxu0 0.0
      %5339 = vmatprep.subr.mxu0 0.0
      %5340 = vmatpush1.msra.mxu0 0.0
      %5341 = vmatprep.subr.mxu0 0.0
      %5342 = vmatpush1.msra.mxu0 0.0
      %5343 = vmatprep.subr.mxu0 0.0
      %5344 = vmatpush1.msra.mxu0 0.0
      %5345 = vmatprep.subr.mxu0 0.0
      %5346 = vmatpush1.msra.mxu0 0.0
      %5347 = vmatprep.subr.mxu0 0.0
      %5348 = vmatpush1.msra.mxu0 0.0
      %5349 = vmatprep.subr.mxu0 0.0
      %5350 = vmatpush1.msra.mxu0 0.0
      %5351 = vmatprep.subr.mxu0 0.0
      %5352 = vmatpush1.msra.mxu0 0.0
      %5353 = vmatprep.subr.mxu0 0.0
      %5354 = vmatpush1.msra.mxu0 0.0
      %5355 = vmatprep.subr.mxu0 0.0
      %5356 = vmatpush1.msra.mxu0 0.0
      %5357 = vmatprep.subr.mxu0 0.0
      %5358 = vmatpush1.msra.mxu0 0.0
      %5359 = vmatprep.subr.mxu0 0.0
      %5360 = vmatpush1.msra.mxu0 0.0
      %5361 = vmatprep.subr.mxu0 0.0
      %5362 = vmatpush1.msra.mxu0 0.0
      %5363 = vmatprep.subr.mxu0 0.0
      %5364 = vmatpush1.msra.mxu0 0.0
      %5365 = vmatprep.subr.mxu0 0.0
      %5366 = vmatpush1.msra.mxu0 0.0
      %5367 = vmatprep.subr.mxu0 0.0
      %5368 = vmatpush1.msra.mxu0 0.0
      %5369 = vmatprep.subr.mxu0 0.0
      %5370 = vmatpush1.msra.mxu0 0.0
      %5371 = vmatprep.subr.mxu0 0.0
      %5372 = vmatpush1.msra.mxu0 0.0
      %5373 = vmatprep.subr.mxu0 0.0
      %5374 = vmatpush1.msra.mxu0 0.0
      %5375 = vmatprep.subr.mxu0 0.0
      %5376 = vmatpush1.msra.mxu0 0.0
      %5377 = vmatprep.subr.mxu0 0.0
      %5378 = vmatpush1.msra.mxu0 0.0
      %5379 = vmatprep.subr.mxu0 0.0
      %5380 = vmatpush1.msra.mxu0 0.0
      %5381 = vmatprep.subr.mxu0 0.0
      %5382 = vmatpush1.msra.mxu0 0.0
      %5383 = vmatprep.subr.mxu0 0.0
      %5384 = vmatpush1.msra.mxu0 0.0
      %5385 = vmatprep.subr.mxu0 0.0
      %5386 = vmatpush1.msra.mxu0 0.0
      %5387 = vmatprep.mubr.f32.mxu0 0.0
      %5388 = vmatmul.mubr.f32.gmra.mrb[0].mxu0 %v3839
      %v5389 = vpop.f32.mrb[0].mxu0
      %v5390 = vadd.f32 0.0, %v5389
      %v5391 = vpop.f32.mrb[0].mxu0
      %5392 = vmatprep.mubr.f32.mxu0 0.0
      %5393 = vmatmul.mubr.f32.gmra.mrb[0].mxu0 %v3842
      %v5394 = vpop.f32.mrb[0].mxu0
      %v5395 = vadd.f32 0.0, %v5394
      %v5396 = vpop.f32.mrb[0].mxu0
      %5397 = vmatprep.mubr.f32.mxu0 0.0
      %5398 = vmatmul.mubr.f32.gmra.mrb[0].mxu0 %v3845
      %v5399 = vpop.f32.mrb[0].mxu0
      %v5400 = vadd.f32 0.0, %v5399
      %v5401 = vpop.f32.mrb[0].mxu0
      %5402 = vmatprep.mubr.f32.mxu0 0.0
      %5403 = vmatmul.mubr.f32.gmra.mrb[0].mxu0 %v3848
      %v5404 = vpop.f32.mrb[0].mxu0
      %v5405 = vadd.f32 0.0, %v5404
      %v5406 = vpop.f32.mrb[0].mxu0
      %5407 = vmatprep.mubr.f32.mxu0 0.0
      %5408 = vmatmul.mubr.f32.gmra.mrb[0].mxu0 %v3851
      %v5409 = vpop.f32.mrb[0].mxu0
      %v5410 = vadd.f32 0.0, %v5409
      %v5411 = vpop.f32.mrb[0].mxu0
      %5412 = vmatprep.mubr.f32.mxu0 0.0
      %5413 = vmatmul.mubr.f32.gmra.mrb[0].mxu0 %v3854
      %v5414 = vpop.f32.mrb[0].mxu0
      %v5415 = vadd.f32 0.0, %v5414
      %v5416 = vpop.f32.mrb[0].mxu0
      %5417 = vmatprep.mubr.f32.mxu0 0.0
      %5418 = vmatmul.mubr.f32.gmra.mrb[0].mxu0 %v3857
      %v5419 = vpop.f32.mrb[0].mxu0
      %v5420 = vadd.f32 0.0, %v5419
      %v5421 = vpop.f32.mrb[0].mxu0
      %5422 = vmatprep.mubr.f32.mxu0 0.0
      %5423 = vmatmul.mubr.f32.gmra.mrb[0].mxu0 %v3860
      %v5424 = vpop.f32.mrb[0].mxu0
      %v5425 = vadd.f32 0.0, %v5424
      %v5426 = vpop.f32.mrb[0].mxu0
      %5427 = vmatprep.mubr.f32.mxu0 0.0
      %5428 = vmatmul.mubr.f32.gmra.mrb[0].mxu0 %v3863
      %v5429 = vpop.f32.mrb[0].mxu0
      %v5430 = vadd.f32 0.0, %v5429
      %v5431 = vpop.f32.mrb[0].mxu0
      %5432 = vmatprep.mubr.f32.mxu0 0.0
      %5433 = vmatmul.mubr.f32.gmra.mrb[0].mxu0 %v3866
      %v5434 = vpop.f32.mrb[0].mxu0
      %v5435 = vadd.f32 0.0, %v5434
      %v5436 = vpop.f32.mrb[0].mxu0
      %5437 = vmatprep.mubr.f32.mxu0 0.0
      %5438 = vmatmul.mubr.f32.gmra.mrb[0].mxu0 %v3869
      %v5439 = vpop.f32.mrb[0].mxu0
      %v5440 = vadd.f32 0.0, %v5439
      %v5441 = vpop.f32.mrb[0].mxu0
      %5442 = vmatprep.mubr.f32.mxu0 0.0
      %5443 = vmatmul.mubr.f32.gmra.mrb[0].mxu0 %v3872
      %v5444 = vpop.f32.mrb[0].mxu0
      %v5445 = vadd.f32 0.0, %v5444
      %v5446 = vpop.f32.mrb[0].mxu0
      %5447 = vmatprep.mubr.f32.mxu0 0.0
      %5448 = vmatmul.mubr.f32.gmra.mrb[0].mxu0 %v3875
      %v5449 = vpop.f32.mrb[0].mxu0
      %v5450 = vadd.f32 0.0, %v5449
      %v5451 = vpop.f32.mrb[0].mxu0
      %5452 = vmatprep.mubr.f32.mxu0 0.0
      %5453 = vmatmul.mubr.f32.gmra.mrb[0].mxu0 %v3878
      %v5454 = vpop.f32.mrb[0].mxu0
      %v5455 = vadd.f32 0.0, %v5454
      %v5456 = vpop.f32.mrb[0].mxu0
      %5457 = vmatprep.mubr.f32.mxu0 0.0
      %5458 = vmatmul.mubr.f32.gmra.mrb[0].mxu0 %v3881
      %v5459 = vpop.f32.mrb[0].mxu0
      %v5460 = vadd.f32 0.0, %v5459
      %v5461 = vpop.f32.mrb[0].mxu0
      %5462 = vmatprep.mubr.f32.mxu0 0.0
      %5463 = vmatmul.mubr.f32.gmra.mrb[0].mxu0 %v3884
      %v5464 = vpop.f32.mrb[0].mxu0
      %v5465 = vadd.f32 0.0, %v5464
      %v5466 = vpop.f32.mrb[0].mxu0
      %5467 = vmatprep.mubr.f32.mxu0 0.0
      %5468 = vmatmul.mubr.f32.gmra.mrb[0].mxu0 %v3887
      %v5469 = vpop.f32.mrb[0].mxu0
      %v5470 = vadd.f32 0.0, %v5469
      %v5471 = vpop.f32.mrb[0].mxu0
      %5472 = vmatprep.mubr.f32.mxu0 0.0
      %5473 = vmatmul.mubr.f32.gmra.mrb[0].mxu0 %v3890
      %v5474 = vpop.f32.mrb[0].mxu0
      %v5475 = vadd.f32 0.0, %v5474
      %v5476 = vpop.f32.mrb[0].mxu0
      %5477 = vmatprep.mubr.f32.mxu0 0.0
      %5478 = vmatmul.mubr.f32.gmra.mrb[0].mxu0 %v3893
      %v5479 = vpop.f32.mrb[0].mxu0
      %v5480 = vadd.f32 0.0, %v5479
      %v5481 = vpop.f32.mrb[0].mxu0
      %5482 = vmatprep.mubr.f32.mxu0 0.0
      %5483 = vmatmul.mubr.f32.gmra.mrb[0].mxu0 %v3896
      %v5484 = vpop.f32.mrb[0].mxu0
      %v5485 = vadd.f32 0.0, %v5484
      %v5486 = vpop.f32.mrb[0].mxu0
      %5487 = vmatprep.mubr.f32.mxu0 0.0
      %5488 = vmatmul.mubr.f32.gmra.mrb[0].mxu0 %v3899
      %v5489 = vpop.f32.mrb[0].mxu0
      %v5490 = vadd.f32 0.0, %v5489
      %v5491 = vpop.f32.mrb[0].mxu0
      %5492 = vmatprep.mubr.f32.mxu0 0.0
      %5493 = vmatmul.mubr.f32.gmra.mrb[0].mxu0 %v3902
      %v5494 = vpop.f32.mrb[0].mxu0
      %v5495 = vadd.f32 0.0, %v5494
      %v5496 = vpop.f32.mrb[0].mxu0
      %5497 = vmatprep.mubr.f32.mxu0 0.0
      %5498 = vmatmul.mubr.f32.gmra.mrb[0].mxu0 %v3905
      %v5499 = vpop.f32.mrb[0].mxu0
      %v5500 = vadd.f32 0.0, %v5499
      %v5501 = vpop.f32.mrb[0].mxu0
      %5502 = vmatprep.mubr.f32.mxu0 0.0
      %5503 = vmatmul.mubr.f32.gmra.mrb[0].mxu0 %v3908
      %v5504 = vpop.f32.mrb[0].mxu0
      %v5505 = vadd.f32 0.0, %v5504
      %v5506 = vpop.f32.mrb[0].mxu0
      %5507 = vmatprep.mubr.f32.mxu0 0.0
      %5508 = vmatmul.mubr.f32.gmra.mrb[0].mxu0 %v3911
      %v5509 = vpop.f32.mrb[0].mxu0
      %v5510 = vadd.f32 0.0, %v5509
      %v5511 = vpop.f32.mrb[0].mxu0
      %5512 = vmatprep.mubr.f32.mxu0 0.0
      %5513 = vmatmul.mubr.f32.gmra.mrb[0].mxu0 %v3914
      %v5514 = vpop.f32.mrb[0].mxu0
      %v5515 = vadd.f32 0.0, %v5514
      %v5516 = vpop.f32.mrb[0].mxu0
      %5517 = vmatprep.mubr.f32.mxu0 0.0
      %5518 = vmatmul.mubr.f32.gmra.mrb[0].mxu0 %v3917
      %v5519 = vpop.f32.mrb[0].mxu0
      %v5520 = vadd.f32 0.0, %v5519
      %v5521 = vpop.f32.mrb[0].mxu0
      %5522 = vmatprep.mubr.f32.mxu0 0.0
      %5523 = vmatmul.mubr.f32.gmra.mrb[0].mxu0 %v3920
      %v5524 = vpop.f32.mrb[0].mxu0
      %v5525 = vadd.f32 0.0, %v5524
      %v5526 = vpop.f32.mrb[0].mxu0
      %5527 = vmatprep.mubr.f32.mxu0 0.0
      %5528 = vmatmul.mubr.f32.gmra.mrb[0].mxu0 %v4511
      %v5529 = vpop.f32.mrb[0].mxu0
      %v5530 = vadd.f32 0.0, %v5529
      %v5531 = vpop.f32.mrb[0].mxu0
      %5532 = vmatprep.mubr.f32.mxu0 0.0
      %5533 = vmatmul.mubr.f32.gmra.mrb[0].mxu0 %v4514
      %v5534 = vpop.f32.mrb[0].mxu0
      %v5535 = vadd.f32 0.0, %v5534
      %v5536 = vpop.f32.mrb[0].mxu0
      %5537 = vmatprep.mubr.f32.mxu0 0.0
      %5538 = vmatmul.mubr.f32.gmra.mrb[0].mxu0 %v5315
      %v5539 = vpop.f32.mrb[0].mxu0
      %v5540 = vadd.f32 0.0, %v5539
      %v5541 = vpop.f32.mrb[0].mxu0
      %5542 = vmatprep.mubr.f32.mxu0 0.0
      %5543 = vmatmul.mubr.f32.gmra.mrb[0].mxu0 %v5318
      %v5544 = vpop.f32.mrb[0].mxu0
      %v5545 = vadd.f32 0.0, %v5544
      %v5546 = vpop.f32.mrb[0].mxu0
      %5547 = vdwg.mxu0
      %v5548 = vadd.f32 %v5280, %v5390
      %v5549 = vadd.f32 %v5281, %v5395
      %v5550 = vadd.f32 %v5282, %v5400
      %v5551 = vadd.f32 %v5283, %v5405
      %v5552 = vadd.f32 %v5284, %v5410
      %v5553 = vadd.f32 %v5285, %v5415
      %v5554 = vadd.f32 %v5286, %v5420
      %v5555 = vadd.f32 %v5287, %v5425
      %v5556 = vadd.f32 %v5288, %v5430
      %v5557 = vadd.f32 %v5289, %v5435
      %v5558 = vadd.f32 %v5290, %v5440
      %v5559 = vadd.f32 %v5291, %v5445
      %v5560 = vadd.f32 %v5292, %v5450
      %v5561 = vadd.f32 %v5293, %v5455
      %v5562 = vadd.f32 %v5294, %v5460
      %v5563 = vadd.f32 %v5295, %v5465
      %v5564 = vadd.f32 %v5296, %v5470
      %v5565 = vadd.f32 %v5297, %v5475
      %v5566 = vadd.f32 %v5298, %v5480
      %v5567 = vadd.f32 %v5299, %v5485
      %v5568 = vadd.f32 %v5300, %v5490
      %v5569 = vadd.f32 %v5301, %v5495
      %v5570 = vadd.f32 %v5302, %v5500
      %v5571 = vadd.f32 %v5303, %v5505
      %v5572 = vadd.f32 %v5304, %v5510
      %v5573 = vadd.f32 %v5305, %v5515
      %v5574 = vadd.f32 %v5306, %v5520
      %v5575 = vadd.f32 %v5307, %v5525
      %v5576 = vadd.f32 %v5308, %v5530
      %v5577 = vadd.f32 %v5309, %v5535
      %v5578 = vadd.f32 %v5310, %v5540
      %v5579 = vadd.f32 %v5311, %v5545
      %s5580 = scalar_lea.vmem %s2, 28
      %v5581 = vld [vmem:[%s5580] sm:$0xf]
      %v5583 = vsel %vm518, %v5581, 0
      %5585 = vmatprep.subr.mxu0 0.0
      %5586 = vmatpush1.msra.mxu0 %v5583
      %5587 = vmatprep.subr.mxu0 0.0
      %5588 = vmatpush1.msra.mxu0 0.0
      %5589 = vmatprep.subr.mxu0 0.0
      %5590 = vmatpush1.msra.mxu0 0.0
      %5591 = vmatprep.subr.mxu0 0.0
      %5592 = vmatpush1.msra.mxu0 0.0
      %5593 = vmatprep.subr.mxu0 0.0
      %5594 = vmatpush1.msra.mxu0 0.0
      %5595 = vmatprep.subr.mxu0 0.0
      %5596 = vmatpush1.msra.mxu0 0.0
      %5597 = vmatprep.subr.mxu0 0.0
      %5598 = vmatpush1.msra.mxu0 0.0
      %5599 = vmatprep.subr.mxu0 0.0
      %5600 = vmatpush1.msra.mxu0 0.0
      %5601 = vmatprep.subr.mxu0 0.0
      %5602 = vmatpush1.msra.mxu0 0.0
      %5603 = vmatprep.subr.mxu0 0.0
      %5604 = vmatpush1.msra.mxu0 0.0
      %5605 = vmatprep.subr.mxu0 0.0
      %5606 = vmatpush1.msra.mxu0 0.0
      %5607 = vmatprep.subr.mxu0 0.0
      %5608 = vmatpush1.msra.mxu0 0.0
      %5609 = vmatprep.subr.mxu0 0.0
      %5610 = vmatpush1.msra.mxu0 0.0
      %5611 = vmatprep.subr.mxu0 0.0
      %5612 = vmatpush1.msra.mxu0 0.0
      %5613 = vmatprep.subr.mxu0 0.0
      %5614 = vmatpush1.msra.mxu0 0.0
      %5615 = vmatprep.subr.mxu0 0.0
      %5616 = vmatpush1.msra.mxu0 0.0
      %5617 = vmatprep.subr.mxu0 0.0
      %5618 = vmatpush1.msra.mxu0 0.0
      %5619 = vmatprep.subr.mxu0 0.0
      %5620 = vmatpush1.msra.mxu0 0.0
      %5621 = vmatprep.subr.mxu0 0.0
      %5622 = vmatpush1.msra.mxu0 0.0
      %5623 = vmatprep.subr.mxu0 0.0
      %5624 = vmatpush1.msra.mxu0 0.0
      %5625 = vmatprep.subr.mxu0 0.0
      %5626 = vmatpush1.msra.mxu0 0.0
      %5627 = vmatprep.subr.mxu0 0.0
      %5628 = vmatpush1.msra.mxu0 0.0
      %5629 = vmatprep.subr.mxu0 0.0
      %5630 = vmatpush1.msra.mxu0 0.0
      %5631 = vmatprep.subr.mxu0 0.0
      %5632 = vmatpush1.msra.mxu0 0.0
      %5633 = vmatprep.subr.mxu0 0.0
      %5634 = vmatpush1.msra.mxu0 0.0
      %5635 = vmatprep.subr.mxu0 0.0
      %5636 = vmatpush1.msra.mxu0 0.0
      %5637 = vmatprep.subr.mxu0 0.0
      %5638 = vmatpush1.msra.mxu0 0.0
      %5639 = vmatprep.subr.mxu0 0.0
      %5640 = vmatpush1.msra.mxu0 0.0
      %5641 = vmatprep.subr.mxu0 0.0
      %5642 = vmatpush1.msra.mxu0 0.0
      %5643 = vmatprep.subr.mxu0 0.0
      %5644 = vmatpush1.msra.mxu0 0.0
      %5645 = vmatprep.subr.mxu0 0.0
      %5646 = vmatpush1.msra.mxu0 0.0
      %5647 = vmatprep.subr.mxu0 0.0
      %5648 = vmatpush1.msra.mxu0 0.0
      %5649 = vmatprep.mubr.f32.mxu0 0.0
      %5650 = vmatmul.mubr.f32.gmra.mrb[0].mxu0 %v3509
      %v5651 = vpop.f32.mrb[0].mxu0
      %v5652 = vadd.f32 0.0, %v5651
      %v5653 = vpop.f32.mrb[0].mxu0
      %5654 = vmatprep.mubr.f32.mxu0 0.0
      %5655 = vmatmul.mubr.f32.gmra.mrb[0].mxu0 %v3512
      %v5656 = vpop.f32.mrb[0].mxu0
      %v5657 = vadd.f32 0.0, %v5656
      %v5658 = vpop.f32.mrb[0].mxu0
      %5659 = vmatprep.mubr.f32.mxu0 0.0
      %5660 = vmatmul.mubr.f32.gmra.mrb[0].mxu0 %v3521
      %v5661 = vpop.f32.mrb[0].mxu0
      %v5662 = vadd.f32 0.0, %v5661
      %v5663 = vpop.f32.mrb[0].mxu0
      %5664 = vmatprep.mubr.f32.mxu0 0.0
      %5665 = vmatmul.mubr.f32.gmra.mrb[0].mxu0 %v3524
      %v5666 = vpop.f32.mrb[0].mxu0
      %v5667 = vadd.f32 0.0, %v5666
      %v5668 = vpop.f32.mrb[0].mxu0
      %5669 = vmatprep.mubr.f32.mxu0 0.0
      %5670 = vmatmul.mubr.f32.gmra.mrb[0].mxu0 %v3527
      %v5671 = vpop.f32.mrb[0].mxu0
      %v5672 = vadd.f32 0.0, %v5671
      %v5673 = vpop.f32.mrb[0].mxu0
      %5674 = vmatprep.mubr.f32.mxu0 0.0
      %5675 = vmatmul.mubr.f32.gmra.mrb[0].mxu0 %v3530
      %v5676 = vpop.f32.mrb[0].mxu0
      %v5677 = vadd.f32 0.0, %v5676
      %v5678 = vpop.f32.mrb[0].mxu0
      %5679 = vmatprep.mubr.f32.mxu0 0.0
      %5680 = vmatmul.mubr.f32.gmra.mrb[0].mxu0 %v3533
      %v5681 = vpop.f32.mrb[0].mxu0
      %v5682 = vadd.f32 0.0, %v5681
      %v5683 = vpop.f32.mrb[0].mxu0
      %5684 = vmatprep.mubr.f32.mxu0 0.0
      %5685 = vmatmul.mubr.f32.gmra.mrb[0].mxu0 %v3536
      %v5686 = vpop.f32.mrb[0].mxu0
      %v5687 = vadd.f32 0.0, %v5686
      %v5688 = vpop.f32.mrb[0].mxu0
      %5689 = vmatprep.mubr.f32.mxu0 0.0
      %5690 = vmatmul.mubr.f32.gmra.mrb[0].mxu0 %v3539
      %v5691 = vpop.f32.mrb[0].mxu0
      %v5692 = vadd.f32 0.0, %v5691
      %v5693 = vpop.f32.mrb[0].mxu0
      %5694 = vmatprep.mubr.f32.mxu0 0.0
      %5695 = vmatmul.mubr.f32.gmra.mrb[0].mxu0 %v3542
      %v5696 = vpop.f32.mrb[0].mxu0
      %v5697 = vadd.f32 0.0, %v5696
      %v5698 = vpop.f32.mrb[0].mxu0
      %5699 = vmatprep.mubr.f32.mxu0 0.0
      %5700 = vmatmul.mubr.f32.gmra.mrb[0].mxu0 %v3545
      %v5701 = vpop.f32.mrb[0].mxu0
      %v5702 = vadd.f32 0.0, %v5701
      %v5703 = vpop.f32.mrb[0].mxu0
      %5704 = vmatprep.mubr.f32.mxu0 0.0
      %5705 = vmatmul.mubr.f32.gmra.mrb[0].mxu0 %v3548
      %v5706 = vpop.f32.mrb[0].mxu0
      %v5707 = vadd.f32 0.0, %v5706
      %v5708 = vpop.f32.mrb[0].mxu0
      %5709 = vmatprep.mubr.f32.mxu0 0.0
      %5710 = vmatmul.mubr.f32.gmra.mrb[0].mxu0 %v3551
      %v5711 = vpop.f32.mrb[0].mxu0
      %v5712 = vadd.f32 0.0, %v5711
      %v5713 = vpop.f32.mrb[0].mxu0
      %5714 = vmatprep.mubr.f32.mxu0 0.0
      %5715 = vmatmul.mubr.f32.gmra.mrb[0].mxu0 %v3554
      %v5716 = vpop.f32.mrb[0].mxu0
      %v5717 = vadd.f32 0.0, %v5716
      %v5718 = vpop.f32.mrb[0].mxu0
      %5719 = vmatprep.mubr.f32.mxu0 0.0
      %5720 = vmatmul.mubr.f32.gmra.mrb[0].mxu0 %v3557
      %v5721 = vpop.f32.mrb[0].mxu0
      %v5722 = vadd.f32 0.0, %v5721
      %v5723 = vpop.f32.mrb[0].mxu0
      %5724 = vmatprep.mubr.f32.mxu0 0.0
      %5725 = vmatmul.mubr.f32.gmra.mrb[0].mxu0 %v3560
      %v5726 = vpop.f32.mrb[0].mxu0
      %v5727 = vadd.f32 0.0, %v5726
      %v5728 = vpop.f32.mrb[0].mxu0
      %5729 = vmatprep.mubr.f32.mxu0 0.0
      %5730 = vmatmul.mubr.f32.gmra.mrb[0].mxu0 %v3563
      %v5731 = vpop.f32.mrb[0].mxu0
      %v5732 = vadd.f32 0.0, %v5731
      %v5733 = vpop.f32.mrb[0].mxu0
      %5734 = vmatprep.mubr.f32.mxu0 0.0
      %5735 = vmatmul.mubr.f32.gmra.mrb[0].mxu0 %v3566
      %v5736 = vpop.f32.mrb[0].mxu0
      %v5737 = vadd.f32 0.0, %v5736
      %v5738 = vpop.f32.mrb[0].mxu0
      %5739 = vmatprep.mubr.f32.mxu0 0.0
      %5740 = vmatmul.mubr.f32.gmra.mrb[0].mxu0 %v3569
      %v5741 = vpop.f32.mrb[0].mxu0
      %v5742 = vadd.f32 0.0, %v5741
      %v5743 = vpop.f32.mrb[0].mxu0
      %5744 = vmatprep.mubr.f32.mxu0 0.0
      %5745 = vmatmul.mubr.f32.gmra.mrb[0].mxu0 %v3572
      %v5746 = vpop.f32.mrb[0].mxu0
      %v5747 = vadd.f32 0.0, %v5746
      %v5748 = vpop.f32.mrb[0].mxu0
      %5749 = vmatprep.mubr.f32.mxu0 0.0
      %5750 = vmatmul.mubr.f32.gmra.mrb[0].mxu0 %v3575
      %v5751 = vpop.f32.mrb[0].mxu0
      %v5752 = vadd.f32 0.0, %v5751
      %v5753 = vpop.f32.mrb[0].mxu0
      %5754 = vmatprep.mubr.f32.mxu0 0.0
      %5755 = vmatmul.mubr.f32.gmra.mrb[0].mxu0 %v3578
      %v5756 = vpop.f32.mrb[0].mxu0
      %v5757 = vadd.f32 0.0, %v5756
      %v5758 = vpop.f32.mrb[0].mxu0
      %5759 = vmatprep.mubr.f32.mxu0 0.0
      %5760 = vmatmul.mubr.f32.gmra.mrb[0].mxu0 %v3581
      %v5761 = vpop.f32.mrb[0].mxu0
      %v5762 = vadd.f32 0.0, %v5761
      %v5763 = vpop.f32.mrb[0].mxu0
      %5764 = vmatprep.mubr.f32.mxu0 0.0
      %5765 = vmatmul.mubr.f32.gmra.mrb[0].mxu0 %v3584
      %v5766 = vpop.f32.mrb[0].mxu0
      %v5767 = vadd.f32 0.0, %v5766
      %v5768 = vpop.f32.mrb[0].mxu0
      %5769 = vmatprep.mubr.f32.mxu0 0.0
      %5770 = vmatmul.mubr.f32.gmra.mrb[0].mxu0 %v3587
      %v5771 = vpop.f32.mrb[0].mxu0
      %v5772 = vadd.f32 0.0, %v5771
      %v5773 = vpop.f32.mrb[0].mxu0
      %5774 = vmatprep.mubr.f32.mxu0 0.0
      %5775 = vmatmul.mubr.f32.gmra.mrb[0].mxu0 %v3590
      %v5776 = vpop.f32.mrb[0].mxu0
      %v5777 = vadd.f32 0.0, %v5776
      %v5778 = vpop.f32.mrb[0].mxu0
      %5779 = vmatprep.mubr.f32.mxu0 0.0
      %5780 = vmatmul.mubr.f32.gmra.mrb[0].mxu0 %v3593
      %v5781 = vpop.f32.mrb[0].mxu0
      %v5782 = vadd.f32 0.0, %v5781
      %v5783 = vpop.f32.mrb[0].mxu0
      %5784 = vmatprep.mubr.f32.mxu0 0.0
      %5785 = vmatmul.mubr.f32.gmra.mrb[0].mxu0 %v3596
      %v5786 = vpop.f32.mrb[0].mxu0
      %v5787 = vadd.f32 0.0, %v5786
      %v5788 = vpop.f32.mrb[0].mxu0
      %5789 = vmatprep.mubr.f32.mxu0 0.0
      %5790 = vmatmul.mubr.f32.gmra.mrb[0].mxu0 %v4779
      %v5791 = vpop.f32.mrb[0].mxu0
      %v5792 = vadd.f32 0.0, %v5791
      %v5793 = vpop.f32.mrb[0].mxu0
      %5794 = vmatprep.mubr.f32.mxu0 0.0
      %5795 = vmatmul.mubr.f32.gmra.mrb[0].mxu0 %v4782
      %v5796 = vpop.f32.mrb[0].mxu0
      %v5797 = vadd.f32 0.0, %v5796
      %v5798 = vpop.f32.mrb[0].mxu0
      %5799 = vmatprep.mubr.f32.mxu0 0.0
      %5800 = vmatmul.mubr.f32.gmra.mrb[0].mxu0 %v3593
      %v5801 = vpop.f32.mrb[0].mxu0
      %v5802 = vadd.f32 0.0, %v5801
      %v5803 = vpop.f32.mrb[0].mxu0
      %5804 = vmatprep.mubr.f32.mxu0 0.0
      %5805 = vmatmul.mubr.f32.gmra.mrb[0].mxu0 %v3596
      %v5806 = vpop.f32.mrb[0].mxu0
      %v5807 = vadd.f32 0.0, %v5806
      %v5808 = vpop.f32.mrb[0].mxu0
      %5809 = vdwg.mxu0
      %v5810 = vadd.f32 %v5548, %v5652
      %v5811 = vadd.f32 %v5549, %v5657
      %v5812 = vadd.f32 %v5550, %v5662
      %v5813 = vadd.f32 %v5551, %v5667
      %v5814 = vadd.f32 %v5552, %v5672
      %v5815 = vadd.f32 %v5553, %v5677
      %v5816 = vadd.f32 %v5554, %v5682
      %v5817 = vadd.f32 %v5555, %v5687
      %v5818 = vadd.f32 %v5556, %v5692
      %v5819 = vadd.f32 %v5557, %v5697
      %v5820 = vadd.f32 %v5558, %v5702
      %v5821 = vadd.f32 %v5559, %v5707
      %v5822 = vadd.f32 %v5560, %v5712
      %v5823 = vadd.f32 %v5561, %v5717
      %v5824 = vadd.f32 %v5562, %v5722
      %v5825 = vadd.f32 %v5563, %v5727
      %v5826 = vadd.f32 %v5564, %v5732
      %v5827 = vadd.f32 %v5565, %v5737
      %v5828 = vadd.f32 %v5566, %v5742
      %v5829 = vadd.f32 %v5567, %v5747
      %v5830 = vadd.f32 %v5568, %v5752
      %v5831 = vadd.f32 %v5569, %v5757
      %v5832 = vadd.f32 %v5570, %v5762
      %v5833 = vadd.f32 %v5571, %v5767
      %v5834 = vadd.f32 %v5572, %v5772
      %v5835 = vadd.f32 %v5573, %v5777
      %v5836 = vadd.f32 %v5574, %v5782
      %v5837 = vadd.f32 %v5575, %v5787
      %v5838 = vadd.f32 %v5576, %v5792
      %v5839 = vadd.f32 %v5577, %v5797
      %v5840 = vadd.f32 %v5578, %v5802
      %v5841 = vadd.f32 %v5579, %v5807
      %s5842 = scalar_lea.vmem %s2, 32
      %v5843 = vld [vmem:[%s5842] sm:$0xf]
      %v5845 = vsel %vm427, %v3503, 0
      %v5848 = vsel %vm427, %v3504, 0
      %v5851 = vsel %vm518, %v5843, 0
      %5853 = vmatprep.subr.mxu0 0.0
      %5854 = vmatpush1.msra.mxu0 %v5851
      %5855 = vmatprep.subr.mxu0 0.0
      %5856 = vmatpush1.msra.mxu0 0.0
      %5857 = vmatprep.subr.mxu0 0.0
      %5858 = vmatpush1.msra.mxu0 0.0
      %5859 = vmatprep.subr.mxu0 0.0
      %5860 = vmatpush1.msra.mxu0 0.0
      %5861 = vmatprep.subr.mxu0 0.0
      %5862 = vmatpush1.msra.mxu0 0.0
      %5863 = vmatprep.subr.mxu0 0.0
      %5864 = vmatpush1.msra.mxu0 0.0
      %5865 = vmatprep.subr.mxu0 0.0
      %5866 = vmatpush1.msra.mxu0 0.0
      %5867 = vmatprep.subr.mxu0 0.0
      %5868 = vmatpush1.msra.mxu0 0.0
      %5869 = vmatprep.subr.mxu0 0.0
      %5870 = vmatpush1.msra.mxu0 0.0
      %5871 = vmatprep.subr.mxu0 0.0
      %5872 = vmatpush1.msra.mxu0 0.0
      %5873 = vmatprep.subr.mxu0 0.0
      %5874 = vmatpush1.msra.mxu0 0.0
      %5875 = vmatprep.subr.mxu0 0.0
      %5876 = vmatpush1.msra.mxu0 0.0
      %5877 = vmatprep.subr.mxu0 0.0
      %5878 = vmatpush1.msra.mxu0 0.0
      %5879 = vmatprep.subr.mxu0 0.0
      %5880 = vmatpush1.msra.mxu0 0.0
      %5881 = vmatprep.subr.mxu0 0.0
      %5882 = vmatpush1.msra.mxu0 0.0
      %5883 = vmatprep.subr.mxu0 0.0
      %5884 = vmatpush1.msra.mxu0 0.0
      %5885 = vmatprep.subr.mxu0 0.0
      %5886 = vmatpush1.msra.mxu0 0.0
      %5887 = vmatprep.subr.mxu0 0.0
      %5888 = vmatpush1.msra.mxu0 0.0
      %5889 = vmatprep.subr.mxu0 0.0
      %5890 = vmatpush1.msra.mxu0 0.0
      %5891 = vmatprep.subr.mxu0 0.0
      %5892 = vmatpush1.msra.mxu0 0.0
      %5893 = vmatprep.subr.mxu0 0.0
      %5894 = vmatpush1.msra.mxu0 0.0
      %5895 = vmatprep.subr.mxu0 0.0
      %5896 = vmatpush1.msra.mxu0 0.0
      %5897 = vmatprep.subr.mxu0 0.0
      %5898 = vmatpush1.msra.mxu0 0.0
      %5899 = vmatprep.subr.mxu0 0.0
      %5900 = vmatpush1.msra.mxu0 0.0
      %5901 = vmatprep.subr.mxu0 0.0
      %5902 = vmatpush1.msra.mxu0 0.0
      %5903 = vmatprep.subr.mxu0 0.0
      %5904 = vmatpush1.msra.mxu0 0.0
      %5905 = vmatprep.subr.mxu0 0.0
      %5906 = vmatpush1.msra.mxu0 0.0
      %5907 = vmatprep.subr.mxu0 0.0
      %5908 = vmatpush1.msra.mxu0 0.0
      %5909 = vmatprep.subr.mxu0 0.0
      %5910 = vmatpush1.msra.mxu0 0.0
      %5911 = vmatprep.subr.mxu0 0.0
      %5912 = vmatpush1.msra.mxu0 0.0
      %5913 = vmatprep.subr.mxu0 0.0
      %5914 = vmatpush1.msra.mxu0 0.0
      %5915 = vmatprep.subr.mxu0 0.0
      %5916 = vmatpush1.msra.mxu0 0.0
      %5917 = vmatprep.mubr.f32.mxu0 0.0
      %5918 = vmatmul.mubr.f32.gmra.mrb[0].mxu0 %v4165
      %v5919 = vpop.f32.mrb[0].mxu0
      %v5920 = vadd.f32 0.0, %v5919
      %v5921 = vpop.f32.mrb[0].mxu0
      %5922 = vmatprep.mubr.f32.mxu0 0.0
      %5923 = vmatmul.mubr.f32.gmra.mrb[0].mxu0 %v4168
      %v5924 = vpop.f32.mrb[0].mxu0
      %v5925 = vadd.f32 0.0, %v5924
      %v5926 = vpop.f32.mrb[0].mxu0
      %5927 = vmatprep.mubr.f32.mxu0 0.0
      %5928 = vmatmul.mubr.f32.gmra.mrb[0].mxu0 %v4171
      %v5929 = vpop.f32.mrb[0].mxu0
      %v5930 = vadd.f32 0.0, %v5929
      %v5931 = vpop.f32.mrb[0].mxu0
      %5932 = vmatprep.mubr.f32.mxu0 0.0
      %5933 = vmatmul.mubr.f32.gmra.mrb[0].mxu0 %v4174
      %v5934 = vpop.f32.mrb[0].mxu0
      %v5935 = vadd.f32 0.0, %v5934
      %v5936 = vpop.f32.mrb[0].mxu0
      %5937 = vmatprep.mubr.f32.mxu0 0.0
      %5938 = vmatmul.mubr.f32.gmra.mrb[0].mxu0 %v4177
      %v5939 = vpop.f32.mrb[0].mxu0
      %v5940 = vadd.f32 0.0, %v5939
      %v5941 = vpop.f32.mrb[0].mxu0
      %5942 = vmatprep.mubr.f32.mxu0 0.0
      %5943 = vmatmul.mubr.f32.gmra.mrb[0].mxu0 %v4180
      %v5944 = vpop.f32.mrb[0].mxu0
      %v5945 = vadd.f32 0.0, %v5944
      %v5946 = vpop.f32.mrb[0].mxu0
      %5947 = vmatprep.mubr.f32.mxu0 0.0
      %5948 = vmatmul.mubr.f32.gmra.mrb[0].mxu0 %v4183
      %v5949 = vpop.f32.mrb[0].mxu0
      %v5950 = vadd.f32 0.0, %v5949
      %v5951 = vpop.f32.mrb[0].mxu0
      %5952 = vmatprep.mubr.f32.mxu0 0.0
      %5953 = vmatmul.mubr.f32.gmra.mrb[0].mxu0 %v4186
      %v5954 = vpop.f32.mrb[0].mxu0
      %v5955 = vadd.f32 0.0, %v5954
      %v5956 = vpop.f32.mrb[0].mxu0
      %5957 = vmatprep.mubr.f32.mxu0 0.0
      %5958 = vmatmul.mubr.f32.gmra.mrb[0].mxu0 %v4189
      %v5959 = vpop.f32.mrb[0].mxu0
      %v5960 = vadd.f32 0.0, %v5959
      %v5961 = vpop.f32.mrb[0].mxu0
      %5962 = vmatprep.mubr.f32.mxu0 0.0
      %5963 = vmatmul.mubr.f32.gmra.mrb[0].mxu0 %v4192
      %v5964 = vpop.f32.mrb[0].mxu0
      %v5965 = vadd.f32 0.0, %v5964
      %v5966 = vpop.f32.mrb[0].mxu0
      %5967 = vmatprep.mubr.f32.mxu0 0.0
      %5968 = vmatmul.mubr.f32.gmra.mrb[0].mxu0 %v4195
      %v5969 = vpop.f32.mrb[0].mxu0
      %v5970 = vadd.f32 0.0, %v5969
      %v5971 = vpop.f32.mrb[0].mxu0
      %5972 = vmatprep.mubr.f32.mxu0 0.0
      %5973 = vmatmul.mubr.f32.gmra.mrb[0].mxu0 %v4198
      %v5974 = vpop.f32.mrb[0].mxu0
      %v5975 = vadd.f32 0.0, %v5974
      %v5976 = vpop.f32.mrb[0].mxu0
      %5977 = vmatprep.mubr.f32.mxu0 0.0
      %5978 = vmatmul.mubr.f32.gmra.mrb[0].mxu0 %v4201
      %v5979 = vpop.f32.mrb[0].mxu0
      %v5980 = vadd.f32 0.0, %v5979
      %v5981 = vpop.f32.mrb[0].mxu0
      %5982 = vmatprep.mubr.f32.mxu0 0.0
      %5983 = vmatmul.mubr.f32.gmra.mrb[0].mxu0 %v4204
      %v5984 = vpop.f32.mrb[0].mxu0
      %v5985 = vadd.f32 0.0, %v5984
      %v5986 = vpop.f32.mrb[0].mxu0
      %5987 = vmatprep.mubr.f32.mxu0 0.0
      %5988 = vmatmul.mubr.f32.gmra.mrb[0].mxu0 %v4207
      %v5989 = vpop.f32.mrb[0].mxu0
      %v5990 = vadd.f32 0.0, %v5989
      %v5991 = vpop.f32.mrb[0].mxu0
      %5992 = vmatprep.mubr.f32.mxu0 0.0
      %5993 = vmatmul.mubr.f32.gmra.mrb[0].mxu0 %v4210
      %v5994 = vpop.f32.mrb[0].mxu0
      %v5995 = vadd.f32 0.0, %v5994
      %v5996 = vpop.f32.mrb[0].mxu0
      %5997 = vmatprep.mubr.f32.mxu0 0.0
      %5998 = vmatmul.mubr.f32.gmra.mrb[0].mxu0 %v4213
      %v5999 = vpop.f32.mrb[0].mxu0
      %v6000 = vadd.f32 0.0, %v5999
      %v6001 = vpop.f32.mrb[0].mxu0
      %6002 = vmatprep.mubr.f32.mxu0 0.0
      %6003 = vmatmul.mubr.f32.gmra.mrb[0].mxu0 %v4216
      %v6004 = vpop.f32.mrb[0].mxu0
      %v6005 = vadd.f32 0.0, %v6004
      %v6006 = vpop.f32.mrb[0].mxu0
      %6007 = vmatprep.mubr.f32.mxu0 0.0
      %6008 = vmatmul.mubr.f32.gmra.mrb[0].mxu0 %v4219
      %v6009 = vpop.f32.mrb[0].mxu0
      %v6010 = vadd.f32 0.0, %v6009
      %v6011 = vpop.f32.mrb[0].mxu0
      %6012 = vmatprep.mubr.f32.mxu0 0.0
      %6013 = vmatmul.mubr.f32.gmra.mrb[0].mxu0 %v4222
      %v6014 = vpop.f32.mrb[0].mxu0
      %v6015 = vadd.f32 0.0, %v6014
      %v6016 = vpop.f32.mrb[0].mxu0
      %6017 = vmatprep.mubr.f32.mxu0 0.0
      %6018 = vmatmul.mubr.f32.gmra.mrb[0].mxu0 %v4225
      %v6019 = vpop.f32.mrb[0].mxu0
      %v6020 = vadd.f32 0.0, %v6019
      %v6021 = vpop.f32.mrb[0].mxu0
      %6022 = vmatprep.mubr.f32.mxu0 0.0
      %6023 = vmatmul.mubr.f32.gmra.mrb[0].mxu0 %v4228
      %v6024 = vpop.f32.mrb[0].mxu0
      %v6025 = vadd.f32 0.0, %v6024
      %v6026 = vpop.f32.mrb[0].mxu0
      %6027 = vmatprep.mubr.f32.mxu0 0.0
      %6028 = vmatmul.mubr.f32.gmra.mrb[0].mxu0 %v4231
      %v6029 = vpop.f32.mrb[0].mxu0
      %v6030 = vadd.f32 0.0, %v6029
      %v6031 = vpop.f32.mrb[0].mxu0
      %6032 = vmatprep.mubr.f32.mxu0 0.0
      %6033 = vmatmul.mubr.f32.gmra.mrb[0].mxu0 %v4234
      %v6034 = vpop.f32.mrb[0].mxu0
      %v6035 = vadd.f32 0.0, %v6034
      %v6036 = vpop.f32.mrb[0].mxu0
      %6037 = vmatprep.mubr.f32.mxu0 0.0
      %6038 = vmatmul.mubr.f32.gmra.mrb[0].mxu0 %v4237
      %v6039 = vpop.f32.mrb[0].mxu0
      %v6040 = vadd.f32 0.0, %v6039
      %v6041 = vpop.f32.mrb[0].mxu0
      %6042 = vmatprep.mubr.f32.mxu0 0.0
      %6043 = vmatmul.mubr.f32.gmra.mrb[0].mxu0 %v4240
      %v6044 = vpop.f32.mrb[0].mxu0
      %v6045 = vadd.f32 0.0, %v6044
      %v6046 = vpop.f32.mrb[0].mxu0
      %6047 = vmatprep.mubr.f32.mxu0 0.0
      %6048 = vmatmul.mubr.f32.gmra.mrb[0].mxu0 %v4243
      %v6049 = vpop.f32.mrb[0].mxu0
      %v6050 = vadd.f32 0.0, %v6049
      %v6051 = vpop.f32.mrb[0].mxu0
      %6052 = vmatprep.mubr.f32.mxu0 0.0
      %6053 = vmatmul.mubr.f32.gmra.mrb[0].mxu0 %v4246
      %v6054 = vpop.f32.mrb[0].mxu0
      %v6055 = vadd.f32 0.0, %v6054
      %v6056 = vpop.f32.mrb[0].mxu0
      %6057 = vmatprep.mubr.f32.mxu0 0.0
      %6058 = vmatmul.mubr.f32.gmra.mrb[0].mxu0 %v5047
      %v6059 = vpop.f32.mrb[0].mxu0
      %v6060 = vadd.f32 0.0, %v6059
      %v6061 = vpop.f32.mrb[0].mxu0
      %6062 = vmatprep.mubr.f32.mxu0 0.0
      %6063 = vmatmul.mubr.f32.gmra.mrb[0].mxu0 %v5050
      %v6064 = vpop.f32.mrb[0].mxu0
      %v6065 = vadd.f32 0.0, %v6064
      %v6066 = vpop.f32.mrb[0].mxu0
      %6067 = vmatprep.mubr.f32.mxu0 0.0
      %6068 = vmatmul.mubr.f32.gmra.mrb[0].mxu0 %v5845
      %v6069 = vpop.f32.mrb[0].mxu0
      %v6070 = vadd.f32 0.0, %v6069
      %v6071 = vpop.f32.mrb[0].mxu0
      %6072 = vmatprep.mubr.f32.mxu0 0.0
      %6073 = vmatmul.mubr.f32.gmra.mrb[0].mxu0 %v5848
      %v6074 = vpop.f32.mrb[0].mxu0
      %v6075 = vadd.f32 0.0, %v6074
      %v6076 = vpop.f32.mrb[0].mxu0
      %6077 = vdwg.mxu0
      %v6078 = vadd.f32 %v5810, %v5920
      %v6079 = vadd.f32 %v5811, %v5925
      %v6080 = vadd.f32 %v5812, %v5930
      %v6081 = vadd.f32 %v5813, %v5935
      %v6082 = vadd.f32 %v5814, %v5940
      %v6083 = vadd.f32 %v5815, %v5945
      %v6084 = vadd.f32 %v5816, %v5950
      %v6085 = vadd.f32 %v5817, %v5955
      %v6086 = vadd.f32 %v5818, %v5960
      %v6087 = vadd.f32 %v5819, %v5965
      %v6088 = vadd.f32 %v5820, %v5970
      %v6089 = vadd.f32 %v5821, %v5975
      %v6090 = vadd.f32 %v5822, %v5980
      %v6091 = vadd.f32 %v5823, %v5985
      %v6092 = vadd.f32 %v5824, %v5990
      %v6093 = vadd.f32 %v5825, %v5995
      %v6094 = vadd.f32 %v5826, %v6000
      %v6095 = vadd.f32 %v5827, %v6005
      %v6096 = vadd.f32 %v5828, %v6010
      %v6097 = vadd.f32 %v5829, %v6015
      %v6098 = vadd.f32 %v5830, %v6020
      %v6099 = vadd.f32 %v5831, %v6025
      %v6100 = vadd.f32 %v5832, %v6030
      %v6101 = vadd.f32 %v5833, %v6035
      %v6102 = vadd.f32 %v5834, %v6040
      %v6103 = vadd.f32 %v5835, %v6045
      %v6104 = vadd.f32 %v5836, %v6050
      %v6105 = vadd.f32 %v5837, %v6055
      %v6106 = vadd.f32 %v5838, %v6060
      %v6107 = vadd.f32 %v5839, %v6065
      %v6108 = vadd.f32 %v5840, %v6070
      %v6109 = vadd.f32 %v5841, %v6075
      %v6110 = vsel %vm427, %v6078, 0.0
      %v6111 = vsel %vm427, %v6079, 0.0
      %v6112 = vadd.f32 %v6110, %v6111
      %v6113 = vsel %vm427, %v6080, 0.0
      %v6114 = vadd.f32 %v6112, %v6113
      %v6115 = vsel %vm427, %v6081, 0.0
      %v6116 = vadd.f32 %v6114, %v6115
      %v6117 = vsel %vm427, %v6082, 0.0
      %v6118 = vadd.f32 %v6116, %v6117
      %v6119 = vsel %vm427, %v6083, 0.0
      %v6120 = vadd.f32 %v6118, %v6119
      %v6121 = vsel %vm427, %v6084, 0.0
      %v6122 = vadd.f32 %v6120, %v6121
      %v6123 = vsel %vm427, %v6085, 0.0
      %v6124 = vadd.f32 %v6122, %v6123
      %v6125 = vsel %vm427, %v6086, 0.0
      %v6126 = vadd.f32 %v6124, %v6125
      %v6127 = vsel %vm427, %v6087, 0.0
      %v6128 = vadd.f32 %v6126, %v6127
      %v6129 = vsel %vm427, %v6088, 0.0
      %v6130 = vadd.f32 %v6128, %v6129
      %v6131 = vsel %vm427, %v6089, 0.0
      %v6132 = vadd.f32 %v6130, %v6131
      %v6133 = vsel %vm427, %v6090, 0.0
      %v6134 = vadd.f32 %v6132, %v6133
      %v6135 = vsel %vm427, %v6091, 0.0
      %v6136 = vadd.f32 %v6134, %v6135
      %v6137 = vsel %vm427, %v6092, 0.0
      %v6138 = vadd.f32 %v6136, %v6137
      %v6139 = vsel %vm427, %v6093, 0.0
      %v6140 = vadd.f32 %v6138, %v6139
      %v6141 = vsel %vm427, %v6094, 0.0
      %v6142 = vadd.f32 %v6140, %v6141
      %v6143 = vsel %vm427, %v6095, 0.0
      %v6144 = vadd.f32 %v6142, %v6143
      %v6145 = vsel %vm427, %v6096, 0.0
      %v6146 = vadd.f32 %v6144, %v6145
      %v6147 = vsel %vm427, %v6097, 0.0
      %v6148 = vadd.f32 %v6146, %v6147
      %v6149 = vsel %vm427, %v6098, 0.0
      %v6150 = vadd.f32 %v6148, %v6149
      %v6151 = vsel %vm427, %v6099, 0.0
      %v6152 = vadd.f32 %v6150, %v6151
      %v6153 = vsel %vm427, %v6100, 0.0
      %v6154 = vadd.f32 %v6152, %v6153
      %v6155 = vsel %vm427, %v6101, 0.0
      %v6156 = vadd.f32 %v6154, %v6155
      %v6157 = vsel %vm427, %v6102, 0.0
      %v6158 = vadd.f32 %v6156, %v6157
      %v6159 = vsel %vm427, %v6103, 0.0
      %v6160 = vadd.f32 %v6158, %v6159
      %v6161 = vsel %vm427, %v6104, 0.0
      %v6162 = vadd.f32 %v6160, %v6161
      %v6163 = vsel %vm427, %v6105, 0.0
      %v6164 = vadd.f32 %v6162, %v6163
      %v6165 = vsel %vm427, %v6106, 0.0
      %v6166 = vadd.f32 %v6164, %v6165
      %v6167 = vsel %vm427, %v6107, 0.0
      %v6168 = vadd.f32 %v6166, %v6167
      %v6169 = vsel %vm427, %v6108, 0.0
      %v6170 = vadd.f32 %v6168, %v6169
      %v6171 = vsel %vm427, %v6109, 0.0
      %v6172 = vadd.f32 %v6170, %v6171
      %v6173 = vrot.slane %v6172, 4
      %v6174 = vadd.f32 %v6172, %v6173
      %v6175 = vrot.slane %v6174, 2
      %v6176 = vadd.f32 %v6174, %v6175
      %v6177 = vrot.slane %v6176, 1
      %v6178 = vadd.f32 %v6176, %v6177
      %v6179 = vmul.f32 %v6178, 0.00390625
      %v6180 = vsub.f32 %v6078, %v6179
      %v6181 = vsub.f32 %v6079, %v6179
      %v6182 = vsub.f32 %v6080, %v6179
      %v6183 = vsub.f32 %v6081, %v6179
      %v6184 = vsub.f32 %v6082, %v6179
      %v6185 = vsub.f32 %v6083, %v6179
      %v6186 = vsub.f32 %v6084, %v6179
      %v6187 = vsub.f32 %v6085, %v6179
      %v6188 = vsub.f32 %v6086, %v6179
      %v6189 = vsub.f32 %v6087, %v6179
      %v6190 = vsub.f32 %v6088, %v6179
      %v6191 = vsub.f32 %v6089, %v6179
      %v6192 = vsub.f32 %v6090, %v6179
      %v6193 = vsub.f32 %v6091, %v6179
      %v6194 = vsub.f32 %v6092, %v6179
      %v6195 = vsub.f32 %v6093, %v6179
      %v6196 = vsub.f32 %v6094, %v6179
      %v6197 = vsub.f32 %v6095, %v6179
      %v6198 = vsub.f32 %v6096, %v6179
      %v6199 = vsub.f32 %v6097, %v6179
      %v6200 = vsub.f32 %v6098, %v6179
      %v6201 = vsub.f32 %v6099, %v6179
      %v6202 = vsub.f32 %v6100, %v6179
      %v6203 = vsub.f32 %v6101, %v6179
      %v6204 = vsub.f32 %v6102, %v6179
      %v6205 = vsub.f32 %v6103, %v6179
      %v6206 = vsub.f32 %v6104, %v6179
      %v6207 = vsub.f32 %v6105, %v6179
      %v6208 = vsub.f32 %v6106, %v6179
      %v6209 = vsub.f32 %v6107, %v6179
      %v6210 = vsub.f32 %v6108, %v6179
      %v6211 = vsub.f32 %v6109, %v6179
      %v6212 = vmul.f32 %v6180, %v6180
      %v6213 = vmul.f32 %v6181, %v6181
      %v6214 = vmul.f32 %v6182, %v6182
      %v6215 = vmul.f32 %v6183, %v6183
      %v6216 = vmul.f32 %v6184, %v6184
      %v6217 = vmul.f32 %v6185, %v6185
      %v6218 = vmul.f32 %v6186, %v6186
      %v6219 = vmul.f32 %v6187, %v6187
      %v6220 = vmul.f32 %v6188, %v6188
      %v6221 = vmul.f32 %v6189, %v6189
      %v6222 = vmul.f32 %v6190, %v6190
      %v6223 = vmul.f32 %v6191, %v6191
      %v6224 = vmul.f32 %v6192, %v6192
      %v6225 = vmul.f32 %v6193, %v6193
      %v6226 = vmul.f32 %v6194, %v6194
      %v6227 = vmul.f32 %v6195, %v6195
      %v6228 = vmul.f32 %v6196, %v6196
      %v6229 = vmul.f32 %v6197, %v6197
      %v6230 = vmul.f32 %v6198, %v6198
      %v6231 = vmul.f32 %v6199, %v6199
      %v6232 = vmul.f32 %v6200, %v6200
      %v6233 = vmul.f32 %v6201, %v6201
      %v6234 = vmul.f32 %v6202, %v6202
      %v6235 = vmul.f32 %v6203, %v6203
      %v6236 = vmul.f32 %v6204, %v6204
      %v6237 = vmul.f32 %v6205, %v6205
      %v6238 = vmul.f32 %v6206, %v6206
      %v6239 = vmul.f32 %v6207, %v6207
      %v6240 = vmul.f32 %v6208, %v6208
      %v6241 = vmul.f32 %v6209, %v6209
      %v6242 = vmul.f32 %v6210, %v6210
      %v6243 = vmul.f32 %v6211, %v6211
      %v6244 = vsel %vm427, %v6212, 0.0
      %v6245 = vsel %vm427, %v6213, 0.0
      %v6246 = vadd.f32 %v6244, %v6245
      %v6247 = vsel %vm427, %v6214, 0.0
      %v6248 = vadd.f32 %v6246, %v6247
      %v6249 = vsel %vm427, %v6215, 0.0
      %v6250 = vadd.f32 %v6248, %v6249
      %v6251 = vsel %vm427, %v6216, 0.0
      %v6252 = vadd.f32 %v6250, %v6251
      %v6253 = vsel %vm427, %v6217, 0.0
      %v6254 = vadd.f32 %v6252, %v6253
      %v6255 = vsel %vm427, %v6218, 0.0
      %v6256 = vadd.f32 %v6254, %v6255
      %v6257 = vsel %vm427, %v6219, 0.0
      %v6258 = vadd.f32 %v6256, %v6257
      %v6259 = vsel %vm427, %v6220, 0.0
      %v6260 = vadd.f32 %v6258, %v6259
      %v6261 = vsel %vm427, %v6221, 0.0
      %v6262 = vadd.f32 %v6260, %v6261
      %v6263 = vsel %vm427, %v6222, 0.0
      %v6264 = vadd.f32 %v6262, %v6263
      %v6265 = vsel %vm427, %v6223, 0.0
      %v6266 = vadd.f32 %v6264, %v6265
      %v6267 = vsel %vm427, %v6224, 0.0
      %v6268 = vadd.f32 %v6266, %v6267
      %v6269 = vsel %vm427, %v6225, 0.0
      %v6270 = vadd.f32 %v6268, %v6269
      %v6271 = vsel %vm427, %v6226, 0.0
      %v6272 = vadd.f32 %v6270, %v6271
      %v6273 = vsel %vm427, %v6227, 0.0
      %v6274 = vadd.f32 %v6272, %v6273
      %v6275 = vsel %vm427, %v6228, 0.0
      %v6276 = vadd.f32 %v6274, %v6275
      %v6277 = vsel %vm427, %v6229, 0.0
      %v6278 = vadd.f32 %v6276, %v6277
      %v6279 = vsel %vm427, %v6230, 0.0
      %v6280 = vadd.f32 %v6278, %v6279
      %v6281 = vsel %vm427, %v6231, 0.0
      %v6282 = vadd.f32 %v6280, %v6281
      %v6283 = vsel %vm427, %v6232, 0.0
      %v6284 = vadd.f32 %v6282, %v6283
      %v6285 = vsel %vm427, %v6233, 0.0
      %v6286 = vadd.f32 %v6284, %v6285
      %v6287 = vsel %vm427, %v6234, 0.0
      %v6288 = vadd.f32 %v6286, %v6287
      %v6289 = vsel %vm427, %v6235, 0.0
      %v6290 = vadd.f32 %v6288, %v6289
      %v6291 = vsel %vm427, %v6236, 0.0
      %v6292 = vadd.f32 %v6290, %v6291
      %v6293 = vsel %vm427, %v6237, 0.0
      %v6294 = vadd.f32 %v6292, %v6293
      %v6295 = vsel %vm427, %v6238, 0.0
      %v6296 = vadd.f32 %v6294, %v6295
      %v6297 = vsel %vm427, %v6239, 0.0
      %v6298 = vadd.f32 %v6296, %v6297
      %v6299 = vsel %vm427, %v6240, 0.0
      %v6300 = vadd.f32 %v6298, %v6299
      %v6301 = vsel %vm427, %v6241, 0.0
      %v6302 = vadd.f32 %v6300, %v6301
      %v6303 = vsel %vm427, %v6242, 0.0
      %v6304 = vadd.f32 %v6302, %v6303
      %v6305 = vsel %vm427, %v6243, 0.0
      %v6306 = vadd.f32 %v6304, %v6305
      %v6307 = vrot.slane %v6306, 4
      %v6308 = vadd.f32 %v6306, %v6307
      %v6309 = vrot.slane %v6308, 2
      %v6310 = vadd.f32 %v6308, %v6309
      %v6311 = vrot.slane %v6310, 1
      %v6312 = vadd.f32 %v6310, %v6311
      %v6313 = vmul.f32 %v6312, 0.00390625
      %v6314 = vadd.f32 %v6313, 1e-05
      %v6315 = vrsqrt.pop %v6314
      %v6316 = vmul.f32 %v6180, %v6315
      %v6317 = vmul.f32 %v6181, %v6315
      %v6318 = vmul.f32 %v6182, %v6315
      %v6319 = vmul.f32 %v6183, %v6315
      %v6320 = vmul.f32 %v6184, %v6315
      %v6321 = vmul.f32 %v6185, %v6315
      %v6322 = vmul.f32 %v6186, %v6315
      %v6323 = vmul.f32 %v6187, %v6315
      %v6324 = vmul.f32 %v6188, %v6315
      %v6325 = vmul.f32 %v6189, %v6315
      %v6326 = vmul.f32 %v6190, %v6315
      %v6327 = vmul.f32 %v6191, %v6315
      %v6328 = vmul.f32 %v6192, %v6315
      %v6329 = vmul.f32 %v6193, %v6315
      %v6330 = vmul.f32 %v6194, %v6315
      %v6331 = vmul.f32 %v6195, %v6315
      %v6332 = vmul.f32 %v6196, %v6315
      %v6333 = vmul.f32 %v6197, %v6315
      %v6334 = vmul.f32 %v6198, %v6315
      %v6335 = vmul.f32 %v6199, %v6315
      %v6336 = vmul.f32 %v6200, %v6315
      %v6337 = vmul.f32 %v6201, %v6315
      %v6338 = vmul.f32 %v6202, %v6315
      %v6339 = vmul.f32 %v6203, %v6315
      %v6340 = vmul.f32 %v6204, %v6315
      %v6341 = vmul.f32 %v6205, %v6315
      %v6342 = vmul.f32 %v6206, %v6315
      %v6343 = vmul.f32 %v6207, %v6315
      %v6344 = vmul.f32 %v6208, %v6315
      %v6345 = vmul.f32 %v6209, %v6315
      %v6346 = vmul.f32 %v6210, %v6315
      %v6347 = vmul.f32 %v6211, %v6315
      %v6348 = vadd.f32 %v171, %v6316
      %v6349 = vadd.f32 %v172, %v6317
      %v6350 = vadd.f32 %v173, %v6318
      %v6351 = vadd.f32 %v174, %v6319
      %v6352 = vadd.f32 %v175, %v6320
      %v6353 = vadd.f32 %v176, %v6321
      %v6354 = vadd.f32 %v177, %v6322
      %v6355 = vadd.f32 %v178, %v6323
      %v6356 = vadd.f32 %v179, %v6324
      %v6357 = vadd.f32 %v180, %v6325
      %v6358 = vadd.f32 %v181, %v6326
      %v6359 = vadd.f32 %v182, %v6327
      %v6360 = vadd.f32 %v183, %v6328
      %v6361 = vadd.f32 %v184, %v6329
      %v6362 = vadd.f32 %v185, %v6330
      %v6363 = vadd.f32 %v186, %v6331
      %v6364 = vadd.f32 %v187, %v6332
      %v6365 = vadd.f32 %v188, %v6333
      %v6366 = vadd.f32 %v189, %v6334
      %v6367 = vadd.f32 %v190, %v6335
      %v6368 = vadd.f32 %v191, %v6336
      %v6369 = vadd.f32 %v192, %v6337
      %v6370 = vadd.f32 %v193, %v6338
      %v6371 = vadd.f32 %v194, %v6339
      %v6372 = vadd.f32 %v195, %v6340
      %v6373 = vadd.f32 %v196, %v6341
      %v6374 = vadd.f32 %v197, %v6342
      %v6375 = vadd.f32 %v198, %v6343
      %v6376 = vadd.f32 %v199, %v6344
      %v6377 = vadd.f32 %v200, %v6345
      %v6378 = vadd.f32 %v201, %v6346
      %v6379 = vadd.f32 %v202, %v6347
      %6380 = vst.msk [vmem:[%s170] sm:$0xff] %vm427, %v6348
      %6381 = vst.msk [vmem:[%s170 + $0x8] sm:$0xff] %vm427, %v6349
      %6382 = vst.msk [vmem:[%s170 + $0x10] sm:$0xff] %vm427, %v6350
      %6383 = vst.msk [vmem:[%s170 + $0x18] sm:$0xff] %vm427, %v6351
      %6384 = vst.msk [vmem:[%s170 + $0x20] sm:$0xff] %vm427, %v6352
      %6385 = vst.msk [vmem:[%s170 + $0x28] sm:$0xff] %vm427, %v6353
      %6386 = vst.msk [vmem:[%s170 + $0x30] sm:$0xff] %vm427, %v6354
      %6387 = vst.msk [vmem:[%s170 + $0x38] sm:$0xff] %vm427, %v6355
      %6388 = vst.msk [vmem:[%s170 + $0x40] sm:$0xff] %vm427, %v6356
      %6389 = vst.msk [vmem:[%s170 + $0x48] sm:$0xff] %vm427, %v6357
      %6390 = vst.msk [vmem:[%s170 + $0x50] sm:$0xff] %vm427, %v6358
      %6391 = vst.msk [vmem:[%s170 + $0x58] sm:$0xff] %vm427, %v6359
      %6392 = vst.msk [vmem:[%s170 + $0x60] sm:$0xff] %vm427, %v6360
      %6393 = vst.msk [vmem:[%s170 + $0x68] sm:$0xff] %vm427, %v6361
      %6394 = vst.msk [vmem:[%s170 + $0x70] sm:$0xff] %vm427, %v6362
      %6395 = vst.msk [vmem:[%s170 + $0x78] sm:$0xff] %vm427, %v6363
      %6396 = vst.msk [vmem:[%s170 + $0x80] sm:$0xff] %vm427, %v6364
      %6397 = vst.msk [vmem:[%s170 + $0x88] sm:$0xff] %vm427, %v6365
      %6398 = vst.msk [vmem:[%s170 + $0x90] sm:$0xff] %vm427, %v6366
      %6399 = vst.msk [vmem:[%s170 + $0x98] sm:$0xff] %vm427, %v6367
      %6400 = vst.msk [vmem:[%s170 + $0xa0] sm:$0xff] %vm427, %v6368
      %6401 = vst.msk [vmem:[%s170 + $0xa8] sm:$0xff] %vm427, %v6369
      %6402 = vst.msk [vmem:[%s170 + $0xb0] sm:$0xff] %vm427, %v6370
      %6403 = vst.msk [vmem:[%s170 + $0xb8] sm:$0xff] %vm427, %v6371
      %6404 = vst.msk [vmem:[%s170 + $0xc0] sm:$0xff] %vm427, %v6372
      %6405 = vst.msk [vmem:[%s170 + $0xc8] sm:$0xff] %vm427, %v6373
      %6406 = vst.msk [vmem:[%s170 + $0xd0] sm:$0xff] %vm427, %v6374
      %6407 = vst.msk [vmem:[%s170 + $0xd8] sm:$0xff] %vm427, %v6375
      %6408 = vst.msk [vmem:[%s170 + $0xe0] sm:$0xff] %vm427, %v6376
      %6409 = vst.msk [vmem:[%s170 + $0xe8] sm:$0xff] %vm427, %v6377
      %6410 = vst.msk [vmem:[%s170 + $0xf0] sm:$0xff] %vm427, %v6378
      %6411 = vst.msk [vmem:[%s170 + $0xf8] sm:$0xff] %vm427, %v6379
      %p6412 = scmp.lt.s32.totalorder %s14, 1
      %s6413 = scalar_select %p6412, %s14, 1
      %s6414 = smul.addr %s6413, 32
      %s6415 = smul.addr %s6414, 8
      %s6416 = scalar_lea.vmem %s3, %s6415
      // Predicated region
      $region33: #{tpu_custom_call.1} parent=31 // pred_check
        %p6417 = pneg %p100
      $region34: #{tpu_custom_call.1} parent=31 // pred_check_branch
        %6419 = sbr.rel (%p6417) target = $region36
      $region35: #{tpu_custom_call.1} parent=31 // pred_region
        _
      $region36: #{tpu_custom_call.1} parent=31 // pred_fallthru
        _
    $region32: #{tpu_custom_call.1} parent=5 // pred_fallthru
      _
    %p6420 = scmp.le.s32.totalorder 2, %s9
    // Predicated region
    $region37: #{tpu_custom_call.1} parent=5 // pred_check
      %p6421 = pneg %p6420
    $region38: #{tpu_custom_call.1} parent=5 // pred_check_branch
      %6423 = sbr.rel (%p6421) target = $region40
    $region39: #{tpu_custom_call.1} parent=5 // pred_region
      %s6424 = ssub.s32 %s9, 2
      // Predicated region
      $region41: #{tpu_custom_call.1} parent=39 // pred_check
        %p6425 = pneg %p106
      $region42: #{tpu_custom_call.1} parent=39 // pred_check_branch
        %6427 = sbr.rel (%p6425) target = $region44
      $region43: #{tpu_custom_call.1} parent=39 // pred_region
        %p6428 = scmp.lt.s32.totalorder %s15, 1
        %s6429 = scalar_select %p6428, %s15, 1
        %s6430 = smul.addr %s6429, 32
        %s6431 = smul.addr %s6430, 8
        %s6432 = scalar_lea.vmem %s3, %s6431
      $region44: #{tpu_custom_call.1} parent=39 // pred_fallthru
        _
    $region40: #{tpu_custom_call.1} parent=5 // pred_fallthru
      _
  $region6: #{tpu_custom_call.1} parent=0 // loop_footer
    %s13 = sadd.s32 1, %s9
  $region7: #{tpu_custom_call.1} parent=0 // loop_footer_branch
    %8 = sbr.rel target = $region3
  $region8: #{tpu_custom_call.1} parent=0 // loop_exit
    _

</llo_original>
